<compile_context>
chip_gen: v7x
topology: tpu7x:2x2x1
jax: 0.10.0
libtpu: 0.0.40
codegen_flags: <defaults>
</compile_context>

<pallas_src>
import math
from functools import partial

import jax
import jax.numpy as jnp
from jax.experimental import pallas as pl
from jax.experimental.pallas import tpu as pltpu


# ---------------------------------------------------------------------------
# Parameter / buffer setup (plain JAX; equivalent of the PyTorch __init__s).
# ---------------------------------------------------------------------------
def build_pe_table(d_model: int, max_len: int = 5000) -> jnp.ndarray:
    """Sinusoidal table, identical math to PositionalEncoding.__init__.

    Returned shape is (max_len, d_model); the PyTorch buffer is the same data
    with an extra size-1 broadcast axis.
    """
    position = jnp.arange(0, max_len, dtype=jnp.float32)[:, None]              # (L, 1)
    div_term = jnp.exp(
        jnp.arange(0, d_model, 2, dtype=jnp.float32) * (-math.log(10000.0) / d_model)
    )                                                                           # (D/2,)
    pe = jnp.zeros((max_len, d_model), dtype=jnp.float32)
    pe = pe.at[:, 0::2].set(jnp.sin(position * div_term))
    pe = pe.at[:, 1::2].set(jnp.cos(position * div_term))
    return pe


def init_transam_params(key, d_model: int, dim_ff: int):
    """Forward-pass parameters (weights stored as (in, out) so kernels do x @ W)."""
    ks = jax.random.split(key, 12)

    def lin_w(k, fan_in, fan_out, scale=None):
        s = (1.0 / math.sqrt(fan_in)) if scale is None else scale
        return jax.random.uniform(k, (fan_in, fan_out), jnp.float32, -s, s)

    def lin_b(k, fan_in, fan_out):
        s = 1.0 / math.sqrt(fan_in)
        return jax.random.uniform(k, (1, fan_out), jnp.float32, -s, s)

    p = {
        # self-attention projections (equivalent to the packed in_proj + out_proj)
        "wq": lin_w(ks[0], d_model, d_model), "bq": lin_b(ks[1], d_model, d_model),
        "wk": lin_w(ks[2], d_model, d_model), "bk": lin_b(ks[3], d_model, d_model),
        "wv": lin_w(ks[4], d_model, d_model), "bv": lin_b(ks[5], d_model, d_model),
        "wo": lin_w(ks[6], d_model, d_model), "bo": jnp.zeros((1, d_model), jnp.float32),
        # LayerNorms (PyTorch default init: gamma=1, beta=0, eps=1e-5)
        "ln1_g": jnp.ones((1, d_model), jnp.float32),
        "ln1_b": jnp.zeros((1, d_model), jnp.float32),
        "ln2_g": jnp.ones((1, d_model), jnp.float32),
        "ln2_b": jnp.zeros((1, d_model), jnp.float32),
        # feed-forward
        "w1": lin_w(ks[7], d_model, dim_ff), "b1": lin_b(ks[8], d_model, dim_ff),
        "w2": lin_w(ks[9], dim_ff, d_model), "b2": lin_b(ks[10], dim_ff, d_model),
        # decoder: init_weights() -> bias zero, weight uniform(-0.1, 0.1)
        "wd": lin_w(ks[11], d_model, 1, scale=0.1),
        "bd": jnp.zeros((1, 1), jnp.float32),
    }
    return p


# ---------------------------------------------------------------------------
# Shared math helpers (used both inside the kernel and in the JAX reference).
# ---------------------------------------------------------------------------
def _layer_norm(x, gamma, beta, eps=1e-5):
    mu = jnp.mean(x, axis=-1, keepdims=True)
    xc = x - mu
    var = jnp.mean(xc * xc, axis=-1, keepdims=True)
    return xc * jax.lax.rsqrt(var + eps) * gamma + beta


# ---------------------------------------------------------------------------
# Fused TransAm kernel: one grid step = one batch element's full sequence.
# ---------------------------------------------------------------------------
def _transam_kernel(
    x_ref, pe_ref,
    wq_ref, bq_ref, wk_ref, bk_ref, wv_ref, bv_ref, wo_ref, bo_ref,
    ln1g_ref, ln1b_ref,
    w1_ref, b1_ref, w2_ref, b2_ref,
    ln2g_ref, ln2b_ref,
    wd_ref, bd_ref,
    o_ref,
    *, nhead,
):
    # ---- prologue: fused positional-encoding add (no standalone PE kernel) ----
    x = x_ref[...].astype(jnp.float32) + pe_ref[...].astype(jnp.float32)   # (S, D)
    S, D = x.shape
    head_dim = D // nhead
    scale = 1.0 / math.sqrt(head_dim)

    # ---- self-attention projections (MXU) ----
    q = jnp.dot(x, wq_ref[...], preferred_element_type=jnp.float32) + bq_ref[...]
    k = jnp.dot(x, wk_ref[...], preferred_element_type=jnp.float32) + bk_ref[...]
    v = jnp.dot(x, wv_ref[...], preferred_element_type=jnp.float32) + bv_ref[...]

    # causal ("square subsequent") mask, generated in-kernel
    row = jax.lax.broadcasted_iota(jnp.int32, (S, S), 0)
    col = jax.lax.broadcasted_iota(jnp.int32, (S, S), 1)
    causal = col <= row
    neg_big = jnp.float32(-1e30)

    head_outs = []
    for h in range(nhead):                      # static unroll over heads
        lo = h * head_dim
        qh = q[:, lo:lo + head_dim]             # (S, dh)
        kh = k[:, lo:lo + head_dim]
        vh = v[:, lo:lo + head_dim]
        # scores = qh @ kh^T  (contract last dims; avoids an in-kernel transpose)
        s = jax.lax.dot_general(
            qh, kh, (((1,), (1,)), ((), ())),
            preferred_element_type=jnp.float32) * scale                     # (S, S)
        s = jnp.where(causal, s, neg_big)
        s = s - jnp.max(s, axis=-1, keepdims=True)
        p = jnp.exp(s)
        p = p / jnp.sum(p, axis=-1, keepdims=True)
        head_outs.append(
            jnp.dot(p, vh, preferred_element_type=jnp.float32))             # (S, dh)
    attn = jnp.concatenate(head_outs, axis=-1)                              # (S, D)
    attn = jnp.dot(attn, wo_ref[...], preferred_element_type=jnp.float32) + bo_ref[...]

    # ---- residual + LayerNorm 1 (post-norm; dropout == identity) ----
    y = _layer_norm(x + attn, ln1g_ref[...], ln1b_ref[...])

    # ---- feed-forward (ReLU) + residual + LayerNorm 2 ----
    h1 = jnp.maximum(
        jnp.dot(y, w1_ref[...], preferred_element_type=jnp.float32) + b1_ref[...], 0.0)
    ff = jnp.dot(h1, w2_ref[...], preferred_element_type=jnp.float32) + b2_ref[...]
    z = _layer_norm(y + ff, ln2g_ref[...], ln2b_ref[...])

    # ---- decoder: Linear(d_model -> 1) ----
    out = jnp.dot(z, wd_ref[...], preferred_element_type=jnp.float32) + bd_ref[...]
    o_ref[...] = out.astype(o_ref.dtype)


# ---------------------------------------------------------------------------
# Wrapper: layout plumbing + pallas_call.
# ---------------------------------------------------------------------------
def transam_forward(x_sbd: jnp.ndarray, pe: jnp.ndarray, params, *, nhead: int):
    """x_sbd: (S, B, D) as in the PyTorch module; returns (S, B, 1)."""
    S, B, D = x_sbd.shape
    F = params["w1"].shape[1]

    # Lane-dense layout: process per-batch (S, D) slabs (D is a multiple of 128).
    x_bsd = jnp.transpose(x_sbd, (1, 0, 2))          # (B, S, D) — layout plumbing

    def full(shape):
        return pl.BlockSpec(shape, lambda b, _s=shape: (0,) * len(_s))

    in_specs = [
        pl.BlockSpec((None, S, D), lambda b: (b, 0, 0)),   # x: one batch element / step
        pl.BlockSpec((S, D), lambda b: (0, 0)),            # pe rows [0:S], VMEM-resident
        full((D, D)), full((1, D)),                        # wq, bq
        full((D, D)), full((1, D)),                        # wk, bk
        full((D, D)), full((1, D)),                        # wv, bv
        full((D, D)), full((1, D)),                        # wo, bo
        full((1, D)), full((1, D)),                        # ln1 gamma, beta
        full((D, F)), full((1, F)),                        # w1, b1
        full((F, D)), full((1, D)),                        # w2, b2
        full((1, D)), full((1, D)),                        # ln2 gamma, beta
        full((D, 1)), full((1, 1)),                        # wd, bd
    ]
    out_spec = pl.BlockSpec((None, S, 1), lambda b: (b, 0, 0))

    out_bs1 = pl.pallas_call(
        partial(_transam_kernel, nhead=nhead),
        out_shape=jax.ShapeDtypeStruct((B, S, 1), x_sbd.dtype),
        grid=(B,),
        in_specs=in_specs,
        out_specs=out_spec,
        compiler_params=pltpu.CompilerParams(
            dimension_semantics=("parallel",),      # shard batch across TCs on v7x
            vmem_limit_bytes=16 * 1024 * 1024,      # explicit, fits v5e/v6e/v7x budgets
        ),
    )(
        x_bsd, pe,
        params["wq"], params["bq"], params["wk"], params["bk"],
        params["wv"], params["bv"], params["wo"], params["bo"],
        params["ln1_g"], params["ln1_b"],
        params["w1"], params["b1"], params["w2"], params["b2"],
        params["ln2_g"], params["ln2_b"],
        params["wd"], params["bd"],
    )
    return jnp.transpose(out_bs1, (1, 0, 2))        # back to (S, B, 1)


# ---------------------------------------------------------------------------
# Pure-JAX reference of the same forward pass (mirrors the PyTorch module).
# ---------------------------------------------------------------------------
def transam_reference(x_sbd, pe, params, *, nhead):
    S, B, D = x_sbd.shape
    head_dim = D // nhead
    scale = 1.0 / math.sqrt(head_dim)
    pe_sd = pe[:S]                                   # (S, D)

    row = jnp.arange(S)[:, None]
    col = jnp.arange(S)[None, :]
    causal = col <= row

    def single(xb):                                  # xb: (S, D)
        x = xb + pe_sd
        q = x @ params["wq"] + params["bq"]
        k = x @ params["wk"] + params["bk"]
        v = x @ params["wv"] + params["bv"]
        qh = q.reshape(S, nhead, head_dim).transpose(1, 0, 2)
        kh = k.reshape(S, nhead, head_dim).transpose(1, 0, 2)
        vh = v.reshape(S, nhead, head_dim).transpose(1, 0, 2)
        s = jnp.einsum("hqd,hkd->hqk", qh, kh) * scale
        s = jnp.where(causal[None], s, -jnp.inf)
        p = jax.nn.softmax(s, axis=-1)
        attn = jnp.einsum("hqk,hkd->hqd", p, vh).transpose(1, 0, 2).reshape(S, D)
        attn = attn @ params["wo"] + params["bo"]
        y = _layer_norm(x + attn, params["ln1_g"], params["ln1_b"])
        ff = jnp.maximum(y @ params["w1"] + params["b1"], 0.0) @ params["w2"] + params["b2"]
        z = _layer_norm(y + ff, params["ln2_g"], params["ln2_b"])
        return z @ params["wd"] + params["bd"]       # (S, 1)

    return jax.vmap(single, in_axes=1, out_axes=1)(x_sbd)   # (S, B, 1)


if __name__ == "__main__":
    # Keep kernel and reference matmuls at the same (full-f32) precision.
    jax.config.update("jax_default_matmul_precision", "highest")

    # Small lane-dense demo config consistent with the module:
    # (seq, batch, d_model, nhead, dim_feedforward)
    S, B, D, H, F = 8, 2, 128, 4, 256
    MAX_LEN = 5000

    key = jax.random.PRNGKey(0)
    kx, kp = jax.random.split(key)
    x = jax.random.normal(kx, (S, B, D), dtype=jnp.float32)

    pe = build_pe_table(D, MAX_LEN)
    params = init_transam_params(kp, D, F)

    out = transam_forward(x, pe, params, nhead=H)
    out = jax.block_until_ready(out)

    ref = transam_reference(x, pe, params, nhead=H)
    assert out.shape == (S, B, 1)
    max_err = float(jnp.max(jnp.abs(out - ref)))
    assert jnp.allclose(out, ref, atol=2e-3, rtol=2e-3), f"max abs err = {max_err}"

    print("KERNEL_OK")
</pallas_src>

<mosaic_0001>
module attributes {stable_mosaic.version = 11 : i64} {
  func.func @_transam_kernel(%arg0: i32, %arg1: memref<1x8x128xf32, #tpu.memory_space<vmem>>, %arg2: memref<8x128xf32, #tpu.memory_space<vmem>>, %arg3: memref<128x128xf32, #tpu.memory_space<vmem>>, %arg4: memref<1x128xf32, #tpu.memory_space<vmem>>, %arg5: memref<128x128xf32, #tpu.memory_space<vmem>>, %arg6: memref<1x128xf32, #tpu.memory_space<vmem>>, %arg7: memref<128x128xf32, #tpu.memory_space<vmem>>, %arg8: memref<1x128xf32, #tpu.memory_space<vmem>>, %arg9: memref<128x128xf32, #tpu.memory_space<vmem>>, %arg10: memref<1x128xf32, #tpu.memory_space<vmem>>, %arg11: memref<1x128xf32, #tpu.memory_space<vmem>>, %arg12: memref<1x128xf32, #tpu.memory_space<vmem>>, %arg13: memref<128x256xf32, #tpu.memory_space<vmem>>, %arg14: memref<1x256xf32, #tpu.memory_space<vmem>>, %arg15: memref<256x128xf32, #tpu.memory_space<vmem>>, %arg16: memref<1x128xf32, #tpu.memory_space<vmem>>, %arg17: memref<1x128xf32, #tpu.memory_space<vmem>>, %arg18: memref<1x128xf32, #tpu.memory_space<vmem>>, %arg19: memref<128x1xf32, #tpu.memory_space<vmem>>, %arg20: memref<1x1xf32, #tpu.memory_space<vmem>>, %arg21: memref<1x8x1xf32, #tpu.memory_space<vmem>>) attributes {dimension_semantics = [#tpu.dimension_semantics<parallel>], iteration_bounds = array<i64: 2>, scalar_prefetch = 0 : i64, scratch_operands = 0 : i64, tpu.core_type = #tpu.core_type<tc>, window_params = [{transform_indices = @transform_0, window_bounds = array<i64: 1, 8, 128>}, {transform_indices = @transform_1, window_bounds = array<i64: 8, 128>}, {pipeline_mode = #tpu.pipeline_mode<synchronous>, transform_indices = @transform_2, window_bounds = array<i64: 128, 128>}, {pipeline_mode = #tpu.pipeline_mode<synchronous>, transform_indices = @transform_3, window_bounds = array<i64: 1, 128>}, {pipeline_mode = #tpu.pipeline_mode<synchronous>, transform_indices = @transform_4, window_bounds = array<i64: 128, 128>}, {pipeline_mode = #tpu.pipeline_mode<synchronous>, transform_indices = @transform_5, window_bounds = array<i64: 1, 128>}, {pipeline_mode = #tpu.pipeline_mode<synchronous>, transform_indices = @transform_6, window_bounds = array<i64: 128, 128>}, {pipeline_mode = #tpu.pipeline_mode<synchronous>, transform_indices = @transform_7, window_bounds = array<i64: 1, 128>}, {pipeline_mode = #tpu.pipeline_mode<synchronous>, transform_indices = @transform_8, window_bounds = array<i64: 128, 128>}, {pipeline_mode = #tpu.pipeline_mode<synchronous>, transform_indices = @transform_9, window_bounds = array<i64: 1, 128>}, {pipeline_mode = #tpu.pipeline_mode<synchronous>, transform_indices = @transform_10, window_bounds = array<i64: 1, 128>}, {pipeline_mode = #tpu.pipeline_mode<synchronous>, transform_indices = @transform_11, window_bounds = array<i64: 1, 128>}, {pipeline_mode = #tpu.pipeline_mode<synchronous>, transform_indices = @transform_12, window_bounds = array<i64: 128, 256>}, {pipeline_mode = #tpu.pipeline_mode<synchronous>, transform_indices = @transform_13, window_bounds = array<i64: 1, 256>}, {pipeline_mode = #tpu.pipeline_mode<synchronous>, transform_indices = @transform_14, window_bounds = array<i64: 256, 128>}, {pipeline_mode = #tpu.pipeline_mode<synchronous>, transform_indices = @transform_15, window_bounds = array<i64: 1, 128>}, {pipeline_mode = #tpu.pipeline_mode<synchronous>, transform_indices = @transform_16, window_bounds = array<i64: 1, 128>}, {pipeline_mode = #tpu.pipeline_mode<synchronous>, transform_indices = @transform_17, window_bounds = array<i64: 1, 128>}, {pipeline_mode = #tpu.pipeline_mode<synchronous>, transform_indices = @transform_18, window_bounds = array<i64: 128, 1>}, {pipeline_mode = #tpu.pipeline_mode<synchronous>, transform_indices = @transform_19, window_bounds = array<i64: 1, 1>}, {transform_indices = @transform_20, window_bounds = array<i64: 1, 8, 1>}]} {
    %c0 = arith.constant 0 : index
    %c0_0 = arith.constant 0 : index
    %c0_1 = arith.constant 0 : index
    %0 = vector.load %arg1[%c0, %c0_0, %c0_1] : memref<1x8x128xf32, #tpu.memory_space<vmem>>, vector<1x8x128xf32>
    %1 = vector.shape_cast %0 : vector<1x8x128xf32> to vector<8x128xf32>
    %c0_2 = arith.constant 0 : index
    %c0_3 = arith.constant 0 : index
    %2 = vector.load %arg2[%c0_2, %c0_3] : memref<8x128xf32, #tpu.memory_space<vmem>>, vector<8x128xf32>
    %3 = arith.addf %1, %2 : vector<8x128xf32>
    %c0_4 = arith.constant 0 : index
    %c0_5 = arith.constant 0 : index
    %4 = vector.load %arg3[%c0_4, %c0_5] : memref<128x128xf32, #tpu.memory_space<vmem>>, vector<128x128xf32>
    %cst = arith.constant dense<0.000000e+00> : vector<8x128xf32>
    %5 = tpu.matmul %3, %4, %cst {dimension_numbers = #tpu.dot_dimension_numbers<[1], [0], [0], [1], [0, 0, 1, 1], [], []>, precision = #tpu.contract_precision<fp32>} : vector<8x128xf32>, vector<128x128xf32>, vector<8x128xf32> -> vector<8x128xf32>
    %c0_6 = arith.constant 0 : index
    %c0_7 = arith.constant 0 : index
    %6 = vector.load %arg4[%c0_6, %c0_7] : memref<1x128xf32, #tpu.memory_space<vmem>>, vector<1x128xf32>
    %7 = vector.broadcast %6 : vector<1x128xf32> to vector<8x128xf32>
    %8 = arith.addf %5, %7 : vector<8x128xf32>
    %c0_8 = arith.constant 0 : index
    %c0_9 = arith.constant 0 : index
    %9 = vector.load %arg5[%c0_8, %c0_9] : memref<128x128xf32, #tpu.memory_space<vmem>>, vector<128x128xf32>
    %cst_10 = arith.constant dense<0.000000e+00> : vector<8x128xf32>
    %10 = tpu.matmul %3, %9, %cst_10 {dimension_numbers = #tpu.dot_dimension_numbers<[1], [0], [0], [1], [0, 0, 1, 1], [], []>, precision = #tpu.contract_precision<fp32>} : vector<8x128xf32>, vector<128x128xf32>, vector<8x128xf32> -> vector<8x128xf32>
    %c0_11 = arith.constant 0 : index
    %c0_12 = arith.constant 0 : index
    %11 = vector.load %arg6[%c0_11, %c0_12] : memref<1x128xf32, #tpu.memory_space<vmem>>, vector<1x128xf32>
    %12 = vector.broadcast %11 : vector<1x128xf32> to vector<8x128xf32>
    %13 = arith.addf %10, %12 : vector<8x128xf32>
    %c0_13 = arith.constant 0 : index
    %c0_14 = arith.constant 0 : index
    %14 = vector.load %arg7[%c0_13, %c0_14] : memref<128x128xf32, #tpu.memory_space<vmem>>, vector<128x128xf32>
    %cst_15 = arith.constant dense<0.000000e+00> : vector<8x128xf32>
    %15 = tpu.matmul %3, %14, %cst_15 {dimension_numbers = #tpu.dot_dimension_numbers<[1], [0], [0], [1], [0, 0, 1, 1], [], []>, precision = #tpu.contract_precision<fp32>} : vector<8x128xf32>, vector<128x128xf32>, vector<8x128xf32> -> vector<8x128xf32>
    %c0_16 = arith.constant 0 : index
    %c0_17 = arith.constant 0 : index
    %16 = vector.load %arg8[%c0_16, %c0_17] : memref<1x128xf32, #tpu.memory_space<vmem>>, vector<1x128xf32>
    %17 = vector.broadcast %16 : vector<1x128xf32> to vector<8x128xf32>
    %18 = arith.addf %15, %17 : vector<8x128xf32>
    %19 = tpu.iota {dimensions = array<i32: 0>} : vector<8x8xi32>
    %20 = tpu.iota {dimensions = array<i32: 1>} : vector<8x8xi32>
    %21 = arith.cmpi sle, %20, %19 : vector<8x8xi32>
    %22 = vector.extract_strided_slice %8 {offsets = [0, 0], sizes = [8, 32], strides = [1, 1]} : vector<8x128xf32> to vector<8x32xf32>
    %23 = vector.extract_strided_slice %13 {offsets = [0, 0], sizes = [8, 32], strides = [1, 1]} : vector<8x128xf32> to vector<8x32xf32>
    %24 = vector.extract_strided_slice %18 {offsets = [0, 0], sizes = [8, 32], strides = [1, 1]} : vector<8x128xf32> to vector<8x32xf32>
    %cst_18 = arith.constant dense<0.000000e+00> : vector<8x8xf32>
    %25 = tpu.matmul %22, %23, %cst_18 {dimension_numbers = #tpu.dot_dimension_numbers<[1], [1], [0], [0], [0, 0, 1, 0], [], []>, precision = #tpu.contract_precision<fp32>} : vector<8x32xf32>, vector<8x32xf32>, vector<8x8xf32> -> vector<8x8xf32>
    %cst_19 = arith.constant 0.176776692 : f32
    %26 = vector.broadcast %cst_19 : f32 to vector<8x8xf32>
    %27 = arith.mulf %25, %26 : vector<8x8xf32>
    %cst_20 = arith.constant -1.000000e+30 : f32
    %28 = vector.broadcast %cst_20 : f32 to vector<8x8xf32>
    %29 = arith.select %21, %27, %28 : vector<8x8xi1>, vector<8x8xf32>
    %cst_21 = arith.constant dense<0xFF800000> : vector<8xf32>
    %30 = vector.multi_reduction <maximumf>, %29, %cst_21 [1] : vector<8x8xf32> to vector<8xf32>
    %31 = vector.shape_cast %30 : vector<8xf32> to vector<8x1xf32>
    %32 = vector.broadcast %31 : vector<8x1xf32> to vector<8x8xf32>
    %33 = arith.subf %29, %32 : vector<8x8xf32>
    %34 = math.exp %33 : vector<8x8xf32>
    %cst_22 = arith.constant dense<0.000000e+00> : vector<8xf32>
    %35 = vector.multi_reduction <add>, %34, %cst_22 [1] : vector<8x8xf32> to vector<8xf32>
    %36 = vector.shape_cast %35 : vector<8xf32> to vector<8x1xf32>
    %37 = vector.broadcast %36 : vector<8x1xf32> to vector<8x8xf32>
    %38 = arith.divf %34, %37 : vector<8x8xf32>
    %cst_23 = arith.constant dense<0.000000e+00> : vector<8x32xf32>
    %39 = tpu.matmul %38, %24, %cst_23 {dimension_numbers = #tpu.dot_dimension_numbers<[1], [0], [0], [1], [0, 0, 1, 1], [], []>, precision = #tpu.contract_precision<fp32>} : vector<8x8xf32>, vector<8x32xf32>, vector<8x32xf32> -> vector<8x32xf32>
    %40 = vector.extract_strided_slice %8 {offsets = [0, 32], sizes = [8, 32], strides = [1, 1]} : vector<8x128xf32> to vector<8x32xf32>
    %41 = vector.extract_strided_slice %13 {offsets = [0, 32], sizes = [8, 32], strides = [1, 1]} : vector<8x128xf32> to vector<8x32xf32>
    %42 = vector.extract_strided_slice %18 {offsets = [0, 32], sizes = [8, 32], strides = [1, 1]} : vector<8x128xf32> to vector<8x32xf32>
    %cst_24 = arith.constant dense<0.000000e+00> : vector<8x8xf32>
    %43 = tpu.matmul %40, %41, %cst_24 {dimension_numbers = #tpu.dot_dimension_numbers<[1], [1], [0], [0], [0, 0, 1, 0], [], []>, precision = #tpu.contract_precision<fp32>} : vector<8x32xf32>, vector<8x32xf32>, vector<8x8xf32> -> vector<8x8xf32>
    %cst_25 = arith.constant 0.176776692 : f32
    %44 = vector.broadcast %cst_25 : f32 to vector<8x8xf32>
    %45 = arith.mulf %43, %44 : vector<8x8xf32>
    %cst_26 = arith.constant -1.000000e+30 : f32
    %46 = vector.broadcast %cst_26 : f32 to vector<8x8xf32>
    %47 = arith.select %21, %45, %46 : vector<8x8xi1>, vector<8x8xf32>
    %cst_27 = arith.constant dense<0xFF800000> : vector<8xf32>
    %48 = vector.multi_reduction <maximumf>, %47, %cst_27 [1] : vector<8x8xf32> to vector<8xf32>
    %49 = vector.shape_cast %48 : vector<8xf32> to vector<8x1xf32>
    %50 = vector.broadcast %49 : vector<8x1xf32> to vector<8x8xf32>
    %51 = arith.subf %47, %50 : vector<8x8xf32>
    %52 = math.exp %51 : vector<8x8xf32>
    %cst_28 = arith.constant dense<0.000000e+00> : vector<8xf32>
    %53 = vector.multi_reduction <add>, %52, %cst_28 [1] : vector<8x8xf32> to vector<8xf32>
    %54 = vector.shape_cast %53 : vector<8xf32> to vector<8x1xf32>
    %55 = vector.broadcast %54 : vector<8x1xf32> to vector<8x8xf32>
    %56 = arith.divf %52, %55 : vector<8x8xf32>
    %cst_29 = arith.constant dense<0.000000e+00> : vector<8x32xf32>
    %57 = tpu.matmul %56, %42, %cst_29 {dimension_numbers = #tpu.dot_dimension_numbers<[1], [0], [0], [1], [0, 0, 1, 1], [], []>, precision = #tpu.contract_precision<fp32>} : vector<8x8xf32>, vector<8x32xf32>, vector<8x32xf32> -> vector<8x32xf32>
    %58 = vector.extract_strided_slice %8 {offsets = [0, 64], sizes = [8, 32], strides = [1, 1]} : vector<8x128xf32> to vector<8x32xf32>
    %59 = vector.extract_strided_slice %13 {offsets = [0, 64], sizes = [8, 32], strides = [1, 1]} : vector<8x128xf32> to vector<8x32xf32>
    %60 = vector.extract_strided_slice %18 {offsets = [0, 64], sizes = [8, 32], strides = [1, 1]} : vector<8x128xf32> to vector<8x32xf32>
    %cst_30 = arith.constant dense<0.000000e+00> : vector<8x8xf32>
    %61 = tpu.matmul %58, %59, %cst_30 {dimension_numbers = #tpu.dot_dimension_numbers<[1], [1], [0], [0], [0, 0, 1, 0], [], []>, precision = #tpu.contract_precision<fp32>} : vector<8x32xf32>, vector<8x32xf32>, vector<8x8xf32> -> vector<8x8xf32>
    %cst_31 = arith.constant 0.176776692 : f32
    %62 = vector.broadcast %cst_31 : f32 to vector<8x8xf32>
    %63 = arith.mulf %61, %62 : vector<8x8xf32>
    %cst_32 = arith.constant -1.000000e+30 : f32
    %64 = vector.broadcast %cst_32 : f32 to vector<8x8xf32>
    %65 = arith.select %21, %63, %64 : vector<8x8xi1>, vector<8x8xf32>
    %cst_33 = arith.constant dense<0xFF800000> : vector<8xf32>
    %66 = vector.multi_reduction <maximumf>, %65, %cst_33 [1] : vector<8x8xf32> to vector<8xf32>
    %67 = vector.shape_cast %66 : vector<8xf32> to vector<8x1xf32>
    %68 = vector.broadcast %67 : vector<8x1xf32> to vector<8x8xf32>
    %69 = arith.subf %65, %68 : vector<8x8xf32>
    %70 = math.exp %69 : vector<8x8xf32>
    %cst_34 = arith.constant dense<0.000000e+00> : vector<8xf32>
    %71 = vector.multi_reduction <add>, %70, %cst_34 [1] : vector<8x8xf32> to vector<8xf32>
    %72 = vector.shape_cast %71 : vector<8xf32> to vector<8x1xf32>
    %73 = vector.broadcast %72 : vector<8x1xf32> to vector<8x8xf32>
    %74 = arith.divf %70, %73 : vector<8x8xf32>
    %cst_35 = arith.constant dense<0.000000e+00> : vector<8x32xf32>
    %75 = tpu.matmul %74, %60, %cst_35 {dimension_numbers = #tpu.dot_dimension_numbers<[1], [0], [0], [1], [0, 0, 1, 1], [], []>, precision = #tpu.contract_precision<fp32>} : vector<8x8xf32>, vector<8x32xf32>, vector<8x32xf32> -> vector<8x32xf32>
    %76 = vector.extract_strided_slice %8 {offsets = [0, 96], sizes = [8, 32], strides = [1, 1]} : vector<8x128xf32> to vector<8x32xf32>
    %77 = vector.extract_strided_slice %13 {offsets = [0, 96], sizes = [8, 32], strides = [1, 1]} : vector<8x128xf32> to vector<8x32xf32>
    %78 = vector.extract_strided_slice %18 {offsets = [0, 96], sizes = [8, 32], strides = [1, 1]} : vector<8x128xf32> to vector<8x32xf32>
    %cst_36 = arith.constant dense<0.000000e+00> : vector<8x8xf32>
    %79 = tpu.matmul %76, %77, %cst_36 {dimension_numbers = #tpu.dot_dimension_numbers<[1], [1], [0], [0], [0, 0, 1, 0], [], []>, precision = #tpu.contract_precision<fp32>} : vector<8x32xf32>, vector<8x32xf32>, vector<8x8xf32> -> vector<8x8xf32>
    %cst_37 = arith.constant 0.176776692 : f32
    %80 = vector.broadcast %cst_37 : f32 to vector<8x8xf32>
    %81 = arith.mulf %79, %80 : vector<8x8xf32>
    %cst_38 = arith.constant -1.000000e+30 : f32
    %82 = vector.broadcast %cst_38 : f32 to vector<8x8xf32>
    %83 = arith.select %21, %81, %82 : vector<8x8xi1>, vector<8x8xf32>
    %cst_39 = arith.constant dense<0xFF800000> : vector<8xf32>
    %84 = vector.multi_reduction <maximumf>, %83, %cst_39 [1] : vector<8x8xf32> to vector<8xf32>
    %85 = vector.shape_cast %84 : vector<8xf32> to vector<8x1xf32>
    %86 = vector.broadcast %85 : vector<8x1xf32> to vector<8x8xf32>
    %87 = arith.subf %83, %86 : vector<8x8xf32>
    %88 = math.exp %87 : vector<8x8xf32>
    %cst_40 = arith.constant dense<0.000000e+00> : vector<8xf32>
    %89 = vector.multi_reduction <add>, %88, %cst_40 [1] : vector<8x8xf32> to vector<8xf32>
    %90 = vector.shape_cast %89 : vector<8xf32> to vector<8x1xf32>
    %91 = vector.broadcast %90 : vector<8x1xf32> to vector<8x8xf32>
    %92 = arith.divf %88, %91 : vector<8x8xf32>
    %cst_41 = arith.constant dense<0.000000e+00> : vector<8x32xf32>
    %93 = tpu.matmul %92, %78, %cst_41 {dimension_numbers = #tpu.dot_dimension_numbers<[1], [0], [0], [1], [0, 0, 1, 1], [], []>, precision = #tpu.contract_precision<fp32>} : vector<8x8xf32>, vector<8x32xf32>, vector<8x32xf32> -> vector<8x32xf32>
    %94 = tpu.concatenate %39, %57, %75, %93 in 1 : vector<8x32xf32>, vector<8x32xf32>, vector<8x32xf32>, vector<8x32xf32> -> vector<8x128xf32>
    %c0_42 = arith.constant 0 : index
    %c0_43 = arith.constant 0 : index
    %95 = vector.load %arg9[%c0_42, %c0_43] : memref<128x128xf32, #tpu.memory_space<vmem>>, vector<128x128xf32>
    %cst_44 = arith.constant dense<0.000000e+00> : vector<8x128xf32>
    %96 = tpu.matmul %94, %95, %cst_44 {dimension_numbers = #tpu.dot_dimension_numbers<[1], [0], [0], [1], [0, 0, 1, 1], [], []>, precision = #tpu.contract_precision<fp32>} : vector<8x128xf32>, vector<128x128xf32>, vector<8x128xf32> -> vector<8x128xf32>
    %c0_45 = arith.constant 0 : index
    %c0_46 = arith.constant 0 : index
    %97 = vector.load %arg10[%c0_45, %c0_46] : memref<1x128xf32, #tpu.memory_space<vmem>>, vector<1x128xf32>
    %98 = vector.broadcast %97 : vector<1x128xf32> to vector<8x128xf32>
    %99 = arith.addf %96, %98 : vector<8x128xf32>
    %100 = arith.addf %3, %99 : vector<8x128xf32>
    %c0_47 = arith.constant 0 : index
    %c0_48 = arith.constant 0 : index
    %101 = vector.load %arg11[%c0_47, %c0_48] : memref<1x128xf32, #tpu.memory_space<vmem>>, vector<1x128xf32>
    %c0_49 = arith.constant 0 : index
    %c0_50 = arith.constant 0 : index
    %102 = vector.load %arg12[%c0_49, %c0_50] : memref<1x128xf32, #tpu.memory_space<vmem>>, vector<1x128xf32>
    %cst_51 = arith.constant dense<0.000000e+00> : vector<8xf32>
    %103 = vector.multi_reduction <add>, %100, %cst_51 [1] : vector<8x128xf32> to vector<8xf32>
    %104 = vector.shape_cast %103 : vector<8xf32> to vector<8x1xf32>
    %cst_52 = arith.constant 1.280000e+02 : f32
    %105 = vector.broadcast %cst_52 : f32 to vector<8x1xf32>
    %106 = arith.divf %104, %105 : vector<8x1xf32>
    %107 = vector.broadcast %106 : vector<8x1xf32> to vector<8x128xf32>
    %108 = arith.subf %100, %107 : vector<8x128xf32>
    %109 = arith.mulf %108, %108 : vector<8x128xf32>
    %cst_53 = arith.constant dense<0.000000e+00> : vector<8xf32>
    %110 = vector.multi_reduction <add>, %109, %cst_53 [1] : vector<8x128xf32> to vector<8xf32>
    %111 = vector.shape_cast %110 : vector<8xf32> to vector<8x1xf32>
    %cst_54 = arith.constant 1.280000e+02 : f32
    %112 = vector.broadcast %cst_54 : f32 to vector<8x1xf32>
    %113 = arith.divf %111, %112 : vector<8x1xf32>
    %cst_55 = arith.constant 9.99999974E-6 : f32
    %114 = vector.broadcast %cst_55 : f32 to vector<8x1xf32>
    %115 = arith.addf %113, %114 : vector<8x1xf32>
    %116 = math.rsqrt %115 : vector<8x1xf32>
    %117 = vector.broadcast %116 : vector<8x1xf32> to vector<8x128xf32>
    %118 = arith.mulf %108, %117 : vector<8x128xf32>
    %119 = vector.broadcast %101 : vector<1x128xf32> to vector<8x128xf32>
    %120 = arith.mulf %118, %119 : vector<8x128xf32>
    %121 = vector.broadcast %102 : vector<1x128xf32> to vector<8x128xf32>
    %122 = arith.addf %120, %121 : vector<8x128xf32>
    %c0_56 = arith.constant 0 : index
    %c0_57 = arith.constant 0 : index
    %123 = vector.load %arg13[%c0_56, %c0_57] : memref<128x256xf32, #tpu.memory_space<vmem>>, vector<128x256xf32>
    %cst_58 = arith.constant dense<0.000000e+00> : vector<8x256xf32>
    %124 = tpu.matmul %122, %123, %cst_58 {dimension_numbers = #tpu.dot_dimension_numbers<[1], [0], [0], [1], [0, 0, 1, 1], [], []>, precision = #tpu.contract_precision<fp32>} : vector<8x128xf32>, vector<128x256xf32>, vector<8x256xf32> -> vector<8x256xf32>
    %c0_59 = arith.constant 0 : index
    %c0_60 = arith.constant 0 : index
    %125 = vector.load %arg14[%c0_59, %c0_60] : memref<1x256xf32, #tpu.memory_space<vmem>>, vector<1x256xf32>
    %126 = vector.broadcast %125 : vector<1x256xf32> to vector<8x256xf32>
    %127 = arith.addf %124, %126 : vector<8x256xf32>
    %cst_61 = arith.constant 0.000000e+00 : f32
    %128 = vector.broadcast %cst_61 : f32 to vector<8x256xf32>
    %129 = arith.maximumf %127, %128 : vector<8x256xf32>
    %c0_62 = arith.constant 0 : index
    %c0_63 = arith.constant 0 : index
    %130 = vector.load %arg15[%c0_62, %c0_63] : memref<256x128xf32, #tpu.memory_space<vmem>>, vector<256x128xf32>
    %cst_64 = arith.constant dense<0.000000e+00> : vector<8x128xf32>
    %131 = tpu.matmul %129, %130, %cst_64 {dimension_numbers = #tpu.dot_dimension_numbers<[1], [0], [0], [1], [0, 0, 1, 1], [], []>, precision = #tpu.contract_precision<fp32>} : vector<8x256xf32>, vector<256x128xf32>, vector<8x128xf32> -> vector<8x128xf32>
    %c0_65 = arith.constant 0 : index
    %c0_66 = arith.constant 0 : index
    %132 = vector.load %arg16[%c0_65, %c0_66] : memref<1x128xf32, #tpu.memory_space<vmem>>, vector<1x128xf32>
    %133 = vector.broadcast %132 : vector<1x128xf32> to vector<8x128xf32>
    %134 = arith.addf %131, %133 : vector<8x128xf32>
    %135 = arith.addf %122, %134 : vector<8x128xf32>
    %c0_67 = arith.constant 0 : index
    %c0_68 = arith.constant 0 : index
    %136 = vector.load %arg17[%c0_67, %c0_68] : memref<1x128xf32, #tpu.memory_space<vmem>>, vector<1x128xf32>
    %c0_69 = arith.constant 0 : index
    %c0_70 = arith.constant 0 : index
    %137 = vector.load %arg18[%c0_69, %c0_70] : memref<1x128xf32, #tpu.memory_space<vmem>>, vector<1x128xf32>
    %cst_71 = arith.constant dense<0.000000e+00> : vector<8xf32>
    %138 = vector.multi_reduction <add>, %135, %cst_71 [1] : vector<8x128xf32> to vector<8xf32>
    %139 = vector.shape_cast %138 : vector<8xf32> to vector<8x1xf32>
    %cst_72 = arith.constant 1.280000e+02 : f32
    %140 = vector.broadcast %cst_72 : f32 to vector<8x1xf32>
    %141 = arith.divf %139, %140 : vector<8x1xf32>
    %142 = vector.broadcast %141 : vector<8x1xf32> to vector<8x128xf32>
    %143 = arith.subf %135, %142 : vector<8x128xf32>
    %144 = arith.mulf %143, %143 : vector<8x128xf32>
    %cst_73 = arith.constant dense<0.000000e+00> : vector<8xf32>
    %145 = vector.multi_reduction <add>, %144, %cst_73 [1] : vector<8x128xf32> to vector<8xf32>
    %146 = vector.shape_cast %145 : vector<8xf32> to vector<8x1xf32>
    %cst_74 = arith.constant 1.280000e+02 : f32
    %147 = vector.broadcast %cst_74 : f32 to vector<8x1xf32>
    %148 = arith.divf %146, %147 : vector<8x1xf32>
    %cst_75 = arith.constant 9.99999974E-6 : f32
    %149 = vector.broadcast %cst_75 : f32 to vector<8x1xf32>
    %150 = arith.addf %148, %149 : vector<8x1xf32>
    %151 = math.rsqrt %150 : vector<8x1xf32>
    %152 = vector.broadcast %151 : vector<8x1xf32> to vector<8x128xf32>
    %153 = arith.mulf %143, %152 : vector<8x128xf32>
    %154 = vector.broadcast %136 : vector<1x128xf32> to vector<8x128xf32>
    %155 = arith.mulf %153, %154 : vector<8x128xf32>
    %156 = vector.broadcast %137 : vector<1x128xf32> to vector<8x128xf32>
    %157 = arith.addf %155, %156 : vector<8x128xf32>
    %c0_76 = arith.constant 0 : index
    %c0_77 = arith.constant 0 : index
    %158 = vector.load %arg19[%c0_76, %c0_77] : memref<128x1xf32, #tpu.memory_space<vmem>>, vector<128x1xf32>
    %cst_78 = arith.constant dense<0.000000e+00> : vector<8x1xf32>
    %159 = tpu.matmul %157, %158, %cst_78 {dimension_numbers = #tpu.dot_dimension_numbers<[1], [0], [0], [1], [0, 0, 1, 1], [], []>, precision = #tpu.contract_precision<fp32>} : vector<8x128xf32>, vector<128x1xf32>, vector<8x1xf32> -> vector<8x1xf32>
    %c0_79 = arith.constant 0 : index
    %c0_80 = arith.constant 0 : index
    %160 = vector.load %arg20[%c0_79, %c0_80] : memref<1x1xf32, #tpu.memory_space<vmem>>, vector<1x1xf32>
    %161 = vector.broadcast %160 : vector<1x1xf32> to vector<8x1xf32>
    %162 = arith.addf %159, %161 : vector<8x1xf32>
    %c0_81 = arith.constant 0 : index
    %c0_82 = arith.constant 0 : index
    %c0_83 = arith.constant 0 : index
    %163 = vector.load %arg21[%c0_81, %c0_82, %c0_83] : memref<1x8x1xf32, #tpu.memory_space<vmem>>, vector<1x8x1xf32>
    %164 = vector.shape_cast %163 : vector<1x8x1xf32> to vector<8x1xf32>
    %165 = vector.shape_cast %162 : vector<8x1xf32> to vector<1x8x1xf32>
    tpu.vector_store %arg21[%c0_81, %c0_82, %c0_83], %165 {strides = array<i32>} : memref<1x8x1xf32, #tpu.memory_space<vmem>>, vector<1x8x1xf32>,
    return
  }
  func.func @transform_0(%arg0: i32) -> (i32, i32, i32) {
    %c0_i32 = arith.constant 0 : i32
    %c0_i32_0 = arith.constant 0 : i32
    %c0_i32_1 = arith.constant 0 : i32
    return %arg0, %c0_i32, %c0_i32_0 : i32, i32, i32
  }
  func.func @transform_1(%arg0: i32) -> (i32, i32) {
    %c0_i32 = arith.constant 0 : i32
    %c0_i32_0 = arith.constant 0 : i32
    %c0_i32_1 = arith.constant 0 : i32
    return %c0_i32, %c0_i32_0 : i32, i32
  }
  func.func @transform_2(%arg0: i32) -> (i32, i32) {
    %c0_i32 = arith.constant 0 : i32
    %c0_i32_0 = arith.constant 0 : i32
    %c0_i32_1 = arith.constant 0 : i32
    return %c0_i32, %c0_i32_0 : i32, i32
  }
  func.func @transform_3(%arg0: i32) -> (i32, i32) {
    %c0_i32 = arith.constant 0 : i32
    %c0_i32_0 = arith.constant 0 : i32
    %c0_i32_1 = arith.constant 0 : i32
    return %c0_i32, %c0_i32_0 : i32, i32
  }
  func.func @transform_4(%arg0: i32) -> (i32, i32) {
    %c0_i32 = arith.constant 0 : i32
    %c0_i32_0 = arith.constant 0 : i32
    %c0_i32_1 = arith.constant 0 : i32
    return %c0_i32, %c0_i32_0 : i32, i32
  }
  func.func @transform_5(%arg0: i32) -> (i32, i32) {
    %c0_i32 = arith.constant 0 : i32
    %c0_i32_0 = arith.constant 0 : i32
    %c0_i32_1 = arith.constant 0 : i32
    return %c0_i32, %c0_i32_0 : i32, i32
  }
  func.func @transform_6(%arg0: i32) -> (i32, i32) {
    %c0_i32 = arith.constant 0 : i32
    %c0_i32_0 = arith.constant 0 : i32
    %c0_i32_1 = arith.constant 0 : i32
    return %c0_i32, %c0_i32_0 : i32, i32
  }
  func.func @transform_7(%arg0: i32) -> (i32, i32) {
    %c0_i32 = arith.constant 0 : i32
    %c0_i32_0 = arith.constant 0 : i32
    %c0_i32_1 = arith.constant 0 : i32
    return %c0_i32, %c0_i32_0 : i32, i32
  }
  func.func @transform_8(%arg0: i32) -> (i32, i32) {
    %c0_i32 = arith.constant 0 : i32
    %c0_i32_0 = arith.constant 0 : i32
    %c0_i32_1 = arith.constant 0 : i32
    return %c0_i32, %c0_i32_0 : i32, i32
  }
  func.func @transform_9(%arg0: i32) -> (i32, i32) {
    %c0_i32 = arith.constant 0 : i32
    %c0_i32_0 = arith.constant 0 : i32
    %c0_i32_1 = arith.constant 0 : i32
    return %c0_i32, %c0_i32_0 : i32, i32
  }
  func.func @transform_10(%arg0: i32) -> (i32, i32) {
    %c0_i32 = arith.constant 0 : i32
    %c0_i32_0 = arith.constant 0 : i32
    %c0_i32_1 = arith.constant 0 : i32
    return %c0_i32, %c0_i32_0 : i32, i32
  }
  func.func @transform_11(%arg0: i32) -> (i32, i32) {
    %c0_i32 = arith.constant 0 : i32
    %c0_i32_0 = arith.constant 0 : i32
    %c0_i32_1 = arith.constant 0 : i32
    return %c0_i32, %c0_i32_0 : i32, i32
  }
  func.func @transform_12(%arg0: i32) -> (i32, i32) {
    %c0_i32 = arith.constant 0 : i32
    %c0_i32_0 = arith.constant 0 : i32
    %c0_i32_1 = arith.constant 0 : i32
    return %c0_i32, %c0_i32_0 : i32, i32
  }
  func.func @transform_13(%arg0: i32) -> (i32, i32) {
    %c0_i32 = arith.constant 0 : i32
    %c0_i32_0 = arith.constant 0 : i32
    %c0_i32_1 = arith.constant 0 : i32
    return %c0_i32, %c0_i32_0 : i32, i32
  }
  func.func @transform_14(%arg0: i32) -> (i32, i32) {
    %c0_i32 = arith.constant 0 : i32
    %c0_i32_0 = arith.constant 0 : i32
    %c0_i32_1 = arith.constant 0 : i32
    return %c0_i32, %c0_i32_0 : i32, i32
  }
  func.func @transform_15(%arg0: i32) -> (i32, i32) {
    %c0_i32 = arith.constant 0 : i32
    %c0_i32_0 = arith.constant 0 : i32
    %c0_i32_1 = arith.constant 0 : i32
    return %c0_i32, %c0_i32_0 : i32, i32
  }
  func.func @transform_16(%arg0: i32) -> (i32, i32) {
    %c0_i32 = arith.constant 0 : i32
    %c0_i32_0 = arith.constant 0 : i32
    %c0_i32_1 = arith.constant 0 : i32
    return %c0_i32, %c0_i32_0 : i32, i32
  }
  func.func @transform_17(%arg0: i32) -> (i32, i32) {
    %c0_i32 = arith.constant 0 : i32
    %c0_i32_0 = arith.constant 0 : i32
    %c0_i32_1 = arith.constant 0 : i32
    return %c0_i32, %c0_i32_0 : i32, i32
  }
  func.func @transform_18(%arg0: i32) -> (i32, i32) {
    %c0_i32 = arith.constant 0 : i32
    %c0_i32_0 = arith.constant 0 : i32
    %c0_i32_1 = arith.constant 0 : i32
    return %c0_i32, %c0_i32_0 : i32, i32
  }
  func.func @transform_19(%arg0: i32) -> (i32, i32) {
    %c0_i32 = arith.constant 0 : i32
    %c0_i32_0 = arith.constant 0 : i32
    %c0_i32_1 = arith.constant 0 : i32
    return %c0_i32, %c0_i32_0 : i32, i32
  }
  func.func @transform_20(%arg0: i32) -> (i32, i32, i32) {
    %c0_i32 = arith.constant 0 : i32
    %c0_i32_0 = arith.constant 0 : i32
    %c0_i32_1 = arith.constant 0 : i32
    return %arg0, %c0_i32, %c0_i32_0 : i32, i32, i32
  }
}

</mosaic_0001>

<llo_original>
// kernel: tpu_custom_call.1
$region0: #{tpu_custom_call.1}
  #allocation0 [shape = 'u32[]', space=smem, size = 0x4, offset = 0x4, fixed_abs, tag = 'smem constant byte address 0x4 - core index']
  #allocation1 [shape = 'u32[144,128]{1,0:T(1,128)}', space=vmem, size = 0x12000, scoped, tag = 'internal scratch']
  #allocation2 [shape = 'f32[1,1]{1,0:T(1,128)S(1)}', space=vmem, size = 0x200, scoped, tag = 'scoped memory for tpu_custom_call.1']
  %s0 = inlined_call_operand.hbm [shape: f32[2,8,128], index: 0, kind: input, shape index: {}]
  %s1 = inlined_call_operand.hbm [shape: f32[5000,128], index: 1, kind: input, shape index: {}]
  %s2 = inlined_call_operand.hbm [shape: f32[128,128], index: 2, kind: input, shape index: {}]
  %s3 = inlined_call_operand.hbm [shape: f32[1,128], index: 3, kind: input, shape index: {}]
  %s4 = inlined_call_operand.hbm [shape: f32[128,128], index: 4, kind: input, shape index: {}]
  %s5 = inlined_call_operand.hbm [shape: f32[1,128], index: 5, kind: input, shape index: {}]
  %s6 = inlined_call_operand.hbm [shape: f32[128,128], index: 6, kind: input, shape index: {}]
  %s7 = inlined_call_operand.hbm [shape: f32[1,128], index: 7, kind: input, shape index: {}]
  %s8 = inlined_call_operand.hbm [shape: f32[128,128], index: 8, kind: input, shape index: {}]
  %s9 = inlined_call_operand.hbm [shape: f32[1,128], index: 9, kind: input, shape index: {}]
  %s10 = inlined_call_operand.hbm [shape: f32[1,128], index: 10, kind: input, shape index: {}]
  %s11 = inlined_call_operand.hbm [shape: f32[1,128], index: 11, kind: input, shape index: {}]
  %s12 = inlined_call_operand.hbm [shape: f32[128,256], index: 12, kind: input, shape index: {}]
  %s13 = inlined_call_operand.hbm [shape: f32[1,256], index: 13, kind: input, shape index: {}]
  %s14 = inlined_call_operand.hbm [shape: f32[256,128], index: 14, kind: input, shape index: {}]
  %s15 = inlined_call_operand.hbm [shape: f32[1,128], index: 15, kind: input, shape index: {}]
  %s16 = inlined_call_operand.hbm [shape: f32[1,128], index: 16, kind: input, shape index: {}]
  %s17 = inlined_call_operand.hbm [shape: f32[1,128], index: 17, kind: input, shape index: {}]
  %s18 = inlined_call_operand.vmem [shape: f32[128,1], index: 18, kind: input, shape index: {}]
  %s19 = inlined_call_operand.<no memory space> [shape: f32[1,1], index: 19, kind: input, shape index: {}]
  %s20 = inlined_call_operand.vmem [shape: f32[2,8,1], index: 20, kind: output, shape index: {}]
  %s21 = sld [smem:[#allocation0]]
  $region185: #{tpu_custom_call.1} parent=0
    _
  %s23 = ssub.s32 1, %s21
  %s24 = scalar_select 0, %s23, %s21
  %v25 = vstv %s19
  %26 = vst [vmem:[#allocation2] sm:$0x1] %v25
  $region1: #{tpu_custom_call.1} parent=0
    #allocation3 [shape = 'u8[8192]{0}', space=vmem, size = 0x2000, scoped, tag = 'input window, operand 0']
    #allocation4 [shape = 's32[2]{0}', space=sflag, size = 0x8, scoped, tag = 'scoped memory for tpu_custom_call.1']
    #allocation5 [shape = 'u8[4096]{0}', space=vmem, size = 0x1000, scoped, tag = 'input window, operand 1, single buffered']
    #allocation6 [shape = 's32[1]{0}', space=sflag, size = 0x4, scoped, tag = 'scoped memory for tpu_custom_call.1']
    #allocation7 [shape = 'u8[65536]{0}', space=vmem, size = 0x10000, scoped, tag = 'input window, operand 2, single buffered']
    #allocation8 [shape = 'u8[512]{0}', space=vmem, size = 0x400, scoped, tag = 'input window, operand 3, single buffered']
    #allocation9 [shape = 's32[1]{0}', space=sflag, size = 0x4, scoped, tag = 'scoped memory for tpu_custom_call.1']
    #allocation10 [shape = 'u8[65536]{0}', space=vmem, size = 0x10000, scoped, tag = 'input window, operand 4, single buffered']
    #allocation11 [shape = 'u8[512]{0}', space=vmem, size = 0x400, scoped, tag = 'input window, operand 5, single buffered']
    #allocation12 [shape = 's32[1]{0}', space=sflag, size = 0x4, scoped, tag = 'scoped memory for tpu_custom_call.1']
    #allocation13 [shape = 'u8[65536]{0}', space=vmem, size = 0x10000, scoped, tag = 'input window, operand 6, single buffered']
    #allocation14 [shape = 'u8[512]{0}', space=vmem, size = 0x400, scoped, tag = 'input window, operand 7, single buffered']
    #allocation15 [shape = 's32[1]{0}', space=sflag, size = 0x4, scoped, tag = 'scoped memory for tpu_custom_call.1']
    #allocation16 [shape = 'u8[65536]{0}', space=vmem, size = 0x10000, scoped, tag = 'input window, operand 8, single buffered']
    #allocation17 [shape = 'u8[512]{0}', space=vmem, size = 0x400, scoped, tag = 'input window, operand 9, single buffered']
    #allocation18 [shape = 's32[1]{0}', space=sflag, size = 0x4, scoped, tag = 'scoped memory for tpu_custom_call.1']
    #allocation19 [shape = 'u8[512]{0}', space=vmem, size = 0x400, scoped, tag = 'input window, operand 10, single buffered']
    #allocation20 [shape = 'u8[512]{0}', space=vmem, size = 0x400, scoped, tag = 'input window, operand 11, single buffered']
    #allocation21 [shape = 's32[1]{0}', space=sflag, size = 0x4, scoped, tag = 'scoped memory for tpu_custom_call.1']
    #allocation22 [shape = 'u8[131072]{0}', space=vmem, size = 0x20000, scoped, tag = 'input window, operand 12, single buffered']
    #allocation23 [shape = 'u8[1024]{0}', space=vmem, size = 0x400, scoped, tag = 'input window, operand 13, single buffered']
    #allocation24 [shape = 's32[1]{0}', space=sflag, size = 0x4, scoped, tag = 'scoped memory for tpu_custom_call.1']
    #allocation25 [shape = 'u8[131072]{0}', space=vmem, size = 0x20000, scoped, tag = 'input window, operand 14, single buffered']
    #allocation26 [shape = 'u8[512]{0}', space=vmem, size = 0x400, scoped, tag = 'input window, operand 15, single buffered']
    #allocation27 [shape = 's32[1]{0}', space=sflag, size = 0x4, scoped, tag = 'scoped memory for tpu_custom_call.1']
    #allocation28 [shape = 'u8[512]{0}', space=vmem, size = 0x400, scoped, tag = 'input window, operand 16, single buffered']
    #allocation29 [shape = 'u8[512]{0}', space=vmem, size = 0x400, scoped, tag = 'input window, operand 17, single buffered']
    #allocation30 [shape = 's32[1]{0}', space=sflag, size = 0x4, scoped, tag = 'scoped memory for tpu_custom_call.1']
    %27 = vsyncpa [#allocation4], 0
    %s28 = scalar_lea.sflag [#allocation4], 1
    %29 = vsyncpa %s28, 0
    %30 = vsyncpa [#allocation6], 0
    %31 = vsyncpa [#allocation9], 0
    %32 = vsyncpa [#allocation12], 0
    %33 = vsyncpa [#allocation15], 0
    %34 = vsyncpa [#allocation18], 0
    %35 = vsyncpa [#allocation21], 0
    %36 = vsyncpa [#allocation24], 0
    %37 = vsyncpa [#allocation27], 0
    %38 = vsyncpa [#allocation30], 0
    loop: start=0, step=1, limit=4
    $region2: #{tpu_custom_call.1} parent=1 // loop_pre_header
      _
    $region3: #{tpu_custom_call.1} parent=1 // loop_header
      %s40 = sphi 0, %s44
      %p41 = scmp.ge.s32.totalorder %s40, 4
      %s50 = sphi 0, %s52
      %s53 = sphi 0, %s50
      %s54 = sphi 0, %s53
      %s70 = sphi 0, %s54
      %s74 = sphi 0, %s74
      %s76 = sphi 0, %s74
      %s77 = sphi 0, %s76
      %s91 = sphi 0, %s77
      %s95 = sphi 0, %s95
      %s97 = sphi 0, %s95
      %s98 = sphi 0, %s97
      %s112 = sphi 0, %s98
      %s116 = sphi 0, %s116
      %s118 = sphi 0, %s116
      %s119 = sphi 0, %s118
      %s133 = sphi 0, %s119
      %s137 = sphi 0, %s137
      %s139 = sphi 0, %s137
      %s140 = sphi 0, %s139
      %s154 = sphi 0, %s140
      %s158 = sphi 0, %s158
      %s160 = sphi 0, %s158
      %s161 = sphi 0, %s160
      %s175 = sphi 0, %s161
      %s179 = sphi 0, %s179
      %s181 = sphi 0, %s179
      %s182 = sphi 0, %s181
      %s196 = sphi 0, %s182
      %s200 = sphi 0, %s200
      %s202 = sphi 0, %s200
      %s203 = sphi 0, %s202
      %s217 = sphi 0, %s203
      %s221 = sphi 0, %s221
      %s223 = sphi 0, %s221
      %s224 = sphi 0, %s223
      %s238 = sphi 0, %s224
      %s242 = sphi 0, %s242
      %s244 = sphi 0, %s242
      %s245 = sphi 0, %s244
      %s259 = sphi 0, %s245
      %s263 = sphi 0, %s263
      %s265 = sphi 0, %s263
      %s266 = sphi 0, %s265
      %s280 = sphi 0, %s266
      %s284 = sphi 0, %s284
      %s286 = sphi 0, %s284
      %s287 = sphi 0, %s286
      %s301 = sphi 0, %s287
      %s305 = sphi 0, %s305
      %s307 = sphi 0, %s305
      %s308 = sphi 0, %s307
      %s322 = sphi 0, %s308
      %s326 = sphi 0, %s326
      %s328 = sphi 0, %s326
      %s329 = sphi 0, %s328
      %s343 = sphi 0, %s329
      %s347 = sphi 0, %s347
      %s349 = sphi 0, %s347
      %s350 = sphi 0, %s349
      %s364 = sphi 0, %s350
      %s368 = sphi 0, %s368
      %s370 = sphi 0, %s368
      %s371 = sphi 0, %s370
      %s385 = sphi 0, %s371
      %s389 = sphi 0, %s389
      %s391 = sphi 0, %s389
      %s392 = sphi 0, %s391
      %s406 = sphi 0, %s392
      %s410 = sphi 0, %s410
      %s412 = sphi 0, %s410
      %s413 = sphi 0, %s412
      %s427 = sphi 0, %s413
      %s431 = sphi 0, %s431
      %s433 = sphi 0, %s431
      %s434 = sphi 0, %s433
      %s448 = sphi 0, %s434
      %s452 = sphi 0, %s452
      %s454 = sphi 0, %s452
      %s455 = sphi 0, %s454
      %s469 = sphi 0, %s455
      %s475 = sphi 0, %s477
      %s478 = sphi 0, %s475
      %s479 = sphi 0, %s478
      %s495 = sphi 0, %s479
    $region4: #{tpu_custom_call.1} parent=1 // loop_header_branch
      %43 = sbr.rel (%p41) target = $region8
    $region5: #{tpu_custom_call.1} parent=1 // loop_body
      %s45 = ssub.s32 %s40, 1
      %s46 = ssub.s32 %s40, 2
      %s47 = sadd.s32 %s40, 1
      %s48 = ssub.s32 %s40, %s47
      %p49 = scmp.eq.s32.totalorder %s48, 0
      %s51 = sadd.s32 %s50, 1
      %s52 = scalar_select %p49, %s50, %s51
      %p55 = pneg %p49
      %p56 = scmp.eq.s32.totalorder %s40, 1
      %p57 = por %p55, %p56
      %p58 = scmp.ne.s32.totalorder %s50, %s53
      %p59 = scmp.eq.s32.totalorder %s40, 0
      %p60 = por %p58, %p59
      %p61 = scmp.ne.s32.totalorder %s50, %s53
      %p62 = scmp.eq.s32.totalorder %s45, 1
      %p63 = por %p61, %p62
      %p64 = scmp.ne.s32.totalorder %s53, %s54
      %p65 = scmp.eq.s32.totalorder %s45, 0
      %p66 = por %p64, %p65
      %p67 = scmp.ne.s32.totalorder %s53, %s54
      %p68 = scmp.eq.s32.totalorder %s46, 1
      %p69 = por %p67, %p68
      %p71 = scmp.ne.s32.totalorder %s54, %s70
      %p72 = scmp.eq.s32.totalorder %s46, 0
      %p73 = por %p71, %p72
      %s75 = sadd.s32 %s74, 1
      %p78 = scmp.eq.s32.totalorder %s40, 1
      %p79 = scmp.ne.s32.totalorder %s74, %s76
      %p80 = scmp.eq.s32.totalorder %s40, 0
      %p81 = por %p79, %p80
      %p82 = scmp.ne.s32.totalorder %s74, %s76
      %p83 = scmp.eq.s32.totalorder %s45, 1
      %p84 = por %p82, %p83
      %p85 = scmp.ne.s32.totalorder %s76, %s77
      %p86 = scmp.eq.s32.totalorder %s45, 0
      %p87 = por %p85, %p86
      %p88 = scmp.ne.s32.totalorder %s76, %s77
      %p89 = scmp.eq.s32.totalorder %s46, 1
      %p90 = por %p88, %p89
      %p92 = scmp.ne.s32.totalorder %s77, %s91
      %p93 = scmp.eq.s32.totalorder %s46, 0
      %p94 = por %p92, %p93
      %s96 = sadd.s32 %s95, 1
      %p99 = scmp.eq.s32.totalorder %s40, 1
      %p100 = scmp.ne.s32.totalorder %s95, %s97
      %p101 = scmp.eq.s32.totalorder %s40, 0
      %p102 = por %p100, %p101
      %p103 = scmp.ne.s32.totalorder %s95, %s97
      %p104 = scmp.eq.s32.totalorder %s45, 1
      %p105 = por %p103, %p104
      %p106 = scmp.ne.s32.totalorder %s97, %s98
      %p107 = scmp.eq.s32.totalorder %s45, 0
      %p108 = por %p106, %p107
      %p109 = scmp.ne.s32.totalorder %s97, %s98
      %p110 = scmp.eq.s32.totalorder %s46, 1
      %p111 = por %p109, %p110
      %p113 = scmp.ne.s32.totalorder %s98, %s112
      %p114 = scmp.eq.s32.totalorder %s46, 0
      %p115 = por %p113, %p114
      %s117 = sadd.s32 %s116, 1
      %p120 = scmp.eq.s32.totalorder %s40, 1
      %p121 = scmp.ne.s32.totalorder %s116, %s118
      %p122 = scmp.eq.s32.totalorder %s40, 0
      %p123 = por %p121, %p122
      %p124 = scmp.ne.s32.totalorder %s116, %s118
      %p125 = scmp.eq.s32.totalorder %s45, 1
      %p126 = por %p124, %p125
      %p127 = scmp.ne.s32.totalorder %s118, %s119
      %p128 = scmp.eq.s32.totalorder %s45, 0
      %p129 = por %p127, %p128
      %p130 = scmp.ne.s32.totalorder %s118, %s119
      %p131 = scmp.eq.s32.totalorder %s46, 1
      %p132 = por %p130, %p131
      %p134 = scmp.ne.s32.totalorder %s119, %s133
      %p135 = scmp.eq.s32.totalorder %s46, 0
      %p136 = por %p134, %p135
      %s138 = sadd.s32 %s137, 1
      %p141 = scmp.eq.s32.totalorder %s40, 1
      %p142 = scmp.ne.s32.totalorder %s137, %s139
      %p143 = scmp.eq.s32.totalorder %s40, 0
      %p144 = por %p142, %p143
      %p145 = scmp.ne.s32.totalorder %s137, %s139
      %p146 = scmp.eq.s32.totalorder %s45, 1
      %p147 = por %p145, %p146
      %p148 = scmp.ne.s32.totalorder %s139, %s140
      %p149 = scmp.eq.s32.totalorder %s45, 0
      %p150 = por %p148, %p149
      %p151 = scmp.ne.s32.totalorder %s139, %s140
      %p152 = scmp.eq.s32.totalorder %s46, 1
      %p153 = por %p151, %p152
      %p155 = scmp.ne.s32.totalorder %s140, %s154
      %p156 = scmp.eq.s32.totalorder %s46, 0
      %p157 = por %p155, %p156
      %s159 = sadd.s32 %s158, 1
      %p162 = scmp.eq.s32.totalorder %s40, 1
      %p163 = scmp.ne.s32.totalorder %s158, %s160
      %p164 = scmp.eq.s32.totalorder %s40, 0
      %p165 = por %p163, %p164
      %p166 = scmp.ne.s32.totalorder %s158, %s160
      %p167 = scmp.eq.s32.totalorder %s45, 1
      %p168 = por %p166, %p167
      %p169 = scmp.ne.s32.totalorder %s160, %s161
      %p170 = scmp.eq.s32.totalorder %s45, 0
      %p171 = por %p169, %p170
      %p172 = scmp.ne.s32.totalorder %s160, %s161
      %p173 = scmp.eq.s32.totalorder %s46, 1
      %p174 = por %p172, %p173
      %p176 = scmp.ne.s32.totalorder %s161, %s175
      %p177 = scmp.eq.s32.totalorder %s46, 0
      %p178 = por %p176, %p177
      %s180 = sadd.s32 %s179, 1
      %p183 = scmp.eq.s32.totalorder %s40, 1
      %p184 = scmp.ne.s32.totalorder %s179, %s181
      %p185 = scmp.eq.s32.totalorder %s40, 0
      %p186 = por %p184, %p185
      %p187 = scmp.ne.s32.totalorder %s179, %s181
      %p188 = scmp.eq.s32.totalorder %s45, 1
      %p189 = por %p187, %p188
      %p190 = scmp.ne.s32.totalorder %s181, %s182
      %p191 = scmp.eq.s32.totalorder %s45, 0
      %p192 = por %p190, %p191
      %p193 = scmp.ne.s32.totalorder %s181, %s182
      %p194 = scmp.eq.s32.totalorder %s46, 1
      %p195 = por %p193, %p194
      %p197 = scmp.ne.s32.totalorder %s182, %s196
      %p198 = scmp.eq.s32.totalorder %s46, 0
      %p199 = por %p197, %p198
      %s201 = sadd.s32 %s200, 1
      %p204 = scmp.eq.s32.totalorder %s40, 1
      %p205 = scmp.ne.s32.totalorder %s200, %s202
      %p206 = scmp.eq.s32.totalorder %s40, 0
      %p207 = por %p205, %p206
      %p208 = scmp.ne.s32.totalorder %s200, %s202
      %p209 = scmp.eq.s32.totalorder %s45, 1
      %p210 = por %p208, %p209
      %p211 = scmp.ne.s32.totalorder %s202, %s203
      %p212 = scmp.eq.s32.totalorder %s45, 0
      %p213 = por %p211, %p212
      %p214 = scmp.ne.s32.totalorder %s202, %s203
      %p215 = scmp.eq.s32.totalorder %s46, 1
      %p216 = por %p214, %p215
      %p218 = scmp.ne.s32.totalorder %s203, %s217
      %p219 = scmp.eq.s32.totalorder %s46, 0
      %p220 = por %p218, %p219
      %s222 = sadd.s32 %s221, 1
      %p225 = scmp.eq.s32.totalorder %s40, 1
      %p226 = scmp.ne.s32.totalorder %s221, %s223
      %p227 = scmp.eq.s32.totalorder %s40, 0
      %p228 = por %p226, %p227
      %p229 = scmp.ne.s32.totalorder %s221, %s223
      %p230 = scmp.eq.s32.totalorder %s45, 1
      %p231 = por %p229, %p230
      %p232 = scmp.ne.s32.totalorder %s223, %s224
      %p233 = scmp.eq.s32.totalorder %s45, 0
      %p234 = por %p232, %p233
      %p235 = scmp.ne.s32.totalorder %s223, %s224
      %p236 = scmp.eq.s32.totalorder %s46, 1
      %p237 = por %p235, %p236
      %p239 = scmp.ne.s32.totalorder %s224, %s238
      %p240 = scmp.eq.s32.totalorder %s46, 0
      %p241 = por %p239, %p240
      %s243 = sadd.s32 %s242, 1
      %p246 = scmp.eq.s32.totalorder %s40, 1
      %p247 = scmp.ne.s32.totalorder %s242, %s244
      %p248 = scmp.eq.s32.totalorder %s40, 0
      %p249 = por %p247, %p248
      %p250 = scmp.ne.s32.totalorder %s242, %s244
      %p251 = scmp.eq.s32.totalorder %s45, 1
      %p252 = por %p250, %p251
      %p253 = scmp.ne.s32.totalorder %s244, %s245
      %p254 = scmp.eq.s32.totalorder %s45, 0
      %p255 = por %p253, %p254
      %p256 = scmp.ne.s32.totalorder %s244, %s245
      %p257 = scmp.eq.s32.totalorder %s46, 1
      %p258 = por %p256, %p257
      %p260 = scmp.ne.s32.totalorder %s245, %s259
      %p261 = scmp.eq.s32.totalorder %s46, 0
      %p262 = por %p260, %p261
      %s264 = sadd.s32 %s263, 1
      %p267 = scmp.eq.s32.totalorder %s40, 1
      %p268 = scmp.ne.s32.totalorder %s263, %s265
      %p269 = scmp.eq.s32.totalorder %s40, 0
      %p270 = por %p268, %p269
      %p271 = scmp.ne.s32.totalorder %s263, %s265
      %p272 = scmp.eq.s32.totalorder %s45, 1
      %p273 = por %p271, %p272
      %p274 = scmp.ne.s32.totalorder %s265, %s266
      %p275 = scmp.eq.s32.totalorder %s45, 0
      %p276 = por %p274, %p275
      %p277 = scmp.ne.s32.totalorder %s265, %s266
      %p278 = scmp.eq.s32.totalorder %s46, 1
      %p279 = por %p277, %p278
      %p281 = scmp.ne.s32.totalorder %s266, %s280
      %p282 = scmp.eq.s32.totalorder %s46, 0
      %p283 = por %p281, %p282
      %s285 = sadd.s32 %s284, 1
      %p288 = scmp.eq.s32.totalorder %s40, 1
      %p289 = scmp.ne.s32.totalorder %s284, %s286
      %p290 = scmp.eq.s32.totalorder %s40, 0
      %p291 = por %p289, %p290
      %p292 = scmp.ne.s32.totalorder %s284, %s286
      %p293 = scmp.eq.s32.totalorder %s45, 1
      %p294 = por %p292, %p293
      %p295 = scmp.ne.s32.totalorder %s286, %s287
      %p296 = scmp.eq.s32.totalorder %s45, 0
      %p297 = por %p295, %p296
      %p298 = scmp.ne.s32.totalorder %s286, %s287
      %p299 = scmp.eq.s32.totalorder %s46, 1
      %p300 = por %p298, %p299
      %p302 = scmp.ne.s32.totalorder %s287, %s301
      %p303 = scmp.eq.s32.totalorder %s46, 0
      %p304 = por %p302, %p303
      %s306 = sadd.s32 %s305, 1
      %p309 = scmp.eq.s32.totalorder %s40, 1
      %p310 = scmp.ne.s32.totalorder %s305, %s307
      %p311 = scmp.eq.s32.totalorder %s40, 0
      %p312 = por %p310, %p311
      %p313 = scmp.ne.s32.totalorder %s305, %s307
      %p314 = scmp.eq.s32.totalorder %s45, 1
      %p315 = por %p313, %p314
      %p316 = scmp.ne.s32.totalorder %s307, %s308
      %p317 = scmp.eq.s32.totalorder %s45, 0
      %p318 = por %p316, %p317
      %p319 = scmp.ne.s32.totalorder %s307, %s308
      %p320 = scmp.eq.s32.totalorder %s46, 1
      %p321 = por %p319, %p320
      %p323 = scmp.ne.s32.totalorder %s308, %s322
      %p324 = scmp.eq.s32.totalorder %s46, 0
      %p325 = por %p323, %p324
      %s327 = sadd.s32 %s326, 1
      %p330 = scmp.eq.s32.totalorder %s40, 1
      %p331 = scmp.ne.s32.totalorder %s326, %s328
      %p332 = scmp.eq.s32.totalorder %s40, 0
      %p333 = por %p331, %p332
      %p334 = scmp.ne.s32.totalorder %s326, %s328
      %p335 = scmp.eq.s32.totalorder %s45, 1
      %p336 = por %p334, %p335
      %p337 = scmp.ne.s32.totalorder %s328, %s329
      %p338 = scmp.eq.s32.totalorder %s45, 0
      %p339 = por %p337, %p338
      %p340 = scmp.ne.s32.totalorder %s328, %s329
      %p341 = scmp.eq.s32.totalorder %s46, 1
      %p342 = por %p340, %p341
      %p344 = scmp.ne.s32.totalorder %s329, %s343
      %p345 = scmp.eq.s32.totalorder %s46, 0
      %p346 = por %p344, %p345
      %s348 = sadd.s32 %s347, 1
      %p351 = scmp.eq.s32.totalorder %s40, 1
      %p352 = scmp.ne.s32.totalorder %s347, %s349
      %p353 = scmp.eq.s32.totalorder %s40, 0
      %p354 = por %p352, %p353
      %p355 = scmp.ne.s32.totalorder %s347, %s349
      %p356 = scmp.eq.s32.totalorder %s45, 1
      %p357 = por %p355, %p356
      %p358 = scmp.ne.s32.totalorder %s349, %s350
      %p359 = scmp.eq.s32.totalorder %s45, 0
      %p360 = por %p358, %p359
      %p361 = scmp.ne.s32.totalorder %s349, %s350
      %p362 = scmp.eq.s32.totalorder %s46, 1
      %p363 = por %p361, %p362
      %p365 = scmp.ne.s32.totalorder %s350, %s364
      %p366 = scmp.eq.s32.totalorder %s46, 0
      %p367 = por %p365, %p366
      %s369 = sadd.s32 %s368, 1
      %p372 = scmp.eq.s32.totalorder %s40, 1
      %p373 = scmp.ne.s32.totalorder %s368, %s370
      %p374 = scmp.eq.s32.totalorder %s40, 0
      %p375 = por %p373, %p374
      %p376 = scmp.ne.s32.totalorder %s368, %s370
      %p377 = scmp.eq.s32.totalorder %s45, 1
      %p378 = por %p376, %p377
      %p379 = scmp.ne.s32.totalorder %s370, %s371
      %p380 = scmp.eq.s32.totalorder %s45, 0
      %p381 = por %p379, %p380
      %p382 = scmp.ne.s32.totalorder %s370, %s371
      %p383 = scmp.eq.s32.totalorder %s46, 1
      %p384 = por %p382, %p383
      %p386 = scmp.ne.s32.totalorder %s371, %s385
      %p387 = scmp.eq.s32.totalorder %s46, 0
      %p388 = por %p386, %p387
      %s390 = sadd.s32 %s389, 1
      %p393 = scmp.eq.s32.totalorder %s40, 1
      %p394 = scmp.ne.s32.totalorder %s389, %s391
      %p395 = scmp.eq.s32.totalorder %s40, 0
      %p396 = por %p394, %p395
      %p397 = scmp.ne.s32.totalorder %s389, %s391
      %p398 = scmp.eq.s32.totalorder %s45, 1
      %p399 = por %p397, %p398
      %p400 = scmp.ne.s32.totalorder %s391, %s392
      %p401 = scmp.eq.s32.totalorder %s45, 0
      %p402 = por %p400, %p401
      %p403 = scmp.ne.s32.totalorder %s391, %s392
      %p404 = scmp.eq.s32.totalorder %s46, 1
      %p405 = por %p403, %p404
      %p407 = scmp.ne.s32.totalorder %s392, %s406
      %p408 = scmp.eq.s32.totalorder %s46, 0
      %p409 = por %p407, %p408
      %s411 = sadd.s32 %s410, 1
      %p414 = scmp.eq.s32.totalorder %s40, 1
      %p415 = scmp.ne.s32.totalorder %s410, %s412
      %p416 = scmp.eq.s32.totalorder %s40, 0
      %p417 = por %p415, %p416
      %p418 = scmp.ne.s32.totalorder %s410, %s412
      %p419 = scmp.eq.s32.totalorder %s45, 1
      %p420 = por %p418, %p419
      %p421 = scmp.ne.s32.totalorder %s412, %s413
      %p422 = scmp.eq.s32.totalorder %s45, 0
      %p423 = por %p421, %p422
      %p424 = scmp.ne.s32.totalorder %s412, %s413
      %p425 = scmp.eq.s32.totalorder %s46, 1
      %p426 = por %p424, %p425
      %p428 = scmp.ne.s32.totalorder %s413, %s427
      %p429 = scmp.eq.s32.totalorder %s46, 0
      %p430 = por %p428, %p429
      %s432 = sadd.s32 %s431, 1
      %p435 = scmp.eq.s32.totalorder %s40, 1
      %p436 = scmp.ne.s32.totalorder %s431, %s433
      %p437 = scmp.eq.s32.totalorder %s40, 0
      %p438 = por %p436, %p437
      %p439 = scmp.ne.s32.totalorder %s431, %s433
      %p440 = scmp.eq.s32.totalorder %s45, 1
      %p441 = por %p439, %p440
      %p442 = scmp.ne.s32.totalorder %s433, %s434
      %p443 = scmp.eq.s32.totalorder %s45, 0
      %p444 = por %p442, %p443
      %p445 = scmp.ne.s32.totalorder %s433, %s434
      %p446 = scmp.eq.s32.totalorder %s46, 1
      %p447 = por %p445, %p446
      %p449 = scmp.ne.s32.totalorder %s434, %s448
      %p450 = scmp.eq.s32.totalorder %s46, 0
      %p451 = por %p449, %p450
      %s453 = sadd.s32 %s452, 1
      %p456 = scmp.eq.s32.totalorder %s40, 1
      %p457 = scmp.ne.s32.totalorder %s452, %s454
      %p458 = scmp.eq.s32.totalorder %s40, 0
      %p459 = por %p457, %p458
      %p460 = scmp.ne.s32.totalorder %s452, %s454
      %p461 = scmp.eq.s32.totalorder %s45, 1
      %p462 = por %p460, %p461
      %p463 = scmp.ne.s32.totalorder %s454, %s455
      %p464 = scmp.eq.s32.totalorder %s45, 0
      %p465 = por %p463, %p464
      %p466 = scmp.ne.s32.totalorder %s454, %s455
      %p467 = scmp.eq.s32.totalorder %s46, 1
      %p468 = por %p466, %p467
      %p470 = scmp.ne.s32.totalorder %s455, %s469
      %p471 = scmp.eq.s32.totalorder %s46, 0
      %p472 = por %p470, %p471
      %s473 = ssub.s32 %s40, %s47
      %p474 = scmp.eq.s32.totalorder %s473, 0
      %s476 = sadd.s32 %s475, 1
      %s477 = scalar_select %p474, %s475, %s476
      %p480 = pneg %p474
      %p481 = scmp.eq.s32.totalorder %s40, 1
      %p482 = por %p480, %p481
      %p483 = scmp.ne.s32.totalorder %s475, %s478
      %p484 = scmp.eq.s32.totalorder %s40, 0
      %p485 = por %p483, %p484
      %p486 = scmp.ne.s32.totalorder %s475, %s478
      %p487 = scmp.eq.s32.totalorder %s45, 1
      %p488 = por %p486, %p487
      %p489 = scmp.ne.s32.totalorder %s478, %s479
      %p490 = scmp.eq.s32.totalorder %s45, 0
      %p491 = por %p489, %p490
      %p492 = scmp.ne.s32.totalorder %s478, %s479
      %p493 = scmp.eq.s32.totalorder %s46, 1
      %p494 = por %p492, %p493
      %p496 = scmp.ne.s32.totalorder %s479, %s495
      %p497 = scmp.eq.s32.totalorder %s46, 0
      %p498 = por %p496, %p497
      %p499 = scmp.le.s32.totalorder 1, %s40
      %p500 = scmp.lt.s32.totalorder %s40, 3
      %p501 = pnand %p499, %p500
      %p502 = pneg %p501
      // Predicated region
      $region9: #{tpu_custom_call.1} parent=5 // pred_check
        _
      $region10: #{tpu_custom_call.1} parent=5 // pred_check_branch
        %504 = sbr.rel (%p501) target = $region12
      $region11: #{tpu_custom_call.1} parent=5 // pred_region
        %s505 = ssub.s32 %s40, 1
        // Predicated region
        $region13: #{tpu_custom_call.1} parent=11 // pred_check
          %p506 = pneg %p87
        $region14: #{tpu_custom_call.1} parent=11 // pred_check_branch
          %508 = sbr.rel (%p506) target = $region16
        $region15: #{tpu_custom_call.1} parent=11 // pred_region
          %s510 = ssub.s32 128, 128
          %511 = vsyncadd [#allocation6], %s510
          %s513 = sshll.u32 [#allocation5], 4
          %s514 = int_to_ptr.vmem [resolvable:$true] %s513
          %516 = dma.hbm_to_vmem [thread:$0]  %s1, 128, %s514, [#allocation6]
        $region16: #{tpu_custom_call.1} parent=11 // pred_fallthru
          _
        // Predicated region
        $region17: #{tpu_custom_call.1} parent=11 // pred_check
          %p517 = pneg %p108
        $region18: #{tpu_custom_call.1} parent=11 // pred_check_branch
          %519 = sbr.rel (%p517) target = $region20
        $region19: #{tpu_custom_call.1} parent=11 // pred_region
          %s521 = ssub.s32 2048, 2048
          %522 = vsyncadd [#allocation6], %s521
          %s523 = sshll.u32 [#allocation7], 4
          %s524 = int_to_ptr.vmem [resolvable:$true] %s523
          %529 = dma.hbm_to_vmem [thread:$0]  %s2, 2048, %s524, [#allocation6], 128, 128, 8
        $region20: #{tpu_custom_call.1} parent=11 // pred_fallthru
          _
        // Predicated region
        $region21: #{tpu_custom_call.1} parent=11 // pred_check
          %p530 = pneg %p129
        $region22: #{tpu_custom_call.1} parent=11 // pred_check_branch
          %532 = sbr.rel (%p530) target = $region24
        $region23: #{tpu_custom_call.1} parent=11 // pred_region
          %s534 = ssub.s32 16, 16
          %535 = vsyncadd [#allocation9], %s534
          %s537 = sshll.u32 [#allocation8], 4
          %s538 = int_to_ptr.vmem [resolvable:$true] %s537
          %540 = dma.hbm_to_vmem [thread:$0]  %s3, 16, %s538, [#allocation9]
        $region24: #{tpu_custom_call.1} parent=11 // pred_fallthru
          _
        // Predicated region
        $region25: #{tpu_custom_call.1} parent=11 // pred_check
          %p541 = pneg %p150
        $region26: #{tpu_custom_call.1} parent=11 // pred_check_branch
          %543 = sbr.rel (%p541) target = $region28
        $region27: #{tpu_custom_call.1} parent=11 // pred_region
          %s545 = ssub.s32 2048, 2048
          %546 = vsyncadd [#allocation9], %s545
          %s547 = sshll.u32 [#allocation10], 4
          %s548 = int_to_ptr.vmem [resolvable:$true] %s547
          %553 = dma.hbm_to_vmem [thread:$0]  %s4, 2048, %s548, [#allocation9], 128, 128, 8
        $region28: #{tpu_custom_call.1} parent=11 // pred_fallthru
          _
        // Predicated region
        $region29: #{tpu_custom_call.1} parent=11 // pred_check
          %p554 = pneg %p171
        $region30: #{tpu_custom_call.1} parent=11 // pred_check_branch
          %556 = sbr.rel (%p554) target = $region32
        $region31: #{tpu_custom_call.1} parent=11 // pred_region
          %s558 = ssub.s32 16, 16
          %559 = vsyncadd [#allocation12], %s558
          %s561 = sshll.u32 [#allocation11], 4
          %s562 = int_to_ptr.vmem [resolvable:$true] %s561
          %564 = dma.hbm_to_vmem [thread:$0]  %s5, 16, %s562, [#allocation12]
        $region32: #{tpu_custom_call.1} parent=11 // pred_fallthru
          _
        // Predicated region
        $region33: #{tpu_custom_call.1} parent=11 // pred_check
          %p565 = pneg %p192
        $region34: #{tpu_custom_call.1} parent=11 // pred_check_branch
          %567 = sbr.rel (%p565) target = $region36
        $region35: #{tpu_custom_call.1} parent=11 // pred_region
          %s569 = ssub.s32 2048, 2048
          %570 = vsyncadd [#allocation12], %s569
          %s571 = sshll.u32 [#allocation13], 4
          %s572 = int_to_ptr.vmem [resolvable:$true] %s571
          %577 = dma.hbm_to_vmem [thread:$0]  %s6, 2048, %s572, [#allocation12], 128, 128, 8
        $region36: #{tpu_custom_call.1} parent=11 // pred_fallthru
          _
        // Predicated region
        $region37: #{tpu_custom_call.1} parent=11 // pred_check
          %p578 = pneg %p213
        $region38: #{tpu_custom_call.1} parent=11 // pred_check_branch
          %580 = sbr.rel (%p578) target = $region40
        $region39: #{tpu_custom_call.1} parent=11 // pred_region
          %s582 = ssub.s32 16, 16
          %583 = vsyncadd [#allocation15], %s582
          %s585 = sshll.u32 [#allocation14], 4
          %s586 = int_to_ptr.vmem [resolvable:$true] %s585
          %588 = dma.hbm_to_vmem [thread:$0]  %s7, 16, %s586, [#allocation15]
        $region40: #{tpu_custom_call.1} parent=11 // pred_fallthru
          _
        // Predicated region
        $region41: #{tpu_custom_call.1} parent=11 // pred_check
          %p589 = pneg %p234
        $region42: #{tpu_custom_call.1} parent=11 // pred_check_branch
          %591 = sbr.rel (%p589) target = $region44
        $region43: #{tpu_custom_call.1} parent=11 // pred_region
          %s593 = ssub.s32 2048, 2048
          %594 = vsyncadd [#allocation15], %s593
          %s595 = sshll.u32 [#allocation16], 4
          %s596 = int_to_ptr.vmem [resolvable:$true] %s595
          %601 = dma.hbm_to_vmem [thread:$0]  %s8, 2048, %s596, [#allocation15], 128, 128, 8
        $region44: #{tpu_custom_call.1} parent=11 // pred_fallthru
          _
        // Predicated region
        $region45: #{tpu_custom_call.1} parent=11 // pred_check
          %p602 = pneg %p255
        $region46: #{tpu_custom_call.1} parent=11 // pred_check_branch
          %604 = sbr.rel (%p602) target = $region48
        $region47: #{tpu_custom_call.1} parent=11 // pred_region
          %s606 = ssub.s32 16, 16
          %607 = vsyncadd [#allocation18], %s606
          %s609 = sshll.u32 [#allocation17], 4
          %s610 = int_to_ptr.vmem [resolvable:$true] %s609
          %612 = dma.hbm_to_vmem [thread:$0]  %s9, 16, %s610, [#allocation18]
        $region48: #{tpu_custom_call.1} parent=11 // pred_fallthru
          _
        // Predicated region
        $region49: #{tpu_custom_call.1} parent=11 // pred_check
          %p613 = pneg %p276
        $region50: #{tpu_custom_call.1} parent=11 // pred_check_branch
          %615 = sbr.rel (%p613) target = $region52
        $region51: #{tpu_custom_call.1} parent=11 // pred_region
          %s617 = ssub.s32 16, 16
          %618 = vsyncadd [#allocation18], %s617
          %s620 = sshll.u32 [#allocation19], 4
          %s621 = int_to_ptr.vmem [resolvable:$true] %s620
          %623 = dma.hbm_to_vmem [thread:$0]  %s10, 16, %s621, [#allocation18]
        $region52: #{tpu_custom_call.1} parent=11 // pred_fallthru
          _
        // Predicated region
        $region53: #{tpu_custom_call.1} parent=11 // pred_check
          %p624 = pneg %p297
        $region54: #{tpu_custom_call.1} parent=11 // pred_check_branch
          %626 = sbr.rel (%p624) target = $region56
        $region55: #{tpu_custom_call.1} parent=11 // pred_region
          %s628 = ssub.s32 16, 16
          %629 = vsyncadd [#allocation21], %s628
          %s631 = sshll.u32 [#allocation20], 4
          %s632 = int_to_ptr.vmem [resolvable:$true] %s631
          %634 = dma.hbm_to_vmem [thread:$0]  %s11, 16, %s632, [#allocation21]
        $region56: #{tpu_custom_call.1} parent=11 // pred_fallthru
          _
        // Predicated region
        $region57: #{tpu_custom_call.1} parent=11 // pred_check
          %p635 = pneg %p318
        $region58: #{tpu_custom_call.1} parent=11 // pred_check_branch
          %637 = sbr.rel (%p635) target = $region60
        $region59: #{tpu_custom_call.1} parent=11 // pred_region
          %s639 = ssub.s32 4096, 4096
          %640 = vsyncadd [#allocation21], %s639
          %s641 = sshll.u32 [#allocation22], 4
          %s642 = int_to_ptr.vmem [resolvable:$true] %s641
          %647 = dma.hbm_to_vmem [thread:$0]  %s12, 4096, %s642, [#allocation21], 256, 256, 16
        $region60: #{tpu_custom_call.1} parent=11 // pred_fallthru
          _
        // Predicated region
        $region61: #{tpu_custom_call.1} parent=11 // pred_check
          %p648 = pneg %p339
        $region62: #{tpu_custom_call.1} parent=11 // pred_check_branch
          %650 = sbr.rel (%p648) target = $region64
        $region63: #{tpu_custom_call.1} parent=11 // pred_region
          %s652 = ssub.s32 32, 32
          %653 = vsyncadd [#allocation24], %s652
          %s655 = sshll.u32 [#allocation23], 4
          %s656 = int_to_ptr.vmem [resolvable:$true] %s655
          %658 = dma.hbm_to_vmem [thread:$0]  %s13, 32, %s656, [#allocation24]
        $region64: #{tpu_custom_call.1} parent=11 // pred_fallthru
          _
        // Predicated region
        $region65: #{tpu_custom_call.1} parent=11 // pred_check
          %p659 = pneg %p360
        $region66: #{tpu_custom_call.1} parent=11 // pred_check_branch
          %661 = sbr.rel (%p659) target = $region68
        $region67: #{tpu_custom_call.1} parent=11 // pred_region
          %s663 = ssub.s32 4096, 4096
          %664 = vsyncadd [#allocation24], %s663
          %s665 = sshll.u32 [#allocation25], 4
          %s666 = int_to_ptr.vmem [resolvable:$true] %s665
          %671 = dma.hbm_to_vmem [thread:$0]  %s14, 4096, %s666, [#allocation24], 128, 128, 8
        $region68: #{tpu_custom_call.1} parent=11 // pred_fallthru
          _
        // Predicated region
        $region69: #{tpu_custom_call.1} parent=11 // pred_check
          %p672 = pneg %p381
        $region70: #{tpu_custom_call.1} parent=11 // pred_check_branch
          %674 = sbr.rel (%p672) target = $region72
        $region71: #{tpu_custom_call.1} parent=11 // pred_region
          %s676 = ssub.s32 16, 16
          %677 = vsyncadd [#allocation27], %s676
          %s679 = sshll.u32 [#allocation26], 4
          %s680 = int_to_ptr.vmem [resolvable:$true] %s679
          %682 = dma.hbm_to_vmem [thread:$0]  %s15, 16, %s680, [#allocation27]
        $region72: #{tpu_custom_call.1} parent=11 // pred_fallthru
          _
        // Predicated region
        $region73: #{tpu_custom_call.1} parent=11 // pred_check
          %p683 = pneg %p402
        $region74: #{tpu_custom_call.1} parent=11 // pred_check_branch
          %685 = sbr.rel (%p683) target = $region76
        $region75: #{tpu_custom_call.1} parent=11 // pred_region
          %s687 = ssub.s32 16, 16
          %688 = vsyncadd [#allocation27], %s687
          %s690 = sshll.u32 [#allocation28], 4
          %s691 = int_to_ptr.vmem [resolvable:$true] %s690
          %693 = dma.hbm_to_vmem [thread:$0]  %s16, 16, %s691, [#allocation27]
        $region76: #{tpu_custom_call.1} parent=11 // pred_fallthru
          _
        // Predicated region
        $region77: #{tpu_custom_call.1} parent=11 // pred_check
          %p694 = pneg %p423
        $region78: #{tpu_custom_call.1} parent=11 // pred_check_branch
          %696 = sbr.rel (%p694) target = $region80
        $region79: #{tpu_custom_call.1} parent=11 // pred_region
          %s698 = ssub.s32 16, 16
          %699 = vsyncadd [#allocation30], %s698
          %s701 = sshll.u32 [#allocation29], 4
          %s702 = int_to_ptr.vmem [resolvable:$true] %s701
          %704 = dma.hbm_to_vmem [thread:$0]  %s17, 16, %s702, [#allocation30]
        $region80: #{tpu_custom_call.1} parent=11 // pred_fallthru
          _
        // Predicated region
        $region81: #{tpu_custom_call.1} parent=11 // pred_check
          %p705 = pneg %p444
        $region82: #{tpu_custom_call.1} parent=11 // pred_check_branch
          %707 = sbr.rel (%p705) target = $region84
        $region83: #{tpu_custom_call.1} parent=11 // pred_region
          _
        $region84: #{tpu_custom_call.1} parent=11 // pred_fallthru
          _
        // Predicated region
        $region85: #{tpu_custom_call.1} parent=11 // pred_check
          %p708 = pneg %p465
        $region86: #{tpu_custom_call.1} parent=11 // pred_check_branch
          %710 = sbr.rel (%p708) target = $region88
        $region87: #{tpu_custom_call.1} parent=11 // pred_region
          _
        $region88: #{tpu_custom_call.1} parent=11 // pred_fallthru
          _
      $region12: #{tpu_custom_call.1} parent=5 // pred_fallthru
        _
      %p711 = scmp.lt.s32.totalorder %s40, 2
      // Predicated region
      $region89: #{tpu_custom_call.1} parent=5 // pred_check
        %p712 = pneg %p711
      $region90: #{tpu_custom_call.1} parent=5 // pred_check_branch
        %714 = sbr.rel (%p712) target = $region92
      $region91: #{tpu_custom_call.1} parent=5 // pred_region
        // Predicated region
        $region93: #{tpu_custom_call.1} parent=91 // pred_check
          %p715 = pneg %p60
        $region94: #{tpu_custom_call.1} parent=91 // pred_check_branch
          %717 = sbr.rel (%p715) target = $region96
        $region95: #{tpu_custom_call.1} parent=91 // pred_region
          %s718 = sand.u32 %s50, 1
          %s719 = scalar_lea.sflag [#allocation4], %s718
          %s720 = sand.u32 %s50, 1
          %s721 = smul.addr %s720, 8
          %s722 = scalar_lea.vmem [#allocation3], %s721
          %s724 = ssub.s32 128, 128
          %725 = vsyncadd %s719, %s724
          %s726 = smul.addr %s40, 128
          %s727 = scalar_lea.hbm %s0, %s726
          %s729 = sshll.u32 %s722, 4
          %s730 = int_to_ptr.vmem [resolvable:$true] %s729
          %732 = dma.hbm_to_vmem [thread:$0]  %s727, 128, %s730, %s719
        $region96: #{tpu_custom_call.1} parent=91 // pred_fallthru
          _
      $region92: #{tpu_custom_call.1} parent=5 // pred_fallthru
        _
      %p733 = scmp.le.s32.totalorder 1, %s40
      %p734 = scmp.lt.s32.totalorder %s40, 3
      %p735 = pnand %p733, %p734
      %p736 = pneg %p735
      // Predicated region
      $region97: #{tpu_custom_call.1} parent=5 // pred_check
        _
      $region98: #{tpu_custom_call.1} parent=5 // pred_check_branch
        %738 = sbr.rel (%p735) target = $region100
      $region99: #{tpu_custom_call.1} parent=5 // pred_region
        %s739 = ssub.s32 %s40, 1
        %s740 = sand.u32 %s53, 1
        %s741 = scalar_lea.sflag [#allocation4], %s740
        %s742 = sand.u32 %s53, 1
        %s743 = smul.addr %s742, 8
        %s744 = scalar_lea.vmem [#allocation3], %s743
        // Predicated region
        $region101: #{tpu_custom_call.1} parent=99 // pred_check
          %p745 = pneg %p66
        $region102: #{tpu_custom_call.1} parent=99 // pred_check_branch
          %747 = sbr.rel (%p745) target = $region104
        $region103: #{tpu_custom_call.1} parent=99 // pred_region
          %748 = dma.done %s741, 128
        $region104: #{tpu_custom_call.1} parent=99 // pred_fallthru
          _
        // Predicated region
        $region105: #{tpu_custom_call.1} parent=99 // pred_check
          %p749 = pneg %p87
        $region106: #{tpu_custom_call.1} parent=99 // pred_check_branch
          %751 = sbr.rel (%p749) target = $region108
        $region107: #{tpu_custom_call.1} parent=99 // pred_region
          %752 = dma.done [#allocation6], 128
        $region108: #{tpu_custom_call.1} parent=99 // pred_fallthru
          _
        // Predicated region
        $region109: #{tpu_custom_call.1} parent=99 // pred_check
          %p753 = pneg %p108
        $region110: #{tpu_custom_call.1} parent=99 // pred_check_branch
          %755 = sbr.rel (%p753) target = $region112
        $region111: #{tpu_custom_call.1} parent=99 // pred_region
          %756 = dma.done [#allocation6], 2048
        $region112: #{tpu_custom_call.1} parent=99 // pred_fallthru
          _
        // Predicated region
        $region113: #{tpu_custom_call.1} parent=99 // pred_check
          %p757 = pneg %p129
        $region114: #{tpu_custom_call.1} parent=99 // pred_check_branch
          %759 = sbr.rel (%p757) target = $region116
        $region115: #{tpu_custom_call.1} parent=99 // pred_region
          %760 = dma.done [#allocation9], 16
        $region116: #{tpu_custom_call.1} parent=99 // pred_fallthru
          _
        // Predicated region
        $region117: #{tpu_custom_call.1} parent=99 // pred_check
          %p761 = pneg %p150
        $region118: #{tpu_custom_call.1} parent=99 // pred_check_branch
          %763 = sbr.rel (%p761) target = $region120
        $region119: #{tpu_custom_call.1} parent=99 // pred_region
          %764 = dma.done [#allocation9], 2048
        $region120: #{tpu_custom_call.1} parent=99 // pred_fallthru
          _
        // Predicated region
        $region121: #{tpu_custom_call.1} parent=99 // pred_check
          %p765 = pneg %p171
        $region122: #{tpu_custom_call.1} parent=99 // pred_check_branch
          %767 = sbr.rel (%p765) target = $region124
        $region123: #{tpu_custom_call.1} parent=99 // pred_region
          %768 = dma.done [#allocation12], 16
        $region124: #{tpu_custom_call.1} parent=99 // pred_fallthru
          _
        // Predicated region
        $region125: #{tpu_custom_call.1} parent=99 // pred_check
          %p769 = pneg %p192
        $region126: #{tpu_custom_call.1} parent=99 // pred_check_branch
          %771 = sbr.rel (%p769) target = $region128
        $region127: #{tpu_custom_call.1} parent=99 // pred_region
          %772 = dma.done [#allocation12], 2048
        $region128: #{tpu_custom_call.1} parent=99 // pred_fallthru
          _
        // Predicated region
        $region129: #{tpu_custom_call.1} parent=99 // pred_check
          %p773 = pneg %p213
        $region130: #{tpu_custom_call.1} parent=99 // pred_check_branch
          %775 = sbr.rel (%p773) target = $region132
        $region131: #{tpu_custom_call.1} parent=99 // pred_region
          %776 = dma.done [#allocation15], 16
        $region132: #{tpu_custom_call.1} parent=99 // pred_fallthru
          _
        // Predicated region
        $region133: #{tpu_custom_call.1} parent=99 // pred_check
          %p777 = pneg %p234
        $region134: #{tpu_custom_call.1} parent=99 // pred_check_branch
          %779 = sbr.rel (%p777) target = $region136
        $region135: #{tpu_custom_call.1} parent=99 // pred_region
          %780 = dma.done [#allocation15], 2048
        $region136: #{tpu_custom_call.1} parent=99 // pred_fallthru
          _
        // Predicated region
        $region137: #{tpu_custom_call.1} parent=99 // pred_check
          %p781 = pneg %p255
        $region138: #{tpu_custom_call.1} parent=99 // pred_check_branch
          %783 = sbr.rel (%p781) target = $region140
        $region139: #{tpu_custom_call.1} parent=99 // pred_region
          %784 = dma.done [#allocation18], 16
        $region140: #{tpu_custom_call.1} parent=99 // pred_fallthru
          _
        // Predicated region
        $region141: #{tpu_custom_call.1} parent=99 // pred_check
          %p785 = pneg %p276
        $region142: #{tpu_custom_call.1} parent=99 // pred_check_branch
          %787 = sbr.rel (%p785) target = $region144
        $region143: #{tpu_custom_call.1} parent=99 // pred_region
          %788 = dma.done [#allocation18], 16
        $region144: #{tpu_custom_call.1} parent=99 // pred_fallthru
          _
        // Predicated region
        $region145: #{tpu_custom_call.1} parent=99 // pred_check
          %p789 = pneg %p297
        $region146: #{tpu_custom_call.1} parent=99 // pred_check_branch
          %791 = sbr.rel (%p789) target = $region148
        $region147: #{tpu_custom_call.1} parent=99 // pred_region
          %792 = dma.done [#allocation21], 16
        $region148: #{tpu_custom_call.1} parent=99 // pred_fallthru
          _
        // Predicated region
        $region149: #{tpu_custom_call.1} parent=99 // pred_check
          %p793 = pneg %p318
        $region150: #{tpu_custom_call.1} parent=99 // pred_check_branch
          %795 = sbr.rel (%p793) target = $region152
        $region151: #{tpu_custom_call.1} parent=99 // pred_region
          %796 = dma.done [#allocation21], 4096
        $region152: #{tpu_custom_call.1} parent=99 // pred_fallthru
          _
        // Predicated region
        $region153: #{tpu_custom_call.1} parent=99 // pred_check
          %p797 = pneg %p339
        $region154: #{tpu_custom_call.1} parent=99 // pred_check_branch
          %799 = sbr.rel (%p797) target = $region156
        $region155: #{tpu_custom_call.1} parent=99 // pred_region
          %800 = dma.done [#allocation24], 32
        $region156: #{tpu_custom_call.1} parent=99 // pred_fallthru
          _
        // Predicated region
        $region157: #{tpu_custom_call.1} parent=99 // pred_check
          %p801 = pneg %p360
        $region158: #{tpu_custom_call.1} parent=99 // pred_check_branch
          %803 = sbr.rel (%p801) target = $region160
        $region159: #{tpu_custom_call.1} parent=99 // pred_region
          %804 = dma.done [#allocation24], 4096
        $region160: #{tpu_custom_call.1} parent=99 // pred_fallthru
          _
        // Predicated region
        $region161: #{tpu_custom_call.1} parent=99 // pred_check
          %p805 = pneg %p381
        $region162: #{tpu_custom_call.1} parent=99 // pred_check_branch
          %807 = sbr.rel (%p805) target = $region164
        $region163: #{tpu_custom_call.1} parent=99 // pred_region
          %808 = dma.done [#allocation27], 16
        $region164: #{tpu_custom_call.1} parent=99 // pred_fallthru
          _
        // Predicated region
        $region165: #{tpu_custom_call.1} parent=99 // pred_check
          %p809 = pneg %p402
        $region166: #{tpu_custom_call.1} parent=99 // pred_check_branch
          %811 = sbr.rel (%p809) target = $region168
        $region167: #{tpu_custom_call.1} parent=99 // pred_region
          %812 = dma.done [#allocation27], 16
        $region168: #{tpu_custom_call.1} parent=99 // pred_fallthru
          _
        // Predicated region
        $region169: #{tpu_custom_call.1} parent=99 // pred_check
          %p813 = pneg %p423
        $region170: #{tpu_custom_call.1} parent=99 // pred_check_branch
          %815 = sbr.rel (%p813) target = $region172
        $region171: #{tpu_custom_call.1} parent=99 // pred_region
          %816 = dma.done [#allocation30], 16
        $region172: #{tpu_custom_call.1} parent=99 // pred_fallthru
          _
        %s817 = sand.u32 %s53, 1
        %s818 = scalar_lea.sflag [#allocation4], %s817
        %s819 = sand.u32 %s53, 1
        %s820 = smul.addr %s819, 8
        %s821 = scalar_lea.vmem [#allocation3], %s820
        %p822 = pneg %p66
        %p823 = pneg %p63
        %p824 = pneg %p87
        %p825 = pneg %p84
        %p826 = pneg %p108
        %p827 = pneg %p105
        %p828 = pneg %p129
        %p829 = pneg %p126
        %p830 = pneg %p150
        %p831 = pneg %p147
        %p832 = pneg %p171
        %p833 = pneg %p168
        %p834 = pneg %p192
        %p835 = pneg %p189
        %p836 = pneg %p213
        %p837 = pneg %p210
        %p838 = pneg %p234
        %p839 = pneg %p231
        %p840 = pneg %p255
        %p841 = pneg %p252
        %p842 = pneg %p276
        %p843 = pneg %p273
        %p844 = pneg %p297
        %p845 = pneg %p294
        %p846 = pneg %p318
        %p847 = pneg %p315
        %p848 = pneg %p339
        %p849 = pneg %p336
        %p850 = pneg %p360
        %p851 = pneg %p357
        %p852 = pneg %p381
        %p853 = pneg %p378
        %p854 = pneg %p402
        %p855 = pneg %p399
        %p856 = pneg %p423
        %p857 = pneg %p420
        %p858 = pneg %p444
        %p859 = pneg %p441
        %p860 = pneg %p465
        %p861 = pneg %p462
        %p862 = pneg %p491
        %p863 = pneg %p488
        %p864 = scmp.lt.s32.totalorder %s45, 1
        %s865 = scalar_select %p864, %s45, 1
        %s866 = smul.addr %s865, 8
        %s867 = scalar_lea.vmem %s20, %s866
        %p868 = scmp.lt.s32.totalorder %s45, 1
        %s869 = scalar_select %p868, %s45, 1
        %s870 = smul.addr %s869, 8
        %s871 = scalar_lea.vmem %s20, %s870
        %v872 = vld [vmem:[%s744] sm:$0xff]
        %v873 = vld [vmem:[#allocation5] sm:$0xff]
        %v874 = vadd.f32 %v872, %v873
        %v875 = vld [vmem:[#allocation7] sm:$0xff]
        %v876 = vld [vmem:[#allocation7 + $0x8] sm:$0xff]
        %v877 = vld [vmem:[#allocation7 + $0x10] sm:$0xff]
        %v878 = vld [vmem:[#allocation7 + $0x18] sm:$0xff]
        %v879 = vld [vmem:[#allocation7 + $0x20] sm:$0xff]
        %v880 = vld [vmem:[#allocation7 + $0x28] sm:$0xff]
        %v881 = vld [vmem:[#allocation7 + $0x30] sm:$0xff]
        %v882 = vld [vmem:[#allocation7 + $0x38] sm:$0xff]
        %v883 = vld [vmem:[#allocation7 + $0x40] sm:$0xff]
        %v884 = vld [vmem:[#allocation7 + $0x48] sm:$0xff]
        %v885 = vld [vmem:[#allocation7 + $0x50] sm:$0xff]
        %v886 = vld [vmem:[#allocation7 + $0x58] sm:$0xff]
        %v887 = vld [vmem:[#allocation7 + $0x60] sm:$0xff]
        %v888 = vld [vmem:[#allocation7 + $0x68] sm:$0xff]
        %v889 = vld [vmem:[#allocation7 + $0x70] sm:$0xff]
        %v890 = vld [vmem:[#allocation7 + $0x78] sm:$0xff]
        %v891 = vld [vmem:[#allocation8] sm:$0x1]
        %v893 = vlaneseq
        %v894 = vshrl.u32 %v893, 7
        %v895 = vsub.s32 0, %v894
        %v896 = vrot.slane %v891, %v895
        %898 = vmatprep.subr.mxu0 0.0
        %v899 = vand.u32 %v875, 4294901760
        %900 = vmatpush1.msra.mxu0 %v899
        %901 = vmatprep.subr.mxu0 0.0
        %v902 = vand.u32 %v876, 4294901760
        %903 = vmatpush1.msra.mxu0 %v902
        %904 = vmatprep.subr.mxu0 0.0
        %v905 = vand.u32 %v877, 4294901760
        %906 = vmatpush1.msra.mxu0 %v905
        %907 = vmatprep.subr.mxu0 0.0
        %v908 = vand.u32 %v878, 4294901760
        %909 = vmatpush1.msra.mxu0 %v908
        %910 = vmatprep.subr.mxu0 0.0
        %v911 = vand.u32 %v879, 4294901760
        %912 = vmatpush1.msra.mxu0 %v911
        %913 = vmatprep.subr.mxu0 0.0
        %v914 = vand.u32 %v880, 4294901760
        %915 = vmatpush1.msra.mxu0 %v914
        %916 = vmatprep.subr.mxu0 0.0
        %v917 = vand.u32 %v881, 4294901760
        %918 = vmatpush1.msra.mxu0 %v917
        %919 = vmatprep.subr.mxu0 0.0
        %v920 = vand.u32 %v882, 4294901760
        %921 = vmatpush1.msra.mxu0 %v920
        %922 = vmatprep.subr.mxu0 0.0
        %v923 = vand.u32 %v883, 4294901760
        %924 = vmatpush1.msra.mxu0 %v923
        %925 = vmatprep.subr.mxu0 0.0
        %v926 = vand.u32 %v884, 4294901760
        %927 = vmatpush1.msra.mxu0 %v926
        %928 = vmatprep.subr.mxu0 0.0
        %v929 = vand.u32 %v885, 4294901760
        %930 = vmatpush1.msra.mxu0 %v929
        %931 = vmatprep.subr.mxu0 0.0
        %v932 = vand.u32 %v886, 4294901760
        %933 = vmatpush1.msra.mxu0 %v932
        %934 = vmatprep.subr.mxu0 0.0
        %v935 = vand.u32 %v887, 4294901760
        %936 = vmatpush1.msra.mxu0 %v935
        %937 = vmatprep.subr.mxu0 0.0
        %v938 = vand.u32 %v888, 4294901760
        %939 = vmatpush1.msra.mxu0 %v938
        %940 = vmatprep.subr.mxu0 0.0
        %v941 = vand.u32 %v889, 4294901760
        %942 = vmatpush1.msra.mxu0 %v941
        %943 = vmatprep.subr.mxu0 0.0
        %v944 = vand.u32 %v890, 4294901760
        %945 = vmatpush1.msra.mxu0 %v944
        %946 = vmatprep.subr.mxu0 0.0
        %947 = vmatpush1.msra.mxu0 0.0
        %948 = vmatprep.subr.mxu0 0.0
        %949 = vmatpush1.msra.mxu0 0.0
        %950 = vmatprep.subr.mxu0 0.0
        %951 = vmatpush1.msra.mxu0 0.0
        %952 = vmatprep.subr.mxu0 0.0
        %953 = vmatpush1.msra.mxu0 0.0
        %954 = vmatprep.subr.mxu0 0.0
        %955 = vmatpush1.msra.mxu0 0.0
        %956 = vmatprep.subr.mxu0 0.0
        %957 = vmatpush1.msra.mxu0 0.0
        %958 = vmatprep.subr.mxu0 0.0
        %959 = vmatpush1.msra.mxu0 0.0
        %960 = vmatprep.subr.mxu0 0.0
        %961 = vmatpush1.msra.mxu0 0.0
        %962 = vmatprep.subr.mxu0 0.0
        %963 = vmatpush1.msra.mxu0 0.0
        %964 = vmatprep.subr.mxu0 0.0
        %965 = vmatpush1.msra.mxu0 0.0
        %966 = vmatprep.subr.mxu0 0.0
        %967 = vmatpush1.msra.mxu0 0.0
        %968 = vmatprep.subr.mxu0 0.0
        %969 = vmatpush1.msra.mxu0 0.0
        %970 = vmatprep.subr.mxu0 0.0
        %971 = vmatpush1.msra.mxu0 0.0
        %972 = vmatprep.subr.mxu0 0.0
        %973 = vmatpush1.msra.mxu0 0.0
        %974 = vmatprep.subr.mxu0 0.0
        %975 = vmatpush1.msra.mxu0 0.0
        %976 = vmatprep.subr.mxu0 0.0
        %977 = vmatpush1.msra.mxu0 0.0
        %978 = vmatprep.mubr.f32.mxu0 0.0
        %v979 = vand.u32 %v874, 4294901760
        %v980 = vsub.f32 %v874, %v979
        %v981 = vand.u32 %v980, 4294901760
        %v982 = vsub.f32 %v980, %v981
        %v983 = vand.u32 %v982, 4294901760
        %984 = vmatmul.mubr.f32.gmra.mrb[0].mxu0 %v983
        %v985 = vpop.f32.mrb[0].mxu0
        %v986 = vadd.f32 %v896, %v985
        %v987 = vpop.f32.mrb[0].mxu0
        %988 = vdwg.mxu0
        %989 = vmatprep.subr.mxu0 0.0
        %v990 = vand.u32 %v875, 4294901760
        %v991 = vsub.f32 %v875, %v990
        %v992 = vand.u32 %v991, 4294901760
        %v993 = vsub.f32 %v991, %v992
        %v994 = vand.u32 %v993, 4294901760
        %995 = vmatpush1.msra.mxu0 %v994
        %996 = vmatprep.subr.mxu0 0.0
        %v997 = vand.u32 %v876, 4294901760
        %v998 = vsub.f32 %v876, %v997
        %v999 = vand.u32 %v998, 4294901760
        %v1000 = vsub.f32 %v998, %v999
        %v1001 = vand.u32 %v1000, 4294901760
        %1002 = vmatpush1.msra.mxu0 %v1001
        %1003 = vmatprep.subr.mxu0 0.0
        %v1004 = vand.u32 %v877, 4294901760
        %v1005 = vsub.f32 %v877, %v1004
        %v1006 = vand.u32 %v1005, 4294901760
        %v1007 = vsub.f32 %v1005, %v1006
        %v1008 = vand.u32 %v1007, 4294901760
        %1009 = vmatpush1.msra.mxu0 %v1008
        %1010 = vmatprep.subr.mxu0 0.0
        %v1011 = vand.u32 %v878, 4294901760
        %v1012 = vsub.f32 %v878, %v1011
        %v1013 = vand.u32 %v1012, 4294901760
        %v1014 = vsub.f32 %v1012, %v1013
        %v1015 = vand.u32 %v1014, 4294901760
        %1016 = vmatpush1.msra.mxu0 %v1015
        %1017 = vmatprep.subr.mxu0 0.0
        %v1018 = vand.u32 %v879, 4294901760
        %v1019 = vsub.f32 %v879, %v1018
        %v1020 = vand.u32 %v1019, 4294901760
        %v1021 = vsub.f32 %v1019, %v1020
        %v1022 = vand.u32 %v1021, 4294901760
        %1023 = vmatpush1.msra.mxu0 %v1022
        %1024 = vmatprep.subr.mxu0 0.0
        %v1025 = vand.u32 %v880, 4294901760
        %v1026 = vsub.f32 %v880, %v1025
        %v1027 = vand.u32 %v1026, 4294901760
        %v1028 = vsub.f32 %v1026, %v1027
        %v1029 = vand.u32 %v1028, 4294901760
        %1030 = vmatpush1.msra.mxu0 %v1029
        %1031 = vmatprep.subr.mxu0 0.0
        %v1032 = vand.u32 %v881, 4294901760
        %v1033 = vsub.f32 %v881, %v1032
        %v1034 = vand.u32 %v1033, 4294901760
        %v1035 = vsub.f32 %v1033, %v1034
        %v1036 = vand.u32 %v1035, 4294901760
        %1037 = vmatpush1.msra.mxu0 %v1036
        %1038 = vmatprep.subr.mxu0 0.0
        %v1039 = vand.u32 %v882, 4294901760
        %v1040 = vsub.f32 %v882, %v1039
        %v1041 = vand.u32 %v1040, 4294901760
        %v1042 = vsub.f32 %v1040, %v1041
        %v1043 = vand.u32 %v1042, 4294901760
        %1044 = vmatpush1.msra.mxu0 %v1043
        %1045 = vmatprep.subr.mxu0 0.0
        %v1046 = vand.u32 %v883, 4294901760
        %v1047 = vsub.f32 %v883, %v1046
        %v1048 = vand.u32 %v1047, 4294901760
        %v1049 = vsub.f32 %v1047, %v1048
        %v1050 = vand.u32 %v1049, 4294901760
        %1051 = vmatpush1.msra.mxu0 %v1050
        %1052 = vmatprep.subr.mxu0 0.0
        %v1053 = vand.u32 %v884, 4294901760
        %v1054 = vsub.f32 %v884, %v1053
        %v1055 = vand.u32 %v1054, 4294901760
        %v1056 = vsub.f32 %v1054, %v1055
        %v1057 = vand.u32 %v1056, 4294901760
        %1058 = vmatpush1.msra.mxu0 %v1057
        %1059 = vmatprep.subr.mxu0 0.0
        %v1060 = vand.u32 %v885, 4294901760
        %v1061 = vsub.f32 %v885, %v1060
        %v1062 = vand.u32 %v1061, 4294901760
        %v1063 = vsub.f32 %v1061, %v1062
        %v1064 = vand.u32 %v1063, 4294901760
        %1065 = vmatpush1.msra.mxu0 %v1064
        %1066 = vmatprep.subr.mxu0 0.0
        %v1067 = vand.u32 %v886, 4294901760
        %v1068 = vsub.f32 %v886, %v1067
        %v1069 = vand.u32 %v1068, 4294901760
        %v1070 = vsub.f32 %v1068, %v1069
        %v1071 = vand.u32 %v1070, 4294901760
        %1072 = vmatpush1.msra.mxu0 %v1071
        %1073 = vmatprep.subr.mxu0 0.0
        %v1074 = vand.u32 %v887, 4294901760
        %v1075 = vsub.f32 %v887, %v1074
        %v1076 = vand.u32 %v1075, 4294901760
        %v1077 = vsub.f32 %v1075, %v1076
        %v1078 = vand.u32 %v1077, 4294901760
        %1079 = vmatpush1.msra.mxu0 %v1078
        %1080 = vmatprep.subr.mxu0 0.0
        %v1081 = vand.u32 %v888, 4294901760
        %v1082 = vsub.f32 %v888, %v1081
        %v1083 = vand.u32 %v1082, 4294901760
        %v1084 = vsub.f32 %v1082, %v1083
        %v1085 = vand.u32 %v1084, 4294901760
        %1086 = vmatpush1.msra.mxu0 %v1085
        %1087 = vmatprep.subr.mxu0 0.0
        %v1088 = vand.u32 %v889, 4294901760
        %v1089 = vsub.f32 %v889, %v1088
        %v1090 = vand.u32 %v1089, 4294901760
        %v1091 = vsub.f32 %v1089, %v1090
        %v1092 = vand.u32 %v1091, 4294901760
        %1093 = vmatpush1.msra.mxu0 %v1092
        %1094 = vmatprep.subr.mxu0 0.0
        %v1095 = vand.u32 %v890, 4294901760
        %v1096 = vsub.f32 %v890, %v1095
        %v1097 = vand.u32 %v1096, 4294901760
        %v1098 = vsub.f32 %v1096, %v1097
        %v1099 = vand.u32 %v1098, 4294901760
        %1100 = vmatpush1.msra.mxu0 %v1099
        %1101 = vmatprep.subr.mxu0 0.0
        %1102 = vmatpush1.msra.mxu0 0.0
        %1103 = vmatprep.subr.mxu0 0.0
        %1104 = vmatpush1.msra.mxu0 0.0
        %1105 = vmatprep.subr.mxu0 0.0
        %1106 = vmatpush1.msra.mxu0 0.0
        %1107 = vmatprep.subr.mxu0 0.0
        %1108 = vmatpush1.msra.mxu0 0.0
        %1109 = vmatprep.subr.mxu0 0.0
        %1110 = vmatpush1.msra.mxu0 0.0
        %1111 = vmatprep.subr.mxu0 0.0
        %1112 = vmatpush1.msra.mxu0 0.0
        %1113 = vmatprep.subr.mxu0 0.0
        %1114 = vmatpush1.msra.mxu0 0.0
        %1115 = vmatprep.subr.mxu0 0.0
        %1116 = vmatpush1.msra.mxu0 0.0
        %1117 = vmatprep.subr.mxu0 0.0
        %1118 = vmatpush1.msra.mxu0 0.0
        %1119 = vmatprep.subr.mxu0 0.0
        %1120 = vmatpush1.msra.mxu0 0.0
        %1121 = vmatprep.subr.mxu0 0.0
        %1122 = vmatpush1.msra.mxu0 0.0
        %1123 = vmatprep.subr.mxu0 0.0
        %1124 = vmatpush1.msra.mxu0 0.0
        %1125 = vmatprep.subr.mxu0 0.0
        %1126 = vmatpush1.msra.mxu0 0.0
        %1127 = vmatprep.subr.mxu0 0.0
        %1128 = vmatpush1.msra.mxu0 0.0
        %1129 = vmatprep.subr.mxu0 0.0
        %1130 = vmatpush1.msra.mxu0 0.0
        %1131 = vmatprep.subr.mxu0 0.0
        %1132 = vmatpush1.msra.mxu0 0.0
        %1133 = vmatprep.mubr.f32.mxu0 0.0
        %v1134 = vand.u32 %v874, 4294901760
        %1135 = vmatmul.mubr.f32.gmra.mrb[0].mxu0 %v1134
        %v1136 = vpop.f32.mrb[0].mxu0
        %v1137 = vadd.f32 %v986, %v1136
        %v1138 = vpop.f32.mrb[0].mxu0
        %1139 = vdwg.mxu0
        %1140 = vmatprep.subr.mxu0 0.0
        %v1141 = vand.u32 %v875, 4294901760
        %v1142 = vsub.f32 %v875, %v1141
        %1143 = vmatpush1.msra.mxu0 %v1142
        %1144 = vmatprep.subr.mxu0 0.0
        %v1145 = vand.u32 %v876, 4294901760
        %v1146 = vsub.f32 %v876, %v1145
        %1147 = vmatpush1.msra.mxu0 %v1146
        %1148 = vmatprep.subr.mxu0 0.0
        %v1149 = vand.u32 %v877, 4294901760
        %v1150 = vsub.f32 %v877, %v1149
        %1151 = vmatpush1.msra.mxu0 %v1150
        %1152 = vmatprep.subr.mxu0 0.0
        %v1153 = vand.u32 %v878, 4294901760
        %v1154 = vsub.f32 %v878, %v1153
        %1155 = vmatpush1.msra.mxu0 %v1154
        %1156 = vmatprep.subr.mxu0 0.0
        %v1157 = vand.u32 %v879, 4294901760
        %v1158 = vsub.f32 %v879, %v1157
        %1159 = vmatpush1.msra.mxu0 %v1158
        %1160 = vmatprep.subr.mxu0 0.0
        %v1161 = vand.u32 %v880, 4294901760
        %v1162 = vsub.f32 %v880, %v1161
        %1163 = vmatpush1.msra.mxu0 %v1162
        %1164 = vmatprep.subr.mxu0 0.0
        %v1165 = vand.u32 %v881, 4294901760
        %v1166 = vsub.f32 %v881, %v1165
        %1167 = vmatpush1.msra.mxu0 %v1166
        %1168 = vmatprep.subr.mxu0 0.0
        %v1169 = vand.u32 %v882, 4294901760
        %v1170 = vsub.f32 %v882, %v1169
        %1171 = vmatpush1.msra.mxu0 %v1170
        %1172 = vmatprep.subr.mxu0 0.0
        %v1173 = vand.u32 %v883, 4294901760
        %v1174 = vsub.f32 %v883, %v1173
        %1175 = vmatpush1.msra.mxu0 %v1174
        %1176 = vmatprep.subr.mxu0 0.0
        %v1177 = vand.u32 %v884, 4294901760
        %v1178 = vsub.f32 %v884, %v1177
        %1179 = vmatpush1.msra.mxu0 %v1178
        %1180 = vmatprep.subr.mxu0 0.0
        %v1181 = vand.u32 %v885, 4294901760
        %v1182 = vsub.f32 %v885, %v1181
        %1183 = vmatpush1.msra.mxu0 %v1182
        %1184 = vmatprep.subr.mxu0 0.0
        %v1185 = vand.u32 %v886, 4294901760
        %v1186 = vsub.f32 %v886, %v1185
        %1187 = vmatpush1.msra.mxu0 %v1186
        %1188 = vmatprep.subr.mxu0 0.0
        %v1189 = vand.u32 %v887, 4294901760
        %v1190 = vsub.f32 %v887, %v1189
        %1191 = vmatpush1.msra.mxu0 %v1190
        %1192 = vmatprep.subr.mxu0 0.0
        %v1193 = vand.u32 %v888, 4294901760
        %v1194 = vsub.f32 %v888, %v1193
        %1195 = vmatpush1.msra.mxu0 %v1194
        %1196 = vmatprep.subr.mxu0 0.0
        %v1197 = vand.u32 %v889, 4294901760
        %v1198 = vsub.f32 %v889, %v1197
        %1199 = vmatpush1.msra.mxu0 %v1198
        %1200 = vmatprep.subr.mxu0 0.0
        %v1201 = vand.u32 %v890, 4294901760
        %v1202 = vsub.f32 %v890, %v1201
        %1203 = vmatpush1.msra.mxu0 %v1202
        %1204 = vmatprep.subr.mxu0 0.0
        %1205 = vmatpush1.msra.mxu0 0.0
        %1206 = vmatprep.subr.mxu0 0.0
        %1207 = vmatpush1.msra.mxu0 0.0
        %1208 = vmatprep.subr.mxu0 0.0
        %1209 = vmatpush1.msra.mxu0 0.0
        %1210 = vmatprep.subr.mxu0 0.0
        %1211 = vmatpush1.msra.mxu0 0.0
        %1212 = vmatprep.subr.mxu0 0.0
        %1213 = vmatpush1.msra.mxu0 0.0
        %1214 = vmatprep.subr.mxu0 0.0
        %1215 = vmatpush1.msra.mxu0 0.0
        %1216 = vmatprep.subr.mxu0 0.0
        %1217 = vmatpush1.msra.mxu0 0.0
        %1218 = vmatprep.subr.mxu0 0.0
        %1219 = vmatpush1.msra.mxu0 0.0
        %1220 = vmatprep.subr.mxu0 0.0
        %1221 = vmatpush1.msra.mxu0 0.0
        %1222 = vmatprep.subr.mxu0 0.0
        %1223 = vmatpush1.msra.mxu0 0.0
        %1224 = vmatprep.subr.mxu0 0.0
        %1225 = vmatpush1.msra.mxu0 0.0
        %1226 = vmatprep.subr.mxu0 0.0
        %1227 = vmatpush1.msra.mxu0 0.0
        %1228 = vmatprep.subr.mxu0 0.0
        %1229 = vmatpush1.msra.mxu0 0.0
        %1230 = vmatprep.subr.mxu0 0.0
        %1231 = vmatpush1.msra.mxu0 0.0
        %1232 = vmatprep.subr.mxu0 0.0
        %1233 = vmatpush1.msra.mxu0 0.0
        %1234 = vmatprep.subr.mxu0 0.0
        %1235 = vmatpush1.msra.mxu0 0.0
        %1236 = vmatprep.mubr.f32.mxu0 0.0
        %v1237 = vand.u32 %v874, 4294901760
        %v1238 = vsub.f32 %v874, %v1237
        %1239 = vmatmul.mubr.f32.gmra.mrb[0].mxu0 %v1238
        %v1240 = vpop.f32.mrb[0].mxu0
        %v1241 = vadd.f32 %v1137, %v1240
        %v1242 = vpop.f32.mrb[0].mxu0
        %1243 = vdwg.mxu0
        %1244 = vmatprep.subr.mxu0 0.0
        %v1245 = vand.u32 %v875, 4294901760
        %1246 = vmatpush1.msra.mxu0 %v1245
        %1247 = vmatprep.subr.mxu0 0.0
        %v1248 = vand.u32 %v876, 4294901760
        %1249 = vmatpush1.msra.mxu0 %v1248
        %1250 = vmatprep.subr.mxu0 0.0
        %v1251 = vand.u32 %v877, 4294901760
        %1252 = vmatpush1.msra.mxu0 %v1251
        %1253 = vmatprep.subr.mxu0 0.0
        %v1254 = vand.u32 %v878, 4294901760
        %1255 = vmatpush1.msra.mxu0 %v1254
        %1256 = vmatprep.subr.mxu0 0.0
        %v1257 = vand.u32 %v879, 4294901760
        %1258 = vmatpush1.msra.mxu0 %v1257
        %1259 = vmatprep.subr.mxu0 0.0
        %v1260 = vand.u32 %v880, 4294901760
        %1261 = vmatpush1.msra.mxu0 %v1260
        %1262 = vmatprep.subr.mxu0 0.0
        %v1263 = vand.u32 %v881, 4294901760
        %1264 = vmatpush1.msra.mxu0 %v1263
        %1265 = vmatprep.subr.mxu0 0.0
        %v1266 = vand.u32 %v882, 4294901760
        %1267 = vmatpush1.msra.mxu0 %v1266
        %1268 = vmatprep.subr.mxu0 0.0
        %v1269 = vand.u32 %v883, 4294901760
        %1270 = vmatpush1.msra.mxu0 %v1269
        %1271 = vmatprep.subr.mxu0 0.0
        %v1272 = vand.u32 %v884, 4294901760
        %1273 = vmatpush1.msra.mxu0 %v1272
        %1274 = vmatprep.subr.mxu0 0.0
        %v1275 = vand.u32 %v885, 4294901760
        %1276 = vmatpush1.msra.mxu0 %v1275
        %1277 = vmatprep.subr.mxu0 0.0
        %v1278 = vand.u32 %v886, 4294901760
        %1279 = vmatpush1.msra.mxu0 %v1278
        %1280 = vmatprep.subr.mxu0 0.0
        %v1281 = vand.u32 %v887, 4294901760
        %1282 = vmatpush1.msra.mxu0 %v1281
        %1283 = vmatprep.subr.mxu0 0.0
        %v1284 = vand.u32 %v888, 4294901760
        %1285 = vmatpush1.msra.mxu0 %v1284
        %1286 = vmatprep.subr.mxu0 0.0
        %v1287 = vand.u32 %v889, 4294901760
        %1288 = vmatpush1.msra.mxu0 %v1287
        %1289 = vmatprep.subr.mxu0 0.0
        %v1290 = vand.u32 %v890, 4294901760
        %1291 = vmatpush1.msra.mxu0 %v1290
        %1292 = vmatprep.subr.mxu0 0.0
        %1293 = vmatpush1.msra.mxu0 0.0
        %1294 = vmatprep.subr.mxu0 0.0
        %1295 = vmatpush1.msra.mxu0 0.0
        %1296 = vmatprep.subr.mxu0 0.0
        %1297 = vmatpush1.msra.mxu0 0.0
        %1298 = vmatprep.subr.mxu0 0.0
        %1299 = vmatpush1.msra.mxu0 0.0
        %1300 = vmatprep.subr.mxu0 0.0
        %1301 = vmatpush1.msra.mxu0 0.0
        %1302 = vmatprep.subr.mxu0 0.0
        %1303 = vmatpush1.msra.mxu0 0.0
        %1304 = vmatprep.subr.mxu0 0.0
        %1305 = vmatpush1.msra.mxu0 0.0
        %1306 = vmatprep.subr.mxu0 0.0
        %1307 = vmatpush1.msra.mxu0 0.0
        %1308 = vmatprep.subr.mxu0 0.0
        %1309 = vmatpush1.msra.mxu0 0.0
        %1310 = vmatprep.subr.mxu0 0.0
        %1311 = vmatpush1.msra.mxu0 0.0
        %1312 = vmatprep.subr.mxu0 0.0
        %1313 = vmatpush1.msra.mxu0 0.0
        %1314 = vmatprep.subr.mxu0 0.0
        %1315 = vmatpush1.msra.mxu0 0.0
        %1316 = vmatprep.subr.mxu0 0.0
        %1317 = vmatpush1.msra.mxu0 0.0
        %1318 = vmatprep.subr.mxu0 0.0
        %1319 = vmatpush1.msra.mxu0 0.0
        %1320 = vmatprep.subr.mxu0 0.0
        %1321 = vmatpush1.msra.mxu0 0.0
        %1322 = vmatprep.subr.mxu0 0.0
        %1323 = vmatpush1.msra.mxu0 0.0
        %1324 = vmatprep.mubr.f32.mxu0 0.0
        %v1325 = vand.u32 %v874, 4294901760
        %v1326 = vsub.f32 %v874, %v1325
        %v1327 = vand.u32 %v1326, 4294901760
        %1328 = vmatmul.mubr.f32.gmra.mrb[0].mxu0 %v1327
        %v1329 = vpop.f32.mrb[0].mxu0
        %v1330 = vadd.f32 %v1241, %v1329
        %v1331 = vpop.f32.mrb[0].mxu0
        %1332 = vdwg.mxu0
        %1333 = vmatprep.subr.mxu0 0.0
        %v1334 = vand.u32 %v875, 4294901760
        %v1335 = vsub.f32 %v875, %v1334
        %v1336 = vand.u32 %v1335, 4294901760
        %1337 = vmatpush1.msra.mxu0 %v1336
        %1338 = vmatprep.subr.mxu0 0.0
        %v1339 = vand.u32 %v876, 4294901760
        %v1340 = vsub.f32 %v876, %v1339
        %v1341 = vand.u32 %v1340, 4294901760
        %1342 = vmatpush1.msra.mxu0 %v1341
        %1343 = vmatprep.subr.mxu0 0.0
        %v1344 = vand.u32 %v877, 4294901760
        %v1345 = vsub.f32 %v877, %v1344
        %v1346 = vand.u32 %v1345, 4294901760
        %1347 = vmatpush1.msra.mxu0 %v1346
        %1348 = vmatprep.subr.mxu0 0.0
        %v1349 = vand.u32 %v878, 4294901760
        %v1350 = vsub.f32 %v878, %v1349
        %v1351 = vand.u32 %v1350, 4294901760
        %1352 = vmatpush1.msra.mxu0 %v1351
        %1353 = vmatprep.subr.mxu0 0.0
        %v1354 = vand.u32 %v879, 4294901760
        %v1355 = vsub.f32 %v879, %v1354
        %v1356 = vand.u32 %v1355, 4294901760
        %1357 = vmatpush1.msra.mxu0 %v1356
        %1358 = vmatprep.subr.mxu0 0.0
        %v1359 = vand.u32 %v880, 4294901760
        %v1360 = vsub.f32 %v880, %v1359
        %v1361 = vand.u32 %v1360, 4294901760
        %1362 = vmatpush1.msra.mxu0 %v1361
        %1363 = vmatprep.subr.mxu0 0.0
        %v1364 = vand.u32 %v881, 4294901760
        %v1365 = vsub.f32 %v881, %v1364
        %v1366 = vand.u32 %v1365, 4294901760
        %1367 = vmatpush1.msra.mxu0 %v1366
        %1368 = vmatprep.subr.mxu0 0.0
        %v1369 = vand.u32 %v882, 4294901760
        %v1370 = vsub.f32 %v882, %v1369
        %v1371 = vand.u32 %v1370, 4294901760
        %1372 = vmatpush1.msra.mxu0 %v1371
        %1373 = vmatprep.subr.mxu0 0.0
        %v1374 = vand.u32 %v883, 4294901760
        %v1375 = vsub.f32 %v883, %v1374
        %v1376 = vand.u32 %v1375, 4294901760
        %1377 = vmatpush1.msra.mxu0 %v1376
        %1378 = vmatprep.subr.mxu0 0.0
        %v1379 = vand.u32 %v884, 4294901760
        %v1380 = vsub.f32 %v884, %v1379
        %v1381 = vand.u32 %v1380, 4294901760
        %1382 = vmatpush1.msra.mxu0 %v1381
        %1383 = vmatprep.subr.mxu0 0.0
        %v1384 = vand.u32 %v885, 4294901760
        %v1385 = vsub.f32 %v885, %v1384
        %v1386 = vand.u32 %v1385, 4294901760
        %1387 = vmatpush1.msra.mxu0 %v1386
        %1388 = vmatprep.subr.mxu0 0.0
        %v1389 = vand.u32 %v886, 4294901760
        %v1390 = vsub.f32 %v886, %v1389
        %v1391 = vand.u32 %v1390, 4294901760
        %1392 = vmatpush1.msra.mxu0 %v1391
        %1393 = vmatprep.subr.mxu0 0.0
        %v1394 = vand.u32 %v887, 4294901760
        %v1395 = vsub.f32 %v887, %v1394
        %v1396 = vand.u32 %v1395, 4294901760
        %1397 = vmatpush1.msra.mxu0 %v1396
        %1398 = vmatprep.subr.mxu0 0.0
        %v1399 = vand.u32 %v888, 4294901760
        %v1400 = vsub.f32 %v888, %v1399
        %v1401 = vand.u32 %v1400, 4294901760
        %1402 = vmatpush1.msra.mxu0 %v1401
        %1403 = vmatprep.subr.mxu0 0.0
        %v1404 = vand.u32 %v889, 4294901760
        %v1405 = vsub.f32 %v889, %v1404
        %v1406 = vand.u32 %v1405, 4294901760
        %1407 = vmatpush1.msra.mxu0 %v1406
        %1408 = vmatprep.subr.mxu0 0.0
        %v1409 = vand.u32 %v890, 4294901760
        %v1410 = vsub.f32 %v890, %v1409
        %v1411 = vand.u32 %v1410, 4294901760
        %1412 = vmatpush1.msra.mxu0 %v1411
        %1413 = vmatprep.subr.mxu0 0.0
        %1414 = vmatpush1.msra.mxu0 0.0
        %1415 = vmatprep.subr.mxu0 0.0
        %1416 = vmatpush1.msra.mxu0 0.0
        %1417 = vmatprep.subr.mxu0 0.0
        %1418 = vmatpush1.msra.mxu0 0.0
        %1419 = vmatprep.subr.mxu0 0.0
        %1420 = vmatpush1.msra.mxu0 0.0
        %1421 = vmatprep.subr.mxu0 0.0
        %1422 = vmatpush1.msra.mxu0 0.0
        %1423 = vmatprep.subr.mxu0 0.0
        %1424 = vmatpush1.msra.mxu0 0.0
        %1425 = vmatprep.subr.mxu0 0.0
        %1426 = vmatpush1.msra.mxu0 0.0
        %1427 = vmatprep.subr.mxu0 0.0
        %1428 = vmatpush1.msra.mxu0 0.0
        %1429 = vmatprep.subr.mxu0 0.0
        %1430 = vmatpush1.msra.mxu0 0.0
        %1431 = vmatprep.subr.mxu0 0.0
        %1432 = vmatpush1.msra.mxu0 0.0
        %1433 = vmatprep.subr.mxu0 0.0
        %1434 = vmatpush1.msra.mxu0 0.0
        %1435 = vmatprep.subr.mxu0 0.0
        %1436 = vmatpush1.msra.mxu0 0.0
        %1437 = vmatprep.subr.mxu0 0.0
        %1438 = vmatpush1.msra.mxu0 0.0
        %1439 = vmatprep.subr.mxu0 0.0
        %1440 = vmatpush1.msra.mxu0 0.0
        %1441 = vmatprep.subr.mxu0 0.0
        %1442 = vmatpush1.msra.mxu0 0.0
        %1443 = vmatprep.subr.mxu0 0.0
        %1444 = vmatpush1.msra.mxu0 0.0
        %1445 = vmatprep.mubr.f32.mxu0 0.0
        %v1446 = vand.u32 %v874, 4294901760
        %1447 = vmatmul.mubr.f32.gmra.mrb[0].mxu0 %v1446
        %v1448 = vpop.f32.mrb[0].mxu0
        %v1449 = vadd.f32 %v1330, %v1448
        %v1450 = vpop.f32.mrb[0].mxu0
        %1451 = vdwg.mxu0
        %1452 = vmatprep.subr.mxu0 0.0
        %v1453 = vand.u32 %v875, 4294901760
        %1454 = vmatpush1.msra.mxu0 %v1453
        %1455 = vmatprep.subr.mxu0 0.0
        %v1456 = vand.u32 %v876, 4294901760
        %1457 = vmatpush1.msra.mxu0 %v1456
        %1458 = vmatprep.subr.mxu0 0.0
        %v1459 = vand.u32 %v877, 4294901760
        %1460 = vmatpush1.msra.mxu0 %v1459
        %1461 = vmatprep.subr.mxu0 0.0
        %v1462 = vand.u32 %v878, 4294901760
        %1463 = vmatpush1.msra.mxu0 %v1462
        %1464 = vmatprep.subr.mxu0 0.0
        %v1465 = vand.u32 %v879, 4294901760
        %1466 = vmatpush1.msra.mxu0 %v1465
        %1467 = vmatprep.subr.mxu0 0.0
        %v1468 = vand.u32 %v880, 4294901760
        %1469 = vmatpush1.msra.mxu0 %v1468
        %1470 = vmatprep.subr.mxu0 0.0
        %v1471 = vand.u32 %v881, 4294901760
        %1472 = vmatpush1.msra.mxu0 %v1471
        %1473 = vmatprep.subr.mxu0 0.0
        %v1474 = vand.u32 %v882, 4294901760
        %1475 = vmatpush1.msra.mxu0 %v1474
        %1476 = vmatprep.subr.mxu0 0.0
        %v1477 = vand.u32 %v883, 4294901760
        %1478 = vmatpush1.msra.mxu0 %v1477
        %1479 = vmatprep.subr.mxu0 0.0
        %v1480 = vand.u32 %v884, 4294901760
        %1481 = vmatpush1.msra.mxu0 %v1480
        %1482 = vmatprep.subr.mxu0 0.0
        %v1483 = vand.u32 %v885, 4294901760
        %1484 = vmatpush1.msra.mxu0 %v1483
        %1485 = vmatprep.subr.mxu0 0.0
        %v1486 = vand.u32 %v886, 4294901760
        %1487 = vmatpush1.msra.mxu0 %v1486
        %1488 = vmatprep.subr.mxu0 0.0
        %v1489 = vand.u32 %v887, 4294901760
        %1490 = vmatpush1.msra.mxu0 %v1489
        %1491 = vmatprep.subr.mxu0 0.0
        %v1492 = vand.u32 %v888, 4294901760
        %1493 = vmatpush1.msra.mxu0 %v1492
        %1494 = vmatprep.subr.mxu0 0.0
        %v1495 = vand.u32 %v889, 4294901760
        %1496 = vmatpush1.msra.mxu0 %v1495
        %1497 = vmatprep.subr.mxu0 0.0
        %v1498 = vand.u32 %v890, 4294901760
        %1499 = vmatpush1.msra.mxu0 %v1498
        %1500 = vmatprep.subr.mxu0 0.0
        %1501 = vmatpush1.msra.mxu0 0.0
        %1502 = vmatprep.subr.mxu0 0.0
        %1503 = vmatpush1.msra.mxu0 0.0
        %1504 = vmatprep.subr.mxu0 0.0
        %1505 = vmatpush1.msra.mxu0 0.0
        %1506 = vmatprep.subr.mxu0 0.0
        %1507 = vmatpush1.msra.mxu0 0.0
        %1508 = vmatprep.subr.mxu0 0.0
        %1509 = vmatpush1.msra.mxu0 0.0
        %1510 = vmatprep.subr.mxu0 0.0
        %1511 = vmatpush1.msra.mxu0 0.0
        %1512 = vmatprep.subr.mxu0 0.0
        %1513 = vmatpush1.msra.mxu0 0.0
        %1514 = vmatprep.subr.mxu0 0.0
        %1515 = vmatpush1.msra.mxu0 0.0
        %1516 = vmatprep.subr.mxu0 0.0
        %1517 = vmatpush1.msra.mxu0 0.0
        %1518 = vmatprep.subr.mxu0 0.0
        %1519 = vmatpush1.msra.mxu0 0.0
        %1520 = vmatprep.subr.mxu0 0.0
        %1521 = vmatpush1.msra.mxu0 0.0
        %1522 = vmatprep.subr.mxu0 0.0
        %1523 = vmatpush1.msra.mxu0 0.0
        %1524 = vmatprep.subr.mxu0 0.0
        %1525 = vmatpush1.msra.mxu0 0.0
        %1526 = vmatprep.subr.mxu0 0.0
        %1527 = vmatpush1.msra.mxu0 0.0
        %1528 = vmatprep.subr.mxu0 0.0
        %1529 = vmatpush1.msra.mxu0 0.0
        %1530 = vmatprep.subr.mxu0 0.0
        %1531 = vmatpush1.msra.mxu0 0.0
        %1532 = vmatprep.mubr.f32.mxu0 0.0
        %v1533 = vand.u32 %v874, 4294901760
        %1534 = vmatmul.mubr.f32.gmra.mrb[0].mxu0 %v1533
        %v1535 = vpop.f32.mrb[0].mxu0
        %v1536 = vadd.f32 %v1449, %v1535
        %v1537 = vpop.f32.mrb[0].mxu0
        %1538 = vdwg.mxu0
        %v1539 = vld [vmem:[#allocation10] sm:$0xff]
        %v1540 = vld [vmem:[#allocation10 + $0x8] sm:$0xff]
        %v1541 = vld [vmem:[#allocation10 + $0x10] sm:$0xff]
        %v1542 = vld [vmem:[#allocation10 + $0x18] sm:$0xff]
        %v1543 = vld [vmem:[#allocation10 + $0x20] sm:$0xff]
        %v1544 = vld [vmem:[#allocation10 + $0x28] sm:$0xff]
        %v1545 = vld [vmem:[#allocation10 + $0x30] sm:$0xff]
        %v1546 = vld [vmem:[#allocation10 + $0x38] sm:$0xff]
        %v1547 = vld [vmem:[#allocation10 + $0x40] sm:$0xff]
        %v1548 = vld [vmem:[#allocation10 + $0x48] sm:$0xff]
        %v1549 = vld [vmem:[#allocation10 + $0x50] sm:$0xff]
        %v1550 = vld [vmem:[#allocation10 + $0x58] sm:$0xff]
        %v1551 = vld [vmem:[#allocation10 + $0x60] sm:$0xff]
        %v1552 = vld [vmem:[#allocation10 + $0x68] sm:$0xff]
        %v1553 = vld [vmem:[#allocation10 + $0x70] sm:$0xff]
        %v1554 = vld [vmem:[#allocation10 + $0x78] sm:$0xff]
        %v1555 = vld [vmem:[#allocation11] sm:$0x1]
        %v1557 = vlaneseq
        %v1558 = vshrl.u32 %v1557, 7
        %v1559 = vsub.s32 0, %v1558
        %v1560 = vrot.slane %v1555, %v1559
        %1562 = vmatprep.subr.mxu0 0.0
        %v1563 = vand.u32 %v1539, 4294901760
        %1564 = vmatpush1.msra.mxu0 %v1563
        %1565 = vmatprep.subr.mxu0 0.0
        %v1566 = vand.u32 %v1540, 4294901760
        %1567 = vmatpush1.msra.mxu0 %v1566
        %1568 = vmatprep.subr.mxu0 0.0
        %v1569 = vand.u32 %v1541, 4294901760
        %1570 = vmatpush1.msra.mxu0 %v1569
        %1571 = vmatprep.subr.mxu0 0.0
        %v1572 = vand.u32 %v1542, 4294901760
        %1573 = vmatpush1.msra.mxu0 %v1572
        %1574 = vmatprep.subr.mxu0 0.0
        %v1575 = vand.u32 %v1543, 4294901760
        %1576 = vmatpush1.msra.mxu0 %v1575
        %1577 = vmatprep.subr.mxu0 0.0
        %v1578 = vand.u32 %v1544, 4294901760
        %1579 = vmatpush1.msra.mxu0 %v1578
        %1580 = vmatprep.subr.mxu0 0.0
        %v1581 = vand.u32 %v1545, 4294901760
        %1582 = vmatpush1.msra.mxu0 %v1581
        %1583 = vmatprep.subr.mxu0 0.0
        %v1584 = vand.u32 %v1546, 4294901760
        %1585 = vmatpush1.msra.mxu0 %v1584
        %1586 = vmatprep.subr.mxu0 0.0
        %v1587 = vand.u32 %v1547, 4294901760
        %1588 = vmatpush1.msra.mxu0 %v1587
        %1589 = vmatprep.subr.mxu0 0.0
        %v1590 = vand.u32 %v1548, 4294901760
        %1591 = vmatpush1.msra.mxu0 %v1590
        %1592 = vmatprep.subr.mxu0 0.0
        %v1593 = vand.u32 %v1549, 4294901760
        %1594 = vmatpush1.msra.mxu0 %v1593
        %1595 = vmatprep.subr.mxu0 0.0
        %v1596 = vand.u32 %v1550, 4294901760
        %1597 = vmatpush1.msra.mxu0 %v1596
        %1598 = vmatprep.subr.mxu0 0.0
        %v1599 = vand.u32 %v1551, 4294901760
        %1600 = vmatpush1.msra.mxu0 %v1599
        %1601 = vmatprep.subr.mxu0 0.0
        %v1602 = vand.u32 %v1552, 4294901760
        %1603 = vmatpush1.msra.mxu0 %v1602
        %1604 = vmatprep.subr.mxu0 0.0
        %v1605 = vand.u32 %v1553, 4294901760
        %1606 = vmatpush1.msra.mxu0 %v1605
        %1607 = vmatprep.subr.mxu0 0.0
        %v1608 = vand.u32 %v1554, 4294901760
        %1609 = vmatpush1.msra.mxu0 %v1608
        %1610 = vmatprep.subr.mxu0 0.0
        %1611 = vmatpush1.msra.mxu0 0.0
        %1612 = vmatprep.subr.mxu0 0.0
        %1613 = vmatpush1.msra.mxu0 0.0
        %1614 = vmatprep.subr.mxu0 0.0
        %1615 = vmatpush1.msra.mxu0 0.0
        %1616 = vmatprep.subr.mxu0 0.0
        %1617 = vmatpush1.msra.mxu0 0.0
        %1618 = vmatprep.subr.mxu0 0.0
        %1619 = vmatpush1.msra.mxu0 0.0
        %1620 = vmatprep.subr.mxu0 0.0
        %1621 = vmatpush1.msra.mxu0 0.0
        %1622 = vmatprep.subr.mxu0 0.0
        %1623 = vmatpush1.msra.mxu0 0.0
        %1624 = vmatprep.subr.mxu0 0.0
        %1625 = vmatpush1.msra.mxu0 0.0
        %1626 = vmatprep.subr.mxu0 0.0
        %1627 = vmatpush1.msra.mxu0 0.0
        %1628 = vmatprep.subr.mxu0 0.0
        %1629 = vmatpush1.msra.mxu0 0.0
        %1630 = vmatprep.subr.mxu0 0.0
        %1631 = vmatpush1.msra.mxu0 0.0
        %1632 = vmatprep.subr.mxu0 0.0
        %1633 = vmatpush1.msra.mxu0 0.0
        %1634 = vmatprep.subr.mxu0 0.0
        %1635 = vmatpush1.msra.mxu0 0.0
        %1636 = vmatprep.subr.mxu0 0.0
        %1637 = vmatpush1.msra.mxu0 0.0
        %1638 = vmatprep.subr.mxu0 0.0
        %1639 = vmatpush1.msra.mxu0 0.0
        %1640 = vmatprep.subr.mxu0 0.0
        %1641 = vmatpush1.msra.mxu0 0.0
        %1642 = vmatprep.mubr.f32.mxu0 0.0
        %v1643 = vand.u32 %v874, 4294901760
        %v1644 = vsub.f32 %v874, %v1643
        %v1645 = vand.u32 %v1644, 4294901760
        %v1646 = vsub.f32 %v1644, %v1645
        %v1647 = vand.u32 %v1646, 4294901760
        %1648 = vmatmul.mubr.f32.gmra.mrb[0].mxu0 %v1647
        %v1649 = vpop.f32.mrb[0].mxu0
        %v1650 = vadd.f32 %v1560, %v1649
        %v1651 = vpop.f32.mrb[0].mxu0
        %1652 = vdwg.mxu0
        %1653 = vmatprep.subr.mxu0 0.0
        %v1654 = vand.u32 %v1539, 4294901760
        %v1655 = vsub.f32 %v1539, %v1654
        %v1656 = vand.u32 %v1655, 4294901760
        %v1657 = vsub.f32 %v1655, %v1656
        %v1658 = vand.u32 %v1657, 4294901760
        %1659 = vmatpush1.msra.mxu0 %v1658
        %1660 = vmatprep.subr.mxu0 0.0
        %v1661 = vand.u32 %v1540, 4294901760
        %v1662 = vsub.f32 %v1540, %v1661
        %v1663 = vand.u32 %v1662, 4294901760
        %v1664 = vsub.f32 %v1662, %v1663
        %v1665 = vand.u32 %v1664, 4294901760
        %1666 = vmatpush1.msra.mxu0 %v1665
        %1667 = vmatprep.subr.mxu0 0.0
        %v1668 = vand.u32 %v1541, 4294901760
        %v1669 = vsub.f32 %v1541, %v1668
        %v1670 = vand.u32 %v1669, 4294901760
        %v1671 = vsub.f32 %v1669, %v1670
        %v1672 = vand.u32 %v1671, 4294901760
        %1673 = vmatpush1.msra.mxu0 %v1672
        %1674 = vmatprep.subr.mxu0 0.0
        %v1675 = vand.u32 %v1542, 4294901760
        %v1676 = vsub.f32 %v1542, %v1675
        %v1677 = vand.u32 %v1676, 4294901760
        %v1678 = vsub.f32 %v1676, %v1677
        %v1679 = vand.u32 %v1678, 4294901760
        %1680 = vmatpush1.msra.mxu0 %v1679
        %1681 = vmatprep.subr.mxu0 0.0
        %v1682 = vand.u32 %v1543, 4294901760
        %v1683 = vsub.f32 %v1543, %v1682
        %v1684 = vand.u32 %v1683, 4294901760
        %v1685 = vsub.f32 %v1683, %v1684
        %v1686 = vand.u32 %v1685, 4294901760
        %1687 = vmatpush1.msra.mxu0 %v1686
        %1688 = vmatprep.subr.mxu0 0.0
        %v1689 = vand.u32 %v1544, 4294901760
        %v1690 = vsub.f32 %v1544, %v1689
        %v1691 = vand.u32 %v1690, 4294901760
        %v1692 = vsub.f32 %v1690, %v1691
        %v1693 = vand.u32 %v1692, 4294901760
        %1694 = vmatpush1.msra.mxu0 %v1693
        %1695 = vmatprep.subr.mxu0 0.0
        %v1696 = vand.u32 %v1545, 4294901760
        %v1697 = vsub.f32 %v1545, %v1696
        %v1698 = vand.u32 %v1697, 4294901760
        %v1699 = vsub.f32 %v1697, %v1698
        %v1700 = vand.u32 %v1699, 4294901760
        %1701 = vmatpush1.msra.mxu0 %v1700
        %1702 = vmatprep.subr.mxu0 0.0
        %v1703 = vand.u32 %v1546, 4294901760
        %v1704 = vsub.f32 %v1546, %v1703
        %v1705 = vand.u32 %v1704, 4294901760
        %v1706 = vsub.f32 %v1704, %v1705
        %v1707 = vand.u32 %v1706, 4294901760
        %1708 = vmatpush1.msra.mxu0 %v1707
        %1709 = vmatprep.subr.mxu0 0.0
        %v1710 = vand.u32 %v1547, 4294901760
        %v1711 = vsub.f32 %v1547, %v1710
        %v1712 = vand.u32 %v1711, 4294901760
        %v1713 = vsub.f32 %v1711, %v1712
        %v1714 = vand.u32 %v1713, 4294901760
        %1715 = vmatpush1.msra.mxu0 %v1714
        %1716 = vmatprep.subr.mxu0 0.0
        %v1717 = vand.u32 %v1548, 4294901760
        %v1718 = vsub.f32 %v1548, %v1717
        %v1719 = vand.u32 %v1718, 4294901760
        %v1720 = vsub.f32 %v1718, %v1719
        %v1721 = vand.u32 %v1720, 4294901760
        %1722 = vmatpush1.msra.mxu0 %v1721
        %1723 = vmatprep.subr.mxu0 0.0
        %v1724 = vand.u32 %v1549, 4294901760
        %v1725 = vsub.f32 %v1549, %v1724
        %v1726 = vand.u32 %v1725, 4294901760
        %v1727 = vsub.f32 %v1725, %v1726
        %v1728 = vand.u32 %v1727, 4294901760
        %1729 = vmatpush1.msra.mxu0 %v1728
        %1730 = vmatprep.subr.mxu0 0.0
        %v1731 = vand.u32 %v1550, 4294901760
        %v1732 = vsub.f32 %v1550, %v1731
        %v1733 = vand.u32 %v1732, 4294901760
        %v1734 = vsub.f32 %v1732, %v1733
        %v1735 = vand.u32 %v1734, 4294901760
        %1736 = vmatpush1.msra.mxu0 %v1735
        %1737 = vmatprep.subr.mxu0 0.0
        %v1738 = vand.u32 %v1551, 4294901760
        %v1739 = vsub.f32 %v1551, %v1738
        %v1740 = vand.u32 %v1739, 4294901760
        %v1741 = vsub.f32 %v1739, %v1740
        %v1742 = vand.u32 %v1741, 4294901760
        %1743 = vmatpush1.msra.mxu0 %v1742
        %1744 = vmatprep.subr.mxu0 0.0
        %v1745 = vand.u32 %v1552, 4294901760
        %v1746 = vsub.f32 %v1552, %v1745
        %v1747 = vand.u32 %v1746, 4294901760
        %v1748 = vsub.f32 %v1746, %v1747
        %v1749 = vand.u32 %v1748, 4294901760
        %1750 = vmatpush1.msra.mxu0 %v1749
        %1751 = vmatprep.subr.mxu0 0.0
        %v1752 = vand.u32 %v1553, 4294901760
        %v1753 = vsub.f32 %v1553, %v1752
        %v1754 = vand.u32 %v1753, 4294901760
        %v1755 = vsub.f32 %v1753, %v1754
        %v1756 = vand.u32 %v1755, 4294901760
        %1757 = vmatpush1.msra.mxu0 %v1756
        %1758 = vmatprep.subr.mxu0 0.0
        %v1759 = vand.u32 %v1554, 4294901760
        %v1760 = vsub.f32 %v1554, %v1759
        %v1761 = vand.u32 %v1760, 4294901760
        %v1762 = vsub.f32 %v1760, %v1761
        %v1763 = vand.u32 %v1762, 4294901760
        %1764 = vmatpush1.msra.mxu0 %v1763
        %1765 = vmatprep.subr.mxu0 0.0
        %1766 = vmatpush1.msra.mxu0 0.0
        %1767 = vmatprep.subr.mxu0 0.0
        %1768 = vmatpush1.msra.mxu0 0.0
        %1769 = vmatprep.subr.mxu0 0.0
        %1770 = vmatpush1.msra.mxu0 0.0
        %1771 = vmatprep.subr.mxu0 0.0
        %1772 = vmatpush1.msra.mxu0 0.0
        %1773 = vmatprep.subr.mxu0 0.0
        %1774 = vmatpush1.msra.mxu0 0.0
        %1775 = vmatprep.subr.mxu0 0.0
        %1776 = vmatpush1.msra.mxu0 0.0
        %1777 = vmatprep.subr.mxu0 0.0
        %1778 = vmatpush1.msra.mxu0 0.0
        %1779 = vmatprep.subr.mxu0 0.0
        %1780 = vmatpush1.msra.mxu0 0.0
        %1781 = vmatprep.subr.mxu0 0.0
        %1782 = vmatpush1.msra.mxu0 0.0
        %1783 = vmatprep.subr.mxu0 0.0
        %1784 = vmatpush1.msra.mxu0 0.0
        %1785 = vmatprep.subr.mxu0 0.0
        %1786 = vmatpush1.msra.mxu0 0.0
        %1787 = vmatprep.subr.mxu0 0.0
        %1788 = vmatpush1.msra.mxu0 0.0
        %1789 = vmatprep.subr.mxu0 0.0
        %1790 = vmatpush1.msra.mxu0 0.0
        %1791 = vmatprep.subr.mxu0 0.0
        %1792 = vmatpush1.msra.mxu0 0.0
        %1793 = vmatprep.subr.mxu0 0.0
        %1794 = vmatpush1.msra.mxu0 0.0
        %1795 = vmatprep.subr.mxu0 0.0
        %1796 = vmatpush1.msra.mxu0 0.0
        %1797 = vmatprep.mubr.f32.mxu0 0.0
        %v1798 = vand.u32 %v874, 4294901760
        %1799 = vmatmul.mubr.f32.gmra.mrb[0].mxu0 %v1798
        %v1800 = vpop.f32.mrb[0].mxu0
        %v1801 = vadd.f32 %v1650, %v1800
        %v1802 = vpop.f32.mrb[0].mxu0
        %1803 = vdwg.mxu0
        %1804 = vmatprep.subr.mxu0 0.0
        %v1805 = vand.u32 %v1539, 4294901760
        %v1806 = vsub.f32 %v1539, %v1805
        %1807 = vmatpush1.msra.mxu0 %v1806
        %1808 = vmatprep.subr.mxu0 0.0
        %v1809 = vand.u32 %v1540, 4294901760
        %v1810 = vsub.f32 %v1540, %v1809
        %1811 = vmatpush1.msra.mxu0 %v1810
        %1812 = vmatprep.subr.mxu0 0.0
        %v1813 = vand.u32 %v1541, 4294901760
        %v1814 = vsub.f32 %v1541, %v1813
        %1815 = vmatpush1.msra.mxu0 %v1814
        %1816 = vmatprep.subr.mxu0 0.0
        %v1817 = vand.u32 %v1542, 4294901760
        %v1818 = vsub.f32 %v1542, %v1817
        %1819 = vmatpush1.msra.mxu0 %v1818
        %1820 = vmatprep.subr.mxu0 0.0
        %v1821 = vand.u32 %v1543, 4294901760
        %v1822 = vsub.f32 %v1543, %v1821
        %1823 = vmatpush1.msra.mxu0 %v1822
        %1824 = vmatprep.subr.mxu0 0.0
        %v1825 = vand.u32 %v1544, 4294901760
        %v1826 = vsub.f32 %v1544, %v1825
        %1827 = vmatpush1.msra.mxu0 %v1826
        %1828 = vmatprep.subr.mxu0 0.0
        %v1829 = vand.u32 %v1545, 4294901760
        %v1830 = vsub.f32 %v1545, %v1829
        %1831 = vmatpush1.msra.mxu0 %v1830
        %1832 = vmatprep.subr.mxu0 0.0
        %v1833 = vand.u32 %v1546, 4294901760
        %v1834 = vsub.f32 %v1546, %v1833
        %1835 = vmatpush1.msra.mxu0 %v1834
        %1836 = vmatprep.subr.mxu0 0.0
        %v1837 = vand.u32 %v1547, 4294901760
        %v1838 = vsub.f32 %v1547, %v1837
        %1839 = vmatpush1.msra.mxu0 %v1838
        %1840 = vmatprep.subr.mxu0 0.0
        %v1841 = vand.u32 %v1548, 4294901760
        %v1842 = vsub.f32 %v1548, %v1841
        %1843 = vmatpush1.msra.mxu0 %v1842
        %1844 = vmatprep.subr.mxu0 0.0
        %v1845 = vand.u32 %v1549, 4294901760
        %v1846 = vsub.f32 %v1549, %v1845
        %1847 = vmatpush1.msra.mxu0 %v1846
        %1848 = vmatprep.subr.mxu0 0.0
        %v1849 = vand.u32 %v1550, 4294901760
        %v1850 = vsub.f32 %v1550, %v1849
        %1851 = vmatpush1.msra.mxu0 %v1850
        %1852 = vmatprep.subr.mxu0 0.0
        %v1853 = vand.u32 %v1551, 4294901760
        %v1854 = vsub.f32 %v1551, %v1853
        %1855 = vmatpush1.msra.mxu0 %v1854
        %1856 = vmatprep.subr.mxu0 0.0
        %v1857 = vand.u32 %v1552, 4294901760
        %v1858 = vsub.f32 %v1552, %v1857
        %1859 = vmatpush1.msra.mxu0 %v1858
        %1860 = vmatprep.subr.mxu0 0.0
        %v1861 = vand.u32 %v1553, 4294901760
        %v1862 = vsub.f32 %v1553, %v1861
        %1863 = vmatpush1.msra.mxu0 %v1862
        %1864 = vmatprep.subr.mxu0 0.0
        %v1865 = vand.u32 %v1554, 4294901760
        %v1866 = vsub.f32 %v1554, %v1865
        %1867 = vmatpush1.msra.mxu0 %v1866
        %1868 = vmatprep.subr.mxu0 0.0
        %1869 = vmatpush1.msra.mxu0 0.0
        %1870 = vmatprep.subr.mxu0 0.0
        %1871 = vmatpush1.msra.mxu0 0.0
        %1872 = vmatprep.subr.mxu0 0.0
        %1873 = vmatpush1.msra.mxu0 0.0
        %1874 = vmatprep.subr.mxu0 0.0
        %1875 = vmatpush1.msra.mxu0 0.0
        %1876 = vmatprep.subr.mxu0 0.0
        %1877 = vmatpush1.msra.mxu0 0.0
        %1878 = vmatprep.subr.mxu0 0.0
        %1879 = vmatpush1.msra.mxu0 0.0
        %1880 = vmatprep.subr.mxu0 0.0
        %1881 = vmatpush1.msra.mxu0 0.0
        %1882 = vmatprep.subr.mxu0 0.0
        %1883 = vmatpush1.msra.mxu0 0.0
        %1884 = vmatprep.subr.mxu0 0.0
        %1885 = vmatpush1.msra.mxu0 0.0
        %1886 = vmatprep.subr.mxu0 0.0
        %1887 = vmatpush1.msra.mxu0 0.0
        %1888 = vmatprep.subr.mxu0 0.0
        %1889 = vmatpush1.msra.mxu0 0.0
        %1890 = vmatprep.subr.mxu0 0.0
        %1891 = vmatpush1.msra.mxu0 0.0
        %1892 = vmatprep.subr.mxu0 0.0
        %1893 = vmatpush1.msra.mxu0 0.0
        %1894 = vmatprep.subr.mxu0 0.0
        %1895 = vmatpush1.msra.mxu0 0.0
        %1896 = vmatprep.subr.mxu0 0.0
        %1897 = vmatpush1.msra.mxu0 0.0
        %1898 = vmatprep.subr.mxu0 0.0
        %1899 = vmatpush1.msra.mxu0 0.0
        %1900 = vmatprep.mubr.f32.mxu0 0.0
        %v1901 = vand.u32 %v874, 4294901760
        %v1902 = vsub.f32 %v874, %v1901
        %1903 = vmatmul.mubr.f32.gmra.mrb[0].mxu0 %v1902
        %v1904 = vpop.f32.mrb[0].mxu0
        %v1905 = vadd.f32 %v1801, %v1904
        %v1906 = vpop.f32.mrb[0].mxu0
        %1907 = vdwg.mxu0
        %1908 = vmatprep.subr.mxu0 0.0
        %v1909 = vand.u32 %v1539, 4294901760
        %1910 = vmatpush1.msra.mxu0 %v1909
        %1911 = vmatprep.subr.mxu0 0.0
        %v1912 = vand.u32 %v1540, 4294901760
        %1913 = vmatpush1.msra.mxu0 %v1912
        %1914 = vmatprep.subr.mxu0 0.0
        %v1915 = vand.u32 %v1541, 4294901760
        %1916 = vmatpush1.msra.mxu0 %v1915
        %1917 = vmatprep.subr.mxu0 0.0
        %v1918 = vand.u32 %v1542, 4294901760
        %1919 = vmatpush1.msra.mxu0 %v1918
        %1920 = vmatprep.subr.mxu0 0.0
        %v1921 = vand.u32 %v1543, 4294901760
        %1922 = vmatpush1.msra.mxu0 %v1921
        %1923 = vmatprep.subr.mxu0 0.0
        %v1924 = vand.u32 %v1544, 4294901760
        %1925 = vmatpush1.msra.mxu0 %v1924
        %1926 = vmatprep.subr.mxu0 0.0
        %v1927 = vand.u32 %v1545, 4294901760
        %1928 = vmatpush1.msra.mxu0 %v1927
        %1929 = vmatprep.subr.mxu0 0.0
        %v1930 = vand.u32 %v1546, 4294901760
        %1931 = vmatpush1.msra.mxu0 %v1930
        %1932 = vmatprep.subr.mxu0 0.0
        %v1933 = vand.u32 %v1547, 4294901760
        %1934 = vmatpush1.msra.mxu0 %v1933
        %1935 = vmatprep.subr.mxu0 0.0
        %v1936 = vand.u32 %v1548, 4294901760
        %1937 = vmatpush1.msra.mxu0 %v1936
        %1938 = vmatprep.subr.mxu0 0.0
        %v1939 = vand.u32 %v1549, 4294901760
        %1940 = vmatpush1.msra.mxu0 %v1939
        %1941 = vmatprep.subr.mxu0 0.0
        %v1942 = vand.u32 %v1550, 4294901760
        %1943 = vmatpush1.msra.mxu0 %v1942
        %1944 = vmatprep.subr.mxu0 0.0
        %v1945 = vand.u32 %v1551, 4294901760
        %1946 = vmatpush1.msra.mxu0 %v1945
        %1947 = vmatprep.subr.mxu0 0.0
        %v1948 = vand.u32 %v1552, 4294901760
        %1949 = vmatpush1.msra.mxu0 %v1948
        %1950 = vmatprep.subr.mxu0 0.0
        %v1951 = vand.u32 %v1553, 4294901760
        %1952 = vmatpush1.msra.mxu0 %v1951
        %1953 = vmatprep.subr.mxu0 0.0
        %v1954 = vand.u32 %v1554, 4294901760
        %1955 = vmatpush1.msra.mxu0 %v1954
        %1956 = vmatprep.subr.mxu0 0.0
        %1957 = vmatpush1.msra.mxu0 0.0
        %1958 = vmatprep.subr.mxu0 0.0
        %1959 = vmatpush1.msra.mxu0 0.0
        %1960 = vmatprep.subr.mxu0 0.0
        %1961 = vmatpush1.msra.mxu0 0.0
        %1962 = vmatprep.subr.mxu0 0.0
        %1963 = vmatpush1.msra.mxu0 0.0
        %1964 = vmatprep.subr.mxu0 0.0
        %1965 = vmatpush1.msra.mxu0 0.0
        %1966 = vmatprep.subr.mxu0 0.0
        %1967 = vmatpush1.msra.mxu0 0.0
        %1968 = vmatprep.subr.mxu0 0.0
        %1969 = vmatpush1.msra.mxu0 0.0
        %1970 = vmatprep.subr.mxu0 0.0
        %1971 = vmatpush1.msra.mxu0 0.0
        %1972 = vmatprep.subr.mxu0 0.0
        %1973 = vmatpush1.msra.mxu0 0.0
        %1974 = vmatprep.subr.mxu0 0.0
        %1975 = vmatpush1.msra.mxu0 0.0
        %1976 = vmatprep.subr.mxu0 0.0
        %1977 = vmatpush1.msra.mxu0 0.0
        %1978 = vmatprep.subr.mxu0 0.0
        %1979 = vmatpush1.msra.mxu0 0.0
        %1980 = vmatprep.subr.mxu0 0.0
        %1981 = vmatpush1.msra.mxu0 0.0
        %1982 = vmatprep.subr.mxu0 0.0
        %1983 = vmatpush1.msra.mxu0 0.0
        %1984 = vmatprep.subr.mxu0 0.0
        %1985 = vmatpush1.msra.mxu0 0.0
        %1986 = vmatprep.subr.mxu0 0.0
        %1987 = vmatpush1.msra.mxu0 0.0
        %1988 = vmatprep.mubr.f32.mxu0 0.0
        %v1989 = vand.u32 %v874, 4294901760
        %v1990 = vsub.f32 %v874, %v1989
        %v1991 = vand.u32 %v1990, 4294901760
        %1992 = vmatmul.mubr.f32.gmra.mrb[0].mxu0 %v1991
        %v1993 = vpop.f32.mrb[0].mxu0
        %v1994 = vadd.f32 %v1905, %v1993
        %v1995 = vpop.f32.mrb[0].mxu0
        %1996 = vdwg.mxu0
        %1997 = vmatprep.subr.mxu0 0.0
        %v1998 = vand.u32 %v1539, 4294901760
        %v1999 = vsub.f32 %v1539, %v1998
        %v2000 = vand.u32 %v1999, 4294901760
        %2001 = vmatpush1.msra.mxu0 %v2000
        %2002 = vmatprep.subr.mxu0 0.0
        %v2003 = vand.u32 %v1540, 4294901760
        %v2004 = vsub.f32 %v1540, %v2003
        %v2005 = vand.u32 %v2004, 4294901760
        %2006 = vmatpush1.msra.mxu0 %v2005
        %2007 = vmatprep.subr.mxu0 0.0
        %v2008 = vand.u32 %v1541, 4294901760
        %v2009 = vsub.f32 %v1541, %v2008
        %v2010 = vand.u32 %v2009, 4294901760
        %2011 = vmatpush1.msra.mxu0 %v2010
        %2012 = vmatprep.subr.mxu0 0.0
        %v2013 = vand.u32 %v1542, 4294901760
        %v2014 = vsub.f32 %v1542, %v2013
        %v2015 = vand.u32 %v2014, 4294901760
        %2016 = vmatpush1.msra.mxu0 %v2015
        %2017 = vmatprep.subr.mxu0 0.0
        %v2018 = vand.u32 %v1543, 4294901760
        %v2019 = vsub.f32 %v1543, %v2018
        %v2020 = vand.u32 %v2019, 4294901760
        %2021 = vmatpush1.msra.mxu0 %v2020
        %2022 = vmatprep.subr.mxu0 0.0
        %v2023 = vand.u32 %v1544, 4294901760
        %v2024 = vsub.f32 %v1544, %v2023
        %v2025 = vand.u32 %v2024, 4294901760
        %2026 = vmatpush1.msra.mxu0 %v2025
        %2027 = vmatprep.subr.mxu0 0.0
        %v2028 = vand.u32 %v1545, 4294901760
        %v2029 = vsub.f32 %v1545, %v2028
        %v2030 = vand.u32 %v2029, 4294901760
        %2031 = vmatpush1.msra.mxu0 %v2030
        %2032 = vmatprep.subr.mxu0 0.0
        %v2033 = vand.u32 %v1546, 4294901760
        %v2034 = vsub.f32 %v1546, %v2033
        %v2035 = vand.u32 %v2034, 4294901760
        %2036 = vmatpush1.msra.mxu0 %v2035
        %2037 = vmatprep.subr.mxu0 0.0
        %v2038 = vand.u32 %v1547, 4294901760
        %v2039 = vsub.f32 %v1547, %v2038
        %v2040 = vand.u32 %v2039, 4294901760
        %2041 = vmatpush1.msra.mxu0 %v2040
        %2042 = vmatprep.subr.mxu0 0.0
        %v2043 = vand.u32 %v1548, 4294901760
        %v2044 = vsub.f32 %v1548, %v2043
        %v2045 = vand.u32 %v2044, 4294901760
        %2046 = vmatpush1.msra.mxu0 %v2045
        %2047 = vmatprep.subr.mxu0 0.0
        %v2048 = vand.u32 %v1549, 4294901760
        %v2049 = vsub.f32 %v1549, %v2048
        %v2050 = vand.u32 %v2049, 4294901760
        %2051 = vmatpush1.msra.mxu0 %v2050
        %2052 = vmatprep.subr.mxu0 0.0
        %v2053 = vand.u32 %v1550, 4294901760
        %v2054 = vsub.f32 %v1550, %v2053
        %v2055 = vand.u32 %v2054, 4294901760
        %2056 = vmatpush1.msra.mxu0 %v2055
        %2057 = vmatprep.subr.mxu0 0.0
        %v2058 = vand.u32 %v1551, 4294901760
        %v2059 = vsub.f32 %v1551, %v2058
        %v2060 = vand.u32 %v2059, 4294901760
        %2061 = vmatpush1.msra.mxu0 %v2060
        %2062 = vmatprep.subr.mxu0 0.0
        %v2063 = vand.u32 %v1552, 4294901760
        %v2064 = vsub.f32 %v1552, %v2063
        %v2065 = vand.u32 %v2064, 4294901760
        %2066 = vmatpush1.msra.mxu0 %v2065
        %2067 = vmatprep.subr.mxu0 0.0
        %v2068 = vand.u32 %v1553, 4294901760
        %v2069 = vsub.f32 %v1553, %v2068
        %v2070 = vand.u32 %v2069, 4294901760
        %2071 = vmatpush1.msra.mxu0 %v2070
        %2072 = vmatprep.subr.mxu0 0.0
        %v2073 = vand.u32 %v1554, 4294901760
        %v2074 = vsub.f32 %v1554, %v2073
        %v2075 = vand.u32 %v2074, 4294901760
        %2076 = vmatpush1.msra.mxu0 %v2075
        %2077 = vmatprep.subr.mxu0 0.0
        %2078 = vmatpush1.msra.mxu0 0.0
        %2079 = vmatprep.subr.mxu0 0.0
        %2080 = vmatpush1.msra.mxu0 0.0
        %2081 = vmatprep.subr.mxu0 0.0
        %2082 = vmatpush1.msra.mxu0 0.0
        %2083 = vmatprep.subr.mxu0 0.0
        %2084 = vmatpush1.msra.mxu0 0.0
        %2085 = vmatprep.subr.mxu0 0.0
        %2086 = vmatpush1.msra.mxu0 0.0
        %2087 = vmatprep.subr.mxu0 0.0
        %2088 = vmatpush1.msra.mxu0 0.0
        %2089 = vmatprep.subr.mxu0 0.0
        %2090 = vmatpush1.msra.mxu0 0.0
        %2091 = vmatprep.subr.mxu0 0.0
        %2092 = vmatpush1.msra.mxu0 0.0
        %2093 = vmatprep.subr.mxu0 0.0
        %2094 = vmatpush1.msra.mxu0 0.0
        %2095 = vmatprep.subr.mxu0 0.0
        %2096 = vmatpush1.msra.mxu0 0.0
        %2097 = vmatprep.subr.mxu0 0.0
        %2098 = vmatpush1.msra.mxu0 0.0
        %2099 = vmatprep.subr.mxu0 0.0
        %2100 = vmatpush1.msra.mxu0 0.0
        %2101 = vmatprep.subr.mxu0 0.0
        %2102 = vmatpush1.msra.mxu0 0.0
        %2103 = vmatprep.subr.mxu0 0.0
        %2104 = vmatpush1.msra.mxu0 0.0
        %2105 = vmatprep.subr.mxu0 0.0
        %2106 = vmatpush1.msra.mxu0 0.0
        %2107 = vmatprep.subr.mxu0 0.0
        %2108 = vmatpush1.msra.mxu0 0.0
        %2109 = vmatprep.mubr.f32.mxu0 0.0
        %v2110 = vand.u32 %v874, 4294901760
        %2111 = vmatmul.mubr.f32.gmra.mrb[0].mxu0 %v2110
        %v2112 = vpop.f32.mrb[0].mxu0
        %v2113 = vadd.f32 %v1994, %v2112
        %v2114 = vpop.f32.mrb[0].mxu0
        %2115 = vdwg.mxu0
        %2116 = vmatprep.subr.mxu0 0.0
        %v2117 = vand.u32 %v1539, 4294901760
        %2118 = vmatpush1.msra.mxu0 %v2117
        %2119 = vmatprep.subr.mxu0 0.0
        %v2120 = vand.u32 %v1540, 4294901760
        %2121 = vmatpush1.msra.mxu0 %v2120
        %2122 = vmatprep.subr.mxu0 0.0
        %v2123 = vand.u32 %v1541, 4294901760
        %2124 = vmatpush1.msra.mxu0 %v2123
        %2125 = vmatprep.subr.mxu0 0.0
        %v2126 = vand.u32 %v1542, 4294901760
        %2127 = vmatpush1.msra.mxu0 %v2126
        %2128 = vmatprep.subr.mxu0 0.0
        %v2129 = vand.u32 %v1543, 4294901760
        %2130 = vmatpush1.msra.mxu0 %v2129
        %2131 = vmatprep.subr.mxu0 0.0
        %v2132 = vand.u32 %v1544, 4294901760
        %2133 = vmatpush1.msra.mxu0 %v2132
        %2134 = vmatprep.subr.mxu0 0.0
        %v2135 = vand.u32 %v1545, 4294901760
        %2136 = vmatpush1.msra.mxu0 %v2135
        %2137 = vmatprep.subr.mxu0 0.0
        %v2138 = vand.u32 %v1546, 4294901760
        %2139 = vmatpush1.msra.mxu0 %v2138
        %2140 = vmatprep.subr.mxu0 0.0
        %v2141 = vand.u32 %v1547, 4294901760
        %2142 = vmatpush1.msra.mxu0 %v2141
        %2143 = vmatprep.subr.mxu0 0.0
        %v2144 = vand.u32 %v1548, 4294901760
        %2145 = vmatpush1.msra.mxu0 %v2144
        %2146 = vmatprep.subr.mxu0 0.0
        %v2147 = vand.u32 %v1549, 4294901760
        %2148 = vmatpush1.msra.mxu0 %v2147
        %2149 = vmatprep.subr.mxu0 0.0
        %v2150 = vand.u32 %v1550, 4294901760
        %2151 = vmatpush1.msra.mxu0 %v2150
        %2152 = vmatprep.subr.mxu0 0.0
        %v2153 = vand.u32 %v1551, 4294901760
        %2154 = vmatpush1.msra.mxu0 %v2153
        %2155 = vmatprep.subr.mxu0 0.0
        %v2156 = vand.u32 %v1552, 4294901760
        %2157 = vmatpush1.msra.mxu0 %v2156
        %2158 = vmatprep.subr.mxu0 0.0
        %v2159 = vand.u32 %v1553, 4294901760
        %2160 = vmatpush1.msra.mxu0 %v2159
        %2161 = vmatprep.subr.mxu0 0.0
        %v2162 = vand.u32 %v1554, 4294901760
        %2163 = vmatpush1.msra.mxu0 %v2162
        %2164 = vmatprep.subr.mxu0 0.0
        %2165 = vmatpush1.msra.mxu0 0.0
        %2166 = vmatprep.subr.mxu0 0.0
        %2167 = vmatpush1.msra.mxu0 0.0
        %2168 = vmatprep.subr.mxu0 0.0
        %2169 = vmatpush1.msra.mxu0 0.0
        %2170 = vmatprep.subr.mxu0 0.0
        %2171 = vmatpush1.msra.mxu0 0.0
        %2172 = vmatprep.subr.mxu0 0.0
        %2173 = vmatpush1.msra.mxu0 0.0
        %2174 = vmatprep.subr.mxu0 0.0
        %2175 = vmatpush1.msra.mxu0 0.0
        %2176 = vmatprep.subr.mxu0 0.0
        %2177 = vmatpush1.msra.mxu0 0.0
        %2178 = vmatprep.subr.mxu0 0.0
        %2179 = vmatpush1.msra.mxu0 0.0
        %2180 = vmatprep.subr.mxu0 0.0
        %2181 = vmatpush1.msra.mxu0 0.0
        %2182 = vmatprep.subr.mxu0 0.0
        %2183 = vmatpush1.msra.mxu0 0.0
        %2184 = vmatprep.subr.mxu0 0.0
        %2185 = vmatpush1.msra.mxu0 0.0
        %2186 = vmatprep.subr.mxu0 0.0
        %2187 = vmatpush1.msra.mxu0 0.0
        %2188 = vmatprep.subr.mxu0 0.0
        %2189 = vmatpush1.msra.mxu0 0.0
        %2190 = vmatprep.subr.mxu0 0.0
        %2191 = vmatpush1.msra.mxu0 0.0
        %2192 = vmatprep.subr.mxu0 0.0
        %2193 = vmatpush1.msra.mxu0 0.0
        %2194 = vmatprep.subr.mxu0 0.0
        %2195 = vmatpush1.msra.mxu0 0.0
        %2196 = vmatprep.mubr.f32.mxu0 0.0
        %v2197 = vand.u32 %v874, 4294901760
        %2198 = vmatmul.mubr.f32.gmra.mrb[0].mxu0 %v2197
        %v2199 = vpop.f32.mrb[0].mxu0
        %v2200 = vadd.f32 %v2113, %v2199
        %v2201 = vpop.f32.mrb[0].mxu0
        %2202 = vdwg.mxu0
        %v2203 = vld [vmem:[#allocation13] sm:$0xff]
        %v2204 = vld [vmem:[#allocation13 + $0x8] sm:$0xff]
        %v2205 = vld [vmem:[#allocation13 + $0x10] sm:$0xff]
        %v2206 = vld [vmem:[#allocation13 + $0x18] sm:$0xff]
        %v2207 = vld [vmem:[#allocation13 + $0x20] sm:$0xff]
        %v2208 = vld [vmem:[#allocation13 + $0x28] sm:$0xff]
        %v2209 = vld [vmem:[#allocation13 + $0x30] sm:$0xff]
        %v2210 = vld [vmem:[#allocation13 + $0x38] sm:$0xff]
        %v2211 = vld [vmem:[#allocation13 + $0x40] sm:$0xff]
        %v2212 = vld [vmem:[#allocation13 + $0x48] sm:$0xff]
        %v2213 = vld [vmem:[#allocation13 + $0x50] sm:$0xff]
        %v2214 = vld [vmem:[#allocation13 + $0x58] sm:$0xff]
        %v2215 = vld [vmem:[#allocation13 + $0x60] sm:$0xff]
        %v2216 = vld [vmem:[#allocation13 + $0x68] sm:$0xff]
        %v2217 = vld [vmem:[#allocation13 + $0x70] sm:$0xff]
        %v2218 = vld [vmem:[#allocation13 + $0x78] sm:$0xff]
        %v2219 = vld [vmem:[#allocation14] sm:$0x1]
        %v2221 = vlaneseq
        %v2222 = vshrl.u32 %v2221, 7
        %v2223 = vsub.s32 0, %v2222
        %v2224 = vrot.slane %v2219, %v2223
        %2226 = vmatprep.subr.mxu0 0.0
        %v2227 = vand.u32 %v2203, 4294901760
        %2228 = vmatpush1.msra.mxu0 %v2227
        %2229 = vmatprep.subr.mxu0 0.0
        %v2230 = vand.u32 %v2204, 4294901760
        %2231 = vmatpush1.msra.mxu0 %v2230
        %2232 = vmatprep.subr.mxu0 0.0
        %v2233 = vand.u32 %v2205, 4294901760
        %2234 = vmatpush1.msra.mxu0 %v2233
        %2235 = vmatprep.subr.mxu0 0.0
        %v2236 = vand.u32 %v2206, 4294901760
        %2237 = vmatpush1.msra.mxu0 %v2236
        %2238 = vmatprep.subr.mxu0 0.0
        %v2239 = vand.u32 %v2207, 4294901760
        %2240 = vmatpush1.msra.mxu0 %v2239
        %2241 = vmatprep.subr.mxu0 0.0
        %v2242 = vand.u32 %v2208, 4294901760
        %2243 = vmatpush1.msra.mxu0 %v2242
        %2244 = vmatprep.subr.mxu0 0.0
        %v2245 = vand.u32 %v2209, 4294901760
        %2246 = vmatpush1.msra.mxu0 %v2245
        %2247 = vmatprep.subr.mxu0 0.0
        %v2248 = vand.u32 %v2210, 4294901760
        %2249 = vmatpush1.msra.mxu0 %v2248
        %2250 = vmatprep.subr.mxu0 0.0
        %v2251 = vand.u32 %v2211, 4294901760
        %2252 = vmatpush1.msra.mxu0 %v2251
        %2253 = vmatprep.subr.mxu0 0.0
        %v2254 = vand.u32 %v2212, 4294901760
        %2255 = vmatpush1.msra.mxu0 %v2254
        %2256 = vmatprep.subr.mxu0 0.0
        %v2257 = vand.u32 %v2213, 4294901760
        %2258 = vmatpush1.msra.mxu0 %v2257
        %2259 = vmatprep.subr.mxu0 0.0
        %v2260 = vand.u32 %v2214, 4294901760
        %2261 = vmatpush1.msra.mxu0 %v2260
        %2262 = vmatprep.subr.mxu0 0.0
        %v2263 = vand.u32 %v2215, 4294901760
        %2264 = vmatpush1.msra.mxu0 %v2263
        %2265 = vmatprep.subr.mxu0 0.0
        %v2266 = vand.u32 %v2216, 4294901760
        %2267 = vmatpush1.msra.mxu0 %v2266
        %2268 = vmatprep.subr.mxu0 0.0
        %v2269 = vand.u32 %v2217, 4294901760
        %2270 = vmatpush1.msra.mxu0 %v2269
        %2271 = vmatprep.subr.mxu0 0.0
        %v2272 = vand.u32 %v2218, 4294901760
        %2273 = vmatpush1.msra.mxu0 %v2272
        %2274 = vmatprep.subr.mxu0 0.0
        %2275 = vmatpush1.msra.mxu0 0.0
        %2276 = vmatprep.subr.mxu0 0.0
        %2277 = vmatpush1.msra.mxu0 0.0
        %2278 = vmatprep.subr.mxu0 0.0
        %2279 = vmatpush1.msra.mxu0 0.0
        %2280 = vmatprep.subr.mxu0 0.0
        %2281 = vmatpush1.msra.mxu0 0.0
        %2282 = vmatprep.subr.mxu0 0.0
        %2283 = vmatpush1.msra.mxu0 0.0
        %2284 = vmatprep.subr.mxu0 0.0
        %2285 = vmatpush1.msra.mxu0 0.0
        %2286 = vmatprep.subr.mxu0 0.0
        %2287 = vmatpush1.msra.mxu0 0.0
        %2288 = vmatprep.subr.mxu0 0.0
        %2289 = vmatpush1.msra.mxu0 0.0
        %2290 = vmatprep.subr.mxu0 0.0
        %2291 = vmatpush1.msra.mxu0 0.0
        %2292 = vmatprep.subr.mxu0 0.0
        %2293 = vmatpush1.msra.mxu0 0.0
        %2294 = vmatprep.subr.mxu0 0.0
        %2295 = vmatpush1.msra.mxu0 0.0
        %2296 = vmatprep.subr.mxu0 0.0
        %2297 = vmatpush1.msra.mxu0 0.0
        %2298 = vmatprep.subr.mxu0 0.0
        %2299 = vmatpush1.msra.mxu0 0.0
        %2300 = vmatprep.subr.mxu0 0.0
        %2301 = vmatpush1.msra.mxu0 0.0
        %2302 = vmatprep.subr.mxu0 0.0
        %2303 = vmatpush1.msra.mxu0 0.0
        %2304 = vmatprep.subr.mxu0 0.0
        %2305 = vmatpush1.msra.mxu0 0.0
        %2306 = vmatprep.mubr.f32.mxu0 0.0
        %v2307 = vand.u32 %v874, 4294901760
        %v2308 = vsub.f32 %v874, %v2307
        %v2309 = vand.u32 %v2308, 4294901760
        %v2310 = vsub.f32 %v2308, %v2309
        %v2311 = vand.u32 %v2310, 4294901760
        %2312 = vmatmul.mubr.f32.gmra.mrb[0].mxu0 %v2311
        %v2313 = vpop.f32.mrb[0].mxu0
        %v2314 = vadd.f32 %v2224, %v2313
        %v2315 = vpop.f32.mrb[0].mxu0
        %2316 = vdwg.mxu0
        %2317 = vmatprep.subr.mxu0 0.0
        %v2318 = vand.u32 %v2203, 4294901760
        %v2319 = vsub.f32 %v2203, %v2318
        %v2320 = vand.u32 %v2319, 4294901760
        %v2321 = vsub.f32 %v2319, %v2320
        %v2322 = vand.u32 %v2321, 4294901760
        %2323 = vmatpush1.msra.mxu0 %v2322
        %2324 = vmatprep.subr.mxu0 0.0
        %v2325 = vand.u32 %v2204, 4294901760
        %v2326 = vsub.f32 %v2204, %v2325
        %v2327 = vand.u32 %v2326, 4294901760
        %v2328 = vsub.f32 %v2326, %v2327
        %v2329 = vand.u32 %v2328, 4294901760
        %2330 = vmatpush1.msra.mxu0 %v2329
        %2331 = vmatprep.subr.mxu0 0.0
        %v2332 = vand.u32 %v2205, 4294901760
        %v2333 = vsub.f32 %v2205, %v2332
        %v2334 = vand.u32 %v2333, 4294901760
        %v2335 = vsub.f32 %v2333, %v2334
        %v2336 = vand.u32 %v2335, 4294901760
        %2337 = vmatpush1.msra.mxu0 %v2336
        %2338 = vmatprep.subr.mxu0 0.0
        %v2339 = vand.u32 %v2206, 4294901760
        %v2340 = vsub.f32 %v2206, %v2339
        %v2341 = vand.u32 %v2340, 4294901760
        %v2342 = vsub.f32 %v2340, %v2341
        %v2343 = vand.u32 %v2342, 4294901760
        %2344 = vmatpush1.msra.mxu0 %v2343
        %2345 = vmatprep.subr.mxu0 0.0
        %v2346 = vand.u32 %v2207, 4294901760
        %v2347 = vsub.f32 %v2207, %v2346
        %v2348 = vand.u32 %v2347, 4294901760
        %v2349 = vsub.f32 %v2347, %v2348
        %v2350 = vand.u32 %v2349, 4294901760
        %2351 = vmatpush1.msra.mxu0 %v2350
        %2352 = vmatprep.subr.mxu0 0.0
        %v2353 = vand.u32 %v2208, 4294901760
        %v2354 = vsub.f32 %v2208, %v2353
        %v2355 = vand.u32 %v2354, 4294901760
        %v2356 = vsub.f32 %v2354, %v2355
        %v2357 = vand.u32 %v2356, 4294901760
        %2358 = vmatpush1.msra.mxu0 %v2357
        %2359 = vmatprep.subr.mxu0 0.0
        %v2360 = vand.u32 %v2209, 4294901760
        %v2361 = vsub.f32 %v2209, %v2360
        %v2362 = vand.u32 %v2361, 4294901760
        %v2363 = vsub.f32 %v2361, %v2362
        %v2364 = vand.u32 %v2363, 4294901760
        %2365 = vmatpush1.msra.mxu0 %v2364
        %2366 = vmatprep.subr.mxu0 0.0
        %v2367 = vand.u32 %v2210, 4294901760
        %v2368 = vsub.f32 %v2210, %v2367
        %v2369 = vand.u32 %v2368, 4294901760
        %v2370 = vsub.f32 %v2368, %v2369
        %v2371 = vand.u32 %v2370, 4294901760
        %2372 = vmatpush1.msra.mxu0 %v2371
        %2373 = vmatprep.subr.mxu0 0.0
        %v2374 = vand.u32 %v2211, 4294901760
        %v2375 = vsub.f32 %v2211, %v2374
        %v2376 = vand.u32 %v2375, 4294901760
        %v2377 = vsub.f32 %v2375, %v2376
        %v2378 = vand.u32 %v2377, 4294901760
        %2379 = vmatpush1.msra.mxu0 %v2378
        %2380 = vmatprep.subr.mxu0 0.0
        %v2381 = vand.u32 %v2212, 4294901760
        %v2382 = vsub.f32 %v2212, %v2381
        %v2383 = vand.u32 %v2382, 4294901760
        %v2384 = vsub.f32 %v2382, %v2383
        %v2385 = vand.u32 %v2384, 4294901760
        %2386 = vmatpush1.msra.mxu0 %v2385
        %2387 = vmatprep.subr.mxu0 0.0
        %v2388 = vand.u32 %v2213, 4294901760
        %v2389 = vsub.f32 %v2213, %v2388
        %v2390 = vand.u32 %v2389, 4294901760
        %v2391 = vsub.f32 %v2389, %v2390
        %v2392 = vand.u32 %v2391, 4294901760
        %2393 = vmatpush1.msra.mxu0 %v2392
        %2394 = vmatprep.subr.mxu0 0.0
        %v2395 = vand.u32 %v2214, 4294901760
        %v2396 = vsub.f32 %v2214, %v2395
        %v2397 = vand.u32 %v2396, 4294901760
        %v2398 = vsub.f32 %v2396, %v2397
        %v2399 = vand.u32 %v2398, 4294901760
        %2400 = vmatpush1.msra.mxu0 %v2399
        %2401 = vmatprep.subr.mxu0 0.0
        %v2402 = vand.u32 %v2215, 4294901760
        %v2403 = vsub.f32 %v2215, %v2402
        %v2404 = vand.u32 %v2403, 4294901760
        %v2405 = vsub.f32 %v2403, %v2404
        %v2406 = vand.u32 %v2405, 4294901760
        %2407 = vmatpush1.msra.mxu0 %v2406
        %2408 = vmatprep.subr.mxu0 0.0
        %v2409 = vand.u32 %v2216, 4294901760
        %v2410 = vsub.f32 %v2216, %v2409
        %v2411 = vand.u32 %v2410, 4294901760
        %v2412 = vsub.f32 %v2410, %v2411
        %v2413 = vand.u32 %v2412, 4294901760
        %2414 = vmatpush1.msra.mxu0 %v2413
        %2415 = vmatprep.subr.mxu0 0.0
        %v2416 = vand.u32 %v2217, 4294901760
        %v2417 = vsub.f32 %v2217, %v2416
        %v2418 = vand.u32 %v2417, 4294901760
        %v2419 = vsub.f32 %v2417, %v2418
        %v2420 = vand.u32 %v2419, 4294901760
        %2421 = vmatpush1.msra.mxu0 %v2420
        %2422 = vmatprep.subr.mxu0 0.0
        %v2423 = vand.u32 %v2218, 4294901760
        %v2424 = vsub.f32 %v2218, %v2423
        %v2425 = vand.u32 %v2424, 4294901760
        %v2426 = vsub.f32 %v2424, %v2425
        %v2427 = vand.u32 %v2426, 4294901760
        %2428 = vmatpush1.msra.mxu0 %v2427
        %2429 = vmatprep.subr.mxu0 0.0
        %2430 = vmatpush1.msra.mxu0 0.0
        %2431 = vmatprep.subr.mxu0 0.0
        %2432 = vmatpush1.msra.mxu0 0.0
        %2433 = vmatprep.subr.mxu0 0.0
        %2434 = vmatpush1.msra.mxu0 0.0
        %2435 = vmatprep.subr.mxu0 0.0
        %2436 = vmatpush1.msra.mxu0 0.0
        %2437 = vmatprep.subr.mxu0 0.0
        %2438 = vmatpush1.msra.mxu0 0.0
        %2439 = vmatprep.subr.mxu0 0.0
        %2440 = vmatpush1.msra.mxu0 0.0
        %2441 = vmatprep.subr.mxu0 0.0
        %2442 = vmatpush1.msra.mxu0 0.0
        %2443 = vmatprep.subr.mxu0 0.0
        %2444 = vmatpush1.msra.mxu0 0.0
        %2445 = vmatprep.subr.mxu0 0.0
        %2446 = vmatpush1.msra.mxu0 0.0
        %2447 = vmatprep.subr.mxu0 0.0
        %2448 = vmatpush1.msra.mxu0 0.0
        %2449 = vmatprep.subr.mxu0 0.0
        %2450 = vmatpush1.msra.mxu0 0.0
        %2451 = vmatprep.subr.mxu0 0.0
        %2452 = vmatpush1.msra.mxu0 0.0
        %2453 = vmatprep.subr.mxu0 0.0
        %2454 = vmatpush1.msra.mxu0 0.0
        %2455 = vmatprep.subr.mxu0 0.0
        %2456 = vmatpush1.msra.mxu0 0.0
        %2457 = vmatprep.subr.mxu0 0.0
        %2458 = vmatpush1.msra.mxu0 0.0
        %2459 = vmatprep.subr.mxu0 0.0
        %2460 = vmatpush1.msra.mxu0 0.0
        %2461 = vmatprep.mubr.f32.mxu0 0.0
        %v2462 = vand.u32 %v874, 4294901760
        %2463 = vmatmul.mubr.f32.gmra.mrb[0].mxu0 %v2462
        %v2464 = vpop.f32.mrb[0].mxu0
        %v2465 = vadd.f32 %v2314, %v2464
        %v2466 = vpop.f32.mrb[0].mxu0
        %2467 = vdwg.mxu0
        %2468 = vmatprep.subr.mxu0 0.0
        %v2469 = vand.u32 %v2203, 4294901760
        %v2470 = vsub.f32 %v2203, %v2469
        %2471 = vmatpush1.msra.mxu0 %v2470
        %2472 = vmatprep.subr.mxu0 0.0
        %v2473 = vand.u32 %v2204, 4294901760
        %v2474 = vsub.f32 %v2204, %v2473
        %2475 = vmatpush1.msra.mxu0 %v2474
        %2476 = vmatprep.subr.mxu0 0.0
        %v2477 = vand.u32 %v2205, 4294901760
        %v2478 = vsub.f32 %v2205, %v2477
        %2479 = vmatpush1.msra.mxu0 %v2478
        %2480 = vmatprep.subr.mxu0 0.0
        %v2481 = vand.u32 %v2206, 4294901760
        %v2482 = vsub.f32 %v2206, %v2481
        %2483 = vmatpush1.msra.mxu0 %v2482
        %2484 = vmatprep.subr.mxu0 0.0
        %v2485 = vand.u32 %v2207, 4294901760
        %v2486 = vsub.f32 %v2207, %v2485
        %2487 = vmatpush1.msra.mxu0 %v2486
        %2488 = vmatprep.subr.mxu0 0.0
        %v2489 = vand.u32 %v2208, 4294901760
        %v2490 = vsub.f32 %v2208, %v2489
        %2491 = vmatpush1.msra.mxu0 %v2490
        %2492 = vmatprep.subr.mxu0 0.0
        %v2493 = vand.u32 %v2209, 4294901760
        %v2494 = vsub.f32 %v2209, %v2493
        %2495 = vmatpush1.msra.mxu0 %v2494
        %2496 = vmatprep.subr.mxu0 0.0
        %v2497 = vand.u32 %v2210, 4294901760
        %v2498 = vsub.f32 %v2210, %v2497
        %2499 = vmatpush1.msra.mxu0 %v2498
        %2500 = vmatprep.subr.mxu0 0.0
        %v2501 = vand.u32 %v2211, 4294901760
        %v2502 = vsub.f32 %v2211, %v2501
        %2503 = vmatpush1.msra.mxu0 %v2502
        %2504 = vmatprep.subr.mxu0 0.0
        %v2505 = vand.u32 %v2212, 4294901760
        %v2506 = vsub.f32 %v2212, %v2505
        %2507 = vmatpush1.msra.mxu0 %v2506
        %2508 = vmatprep.subr.mxu0 0.0
        %v2509 = vand.u32 %v2213, 4294901760
        %v2510 = vsub.f32 %v2213, %v2509
        %2511 = vmatpush1.msra.mxu0 %v2510
        %2512 = vmatprep.subr.mxu0 0.0
        %v2513 = vand.u32 %v2214, 4294901760
        %v2514 = vsub.f32 %v2214, %v2513
        %2515 = vmatpush1.msra.mxu0 %v2514
        %2516 = vmatprep.subr.mxu0 0.0
        %v2517 = vand.u32 %v2215, 4294901760
        %v2518 = vsub.f32 %v2215, %v2517
        %2519 = vmatpush1.msra.mxu0 %v2518
        %2520 = vmatprep.subr.mxu0 0.0
        %v2521 = vand.u32 %v2216, 4294901760
        %v2522 = vsub.f32 %v2216, %v2521
        %2523 = vmatpush1.msra.mxu0 %v2522
        %2524 = vmatprep.subr.mxu0 0.0
        %v2525 = vand.u32 %v2217, 4294901760
        %v2526 = vsub.f32 %v2217, %v2525
        %2527 = vmatpush1.msra.mxu0 %v2526
        %2528 = vmatprep.subr.mxu0 0.0
        %v2529 = vand.u32 %v2218, 4294901760
        %v2530 = vsub.f32 %v2218, %v2529
        %2531 = vmatpush1.msra.mxu0 %v2530
        %2532 = vmatprep.subr.mxu0 0.0
        %2533 = vmatpush1.msra.mxu0 0.0
        %2534 = vmatprep.subr.mxu0 0.0
        %2535 = vmatpush1.msra.mxu0 0.0
        %2536 = vmatprep.subr.mxu0 0.0
        %2537 = vmatpush1.msra.mxu0 0.0
        %2538 = vmatprep.subr.mxu0 0.0
        %2539 = vmatpush1.msra.mxu0 0.0
        %2540 = vmatprep.subr.mxu0 0.0
        %2541 = vmatpush1.msra.mxu0 0.0
        %2542 = vmatprep.subr.mxu0 0.0
        %2543 = vmatpush1.msra.mxu0 0.0
        %2544 = vmatprep.subr.mxu0 0.0
        %2545 = vmatpush1.msra.mxu0 0.0
        %2546 = vmatprep.subr.mxu0 0.0
        %2547 = vmatpush1.msra.mxu0 0.0
        %2548 = vmatprep.subr.mxu0 0.0
        %2549 = vmatpush1.msra.mxu0 0.0
        %2550 = vmatprep.subr.mxu0 0.0
        %2551 = vmatpush1.msra.mxu0 0.0
        %2552 = vmatprep.subr.mxu0 0.0
        %2553 = vmatpush1.msra.mxu0 0.0
        %2554 = vmatprep.subr.mxu0 0.0
        %2555 = vmatpush1.msra.mxu0 0.0
        %2556 = vmatprep.subr.mxu0 0.0
        %2557 = vmatpush1.msra.mxu0 0.0
        %2558 = vmatprep.subr.mxu0 0.0
        %2559 = vmatpush1.msra.mxu0 0.0
        %2560 = vmatprep.subr.mxu0 0.0
        %2561 = vmatpush1.msra.mxu0 0.0
        %2562 = vmatprep.subr.mxu0 0.0
        %2563 = vmatpush1.msra.mxu0 0.0
        %2564 = vmatprep.mubr.f32.mxu0 0.0
        %v2565 = vand.u32 %v874, 4294901760
        %v2566 = vsub.f32 %v874, %v2565
        %2567 = vmatmul.mubr.f32.gmra.mrb[0].mxu0 %v2566
        %v2568 = vpop.f32.mrb[0].mxu0
        %v2569 = vadd.f32 %v2465, %v2568
        %v2570 = vpop.f32.mrb[0].mxu0
        %2571 = vdwg.mxu0
        %2572 = vmatprep.subr.mxu0 0.0
        %v2573 = vand.u32 %v2203, 4294901760
        %2574 = vmatpush1.msra.mxu0 %v2573
        %2575 = vmatprep.subr.mxu0 0.0
        %v2576 = vand.u32 %v2204, 4294901760
        %2577 = vmatpush1.msra.mxu0 %v2576
        %2578 = vmatprep.subr.mxu0 0.0
        %v2579 = vand.u32 %v2205, 4294901760
        %2580 = vmatpush1.msra.mxu0 %v2579
        %2581 = vmatprep.subr.mxu0 0.0
        %v2582 = vand.u32 %v2206, 4294901760
        %2583 = vmatpush1.msra.mxu0 %v2582
        %2584 = vmatprep.subr.mxu0 0.0
        %v2585 = vand.u32 %v2207, 4294901760
        %2586 = vmatpush1.msra.mxu0 %v2585
        %2587 = vmatprep.subr.mxu0 0.0
        %v2588 = vand.u32 %v2208, 4294901760
        %2589 = vmatpush1.msra.mxu0 %v2588
        %2590 = vmatprep.subr.mxu0 0.0
        %v2591 = vand.u32 %v2209, 4294901760
        %2592 = vmatpush1.msra.mxu0 %v2591
        %2593 = vmatprep.subr.mxu0 0.0
        %v2594 = vand.u32 %v2210, 4294901760
        %2595 = vmatpush1.msra.mxu0 %v2594
        %2596 = vmatprep.subr.mxu0 0.0
        %v2597 = vand.u32 %v2211, 4294901760
        %2598 = vmatpush1.msra.mxu0 %v2597
        %2599 = vmatprep.subr.mxu0 0.0
        %v2600 = vand.u32 %v2212, 4294901760
        %2601 = vmatpush1.msra.mxu0 %v2600
        %2602 = vmatprep.subr.mxu0 0.0
        %v2603 = vand.u32 %v2213, 4294901760
        %2604 = vmatpush1.msra.mxu0 %v2603
        %2605 = vmatprep.subr.mxu0 0.0
        %v2606 = vand.u32 %v2214, 4294901760
        %2607 = vmatpush1.msra.mxu0 %v2606
        %2608 = vmatprep.subr.mxu0 0.0
        %v2609 = vand.u32 %v2215, 4294901760
        %2610 = vmatpush1.msra.mxu0 %v2609
        %2611 = vmatprep.subr.mxu0 0.0
        %v2612 = vand.u32 %v2216, 4294901760
        %2613 = vmatpush1.msra.mxu0 %v2612
        %2614 = vmatprep.subr.mxu0 0.0
        %v2615 = vand.u32 %v2217, 4294901760
        %2616 = vmatpush1.msra.mxu0 %v2615
        %2617 = vmatprep.subr.mxu0 0.0
        %v2618 = vand.u32 %v2218, 4294901760
        %2619 = vmatpush1.msra.mxu0 %v2618
        %2620 = vmatprep.subr.mxu0 0.0
        %2621 = vmatpush1.msra.mxu0 0.0
        %2622 = vmatprep.subr.mxu0 0.0
        %2623 = vmatpush1.msra.mxu0 0.0
        %2624 = vmatprep.subr.mxu0 0.0
        %2625 = vmatpush1.msra.mxu0 0.0
        %2626 = vmatprep.subr.mxu0 0.0
        %2627 = vmatpush1.msra.mxu0 0.0
        %2628 = vmatprep.subr.mxu0 0.0
        %2629 = vmatpush1.msra.mxu0 0.0
        %2630 = vmatprep.subr.mxu0 0.0
        %2631 = vmatpush1.msra.mxu0 0.0
        %2632 = vmatprep.subr.mxu0 0.0
        %2633 = vmatpush1.msra.mxu0 0.0
        %2634 = vmatprep.subr.mxu0 0.0
        %2635 = vmatpush1.msra.mxu0 0.0
        %2636 = vmatprep.subr.mxu0 0.0
        %2637 = vmatpush1.msra.mxu0 0.0
        %2638 = vmatprep.subr.mxu0 0.0
        %2639 = vmatpush1.msra.mxu0 0.0
        %2640 = vmatprep.subr.mxu0 0.0
        %2641 = vmatpush1.msra.mxu0 0.0
        %2642 = vmatprep.subr.mxu0 0.0
        %2643 = vmatpush1.msra.mxu0 0.0
        %2644 = vmatprep.subr.mxu0 0.0
        %2645 = vmatpush1.msra.mxu0 0.0
        %2646 = vmatprep.subr.mxu0 0.0
        %2647 = vmatpush1.msra.mxu0 0.0
        %2648 = vmatprep.subr.mxu0 0.0
        %2649 = vmatpush1.msra.mxu0 0.0
        %2650 = vmatprep.subr.mxu0 0.0
        %2651 = vmatpush1.msra.mxu0 0.0
        %2652 = vmatprep.mubr.f32.mxu0 0.0
        %v2653 = vand.u32 %v874, 4294901760
        %v2654 = vsub.f32 %v874, %v2653
        %v2655 = vand.u32 %v2654, 4294901760
        %2656 = vmatmul.mubr.f32.gmra.mrb[0].mxu0 %v2655
        %v2657 = vpop.f32.mrb[0].mxu0
        %v2658 = vadd.f32 %v2569, %v2657
        %v2659 = vpop.f32.mrb[0].mxu0
        %2660 = vdwg.mxu0
        %2661 = vmatprep.subr.mxu0 0.0
        %v2662 = vand.u32 %v2203, 4294901760
        %v2663 = vsub.f32 %v2203, %v2662
        %v2664 = vand.u32 %v2663, 4294901760
        %2665 = vmatpush1.msra.mxu0 %v2664
        %2666 = vmatprep.subr.mxu0 0.0
        %v2667 = vand.u32 %v2204, 4294901760
        %v2668 = vsub.f32 %v2204, %v2667
        %v2669 = vand.u32 %v2668, 4294901760
        %2670 = vmatpush1.msra.mxu0 %v2669
        %2671 = vmatprep.subr.mxu0 0.0
        %v2672 = vand.u32 %v2205, 4294901760
        %v2673 = vsub.f32 %v2205, %v2672
        %v2674 = vand.u32 %v2673, 4294901760
        %2675 = vmatpush1.msra.mxu0 %v2674
        %2676 = vmatprep.subr.mxu0 0.0
        %v2677 = vand.u32 %v2206, 4294901760
        %v2678 = vsub.f32 %v2206, %v2677
        %v2679 = vand.u32 %v2678, 4294901760
        %2680 = vmatpush1.msra.mxu0 %v2679
        %2681 = vmatprep.subr.mxu0 0.0
        %v2682 = vand.u32 %v2207, 4294901760
        %v2683 = vsub.f32 %v2207, %v2682
        %v2684 = vand.u32 %v2683, 4294901760
        %2685 = vmatpush1.msra.mxu0 %v2684
        %2686 = vmatprep.subr.mxu0 0.0
        %v2687 = vand.u32 %v2208, 4294901760
        %v2688 = vsub.f32 %v2208, %v2687
        %v2689 = vand.u32 %v2688, 4294901760
        %2690 = vmatpush1.msra.mxu0 %v2689
        %2691 = vmatprep.subr.mxu0 0.0
        %v2692 = vand.u32 %v2209, 4294901760
        %v2693 = vsub.f32 %v2209, %v2692
        %v2694 = vand.u32 %v2693, 4294901760
        %2695 = vmatpush1.msra.mxu0 %v2694
        %2696 = vmatprep.subr.mxu0 0.0
        %v2697 = vand.u32 %v2210, 4294901760
        %v2698 = vsub.f32 %v2210, %v2697
        %v2699 = vand.u32 %v2698, 4294901760
        %2700 = vmatpush1.msra.mxu0 %v2699
        %2701 = vmatprep.subr.mxu0 0.0
        %v2702 = vand.u32 %v2211, 4294901760
        %v2703 = vsub.f32 %v2211, %v2702
        %v2704 = vand.u32 %v2703, 4294901760
        %2705 = vmatpush1.msra.mxu0 %v2704
        %2706 = vmatprep.subr.mxu0 0.0
        %v2707 = vand.u32 %v2212, 4294901760
        %v2708 = vsub.f32 %v2212, %v2707
        %v2709 = vand.u32 %v2708, 4294901760
        %2710 = vmatpush1.msra.mxu0 %v2709
        %2711 = vmatprep.subr.mxu0 0.0
        %v2712 = vand.u32 %v2213, 4294901760
        %v2713 = vsub.f32 %v2213, %v2712
        %v2714 = vand.u32 %v2713, 4294901760
        %2715 = vmatpush1.msra.mxu0 %v2714
        %2716 = vmatprep.subr.mxu0 0.0
        %v2717 = vand.u32 %v2214, 4294901760
        %v2718 = vsub.f32 %v2214, %v2717
        %v2719 = vand.u32 %v2718, 4294901760
        %2720 = vmatpush1.msra.mxu0 %v2719
        %2721 = vmatprep.subr.mxu0 0.0
        %v2722 = vand.u32 %v2215, 4294901760
        %v2723 = vsub.f32 %v2215, %v2722
        %v2724 = vand.u32 %v2723, 4294901760
        %2725 = vmatpush1.msra.mxu0 %v2724
        %2726 = vmatprep.subr.mxu0 0.0
        %v2727 = vand.u32 %v2216, 4294901760
        %v2728 = vsub.f32 %v2216, %v2727
        %v2729 = vand.u32 %v2728, 4294901760
        %2730 = vmatpush1.msra.mxu0 %v2729
        %2731 = vmatprep.subr.mxu0 0.0
        %v2732 = vand.u32 %v2217, 4294901760
        %v2733 = vsub.f32 %v2217, %v2732
        %v2734 = vand.u32 %v2733, 4294901760
        %2735 = vmatpush1.msra.mxu0 %v2734
        %2736 = vmatprep.subr.mxu0 0.0
        %v2737 = vand.u32 %v2218, 4294901760
        %v2738 = vsub.f32 %v2218, %v2737
        %v2739 = vand.u32 %v2738, 4294901760
        %2740 = vmatpush1.msra.mxu0 %v2739
        %2741 = vmatprep.subr.mxu0 0.0
        %2742 = vmatpush1.msra.mxu0 0.0
        %2743 = vmatprep.subr.mxu0 0.0
        %2744 = vmatpush1.msra.mxu0 0.0
        %2745 = vmatprep.subr.mxu0 0.0
        %2746 = vmatpush1.msra.mxu0 0.0
        %2747 = vmatprep.subr.mxu0 0.0
        %2748 = vmatpush1.msra.mxu0 0.0
        %2749 = vmatprep.subr.mxu0 0.0
        %2750 = vmatpush1.msra.mxu0 0.0
        %2751 = vmatprep.subr.mxu0 0.0
        %2752 = vmatpush1.msra.mxu0 0.0
        %2753 = vmatprep.subr.mxu0 0.0
        %2754 = vmatpush1.msra.mxu0 0.0
        %2755 = vmatprep.subr.mxu0 0.0
        %2756 = vmatpush1.msra.mxu0 0.0
        %2757 = vmatprep.subr.mxu0 0.0
        %2758 = vmatpush1.msra.mxu0 0.0
        %2759 = vmatprep.subr.mxu0 0.0
        %2760 = vmatpush1.msra.mxu0 0.0
        %2761 = vmatprep.subr.mxu0 0.0
        %2762 = vmatpush1.msra.mxu0 0.0
        %2763 = vmatprep.subr.mxu0 0.0
        %2764 = vmatpush1.msra.mxu0 0.0
        %2765 = vmatprep.subr.mxu0 0.0
        %2766 = vmatpush1.msra.mxu0 0.0
        %2767 = vmatprep.subr.mxu0 0.0
        %2768 = vmatpush1.msra.mxu0 0.0
        %2769 = vmatprep.subr.mxu0 0.0
        %2770 = vmatpush1.msra.mxu0 0.0
        %2771 = vmatprep.subr.mxu0 0.0
        %2772 = vmatpush1.msra.mxu0 0.0
        %2773 = vmatprep.mubr.f32.mxu0 0.0
        %v2774 = vand.u32 %v874, 4294901760
        %2775 = vmatmul.mubr.f32.gmra.mrb[0].mxu0 %v2774
        %v2776 = vpop.f32.mrb[0].mxu0
        %v2777 = vadd.f32 %v2658, %v2776
        %v2778 = vpop.f32.mrb[0].mxu0
        %2779 = vdwg.mxu0
        %2780 = vmatprep.subr.mxu0 0.0
        %v2781 = vand.u32 %v2203, 4294901760
        %2782 = vmatpush1.msra.mxu0 %v2781
        %2783 = vmatprep.subr.mxu0 0.0
        %v2784 = vand.u32 %v2204, 4294901760
        %2785 = vmatpush1.msra.mxu0 %v2784
        %2786 = vmatprep.subr.mxu0 0.0
        %v2787 = vand.u32 %v2205, 4294901760
        %2788 = vmatpush1.msra.mxu0 %v2787
        %2789 = vmatprep.subr.mxu0 0.0
        %v2790 = vand.u32 %v2206, 4294901760
        %2791 = vmatpush1.msra.mxu0 %v2790
        %2792 = vmatprep.subr.mxu0 0.0
        %v2793 = vand.u32 %v2207, 4294901760
        %2794 = vmatpush1.msra.mxu0 %v2793
        %2795 = vmatprep.subr.mxu0 0.0
        %v2796 = vand.u32 %v2208, 4294901760
        %2797 = vmatpush1.msra.mxu0 %v2796
        %2798 = vmatprep.subr.mxu0 0.0
        %v2799 = vand.u32 %v2209, 4294901760
        %2800 = vmatpush1.msra.mxu0 %v2799
        %2801 = vmatprep.subr.mxu0 0.0
        %v2802 = vand.u32 %v2210, 4294901760
        %2803 = vmatpush1.msra.mxu0 %v2802
        %2804 = vmatprep.subr.mxu0 0.0
        %v2805 = vand.u32 %v2211, 4294901760
        %2806 = vmatpush1.msra.mxu0 %v2805
        %2807 = vmatprep.subr.mxu0 0.0
        %v2808 = vand.u32 %v2212, 4294901760
        %2809 = vmatpush1.msra.mxu0 %v2808
        %2810 = vmatprep.subr.mxu0 0.0
        %v2811 = vand.u32 %v2213, 4294901760
        %2812 = vmatpush1.msra.mxu0 %v2811
        %2813 = vmatprep.subr.mxu0 0.0
        %v2814 = vand.u32 %v2214, 4294901760
        %2815 = vmatpush1.msra.mxu0 %v2814
        %2816 = vmatprep.subr.mxu0 0.0
        %v2817 = vand.u32 %v2215, 4294901760
        %2818 = vmatpush1.msra.mxu0 %v2817
        %2819 = vmatprep.subr.mxu0 0.0
        %v2820 = vand.u32 %v2216, 4294901760
        %2821 = vmatpush1.msra.mxu0 %v2820
        %2822 = vmatprep.subr.mxu0 0.0
        %v2823 = vand.u32 %v2217, 4294901760
        %2824 = vmatpush1.msra.mxu0 %v2823
        %2825 = vmatprep.subr.mxu0 0.0
        %v2826 = vand.u32 %v2218, 4294901760
        %2827 = vmatpush1.msra.mxu0 %v2826
        %2828 = vmatprep.subr.mxu0 0.0
        %2829 = vmatpush1.msra.mxu0 0.0
        %2830 = vmatprep.subr.mxu0 0.0
        %2831 = vmatpush1.msra.mxu0 0.0
        %2832 = vmatprep.subr.mxu0 0.0
        %2833 = vmatpush1.msra.mxu0 0.0
        %2834 = vmatprep.subr.mxu0 0.0
        %2835 = vmatpush1.msra.mxu0 0.0
        %2836 = vmatprep.subr.mxu0 0.0
        %2837 = vmatpush1.msra.mxu0 0.0
        %2838 = vmatprep.subr.mxu0 0.0
        %2839 = vmatpush1.msra.mxu0 0.0
        %2840 = vmatprep.subr.mxu0 0.0
        %2841 = vmatpush1.msra.mxu0 0.0
        %2842 = vmatprep.subr.mxu0 0.0
        %2843 = vmatpush1.msra.mxu0 0.0
        %2844 = vmatprep.subr.mxu0 0.0
        %2845 = vmatpush1.msra.mxu0 0.0
        %2846 = vmatprep.subr.mxu0 0.0
        %2847 = vmatpush1.msra.mxu0 0.0
        %2848 = vmatprep.subr.mxu0 0.0
        %2849 = vmatpush1.msra.mxu0 0.0
        %2850 = vmatprep.subr.mxu0 0.0
        %2851 = vmatpush1.msra.mxu0 0.0
        %2852 = vmatprep.subr.mxu0 0.0
        %2853 = vmatpush1.msra.mxu0 0.0
        %2854 = vmatprep.subr.mxu0 0.0
        %2855 = vmatpush1.msra.mxu0 0.0
        %2856 = vmatprep.subr.mxu0 0.0
        %2857 = vmatpush1.msra.mxu0 0.0
        %2858 = vmatprep.subr.mxu0 0.0
        %2859 = vmatpush1.msra.mxu0 0.0
        %2860 = vmatprep.mubr.f32.mxu0 0.0
        %v2861 = vand.u32 %v874, 4294901760
        %2862 = vmatmul.mubr.f32.gmra.mrb[0].mxu0 %v2861
        %v2863 = vpop.f32.mrb[0].mxu0
        %v2864 = vadd.f32 %v2777, %v2863
        %v2865 = vpop.f32.mrb[0].mxu0
        %2866 = vdwg.mxu0
        %v2867 = vlaneseq
        %v2868 = vshrl.u32 %v2867, 7
        %v2869 = vlaneseq
        %v2870 = vand.u32 %v2869, 127
        %vm2871 = vcmp.le.s32.totalorder %v2870, %v2868
        %vm2872 = vcmask 261120
        %v2874 = vsel %vm2872, %v1536, 0
        %v2877 = vsel %vm2872, %v2200, 0
        %2879 = vmatprep.subr.mxu0 0.0
        %v2880 = vand.u32 %v2877, 4294901760
        %2881 = vmatpush1.xpose.msra.mxu0 %v2880
        %2882 = vmatprep.subr.mxu0 0.0
        %2883 = vmatpush1.xpose.msra.mxu0 0.0
        %2884 = vmatprep.subr.mxu0 0.0
        %2885 = vmatpush1.xpose.msra.mxu0 0.0
        %2886 = vmatprep.subr.mxu0 0.0
        %2887 = vmatpush1.xpose.msra.mxu0 0.0
        %2888 = vmatprep.subr.mxu0 0.0
        %2889 = vmatpush1.xpose.msra.mxu0 0.0
        %2890 = vmatprep.subr.mxu0 0.0
        %2891 = vmatpush1.xpose.msra.mxu0 0.0
        %2892 = vmatprep.subr.mxu0 0.0
        %2893 = vmatpush1.xpose.msra.mxu0 0.0
        %2894 = vmatprep.subr.mxu0 0.0
        %2895 = vmatpush1.xpose.msra.mxu0 0.0
        %2896 = vmatprep.subr.mxu0 0.0
        %2897 = vmatpush1.xpose.msra.mxu0 0.0
        %2898 = vmatprep.subr.mxu0 0.0
        %2899 = vmatpush1.xpose.msra.mxu0 0.0
        %2900 = vmatprep.subr.mxu0 0.0
        %2901 = vmatpush1.xpose.msra.mxu0 0.0
        %2902 = vmatprep.subr.mxu0 0.0
        %2903 = vmatpush1.xpose.msra.mxu0 0.0
        %2904 = vmatprep.subr.mxu0 0.0
        %2905 = vmatpush1.xpose.msra.mxu0 0.0
        %2906 = vmatprep.subr.mxu0 0.0
        %2907 = vmatpush1.xpose.msra.mxu0 0.0
        %2908 = vmatprep.subr.mxu0 0.0
        %2909 = vmatpush1.xpose.msra.mxu0 0.0
        %2910 = vmatprep.subr.mxu0 0.0
        %2911 = vmatpush1.xpose.msra.mxu0 0.0
        %2912 = vmatprep.subr.mxu0 0.0
        %2913 = vmatpush1.xpose.msra.mxu0 0.0
        %2914 = vmatprep.subr.mxu0 0.0
        %2915 = vmatpush1.xpose.msra.mxu0 0.0
        %2916 = vmatprep.subr.mxu0 0.0
        %2917 = vmatpush1.xpose.msra.mxu0 0.0
        %2918 = vmatprep.subr.mxu0 0.0
        %2919 = vmatpush1.xpose.msra.mxu0 0.0
        %2920 = vmatprep.subr.mxu0 0.0
        %2921 = vmatpush1.xpose.msra.mxu0 0.0
        %2922 = vmatprep.subr.mxu0 0.0
        %2923 = vmatpush1.xpose.msra.mxu0 0.0
        %2924 = vmatprep.subr.mxu0 0.0
        %2925 = vmatpush1.xpose.msra.mxu0 0.0
        %2926 = vmatprep.subr.mxu0 0.0
        %2927 = vmatpush1.xpose.msra.mxu0 0.0
        %2928 = vmatprep.subr.mxu0 0.0
        %2929 = vmatpush1.xpose.msra.mxu0 0.0
        %2930 = vmatprep.subr.mxu0 0.0
        %2931 = vmatpush1.xpose.msra.mxu0 0.0
        %2932 = vmatprep.subr.mxu0 0.0
        %2933 = vmatpush1.xpose.msra.mxu0 0.0
        %2934 = vmatprep.subr.mxu0 0.0
        %2935 = vmatpush1.xpose.msra.mxu0 0.0
        %2936 = vmatprep.subr.mxu0 0.0
        %2937 = vmatpush1.xpose.msra.mxu0 0.0
        %2938 = vmatprep.subr.mxu0 0.0
        %2939 = vmatpush1.xpose.msra.mxu0 0.0
        %2940 = vmatprep.subr.mxu0 0.0
        %2941 = vmatpush1.xpose.msra.mxu0 0.0
        %2942 = vmatprep.subr.mxu0 0.0
        %2943 = vmatpush1.xpose.msra.mxu0 0.0
        %2944 = vmatprep.mubr.f32.mxu0 0.0
        %v2945 = vand.u32 %v2874, 4294901760
        %v2946 = vsub.f32 %v2874, %v2945
        %v2947 = vand.u32 %v2946, 4294901760
        %v2948 = vsub.f32 %v2946, %v2947
        %v2949 = vand.u32 %v2948, 4294901760
        %2950 = vmatmul.mubr.f32.gmra.mrb[0].mxu0 %v2949
        %v2951 = vpop.f32.mrb[0].mxu0
        %v2952 = vadd.f32 0.0, %v2951
        %v2953 = vpop.f32.mrb[0].mxu0
        %2954 = vdwg.mxu0
        %2955 = vmatprep.subr.mxu0 0.0
        %v2956 = vand.u32 %v2877, 4294901760
        %v2957 = vsub.f32 %v2877, %v2956
        %v2958 = vand.u32 %v2957, 4294901760
        %v2959 = vsub.f32 %v2957, %v2958
        %v2960 = vand.u32 %v2959, 4294901760
        %2961 = vmatpush1.xpose.msra.mxu0 %v2960
        %2962 = vmatprep.subr.mxu0 0.0
        %2963 = vmatpush1.xpose.msra.mxu0 0.0
        %2964 = vmatprep.subr.mxu0 0.0
        %2965 = vmatpush1.xpose.msra.mxu0 0.0
        %2966 = vmatprep.subr.mxu0 0.0
        %2967 = vmatpush1.xpose.msra.mxu0 0.0
        %2968 = vmatprep.subr.mxu0 0.0
        %2969 = vmatpush1.xpose.msra.mxu0 0.0
        %2970 = vmatprep.subr.mxu0 0.0
        %2971 = vmatpush1.xpose.msra.mxu0 0.0
        %2972 = vmatprep.subr.mxu0 0.0
        %2973 = vmatpush1.xpose.msra.mxu0 0.0
        %2974 = vmatprep.subr.mxu0 0.0
        %2975 = vmatpush1.xpose.msra.mxu0 0.0
        %2976 = vmatprep.subr.mxu0 0.0
        %2977 = vmatpush1.xpose.msra.mxu0 0.0
        %2978 = vmatprep.subr.mxu0 0.0
        %2979 = vmatpush1.xpose.msra.mxu0 0.0
        %2980 = vmatprep.subr.mxu0 0.0
        %2981 = vmatpush1.xpose.msra.mxu0 0.0
        %2982 = vmatprep.subr.mxu0 0.0
        %2983 = vmatpush1.xpose.msra.mxu0 0.0
        %2984 = vmatprep.subr.mxu0 0.0
        %2985 = vmatpush1.xpose.msra.mxu0 0.0
        %2986 = vmatprep.subr.mxu0 0.0
        %2987 = vmatpush1.xpose.msra.mxu0 0.0
        %2988 = vmatprep.subr.mxu0 0.0
        %2989 = vmatpush1.xpose.msra.mxu0 0.0
        %2990 = vmatprep.subr.mxu0 0.0
        %2991 = vmatpush1.xpose.msra.mxu0 0.0
        %2992 = vmatprep.subr.mxu0 0.0
        %2993 = vmatpush1.xpose.msra.mxu0 0.0
        %2994 = vmatprep.subr.mxu0 0.0
        %2995 = vmatpush1.xpose.msra.mxu0 0.0
        %2996 = vmatprep.subr.mxu0 0.0
        %2997 = vmatpush1.xpose.msra.mxu0 0.0
        %2998 = vmatprep.subr.mxu0 0.0
        %2999 = vmatpush1.xpose.msra.mxu0 0.0
        %3000 = vmatprep.subr.mxu0 0.0
        %3001 = vmatpush1.xpose.msra.mxu0 0.0
        %3002 = vmatprep.subr.mxu0 0.0
        %3003 = vmatpush1.xpose.msra.mxu0 0.0
        %3004 = vmatprep.subr.mxu0 0.0
        %3005 = vmatpush1.xpose.msra.mxu0 0.0
        %3006 = vmatprep.subr.mxu0 0.0
        %3007 = vmatpush1.xpose.msra.mxu0 0.0
        %3008 = vmatprep.subr.mxu0 0.0
        %3009 = vmatpush1.xpose.msra.mxu0 0.0
        %3010 = vmatprep.subr.mxu0 0.0
        %3011 = vmatpush1.xpose.msra.mxu0 0.0
        %3012 = vmatprep.subr.mxu0 0.0
        %3013 = vmatpush1.xpose.msra.mxu0 0.0
        %3014 = vmatprep.subr.mxu0 0.0
        %3015 = vmatpush1.xpose.msra.mxu0 0.0
        %3016 = vmatprep.subr.mxu0 0.0
        %3017 = vmatpush1.xpose.msra.mxu0 0.0
        %3018 = vmatprep.subr.mxu0 0.0
        %3019 = vmatpush1.xpose.msra.mxu0 0.0
        %3020 = vmatprep.subr.mxu0 0.0
        %3021 = vmatpush1.xpose.msra.mxu0 0.0
        %3022 = vmatprep.subr.mxu0 0.0
        %3023 = vmatpush1.xpose.msra.mxu0 0.0
        %3024 = vmatprep.mubr.f32.mxu0 0.0
        %v3025 = vand.u32 %v2874, 4294901760
        %3026 = vmatmul.mubr.f32.gmra.mrb[0].mxu0 %v3025
        %v3027 = vpop.f32.mrb[0].mxu0
        %v3028 = vadd.f32 %v2952, %v3027
        %v3029 = vpop.f32.mrb[0].mxu0
        %3030 = vdwg.mxu0
        %3031 = vmatprep.subr.mxu0 0.0
        %v3032 = vand.u32 %v2877, 4294901760
        %v3033 = vsub.f32 %v2877, %v3032
        %3034 = vmatpush1.xpose.msra.mxu0 %v3033
        %3035 = vmatprep.subr.mxu0 0.0
        %3036 = vmatpush1.xpose.msra.mxu0 0.0
        %3037 = vmatprep.subr.mxu0 0.0
        %3038 = vmatpush1.xpose.msra.mxu0 0.0
        %3039 = vmatprep.subr.mxu0 0.0
        %3040 = vmatpush1.xpose.msra.mxu0 0.0
        %3041 = vmatprep.subr.mxu0 0.0
        %3042 = vmatpush1.xpose.msra.mxu0 0.0
        %3043 = vmatprep.subr.mxu0 0.0
        %3044 = vmatpush1.xpose.msra.mxu0 0.0
        %3045 = vmatprep.subr.mxu0 0.0
        %3046 = vmatpush1.xpose.msra.mxu0 0.0
        %3047 = vmatprep.subr.mxu0 0.0
        %3048 = vmatpush1.xpose.msra.mxu0 0.0
        %3049 = vmatprep.subr.mxu0 0.0
        %3050 = vmatpush1.xpose.msra.mxu0 0.0
        %3051 = vmatprep.subr.mxu0 0.0
        %3052 = vmatpush1.xpose.msra.mxu0 0.0
        %3053 = vmatprep.subr.mxu0 0.0
        %3054 = vmatpush1.xpose.msra.mxu0 0.0
        %3055 = vmatprep.subr.mxu0 0.0
        %3056 = vmatpush1.xpose.msra.mxu0 0.0
        %3057 = vmatprep.subr.mxu0 0.0
        %3058 = vmatpush1.xpose.msra.mxu0 0.0
        %3059 = vmatprep.subr.mxu0 0.0
        %3060 = vmatpush1.xpose.msra.mxu0 0.0
        %3061 = vmatprep.subr.mxu0 0.0
        %3062 = vmatpush1.xpose.msra.mxu0 0.0
        %3063 = vmatprep.subr.mxu0 0.0
        %3064 = vmatpush1.xpose.msra.mxu0 0.0
        %3065 = vmatprep.subr.mxu0 0.0
        %3066 = vmatpush1.xpose.msra.mxu0 0.0
        %3067 = vmatprep.subr.mxu0 0.0
        %3068 = vmatpush1.xpose.msra.mxu0 0.0
        %3069 = vmatprep.subr.mxu0 0.0
        %3070 = vmatpush1.xpose.msra.mxu0 0.0
        %3071 = vmatprep.subr.mxu0 0.0
        %3072 = vmatpush1.xpose.msra.mxu0 0.0
        %3073 = vmatprep.subr.mxu0 0.0
        %3074 = vmatpush1.xpose.msra.mxu0 0.0
        %3075 = vmatprep.subr.mxu0 0.0
        %3076 = vmatpush1.xpose.msra.mxu0 0.0
        %3077 = vmatprep.subr.mxu0 0.0
        %3078 = vmatpush1.xpose.msra.mxu0 0.0
        %3079 = vmatprep.subr.mxu0 0.0
        %3080 = vmatpush1.xpose.msra.mxu0 0.0
        %3081 = vmatprep.subr.mxu0 0.0
        %3082 = vmatpush1.xpose.msra.mxu0 0.0
        %3083 = vmatprep.subr.mxu0 0.0
        %3084 = vmatpush1.xpose.msra.mxu0 0.0
        %3085 = vmatprep.subr.mxu0 0.0
        %3086 = vmatpush1.xpose.msra.mxu0 0.0
        %3087 = vmatprep.subr.mxu0 0.0
        %3088 = vmatpush1.xpose.msra.mxu0 0.0
        %3089 = vmatprep.subr.mxu0 0.0
        %3090 = vmatpush1.xpose.msra.mxu0 0.0
        %3091 = vmatprep.subr.mxu0 0.0
        %3092 = vmatpush1.xpose.msra.mxu0 0.0
        %3093 = vmatprep.subr.mxu0 0.0
        %3094 = vmatpush1.xpose.msra.mxu0 0.0
        %3095 = vmatprep.subr.mxu0 0.0
        %3096 = vmatpush1.xpose.msra.mxu0 0.0
        %3097 = vmatprep.mubr.f32.mxu0 0.0
        %v3098 = vand.u32 %v2874, 4294901760
        %v3099 = vsub.f32 %v2874, %v3098
        %3100 = vmatmul.mubr.f32.gmra.mrb[0].mxu0 %v3099
        %v3101 = vpop.f32.mrb[0].mxu0
        %v3102 = vadd.f32 %v3028, %v3101
        %v3103 = vpop.f32.mrb[0].mxu0
        %3104 = vdwg.mxu0
        %3105 = vmatprep.subr.mxu0 0.0
        %v3106 = vand.u32 %v2877, 4294901760
        %3107 = vmatpush1.xpose.msra.mxu0 %v3106
        %3108 = vmatprep.subr.mxu0 0.0
        %3109 = vmatpush1.xpose.msra.mxu0 0.0
        %3110 = vmatprep.subr.mxu0 0.0
        %3111 = vmatpush1.xpose.msra.mxu0 0.0
        %3112 = vmatprep.subr.mxu0 0.0
        %3113 = vmatpush1.xpose.msra.mxu0 0.0
        %3114 = vmatprep.subr.mxu0 0.0
        %3115 = vmatpush1.xpose.msra.mxu0 0.0
        %3116 = vmatprep.subr.mxu0 0.0
        %3117 = vmatpush1.xpose.msra.mxu0 0.0
        %3118 = vmatprep.subr.mxu0 0.0
        %3119 = vmatpush1.xpose.msra.mxu0 0.0
        %3120 = vmatprep.subr.mxu0 0.0
        %3121 = vmatpush1.xpose.msra.mxu0 0.0
        %3122 = vmatprep.subr.mxu0 0.0
        %3123 = vmatpush1.xpose.msra.mxu0 0.0
        %3124 = vmatprep.subr.mxu0 0.0
        %3125 = vmatpush1.xpose.msra.mxu0 0.0
        %3126 = vmatprep.subr.mxu0 0.0
        %3127 = vmatpush1.xpose.msra.mxu0 0.0
        %3128 = vmatprep.subr.mxu0 0.0
        %3129 = vmatpush1.xpose.msra.mxu0 0.0
        %3130 = vmatprep.subr.mxu0 0.0
        %3131 = vmatpush1.xpose.msra.mxu0 0.0
        %3132 = vmatprep.subr.mxu0 0.0
        %3133 = vmatpush1.xpose.msra.mxu0 0.0
        %3134 = vmatprep.subr.mxu0 0.0
        %3135 = vmatpush1.xpose.msra.mxu0 0.0
        %3136 = vmatprep.subr.mxu0 0.0
        %3137 = vmatpush1.xpose.msra.mxu0 0.0
        %3138 = vmatprep.subr.mxu0 0.0
        %3139 = vmatpush1.xpose.msra.mxu0 0.0
        %3140 = vmatprep.subr.mxu0 0.0
        %3141 = vmatpush1.xpose.msra.mxu0 0.0
        %3142 = vmatprep.subr.mxu0 0.0
        %3143 = vmatpush1.xpose.msra.mxu0 0.0
        %3144 = vmatprep.subr.mxu0 0.0
        %3145 = vmatpush1.xpose.msra.mxu0 0.0
        %3146 = vmatprep.subr.mxu0 0.0
        %3147 = vmatpush1.xpose.msra.mxu0 0.0
        %3148 = vmatprep.subr.mxu0 0.0
        %3149 = vmatpush1.xpose.msra.mxu0 0.0
        %3150 = vmatprep.subr.mxu0 0.0
        %3151 = vmatpush1.xpose.msra.mxu0 0.0
        %3152 = vmatprep.subr.mxu0 0.0
        %3153 = vmatpush1.xpose.msra.mxu0 0.0
        %3154 = vmatprep.subr.mxu0 0.0
        %3155 = vmatpush1.xpose.msra.mxu0 0.0
        %3156 = vmatprep.subr.mxu0 0.0
        %3157 = vmatpush1.xpose.msra.mxu0 0.0
        %3158 = vmatprep.subr.mxu0 0.0
        %3159 = vmatpush1.xpose.msra.mxu0 0.0
        %3160 = vmatprep.subr.mxu0 0.0
        %3161 = vmatpush1.xpose.msra.mxu0 0.0
        %3162 = vmatprep.subr.mxu0 0.0
        %3163 = vmatpush1.xpose.msra.mxu0 0.0
        %3164 = vmatprep.subr.mxu0 0.0
        %3165 = vmatpush1.xpose.msra.mxu0 0.0
        %3166 = vmatprep.subr.mxu0 0.0
        %3167 = vmatpush1.xpose.msra.mxu0 0.0
        %3168 = vmatprep.subr.mxu0 0.0
        %3169 = vmatpush1.xpose.msra.mxu0 0.0
        %3170 = vmatprep.mubr.f32.mxu0 0.0
        %v3171 = vand.u32 %v2874, 4294901760
        %v3172 = vsub.f32 %v2874, %v3171
        %v3173 = vand.u32 %v3172, 4294901760
        %3174 = vmatmul.mubr.f32.gmra.mrb[0].mxu0 %v3173
        %v3175 = vpop.f32.mrb[0].mxu0
        %v3176 = vadd.f32 %v3102, %v3175
        %v3177 = vpop.f32.mrb[0].mxu0
        %3178 = vdwg.mxu0
        %3179 = vmatprep.subr.mxu0 0.0
        %v3180 = vand.u32 %v2877, 4294901760
        %v3181 = vsub.f32 %v2877, %v3180
        %v3182 = vand.u32 %v3181, 4294901760
        %3183 = vmatpush1.xpose.msra.mxu0 %v3182
        %3184 = vmatprep.subr.mxu0 0.0
        %3185 = vmatpush1.xpose.msra.mxu0 0.0
        %3186 = vmatprep.subr.mxu0 0.0
        %3187 = vmatpush1.xpose.msra.mxu0 0.0
        %3188 = vmatprep.subr.mxu0 0.0
        %3189 = vmatpush1.xpose.msra.mxu0 0.0
        %3190 = vmatprep.subr.mxu0 0.0
        %3191 = vmatpush1.xpose.msra.mxu0 0.0
        %3192 = vmatprep.subr.mxu0 0.0
        %3193 = vmatpush1.xpose.msra.mxu0 0.0
        %3194 = vmatprep.subr.mxu0 0.0
        %3195 = vmatpush1.xpose.msra.mxu0 0.0
        %3196 = vmatprep.subr.mxu0 0.0
        %3197 = vmatpush1.xpose.msra.mxu0 0.0
        %3198 = vmatprep.subr.mxu0 0.0
        %3199 = vmatpush1.xpose.msra.mxu0 0.0
        %3200 = vmatprep.subr.mxu0 0.0
        %3201 = vmatpush1.xpose.msra.mxu0 0.0
        %3202 = vmatprep.subr.mxu0 0.0
        %3203 = vmatpush1.xpose.msra.mxu0 0.0
        %3204 = vmatprep.subr.mxu0 0.0
        %3205 = vmatpush1.xpose.msra.mxu0 0.0
        %3206 = vmatprep.subr.mxu0 0.0
        %3207 = vmatpush1.xpose.msra.mxu0 0.0
        %3208 = vmatprep.subr.mxu0 0.0
        %3209 = vmatpush1.xpose.msra.mxu0 0.0
        %3210 = vmatprep.subr.mxu0 0.0
        %3211 = vmatpush1.xpose.msra.mxu0 0.0
        %3212 = vmatprep.subr.mxu0 0.0
        %3213 = vmatpush1.xpose.msra.mxu0 0.0
        %3214 = vmatprep.subr.mxu0 0.0
        %3215 = vmatpush1.xpose.msra.mxu0 0.0
        %3216 = vmatprep.subr.mxu0 0.0
        %3217 = vmatpush1.xpose.msra.mxu0 0.0
        %3218 = vmatprep.subr.mxu0 0.0
        %3219 = vmatpush1.xpose.msra.mxu0 0.0
        %3220 = vmatprep.subr.mxu0 0.0
        %3221 = vmatpush1.xpose.msra.mxu0 0.0
        %3222 = vmatprep.subr.mxu0 0.0
        %3223 = vmatpush1.xpose.msra.mxu0 0.0
        %3224 = vmatprep.subr.mxu0 0.0
        %3225 = vmatpush1.xpose.msra.mxu0 0.0
        %3226 = vmatprep.subr.mxu0 0.0
        %3227 = vmatpush1.xpose.msra.mxu0 0.0
        %3228 = vmatprep.subr.mxu0 0.0
        %3229 = vmatpush1.xpose.msra.mxu0 0.0
        %3230 = vmatprep.subr.mxu0 0.0
        %3231 = vmatpush1.xpose.msra.mxu0 0.0
        %3232 = vmatprep.subr.mxu0 0.0
        %3233 = vmatpush1.xpose.msra.mxu0 0.0
        %3234 = vmatprep.subr.mxu0 0.0
        %3235 = vmatpush1.xpose.msra.mxu0 0.0
        %3236 = vmatprep.subr.mxu0 0.0
        %3237 = vmatpush1.xpose.msra.mxu0 0.0
        %3238 = vmatprep.subr.mxu0 0.0
        %3239 = vmatpush1.xpose.msra.mxu0 0.0
        %3240 = vmatprep.subr.mxu0 0.0
        %3241 = vmatpush1.xpose.msra.mxu0 0.0
        %3242 = vmatprep.subr.mxu0 0.0
        %3243 = vmatpush1.xpose.msra.mxu0 0.0
        %3244 = vmatprep.subr.mxu0 0.0
        %3245 = vmatpush1.xpose.msra.mxu0 0.0
        %3246 = vmatprep.mubr.f32.mxu0 0.0
        %v3247 = vand.u32 %v2874, 4294901760
        %3248 = vmatmul.mubr.f32.gmra.mrb[0].mxu0 %v3247
        %v3249 = vpop.f32.mrb[0].mxu0
        %v3250 = vadd.f32 %v3176, %v3249
        %v3251 = vpop.f32.mrb[0].mxu0
        %3252 = vdwg.mxu0
        %3253 = vmatprep.subr.mxu0 0.0
        %v3254 = vand.u32 %v2877, 4294901760
        %3255 = vmatpush1.xpose.msra.mxu0 %v3254
        %3256 = vmatprep.subr.mxu0 0.0
        %3257 = vmatpush1.xpose.msra.mxu0 0.0
        %3258 = vmatprep.subr.mxu0 0.0
        %3259 = vmatpush1.xpose.msra.mxu0 0.0
        %3260 = vmatprep.subr.mxu0 0.0
        %3261 = vmatpush1.xpose.msra.mxu0 0.0
        %3262 = vmatprep.subr.mxu0 0.0
        %3263 = vmatpush1.xpose.msra.mxu0 0.0
        %3264 = vmatprep.subr.mxu0 0.0
        %3265 = vmatpush1.xpose.msra.mxu0 0.0
        %3266 = vmatprep.subr.mxu0 0.0
        %3267 = vmatpush1.xpose.msra.mxu0 0.0
        %3268 = vmatprep.subr.mxu0 0.0
        %3269 = vmatpush1.xpose.msra.mxu0 0.0
        %3270 = vmatprep.subr.mxu0 0.0
        %3271 = vmatpush1.xpose.msra.mxu0 0.0
        %3272 = vmatprep.subr.mxu0 0.0
        %3273 = vmatpush1.xpose.msra.mxu0 0.0
        %3274 = vmatprep.subr.mxu0 0.0
        %3275 = vmatpush1.xpose.msra.mxu0 0.0
        %3276 = vmatprep.subr.mxu0 0.0
        %3277 = vmatpush1.xpose.msra.mxu0 0.0
        %3278 = vmatprep.subr.mxu0 0.0
        %3279 = vmatpush1.xpose.msra.mxu0 0.0
        %3280 = vmatprep.subr.mxu0 0.0
        %3281 = vmatpush1.xpose.msra.mxu0 0.0
        %3282 = vmatprep.subr.mxu0 0.0
        %3283 = vmatpush1.xpose.msra.mxu0 0.0
        %3284 = vmatprep.subr.mxu0 0.0
        %3285 = vmatpush1.xpose.msra.mxu0 0.0
        %3286 = vmatprep.subr.mxu0 0.0
        %3287 = vmatpush1.xpose.msra.mxu0 0.0
        %3288 = vmatprep.subr.mxu0 0.0
        %3289 = vmatpush1.xpose.msra.mxu0 0.0
        %3290 = vmatprep.subr.mxu0 0.0
        %3291 = vmatpush1.xpose.msra.mxu0 0.0
        %3292 = vmatprep.subr.mxu0 0.0
        %3293 = vmatpush1.xpose.msra.mxu0 0.0
        %3294 = vmatprep.subr.mxu0 0.0
        %3295 = vmatpush1.xpose.msra.mxu0 0.0
        %3296 = vmatprep.subr.mxu0 0.0
        %3297 = vmatpush1.xpose.msra.mxu0 0.0
        %3298 = vmatprep.subr.mxu0 0.0
        %3299 = vmatpush1.xpose.msra.mxu0 0.0
        %3300 = vmatprep.subr.mxu0 0.0
        %3301 = vmatpush1.xpose.msra.mxu0 0.0
        %3302 = vmatprep.subr.mxu0 0.0
        %3303 = vmatpush1.xpose.msra.mxu0 0.0
        %3304 = vmatprep.subr.mxu0 0.0
        %3305 = vmatpush1.xpose.msra.mxu0 0.0
        %3306 = vmatprep.subr.mxu0 0.0
        %3307 = vmatpush1.xpose.msra.mxu0 0.0
        %3308 = vmatprep.subr.mxu0 0.0
        %3309 = vmatpush1.xpose.msra.mxu0 0.0
        %3310 = vmatprep.subr.mxu0 0.0
        %3311 = vmatpush1.xpose.msra.mxu0 0.0
        %3312 = vmatprep.subr.mxu0 0.0
        %3313 = vmatpush1.xpose.msra.mxu0 0.0
        %3314 = vmatprep.subr.mxu0 0.0
        %3315 = vmatpush1.xpose.msra.mxu0 0.0
        %3316 = vmatprep.subr.mxu0 0.0
        %3317 = vmatpush1.xpose.msra.mxu0 0.0
        %3318 = vmatprep.mubr.f32.mxu0 0.0
        %v3319 = vand.u32 %v2874, 4294901760
        %3320 = vmatmul.mubr.f32.gmra.mrb[0].mxu0 %v3319
        %v3321 = vpop.f32.mrb[0].mxu0
        %v3322 = vadd.f32 %v3250, %v3321
        %v3323 = vpop.f32.mrb[0].mxu0
        %3324 = vdwg.mxu0
        %v3325 = vmul.f32 %v3322, 0.17677669
        %v3326 = vsel %vm2871, %v3325, -1e+30
        %vm3327 = vcmask 64512
        %v3328 = vsel %vm3327, %v3326, -inf
        %3329 = vmax.xlane.f32.xlu0 %v3328
        %v3330 = vpop.xlane.xlu0 %3329
        %v3331 = vsub.f32 %v3326, %v3330
        %v3332 = vmul.f32 %v3331, 1.442695
        %v3333 = vpow.pop %v3332
        %v3334 = vsel %vm3327, %v3333, 0.0
        %3335 = vadd.xlane.f32.xlu0 %v3334
        %v3336 = vpop.xlane.xlu0 %3335
        %v3337 = vrcp.pop %v3336
        %v3338 = vmul.f32 %v3333, %v3337
        %v3340 = vsel %vm3327, %v3338, 0
        %3342 = vmatprep.subr.mxu0 0.0
        %v3343 = vand.u32 %v2864, 4294901760
        %3344 = vmatpush1.msra.mxu0 %v3343
        %3345 = vmatprep.subr.mxu0 0.0
        %3346 = vmatpush1.msra.mxu0 0.0
        %3347 = vmatprep.subr.mxu0 0.0
        %3348 = vmatpush1.msra.mxu0 0.0
        %3349 = vmatprep.subr.mxu0 0.0
        %3350 = vmatpush1.msra.mxu0 0.0
        %3351 = vmatprep.subr.mxu0 0.0
        %3352 = vmatpush1.msra.mxu0 0.0
        %3353 = vmatprep.subr.mxu0 0.0
        %3354 = vmatpush1.msra.mxu0 0.0
        %3355 = vmatprep.subr.mxu0 0.0
        %3356 = vmatpush1.msra.mxu0 0.0
        %3357 = vmatprep.subr.mxu0 0.0
        %3358 = vmatpush1.msra.mxu0 0.0
        %3359 = vmatprep.subr.mxu0 0.0
        %3360 = vmatpush1.msra.mxu0 0.0
        %3361 = vmatprep.subr.mxu0 0.0
        %3362 = vmatpush1.msra.mxu0 0.0
        %3363 = vmatprep.subr.mxu0 0.0
        %3364 = vmatpush1.msra.mxu0 0.0
        %3365 = vmatprep.subr.mxu0 0.0
        %3366 = vmatpush1.msra.mxu0 0.0
        %3367 = vmatprep.subr.mxu0 0.0
        %3368 = vmatpush1.msra.mxu0 0.0
        %3369 = vmatprep.subr.mxu0 0.0
        %3370 = vmatpush1.msra.mxu0 0.0
        %3371 = vmatprep.subr.mxu0 0.0
        %3372 = vmatpush1.msra.mxu0 0.0
        %3373 = vmatprep.subr.mxu0 0.0
        %3374 = vmatpush1.msra.mxu0 0.0
        %3375 = vmatprep.subr.mxu0 0.0
        %3376 = vmatpush1.msra.mxu0 0.0
        %3377 = vmatprep.subr.mxu0 0.0
        %3378 = vmatpush1.msra.mxu0 0.0
        %3379 = vmatprep.subr.mxu0 0.0
        %3380 = vmatpush1.msra.mxu0 0.0
        %3381 = vmatprep.subr.mxu0 0.0
        %3382 = vmatpush1.msra.mxu0 0.0
        %3383 = vmatprep.subr.mxu0 0.0
        %3384 = vmatpush1.msra.mxu0 0.0
        %3385 = vmatprep.subr.mxu0 0.0
        %3386 = vmatpush1.msra.mxu0 0.0
        %3387 = vmatprep.subr.mxu0 0.0
        %3388 = vmatpush1.msra.mxu0 0.0
        %3389 = vmatprep.subr.mxu0 0.0
        %3390 = vmatpush1.msra.mxu0 0.0
        %3391 = vmatprep.subr.mxu0 0.0
        %3392 = vmatpush1.msra.mxu0 0.0
        %3393 = vmatprep.subr.mxu0 0.0
        %3394 = vmatpush1.msra.mxu0 0.0
        %3395 = vmatprep.subr.mxu0 0.0
        %3396 = vmatpush1.msra.mxu0 0.0
        %3397 = vmatprep.subr.mxu0 0.0
        %3398 = vmatpush1.msra.mxu0 0.0
        %3399 = vmatprep.subr.mxu0 0.0
        %3400 = vmatpush1.msra.mxu0 0.0
        %3401 = vmatprep.subr.mxu0 0.0
        %3402 = vmatpush1.msra.mxu0 0.0
        %3403 = vmatprep.subr.mxu0 0.0
        %3404 = vmatpush1.msra.mxu0 0.0
        %3405 = vmatprep.subr.mxu0 0.0
        %3406 = vmatpush1.msra.mxu0 0.0
        %3407 = vmatprep.mubr.f32.mxu0 0.0
        %v3408 = vand.u32 %v3340, 4294901760
        %v3409 = vsub.f32 %v3340, %v3408
        %v3410 = vand.u32 %v3409, 4294901760
        %v3411 = vsub.f32 %v3409, %v3410
        %v3412 = vand.u32 %v3411, 4294901760
        %3413 = vmatmul.mubr.f32.gmra.mrb[0].mxu0 %v3412
        %v3414 = vpop.f32.mrb[0].mxu0
        %v3415 = vadd.f32 0.0, %v3414
        %v3416 = vpop.f32.mrb[0].mxu0
        %3417 = vdwg.mxu0
        %3418 = vmatprep.subr.mxu0 0.0
        %v3419 = vand.u32 %v2864, 4294901760
        %v3420 = vsub.f32 %v2864, %v3419
        %v3421 = vand.u32 %v3420, 4294901760
        %v3422 = vsub.f32 %v3420, %v3421
        %v3423 = vand.u32 %v3422, 4294901760
        %3424 = vmatpush1.msra.mxu0 %v3423
        %3425 = vmatprep.subr.mxu0 0.0
        %3426 = vmatpush1.msra.mxu0 0.0
        %3427 = vmatprep.subr.mxu0 0.0
        %3428 = vmatpush1.msra.mxu0 0.0
        %3429 = vmatprep.subr.mxu0 0.0
        %3430 = vmatpush1.msra.mxu0 0.0
        %3431 = vmatprep.subr.mxu0 0.0
        %3432 = vmatpush1.msra.mxu0 0.0
        %3433 = vmatprep.subr.mxu0 0.0
        %3434 = vmatpush1.msra.mxu0 0.0
        %3435 = vmatprep.subr.mxu0 0.0
        %3436 = vmatpush1.msra.mxu0 0.0
        %3437 = vmatprep.subr.mxu0 0.0
        %3438 = vmatpush1.msra.mxu0 0.0
        %3439 = vmatprep.subr.mxu0 0.0
        %3440 = vmatpush1.msra.mxu0 0.0
        %3441 = vmatprep.subr.mxu0 0.0
        %3442 = vmatpush1.msra.mxu0 0.0
        %3443 = vmatprep.subr.mxu0 0.0
        %3444 = vmatpush1.msra.mxu0 0.0
        %3445 = vmatprep.subr.mxu0 0.0
        %3446 = vmatpush1.msra.mxu0 0.0
        %3447 = vmatprep.subr.mxu0 0.0
        %3448 = vmatpush1.msra.mxu0 0.0
        %3449 = vmatprep.subr.mxu0 0.0
        %3450 = vmatpush1.msra.mxu0 0.0
        %3451 = vmatprep.subr.mxu0 0.0
        %3452 = vmatpush1.msra.mxu0 0.0
        %3453 = vmatprep.subr.mxu0 0.0
        %3454 = vmatpush1.msra.mxu0 0.0
        %3455 = vmatprep.subr.mxu0 0.0
        %3456 = vmatpush1.msra.mxu0 0.0
        %3457 = vmatprep.subr.mxu0 0.0
        %3458 = vmatpush1.msra.mxu0 0.0
        %3459 = vmatprep.subr.mxu0 0.0
        %3460 = vmatpush1.msra.mxu0 0.0
        %3461 = vmatprep.subr.mxu0 0.0
        %3462 = vmatpush1.msra.mxu0 0.0
        %3463 = vmatprep.subr.mxu0 0.0
        %3464 = vmatpush1.msra.mxu0 0.0
        %3465 = vmatprep.subr.mxu0 0.0
        %3466 = vmatpush1.msra.mxu0 0.0
        %3467 = vmatprep.subr.mxu0 0.0
        %3468 = vmatpush1.msra.mxu0 0.0
        %3469 = vmatprep.subr.mxu0 0.0
        %3470 = vmatpush1.msra.mxu0 0.0
        %3471 = vmatprep.subr.mxu0 0.0
        %3472 = vmatpush1.msra.mxu0 0.0
        %3473 = vmatprep.subr.mxu0 0.0
        %3474 = vmatpush1.msra.mxu0 0.0
        %3475 = vmatprep.subr.mxu0 0.0
        %3476 = vmatpush1.msra.mxu0 0.0
        %3477 = vmatprep.subr.mxu0 0.0
        %3478 = vmatpush1.msra.mxu0 0.0
        %3479 = vmatprep.subr.mxu0 0.0
        %3480 = vmatpush1.msra.mxu0 0.0
        %3481 = vmatprep.subr.mxu0 0.0
        %3482 = vmatpush1.msra.mxu0 0.0
        %3483 = vmatprep.subr.mxu0 0.0
        %3484 = vmatpush1.msra.mxu0 0.0
        %3485 = vmatprep.subr.mxu0 0.0
        %3486 = vmatpush1.msra.mxu0 0.0
        %3487 = vmatprep.mubr.f32.mxu0 0.0
        %v3488 = vand.u32 %v3340, 4294901760
        %3489 = vmatmul.mubr.f32.gmra.mrb[0].mxu0 %v3488
        %v3490 = vpop.f32.mrb[0].mxu0
        %v3491 = vadd.f32 %v3415, %v3490
        %v3492 = vpop.f32.mrb[0].mxu0
        %3493 = vdwg.mxu0
        %3494 = vmatprep.subr.mxu0 0.0
        %v3495 = vand.u32 %v2864, 4294901760
        %v3496 = vsub.f32 %v2864, %v3495
        %3497 = vmatpush1.msra.mxu0 %v3496
        %3498 = vmatprep.subr.mxu0 0.0
        %3499 = vmatpush1.msra.mxu0 0.0
        %3500 = vmatprep.subr.mxu0 0.0
        %3501 = vmatpush1.msra.mxu0 0.0
        %3502 = vmatprep.subr.mxu0 0.0
        %3503 = vmatpush1.msra.mxu0 0.0
        %3504 = vmatprep.subr.mxu0 0.0
        %3505 = vmatpush1.msra.mxu0 0.0
        %3506 = vmatprep.subr.mxu0 0.0
        %3507 = vmatpush1.msra.mxu0 0.0
        %3508 = vmatprep.subr.mxu0 0.0
        %3509 = vmatpush1.msra.mxu0 0.0
        %3510 = vmatprep.subr.mxu0 0.0
        %3511 = vmatpush1.msra.mxu0 0.0
        %3512 = vmatprep.subr.mxu0 0.0
        %3513 = vmatpush1.msra.mxu0 0.0
        %3514 = vmatprep.subr.mxu0 0.0
        %3515 = vmatpush1.msra.mxu0 0.0
        %3516 = vmatprep.subr.mxu0 0.0
        %3517 = vmatpush1.msra.mxu0 0.0
        %3518 = vmatprep.subr.mxu0 0.0
        %3519 = vmatpush1.msra.mxu0 0.0
        %3520 = vmatprep.subr.mxu0 0.0
        %3521 = vmatpush1.msra.mxu0 0.0
        %3522 = vmatprep.subr.mxu0 0.0
        %3523 = vmatpush1.msra.mxu0 0.0
        %3524 = vmatprep.subr.mxu0 0.0
        %3525 = vmatpush1.msra.mxu0 0.0
        %3526 = vmatprep.subr.mxu0 0.0
        %3527 = vmatpush1.msra.mxu0 0.0
        %3528 = vmatprep.subr.mxu0 0.0
        %3529 = vmatpush1.msra.mxu0 0.0
        %3530 = vmatprep.subr.mxu0 0.0
        %3531 = vmatpush1.msra.mxu0 0.0
        %3532 = vmatprep.subr.mxu0 0.0
        %3533 = vmatpush1.msra.mxu0 0.0
        %3534 = vmatprep.subr.mxu0 0.0
        %3535 = vmatpush1.msra.mxu0 0.0
        %3536 = vmatprep.subr.mxu0 0.0
        %3537 = vmatpush1.msra.mxu0 0.0
        %3538 = vmatprep.subr.mxu0 0.0
        %3539 = vmatpush1.msra.mxu0 0.0
        %3540 = vmatprep.subr.mxu0 0.0
        %3541 = vmatpush1.msra.mxu0 0.0
        %3542 = vmatprep.subr.mxu0 0.0
        %3543 = vmatpush1.msra.mxu0 0.0
        %3544 = vmatprep.subr.mxu0 0.0
        %3545 = vmatpush1.msra.mxu0 0.0
        %3546 = vmatprep.subr.mxu0 0.0
        %3547 = vmatpush1.msra.mxu0 0.0
        %3548 = vmatprep.subr.mxu0 0.0
        %3549 = vmatpush1.msra.mxu0 0.0
        %3550 = vmatprep.subr.mxu0 0.0
        %3551 = vmatpush1.msra.mxu0 0.0
        %3552 = vmatprep.subr.mxu0 0.0
        %3553 = vmatpush1.msra.mxu0 0.0
        %3554 = vmatprep.subr.mxu0 0.0
        %3555 = vmatpush1.msra.mxu0 0.0
        %3556 = vmatprep.subr.mxu0 0.0
        %3557 = vmatpush1.msra.mxu0 0.0
        %3558 = vmatprep.subr.mxu0 0.0
        %3559 = vmatpush1.msra.mxu0 0.0
        %3560 = vmatprep.mubr.f32.mxu0 0.0
        %v3561 = vand.u32 %v3340, 4294901760
        %v3562 = vsub.f32 %v3340, %v3561
        %3563 = vmatmul.mubr.f32.gmra.mrb[0].mxu0 %v3562
        %v3564 = vpop.f32.mrb[0].mxu0
        %v3565 = vadd.f32 %v3491, %v3564
        %v3566 = vpop.f32.mrb[0].mxu0
        %3567 = vdwg.mxu0
        %3568 = vmatprep.subr.mxu0 0.0
        %v3569 = vand.u32 %v2864, 4294901760
        %3570 = vmatpush1.msra.mxu0 %v3569
        %3571 = vmatprep.subr.mxu0 0.0
        %3572 = vmatpush1.msra.mxu0 0.0
        %3573 = vmatprep.subr.mxu0 0.0
        %3574 = vmatpush1.msra.mxu0 0.0
        %3575 = vmatprep.subr.mxu0 0.0
        %3576 = vmatpush1.msra.mxu0 0.0
        %3577 = vmatprep.subr.mxu0 0.0
        %3578 = vmatpush1.msra.mxu0 0.0
        %3579 = vmatprep.subr.mxu0 0.0
        %3580 = vmatpush1.msra.mxu0 0.0
        %3581 = vmatprep.subr.mxu0 0.0
        %3582 = vmatpush1.msra.mxu0 0.0
        %3583 = vmatprep.subr.mxu0 0.0
        %3584 = vmatpush1.msra.mxu0 0.0
        %3585 = vmatprep.subr.mxu0 0.0
        %3586 = vmatpush1.msra.mxu0 0.0
        %3587 = vmatprep.subr.mxu0 0.0
        %3588 = vmatpush1.msra.mxu0 0.0
        %3589 = vmatprep.subr.mxu0 0.0
        %3590 = vmatpush1.msra.mxu0 0.0
        %3591 = vmatprep.subr.mxu0 0.0
        %3592 = vmatpush1.msra.mxu0 0.0
        %3593 = vmatprep.subr.mxu0 0.0
        %3594 = vmatpush1.msra.mxu0 0.0
        %3595 = vmatprep.subr.mxu0 0.0
        %3596 = vmatpush1.msra.mxu0 0.0
        %3597 = vmatprep.subr.mxu0 0.0
        %3598 = vmatpush1.msra.mxu0 0.0
        %3599 = vmatprep.subr.mxu0 0.0
        %3600 = vmatpush1.msra.mxu0 0.0
        %3601 = vmatprep.subr.mxu0 0.0
        %3602 = vmatpush1.msra.mxu0 0.0
        %3603 = vmatprep.subr.mxu0 0.0
        %3604 = vmatpush1.msra.mxu0 0.0
        %3605 = vmatprep.subr.mxu0 0.0
        %3606 = vmatpush1.msra.mxu0 0.0
        %3607 = vmatprep.subr.mxu0 0.0
        %3608 = vmatpush1.msra.mxu0 0.0
        %3609 = vmatprep.subr.mxu0 0.0
        %3610 = vmatpush1.msra.mxu0 0.0
        %3611 = vmatprep.subr.mxu0 0.0
        %3612 = vmatpush1.msra.mxu0 0.0
        %3613 = vmatprep.subr.mxu0 0.0
        %3614 = vmatpush1.msra.mxu0 0.0
        %3615 = vmatprep.subr.mxu0 0.0
        %3616 = vmatpush1.msra.mxu0 0.0
        %3617 = vmatprep.subr.mxu0 0.0
        %3618 = vmatpush1.msra.mxu0 0.0
        %3619 = vmatprep.subr.mxu0 0.0
        %3620 = vmatpush1.msra.mxu0 0.0
        %3621 = vmatprep.subr.mxu0 0.0
        %3622 = vmatpush1.msra.mxu0 0.0
        %3623 = vmatprep.subr.mxu0 0.0
        %3624 = vmatpush1.msra.mxu0 0.0
        %3625 = vmatprep.subr.mxu0 0.0
        %3626 = vmatpush1.msra.mxu0 0.0
        %3627 = vmatprep.subr.mxu0 0.0
        %3628 = vmatpush1.msra.mxu0 0.0
        %3629 = vmatprep.subr.mxu0 0.0
        %3630 = vmatpush1.msra.mxu0 0.0
        %3631 = vmatprep.subr.mxu0 0.0
        %3632 = vmatpush1.msra.mxu0 0.0
        %3633 = vmatprep.mubr.f32.mxu0 0.0
        %v3634 = vand.u32 %v3340, 4294901760
        %v3635 = vsub.f32 %v3340, %v3634
        %v3636 = vand.u32 %v3635, 4294901760
        %3637 = vmatmul.mubr.f32.gmra.mrb[0].mxu0 %v3636
        %v3638 = vpop.f32.mrb[0].mxu0
        %v3639 = vadd.f32 %v3565, %v3638
        %v3640 = vpop.f32.mrb[0].mxu0
        %3641 = vdwg.mxu0
        %3642 = vmatprep.subr.mxu0 0.0
        %v3643 = vand.u32 %v2864, 4294901760
        %v3644 = vsub.f32 %v2864, %v3643
        %v3645 = vand.u32 %v3644, 4294901760
        %3646 = vmatpush1.msra.mxu0 %v3645
        %3647 = vmatprep.subr.mxu0 0.0
        %3648 = vmatpush1.msra.mxu0 0.0
        %3649 = vmatprep.subr.mxu0 0.0
        %3650 = vmatpush1.msra.mxu0 0.0
        %3651 = vmatprep.subr.mxu0 0.0
        %3652 = vmatpush1.msra.mxu0 0.0
        %3653 = vmatprep.subr.mxu0 0.0
        %3654 = vmatpush1.msra.mxu0 0.0
        %3655 = vmatprep.subr.mxu0 0.0
        %3656 = vmatpush1.msra.mxu0 0.0
        %3657 = vmatprep.subr.mxu0 0.0
        %3658 = vmatpush1.msra.mxu0 0.0
        %3659 = vmatprep.subr.mxu0 0.0
        %3660 = vmatpush1.msra.mxu0 0.0
        %3661 = vmatprep.subr.mxu0 0.0
        %3662 = vmatpush1.msra.mxu0 0.0
        %3663 = vmatprep.subr.mxu0 0.0
        %3664 = vmatpush1.msra.mxu0 0.0
        %3665 = vmatprep.subr.mxu0 0.0
        %3666 = vmatpush1.msra.mxu0 0.0
        %3667 = vmatprep.subr.mxu0 0.0
        %3668 = vmatpush1.msra.mxu0 0.0
        %3669 = vmatprep.subr.mxu0 0.0
        %3670 = vmatpush1.msra.mxu0 0.0
        %3671 = vmatprep.subr.mxu0 0.0
        %3672 = vmatpush1.msra.mxu0 0.0
        %3673 = vmatprep.subr.mxu0 0.0
        %3674 = vmatpush1.msra.mxu0 0.0
        %3675 = vmatprep.subr.mxu0 0.0
        %3676 = vmatpush1.msra.mxu0 0.0
        %3677 = vmatprep.subr.mxu0 0.0
        %3678 = vmatpush1.msra.mxu0 0.0
        %3679 = vmatprep.subr.mxu0 0.0
        %3680 = vmatpush1.msra.mxu0 0.0
        %3681 = vmatprep.subr.mxu0 0.0
        %3682 = vmatpush1.msra.mxu0 0.0
        %3683 = vmatprep.subr.mxu0 0.0
        %3684 = vmatpush1.msra.mxu0 0.0
        %3685 = vmatprep.subr.mxu0 0.0
        %3686 = vmatpush1.msra.mxu0 0.0
        %3687 = vmatprep.subr.mxu0 0.0
        %3688 = vmatpush1.msra.mxu0 0.0
        %3689 = vmatprep.subr.mxu0 0.0
        %3690 = vmatpush1.msra.mxu0 0.0
        %3691 = vmatprep.subr.mxu0 0.0
        %3692 = vmatpush1.msra.mxu0 0.0
        %3693 = vmatprep.subr.mxu0 0.0
        %3694 = vmatpush1.msra.mxu0 0.0
        %3695 = vmatprep.subr.mxu0 0.0
        %3696 = vmatpush1.msra.mxu0 0.0
        %3697 = vmatprep.subr.mxu0 0.0
        %3698 = vmatpush1.msra.mxu0 0.0
        %3699 = vmatprep.subr.mxu0 0.0
        %3700 = vmatpush1.msra.mxu0 0.0
        %3701 = vmatprep.subr.mxu0 0.0
        %3702 = vmatpush1.msra.mxu0 0.0
        %3703 = vmatprep.subr.mxu0 0.0
        %3704 = vmatpush1.msra.mxu0 0.0
        %3705 = vmatprep.subr.mxu0 0.0
        %3706 = vmatpush1.msra.mxu0 0.0
        %3707 = vmatprep.subr.mxu0 0.0
        %3708 = vmatpush1.msra.mxu0 0.0
        %3709 = vmatprep.mubr.f32.mxu0 0.0
        %v3710 = vand.u32 %v3340, 4294901760
        %3711 = vmatmul.mubr.f32.gmra.mrb[0].mxu0 %v3710
        %v3712 = vpop.f32.mrb[0].mxu0
        %v3713 = vadd.f32 %v3639, %v3712
        %v3714 = vpop.f32.mrb[0].mxu0
        %3715 = vdwg.mxu0
        %3716 = vmatprep.subr.mxu0 0.0
        %v3717 = vand.u32 %v2864, 4294901760
        %3718 = vmatpush1.msra.mxu0 %v3717
        %3719 = vmatprep.subr.mxu0 0.0
        %3720 = vmatpush1.msra.mxu0 0.0
        %3721 = vmatprep.subr.mxu0 0.0
        %3722 = vmatpush1.msra.mxu0 0.0
        %3723 = vmatprep.subr.mxu0 0.0
        %3724 = vmatpush1.msra.mxu0 0.0
        %3725 = vmatprep.subr.mxu0 0.0
        %3726 = vmatpush1.msra.mxu0 0.0
        %3727 = vmatprep.subr.mxu0 0.0
        %3728 = vmatpush1.msra.mxu0 0.0
        %3729 = vmatprep.subr.mxu0 0.0
        %3730 = vmatpush1.msra.mxu0 0.0
        %3731 = vmatprep.subr.mxu0 0.0
        %3732 = vmatpush1.msra.mxu0 0.0
        %3733 = vmatprep.subr.mxu0 0.0
        %3734 = vmatpush1.msra.mxu0 0.0
        %3735 = vmatprep.subr.mxu0 0.0
        %3736 = vmatpush1.msra.mxu0 0.0
        %3737 = vmatprep.subr.mxu0 0.0
        %3738 = vmatpush1.msra.mxu0 0.0
        %3739 = vmatprep.subr.mxu0 0.0
        %3740 = vmatpush1.msra.mxu0 0.0
        %3741 = vmatprep.subr.mxu0 0.0
        %3742 = vmatpush1.msra.mxu0 0.0
        %3743 = vmatprep.subr.mxu0 0.0
        %3744 = vmatpush1.msra.mxu0 0.0
        %3745 = vmatprep.subr.mxu0 0.0
        %3746 = vmatpush1.msra.mxu0 0.0
        %3747 = vmatprep.subr.mxu0 0.0
        %3748 = vmatpush1.msra.mxu0 0.0
        %3749 = vmatprep.subr.mxu0 0.0
        %3750 = vmatpush1.msra.mxu0 0.0
        %3751 = vmatprep.subr.mxu0 0.0
        %3752 = vmatpush1.msra.mxu0 0.0
        %3753 = vmatprep.subr.mxu0 0.0
        %3754 = vmatpush1.msra.mxu0 0.0
        %3755 = vmatprep.subr.mxu0 0.0
        %3756 = vmatpush1.msra.mxu0 0.0
        %3757 = vmatprep.subr.mxu0 0.0
        %3758 = vmatpush1.msra.mxu0 0.0
        %3759 = vmatprep.subr.mxu0 0.0
        %3760 = vmatpush1.msra.mxu0 0.0
        %3761 = vmatprep.subr.mxu0 0.0
        %3762 = vmatpush1.msra.mxu0 0.0
        %3763 = vmatprep.subr.mxu0 0.0
        %3764 = vmatpush1.msra.mxu0 0.0
        %3765 = vmatprep.subr.mxu0 0.0
        %3766 = vmatpush1.msra.mxu0 0.0
        %3767 = vmatprep.subr.mxu0 0.0
        %3768 = vmatpush1.msra.mxu0 0.0
        %3769 = vmatprep.subr.mxu0 0.0
        %3770 = vmatpush1.msra.mxu0 0.0
        %3771 = vmatprep.subr.mxu0 0.0
        %3772 = vmatpush1.msra.mxu0 0.0
        %3773 = vmatprep.subr.mxu0 0.0
        %3774 = vmatpush1.msra.mxu0 0.0
        %3775 = vmatprep.subr.mxu0 0.0
        %3776 = vmatpush1.msra.mxu0 0.0
        %3777 = vmatprep.subr.mxu0 0.0
        %3778 = vmatpush1.msra.mxu0 0.0
        %3779 = vmatprep.subr.mxu0 0.0
        %3780 = vmatpush1.msra.mxu0 0.0
        %3781 = vmatprep.mubr.f32.mxu0 0.0
        %v3782 = vand.u32 %v3340, 4294901760
        %3783 = vmatmul.mubr.f32.gmra.mrb[0].mxu0 %v3782
        %v3784 = vpop.f32.mrb[0].mxu0
        %v3785 = vadd.f32 %v3713, %v3784
        %v3786 = vpop.f32.mrb[0].mxu0
        %3787 = vdwg.mxu0
        %3788 = vrot.lane.b32.xlu0 %v1536, 96
        %v3789 = vpop.permute.xlu0 %3788
        %3790 = vrot.lane.b32.xlu0 %v2200, 96
        %v3791 = vpop.permute.xlu0 %3790
        %v3792 = vsel %vm2872, %v3789, 0
        %v3794 = vsel %vm2872, %v3791, 0
        %3796 = vmatprep.subr.mxu0 0.0
        %v3797 = vand.u32 %v3794, 4294901760
        %3798 = vmatpush1.xpose.msra.mxu0 %v3797
        %3799 = vmatprep.subr.mxu0 0.0
        %3800 = vmatpush1.xpose.msra.mxu0 0.0
        %3801 = vmatprep.subr.mxu0 0.0
        %3802 = vmatpush1.xpose.msra.mxu0 0.0
        %3803 = vmatprep.subr.mxu0 0.0
        %3804 = vmatpush1.xpose.msra.mxu0 0.0
        %3805 = vmatprep.subr.mxu0 0.0
        %3806 = vmatpush1.xpose.msra.mxu0 0.0
        %3807 = vmatprep.subr.mxu0 0.0
        %3808 = vmatpush1.xpose.msra.mxu0 0.0
        %3809 = vmatprep.subr.mxu0 0.0
        %3810 = vmatpush1.xpose.msra.mxu0 0.0
        %3811 = vmatprep.subr.mxu0 0.0
        %3812 = vmatpush1.xpose.msra.mxu0 0.0
        %3813 = vmatprep.subr.mxu0 0.0
        %3814 = vmatpush1.xpose.msra.mxu0 0.0
        %3815 = vmatprep.subr.mxu0 0.0
        %3816 = vmatpush1.xpose.msra.mxu0 0.0
        %3817 = vmatprep.subr.mxu0 0.0
        %3818 = vmatpush1.xpose.msra.mxu0 0.0
        %3819 = vmatprep.subr.mxu0 0.0
        %3820 = vmatpush1.xpose.msra.mxu0 0.0
        %3821 = vmatprep.subr.mxu0 0.0
        %3822 = vmatpush1.xpose.msra.mxu0 0.0
        %3823 = vmatprep.subr.mxu0 0.0
        %3824 = vmatpush1.xpose.msra.mxu0 0.0
        %3825 = vmatprep.subr.mxu0 0.0
        %3826 = vmatpush1.xpose.msra.mxu0 0.0
        %3827 = vmatprep.subr.mxu0 0.0
        %3828 = vmatpush1.xpose.msra.mxu0 0.0
        %3829 = vmatprep.subr.mxu0 0.0
        %3830 = vmatpush1.xpose.msra.mxu0 0.0
        %3831 = vmatprep.subr.mxu0 0.0
        %3832 = vmatpush1.xpose.msra.mxu0 0.0
        %3833 = vmatprep.subr.mxu0 0.0
        %3834 = vmatpush1.xpose.msra.mxu0 0.0
        %3835 = vmatprep.subr.mxu0 0.0
        %3836 = vmatpush1.xpose.msra.mxu0 0.0
        %3837 = vmatprep.subr.mxu0 0.0
        %3838 = vmatpush1.xpose.msra.mxu0 0.0
        %3839 = vmatprep.subr.mxu0 0.0
        %3840 = vmatpush1.xpose.msra.mxu0 0.0
        %3841 = vmatprep.subr.mxu0 0.0
        %3842 = vmatpush1.xpose.msra.mxu0 0.0
        %3843 = vmatprep.subr.mxu0 0.0
        %3844 = vmatpush1.xpose.msra.mxu0 0.0
        %3845 = vmatprep.subr.mxu0 0.0
        %3846 = vmatpush1.xpose.msra.mxu0 0.0
        %3847 = vmatprep.subr.mxu0 0.0
        %3848 = vmatpush1.xpose.msra.mxu0 0.0
        %3849 = vmatprep.subr.mxu0 0.0
        %3850 = vmatpush1.xpose.msra.mxu0 0.0
        %3851 = vmatprep.subr.mxu0 0.0
        %3852 = vmatpush1.xpose.msra.mxu0 0.0
        %3853 = vmatprep.subr.mxu0 0.0
        %3854 = vmatpush1.xpose.msra.mxu0 0.0
        %3855 = vmatprep.subr.mxu0 0.0
        %3856 = vmatpush1.xpose.msra.mxu0 0.0
        %3857 = vmatprep.subr.mxu0 0.0
        %3858 = vmatpush1.xpose.msra.mxu0 0.0
        %3859 = vmatprep.subr.mxu0 0.0
        %3860 = vmatpush1.xpose.msra.mxu0 0.0
        %3861 = vmatprep.mubr.f32.mxu0 0.0
        %v3862 = vand.u32 %v3792, 4294901760
        %v3863 = vsub.f32 %v3792, %v3862
        %v3864 = vand.u32 %v3863, 4294901760
        %v3865 = vsub.f32 %v3863, %v3864
        %v3866 = vand.u32 %v3865, 4294901760
        %3867 = vmatmul.mubr.f32.gmra.mrb[0].mxu0 %v3866
        %v3868 = vpop.f32.mrb[0].mxu0
        %v3869 = vadd.f32 0.0, %v3868
        %v3870 = vpop.f32.mrb[0].mxu0
        %3871 = vdwg.mxu0
        %3872 = vmatprep.subr.mxu0 0.0
        %v3873 = vand.u32 %v3794, 4294901760
        %v3874 = vsub.f32 %v3794, %v3873
        %v3875 = vand.u32 %v3874, 4294901760
        %v3876 = vsub.f32 %v3874, %v3875
        %v3877 = vand.u32 %v3876, 4294901760
        %3878 = vmatpush1.xpose.msra.mxu0 %v3877
        %3879 = vmatprep.subr.mxu0 0.0
        %3880 = vmatpush1.xpose.msra.mxu0 0.0
        %3881 = vmatprep.subr.mxu0 0.0
        %3882 = vmatpush1.xpose.msra.mxu0 0.0
        %3883 = vmatprep.subr.mxu0 0.0
        %3884 = vmatpush1.xpose.msra.mxu0 0.0
        %3885 = vmatprep.subr.mxu0 0.0
        %3886 = vmatpush1.xpose.msra.mxu0 0.0
        %3887 = vmatprep.subr.mxu0 0.0
        %3888 = vmatpush1.xpose.msra.mxu0 0.0
        %3889 = vmatprep.subr.mxu0 0.0
        %3890 = vmatpush1.xpose.msra.mxu0 0.0
        %3891 = vmatprep.subr.mxu0 0.0
        %3892 = vmatpush1.xpose.msra.mxu0 0.0
        %3893 = vmatprep.subr.mxu0 0.0
        %3894 = vmatpush1.xpose.msra.mxu0 0.0
        %3895 = vmatprep.subr.mxu0 0.0
        %3896 = vmatpush1.xpose.msra.mxu0 0.0
        %3897 = vmatprep.subr.mxu0 0.0
        %3898 = vmatpush1.xpose.msra.mxu0 0.0
        %3899 = vmatprep.subr.mxu0 0.0
        %3900 = vmatpush1.xpose.msra.mxu0 0.0
        %3901 = vmatprep.subr.mxu0 0.0
        %3902 = vmatpush1.xpose.msra.mxu0 0.0
        %3903 = vmatprep.subr.mxu0 0.0
        %3904 = vmatpush1.xpose.msra.mxu0 0.0
        %3905 = vmatprep.subr.mxu0 0.0
        %3906 = vmatpush1.xpose.msra.mxu0 0.0
        %3907 = vmatprep.subr.mxu0 0.0
        %3908 = vmatpush1.xpose.msra.mxu0 0.0
        %3909 = vmatprep.subr.mxu0 0.0
        %3910 = vmatpush1.xpose.msra.mxu0 0.0
        %3911 = vmatprep.subr.mxu0 0.0
        %3912 = vmatpush1.xpose.msra.mxu0 0.0
        %3913 = vmatprep.subr.mxu0 0.0
        %3914 = vmatpush1.xpose.msra.mxu0 0.0
        %3915 = vmatprep.subr.mxu0 0.0
        %3916 = vmatpush1.xpose.msra.mxu0 0.0
        %3917 = vmatprep.subr.mxu0 0.0
        %3918 = vmatpush1.xpose.msra.mxu0 0.0
        %3919 = vmatprep.subr.mxu0 0.0
        %3920 = vmatpush1.xpose.msra.mxu0 0.0
        %3921 = vmatprep.subr.mxu0 0.0
        %3922 = vmatpush1.xpose.msra.mxu0 0.0
        %3923 = vmatprep.subr.mxu0 0.0
        %3924 = vmatpush1.xpose.msra.mxu0 0.0
        %3925 = vmatprep.subr.mxu0 0.0
        %3926 = vmatpush1.xpose.msra.mxu0 0.0
        %3927 = vmatprep.subr.mxu0 0.0
        %3928 = vmatpush1.xpose.msra.mxu0 0.0
        %3929 = vmatprep.subr.mxu0 0.0
        %3930 = vmatpush1.xpose.msra.mxu0 0.0
        %3931 = vmatprep.subr.mxu0 0.0
        %3932 = vmatpush1.xpose.msra.mxu0 0.0
        %3933 = vmatprep.subr.mxu0 0.0
        %3934 = vmatpush1.xpose.msra.mxu0 0.0
        %3935 = vmatprep.subr.mxu0 0.0
        %3936 = vmatpush1.xpose.msra.mxu0 0.0
        %3937 = vmatprep.subr.mxu0 0.0
        %3938 = vmatpush1.xpose.msra.mxu0 0.0
        %3939 = vmatprep.subr.mxu0 0.0
        %3940 = vmatpush1.xpose.msra.mxu0 0.0
        %3941 = vmatprep.mubr.f32.mxu0 0.0
        %v3942 = vand.u32 %v3792, 4294901760
        %3943 = vmatmul.mubr.f32.gmra.mrb[0].mxu0 %v3942
        %v3944 = vpop.f32.mrb[0].mxu0
        %v3945 = vadd.f32 %v3869, %v3944
        %v3946 = vpop.f32.mrb[0].mxu0
        %3947 = vdwg.mxu0
        %3948 = vmatprep.subr.mxu0 0.0
        %v3949 = vand.u32 %v3794, 4294901760
        %v3950 = vsub.f32 %v3794, %v3949
        %3951 = vmatpush1.xpose.msra.mxu0 %v3950
        %3952 = vmatprep.subr.mxu0 0.0
        %3953 = vmatpush1.xpose.msra.mxu0 0.0
        %3954 = vmatprep.subr.mxu0 0.0
        %3955 = vmatpush1.xpose.msra.mxu0 0.0
        %3956 = vmatprep.subr.mxu0 0.0
        %3957 = vmatpush1.xpose.msra.mxu0 0.0
        %3958 = vmatprep.subr.mxu0 0.0
        %3959 = vmatpush1.xpose.msra.mxu0 0.0
        %3960 = vmatprep.subr.mxu0 0.0
        %3961 = vmatpush1.xpose.msra.mxu0 0.0
        %3962 = vmatprep.subr.mxu0 0.0
        %3963 = vmatpush1.xpose.msra.mxu0 0.0
        %3964 = vmatprep.subr.mxu0 0.0
        %3965 = vmatpush1.xpose.msra.mxu0 0.0
        %3966 = vmatprep.subr.mxu0 0.0
        %3967 = vmatpush1.xpose.msra.mxu0 0.0
        %3968 = vmatprep.subr.mxu0 0.0
        %3969 = vmatpush1.xpose.msra.mxu0 0.0
        %3970 = vmatprep.subr.mxu0 0.0
        %3971 = vmatpush1.xpose.msra.mxu0 0.0
        %3972 = vmatprep.subr.mxu0 0.0
        %3973 = vmatpush1.xpose.msra.mxu0 0.0
        %3974 = vmatprep.subr.mxu0 0.0
        %3975 = vmatpush1.xpose.msra.mxu0 0.0
        %3976 = vmatprep.subr.mxu0 0.0
        %3977 = vmatpush1.xpose.msra.mxu0 0.0
        %3978 = vmatprep.subr.mxu0 0.0
        %3979 = vmatpush1.xpose.msra.mxu0 0.0
        %3980 = vmatprep.subr.mxu0 0.0
        %3981 = vmatpush1.xpose.msra.mxu0 0.0
        %3982 = vmatprep.subr.mxu0 0.0
        %3983 = vmatpush1.xpose.msra.mxu0 0.0
        %3984 = vmatprep.subr.mxu0 0.0
        %3985 = vmatpush1.xpose.msra.mxu0 0.0
        %3986 = vmatprep.subr.mxu0 0.0
        %3987 = vmatpush1.xpose.msra.mxu0 0.0
        %3988 = vmatprep.subr.mxu0 0.0
        %3989 = vmatpush1.xpose.msra.mxu0 0.0
        %3990 = vmatprep.subr.mxu0 0.0
        %3991 = vmatpush1.xpose.msra.mxu0 0.0
        %3992 = vmatprep.subr.mxu0 0.0
        %3993 = vmatpush1.xpose.msra.mxu0 0.0
        %3994 = vmatprep.subr.mxu0 0.0
        %3995 = vmatpush1.xpose.msra.mxu0 0.0
        %3996 = vmatprep.subr.mxu0 0.0
        %3997 = vmatpush1.xpose.msra.mxu0 0.0
        %3998 = vmatprep.subr.mxu0 0.0
        %3999 = vmatpush1.xpose.msra.mxu0 0.0
        %4000 = vmatprep.subr.mxu0 0.0
        %4001 = vmatpush1.xpose.msra.mxu0 0.0
        %4002 = vmatprep.subr.mxu0 0.0
        %4003 = vmatpush1.xpose.msra.mxu0 0.0
        %4004 = vmatprep.subr.mxu0 0.0
        %4005 = vmatpush1.xpose.msra.mxu0 0.0
        %4006 = vmatprep.subr.mxu0 0.0
        %4007 = vmatpush1.xpose.msra.mxu0 0.0
        %4008 = vmatprep.subr.mxu0 0.0
        %4009 = vmatpush1.xpose.msra.mxu0 0.0
        %4010 = vmatprep.subr.mxu0 0.0
        %4011 = vmatpush1.xpose.msra.mxu0 0.0
        %4012 = vmatprep.subr.mxu0 0.0
        %4013 = vmatpush1.xpose.msra.mxu0 0.0
        %4014 = vmatprep.mubr.f32.mxu0 0.0
        %v4015 = vand.u32 %v3792, 4294901760
        %v4016 = vsub.f32 %v3792, %v4015
        %4017 = vmatmul.mubr.f32.gmra.mrb[0].mxu0 %v4016
        %v4018 = vpop.f32.mrb[0].mxu0
        %v4019 = vadd.f32 %v3945, %v4018
        %v4020 = vpop.f32.mrb[0].mxu0
        %4021 = vdwg.mxu0
        %4022 = vmatprep.subr.mxu0 0.0
        %v4023 = vand.u32 %v3794, 4294901760
        %4024 = vmatpush1.xpose.msra.mxu0 %v4023
        %4025 = vmatprep.subr.mxu0 0.0
        %4026 = vmatpush1.xpose.msra.mxu0 0.0
        %4027 = vmatprep.subr.mxu0 0.0
        %4028 = vmatpush1.xpose.msra.mxu0 0.0
        %4029 = vmatprep.subr.mxu0 0.0
        %4030 = vmatpush1.xpose.msra.mxu0 0.0
        %4031 = vmatprep.subr.mxu0 0.0
        %4032 = vmatpush1.xpose.msra.mxu0 0.0
        %4033 = vmatprep.subr.mxu0 0.0
        %4034 = vmatpush1.xpose.msra.mxu0 0.0
        %4035 = vmatprep.subr.mxu0 0.0
        %4036 = vmatpush1.xpose.msra.mxu0 0.0
        %4037 = vmatprep.subr.mxu0 0.0
        %4038 = vmatpush1.xpose.msra.mxu0 0.0
        %4039 = vmatprep.subr.mxu0 0.0
        %4040 = vmatpush1.xpose.msra.mxu0 0.0
        %4041 = vmatprep.subr.mxu0 0.0
        %4042 = vmatpush1.xpose.msra.mxu0 0.0
        %4043 = vmatprep.subr.mxu0 0.0
        %4044 = vmatpush1.xpose.msra.mxu0 0.0
        %4045 = vmatprep.subr.mxu0 0.0
        %4046 = vmatpush1.xpose.msra.mxu0 0.0
        %4047 = vmatprep.subr.mxu0 0.0
        %4048 = vmatpush1.xpose.msra.mxu0 0.0
        %4049 = vmatprep.subr.mxu0 0.0
        %4050 = vmatpush1.xpose.msra.mxu0 0.0
        %4051 = vmatprep.subr.mxu0 0.0
        %4052 = vmatpush1.xpose.msra.mxu0 0.0
        %4053 = vmatprep.subr.mxu0 0.0
        %4054 = vmatpush1.xpose.msra.mxu0 0.0
        %4055 = vmatprep.subr.mxu0 0.0
        %4056 = vmatpush1.xpose.msra.mxu0 0.0
        %4057 = vmatprep.subr.mxu0 0.0
        %4058 = vmatpush1.xpose.msra.mxu0 0.0
        %4059 = vmatprep.subr.mxu0 0.0
        %4060 = vmatpush1.xpose.msra.mxu0 0.0
        %4061 = vmatprep.subr.mxu0 0.0
        %4062 = vmatpush1.xpose.msra.mxu0 0.0
        %4063 = vmatprep.subr.mxu0 0.0
        %4064 = vmatpush1.xpose.msra.mxu0 0.0
        %4065 = vmatprep.subr.mxu0 0.0
        %4066 = vmatpush1.xpose.msra.mxu0 0.0
        %4067 = vmatprep.subr.mxu0 0.0
        %4068 = vmatpush1.xpose.msra.mxu0 0.0
        %4069 = vmatprep.subr.mxu0 0.0
        %4070 = vmatpush1.xpose.msra.mxu0 0.0
        %4071 = vmatprep.subr.mxu0 0.0
        %4072 = vmatpush1.xpose.msra.mxu0 0.0
        %4073 = vmatprep.subr.mxu0 0.0
        %4074 = vmatpush1.xpose.msra.mxu0 0.0
        %4075 = vmatprep.subr.mxu0 0.0
        %4076 = vmatpush1.xpose.msra.mxu0 0.0
        %4077 = vmatprep.subr.mxu0 0.0
        %4078 = vmatpush1.xpose.msra.mxu0 0.0
        %4079 = vmatprep.subr.mxu0 0.0
        %4080 = vmatpush1.xpose.msra.mxu0 0.0
        %4081 = vmatprep.subr.mxu0 0.0
        %4082 = vmatpush1.xpose.msra.mxu0 0.0
        %4083 = vmatprep.subr.mxu0 0.0
        %4084 = vmatpush1.xpose.msra.mxu0 0.0
        %4085 = vmatprep.subr.mxu0 0.0
        %4086 = vmatpush1.xpose.msra.mxu0 0.0
        %4087 = vmatprep.mubr.f32.mxu0 0.0
        %v4088 = vand.u32 %v3792, 4294901760
        %v4089 = vsub.f32 %v3792, %v4088
        %v4090 = vand.u32 %v4089, 4294901760
        %4091 = vmatmul.mubr.f32.gmra.mrb[0].mxu0 %v4090
        %v4092 = vpop.f32.mrb[0].mxu0
        %v4093 = vadd.f32 %v4019, %v4092
        %v4094 = vpop.f32.mrb[0].mxu0
        %4095 = vdwg.mxu0
        %4096 = vmatprep.subr.mxu0 0.0
        %v4097 = vand.u32 %v3794, 4294901760
        %v4098 = vsub.f32 %v3794, %v4097
        %v4099 = vand.u32 %v4098, 4294901760
        %4100 = vmatpush1.xpose.msra.mxu0 %v4099
        %4101 = vmatprep.subr.mxu0 0.0
        %4102 = vmatpush1.xpose.msra.mxu0 0.0
        %4103 = vmatprep.subr.mxu0 0.0
        %4104 = vmatpush1.xpose.msra.mxu0 0.0
        %4105 = vmatprep.subr.mxu0 0.0
        %4106 = vmatpush1.xpose.msra.mxu0 0.0
        %4107 = vmatprep.subr.mxu0 0.0
        %4108 = vmatpush1.xpose.msra.mxu0 0.0
        %4109 = vmatprep.subr.mxu0 0.0
        %4110 = vmatpush1.xpose.msra.mxu0 0.0
        %4111 = vmatprep.subr.mxu0 0.0
        %4112 = vmatpush1.xpose.msra.mxu0 0.0
        %4113 = vmatprep.subr.mxu0 0.0
        %4114 = vmatpush1.xpose.msra.mxu0 0.0
        %4115 = vmatprep.subr.mxu0 0.0
        %4116 = vmatpush1.xpose.msra.mxu0 0.0
        %4117 = vmatprep.subr.mxu0 0.0
        %4118 = vmatpush1.xpose.msra.mxu0 0.0
        %4119 = vmatprep.subr.mxu0 0.0
        %4120 = vmatpush1.xpose.msra.mxu0 0.0
        %4121 = vmatprep.subr.mxu0 0.0
        %4122 = vmatpush1.xpose.msra.mxu0 0.0
        %4123 = vmatprep.subr.mxu0 0.0
        %4124 = vmatpush1.xpose.msra.mxu0 0.0
        %4125 = vmatprep.subr.mxu0 0.0
        %4126 = vmatpush1.xpose.msra.mxu0 0.0
        %4127 = vmatprep.subr.mxu0 0.0
        %4128 = vmatpush1.xpose.msra.mxu0 0.0
        %4129 = vmatprep.subr.mxu0 0.0
        %4130 = vmatpush1.xpose.msra.mxu0 0.0
        %4131 = vmatprep.subr.mxu0 0.0
        %4132 = vmatpush1.xpose.msra.mxu0 0.0
        %4133 = vmatprep.subr.mxu0 0.0
        %4134 = vmatpush1.xpose.msra.mxu0 0.0
        %4135 = vmatprep.subr.mxu0 0.0
        %4136 = vmatpush1.xpose.msra.mxu0 0.0
        %4137 = vmatprep.subr.mxu0 0.0
        %4138 = vmatpush1.xpose.msra.mxu0 0.0
        %4139 = vmatprep.subr.mxu0 0.0
        %4140 = vmatpush1.xpose.msra.mxu0 0.0
        %4141 = vmatprep.subr.mxu0 0.0
        %4142 = vmatpush1.xpose.msra.mxu0 0.0
        %4143 = vmatprep.subr.mxu0 0.0
        %4144 = vmatpush1.xpose.msra.mxu0 0.0
        %4145 = vmatprep.subr.mxu0 0.0
        %4146 = vmatpush1.xpose.msra.mxu0 0.0
        %4147 = vmatprep.subr.mxu0 0.0
        %4148 = vmatpush1.xpose.msra.mxu0 0.0
        %4149 = vmatprep.subr.mxu0 0.0
        %4150 = vmatpush1.xpose.msra.mxu0 0.0
        %4151 = vmatprep.subr.mxu0 0.0
        %4152 = vmatpush1.xpose.msra.mxu0 0.0
        %4153 = vmatprep.subr.mxu0 0.0
        %4154 = vmatpush1.xpose.msra.mxu0 0.0
        %4155 = vmatprep.subr.mxu0 0.0
        %4156 = vmatpush1.xpose.msra.mxu0 0.0
        %4157 = vmatprep.subr.mxu0 0.0
        %4158 = vmatpush1.xpose.msra.mxu0 0.0
        %4159 = vmatprep.subr.mxu0 0.0
        %4160 = vmatpush1.xpose.msra.mxu0 0.0
        %4161 = vmatprep.subr.mxu0 0.0
        %4162 = vmatpush1.xpose.msra.mxu0 0.0
        %4163 = vmatprep.mubr.f32.mxu0 0.0
        %v4164 = vand.u32 %v3792, 4294901760
        %4165 = vmatmul.mubr.f32.gmra.mrb[0].mxu0 %v4164
        %v4166 = vpop.f32.mrb[0].mxu0
        %v4167 = vadd.f32 %v4093, %v4166
        %v4168 = vpop.f32.mrb[0].mxu0
        %4169 = vdwg.mxu0
        %4170 = vmatprep.subr.mxu0 0.0
        %v4171 = vand.u32 %v3794, 4294901760
        %4172 = vmatpush1.xpose.msra.mxu0 %v4171
        %4173 = vmatprep.subr.mxu0 0.0
        %4174 = vmatpush1.xpose.msra.mxu0 0.0
        %4175 = vmatprep.subr.mxu0 0.0
        %4176 = vmatpush1.xpose.msra.mxu0 0.0
        %4177 = vmatprep.subr.mxu0 0.0
        %4178 = vmatpush1.xpose.msra.mxu0 0.0
        %4179 = vmatprep.subr.mxu0 0.0
        %4180 = vmatpush1.xpose.msra.mxu0 0.0
        %4181 = vmatprep.subr.mxu0 0.0
        %4182 = vmatpush1.xpose.msra.mxu0 0.0
        %4183 = vmatprep.subr.mxu0 0.0
        %4184 = vmatpush1.xpose.msra.mxu0 0.0
        %4185 = vmatprep.subr.mxu0 0.0
        %4186 = vmatpush1.xpose.msra.mxu0 0.0
        %4187 = vmatprep.subr.mxu0 0.0
        %4188 = vmatpush1.xpose.msra.mxu0 0.0
        %4189 = vmatprep.subr.mxu0 0.0
        %4190 = vmatpush1.xpose.msra.mxu0 0.0
        %4191 = vmatprep.subr.mxu0 0.0
        %4192 = vmatpush1.xpose.msra.mxu0 0.0
        %4193 = vmatprep.subr.mxu0 0.0
        %4194 = vmatpush1.xpose.msra.mxu0 0.0
        %4195 = vmatprep.subr.mxu0 0.0
        %4196 = vmatpush1.xpose.msra.mxu0 0.0
        %4197 = vmatprep.subr.mxu0 0.0
        %4198 = vmatpush1.xpose.msra.mxu0 0.0
        %4199 = vmatprep.subr.mxu0 0.0
        %4200 = vmatpush1.xpose.msra.mxu0 0.0
        %4201 = vmatprep.subr.mxu0 0.0
        %4202 = vmatpush1.xpose.msra.mxu0 0.0
        %4203 = vmatprep.subr.mxu0 0.0
        %4204 = vmatpush1.xpose.msra.mxu0 0.0
        %4205 = vmatprep.subr.mxu0 0.0
        %4206 = vmatpush1.xpose.msra.mxu0 0.0
        %4207 = vmatprep.subr.mxu0 0.0
        %4208 = vmatpush1.xpose.msra.mxu0 0.0
        %4209 = vmatprep.subr.mxu0 0.0
        %4210 = vmatpush1.xpose.msra.mxu0 0.0
        %4211 = vmatprep.subr.mxu0 0.0
        %4212 = vmatpush1.xpose.msra.mxu0 0.0
        %4213 = vmatprep.subr.mxu0 0.0
        %4214 = vmatpush1.xpose.msra.mxu0 0.0
        %4215 = vmatprep.subr.mxu0 0.0
        %4216 = vmatpush1.xpose.msra.mxu0 0.0
        %4217 = vmatprep.subr.mxu0 0.0
        %4218 = vmatpush1.xpose.msra.mxu0 0.0
        %4219 = vmatprep.subr.mxu0 0.0
        %4220 = vmatpush1.xpose.msra.mxu0 0.0
        %4221 = vmatprep.subr.mxu0 0.0
        %4222 = vmatpush1.xpose.msra.mxu0 0.0
        %4223 = vmatprep.subr.mxu0 0.0
        %4224 = vmatpush1.xpose.msra.mxu0 0.0
        %4225 = vmatprep.subr.mxu0 0.0
        %4226 = vmatpush1.xpose.msra.mxu0 0.0
        %4227 = vmatprep.subr.mxu0 0.0
        %4228 = vmatpush1.xpose.msra.mxu0 0.0
        %4229 = vmatprep.subr.mxu0 0.0
        %4230 = vmatpush1.xpose.msra.mxu0 0.0
        %4231 = vmatprep.subr.mxu0 0.0
        %4232 = vmatpush1.xpose.msra.mxu0 0.0
        %4233 = vmatprep.subr.mxu0 0.0
        %4234 = vmatpush1.xpose.msra.mxu0 0.0
        %4235 = vmatprep.mubr.f32.mxu0 0.0
        %v4236 = vand.u32 %v3792, 4294901760
        %4237 = vmatmul.mubr.f32.gmra.mrb[0].mxu0 %v4236
        %v4238 = vpop.f32.mrb[0].mxu0
        %v4239 = vadd.f32 %v4167, %v4238
        %v4240 = vpop.f32.mrb[0].mxu0
        %4241 = vdwg.mxu0
        %v4242 = vmul.f32 %v4239, 0.17677669
        %v4243 = vsel %vm2871, %v4242, -1e+30
        %v4244 = vsel %vm3327, %v4243, -inf
        %4245 = vmax.xlane.f32.xlu0 %v4244
        %v4246 = vpop.xlane.xlu0 %4245
        %v4247 = vsub.f32 %v4243, %v4246
        %v4248 = vmul.f32 %v4247, 1.442695
        %v4249 = vpow.pop %v4248
        %v4250 = vsel %vm3327, %v4249, 0.0
        %4251 = vadd.xlane.f32.xlu0 %v4250
        %v4252 = vpop.xlane.xlu0 %4251
        %v4253 = vrcp.pop %v4252
        %v4254 = vmul.f32 %v4249, %v4253
        %4256 = vrot.lane.b32.xlu0 %v2864, 96
        %v4257 = vpop.permute.xlu0 %4256
        %v4260 = vsel %vm3327, %v4254, 0
        %4262 = vmatprep.subr.mxu0 0.0
        %v4263 = vand.u32 %v4257, 4294901760
        %4264 = vmatpush1.msra.mxu0 %v4263
        %4265 = vmatprep.subr.mxu0 0.0
        %4266 = vmatpush1.msra.mxu0 0.0
        %4267 = vmatprep.subr.mxu0 0.0
        %4268 = vmatpush1.msra.mxu0 0.0
        %4269 = vmatprep.subr.mxu0 0.0
        %4270 = vmatpush1.msra.mxu0 0.0
        %4271 = vmatprep.subr.mxu0 0.0
        %4272 = vmatpush1.msra.mxu0 0.0
        %4273 = vmatprep.subr.mxu0 0.0
        %4274 = vmatpush1.msra.mxu0 0.0
        %4275 = vmatprep.subr.mxu0 0.0
        %4276 = vmatpush1.msra.mxu0 0.0
        %4277 = vmatprep.subr.mxu0 0.0
        %4278 = vmatpush1.msra.mxu0 0.0
        %4279 = vmatprep.subr.mxu0 0.0
        %4280 = vmatpush1.msra.mxu0 0.0
        %4281 = vmatprep.subr.mxu0 0.0
        %4282 = vmatpush1.msra.mxu0 0.0
        %4283 = vmatprep.subr.mxu0 0.0
        %4284 = vmatpush1.msra.mxu0 0.0
        %4285 = vmatprep.subr.mxu0 0.0
        %4286 = vmatpush1.msra.mxu0 0.0
        %4287 = vmatprep.subr.mxu0 0.0
        %4288 = vmatpush1.msra.mxu0 0.0
        %4289 = vmatprep.subr.mxu0 0.0
        %4290 = vmatpush1.msra.mxu0 0.0
        %4291 = vmatprep.subr.mxu0 0.0
        %4292 = vmatpush1.msra.mxu0 0.0
        %4293 = vmatprep.subr.mxu0 0.0
        %4294 = vmatpush1.msra.mxu0 0.0
        %4295 = vmatprep.subr.mxu0 0.0
        %4296 = vmatpush1.msra.mxu0 0.0
        %4297 = vmatprep.subr.mxu0 0.0
        %4298 = vmatpush1.msra.mxu0 0.0
        %4299 = vmatprep.subr.mxu0 0.0
        %4300 = vmatpush1.msra.mxu0 0.0
        %4301 = vmatprep.subr.mxu0 0.0
        %4302 = vmatpush1.msra.mxu0 0.0
        %4303 = vmatprep.subr.mxu0 0.0
        %4304 = vmatpush1.msra.mxu0 0.0
        %4305 = vmatprep.subr.mxu0 0.0
        %4306 = vmatpush1.msra.mxu0 0.0
        %4307 = vmatprep.subr.mxu0 0.0
        %4308 = vmatpush1.msra.mxu0 0.0
        %4309 = vmatprep.subr.mxu0 0.0
        %4310 = vmatpush1.msra.mxu0 0.0
        %4311 = vmatprep.subr.mxu0 0.0
        %4312 = vmatpush1.msra.mxu0 0.0
        %4313 = vmatprep.subr.mxu0 0.0
        %4314 = vmatpush1.msra.mxu0 0.0
        %4315 = vmatprep.subr.mxu0 0.0
        %4316 = vmatpush1.msra.mxu0 0.0
        %4317 = vmatprep.subr.mxu0 0.0
        %4318 = vmatpush1.msra.mxu0 0.0
        %4319 = vmatprep.subr.mxu0 0.0
        %4320 = vmatpush1.msra.mxu0 0.0
        %4321 = vmatprep.subr.mxu0 0.0
        %4322 = vmatpush1.msra.mxu0 0.0
        %4323 = vmatprep.subr.mxu0 0.0
        %4324 = vmatpush1.msra.mxu0 0.0
        %4325 = vmatprep.subr.mxu0 0.0
        %4326 = vmatpush1.msra.mxu0 0.0
        %4327 = vmatprep.mubr.f32.mxu0 0.0
        %v4328 = vand.u32 %v4260, 4294901760
        %v4329 = vsub.f32 %v4260, %v4328
        %v4330 = vand.u32 %v4329, 4294901760
        %v4331 = vsub.f32 %v4329, %v4330
        %v4332 = vand.u32 %v4331, 4294901760
        %4333 = vmatmul.mubr.f32.gmra.mrb[0].mxu0 %v4332
        %v4334 = vpop.f32.mrb[0].mxu0
        %v4335 = vadd.f32 0.0, %v4334
        %v4336 = vpop.f32.mrb[0].mxu0
        %4337 = vdwg.mxu0
        %4338 = vmatprep.subr.mxu0 0.0
        %v4339 = vand.u32 %v4257, 4294901760
        %v4340 = vsub.f32 %v4257, %v4339
        %v4341 = vand.u32 %v4340, 4294901760
        %v4342 = vsub.f32 %v4340, %v4341
        %v4343 = vand.u32 %v4342, 4294901760
        %4344 = vmatpush1.msra.mxu0 %v4343
        %4345 = vmatprep.subr.mxu0 0.0
        %4346 = vmatpush1.msra.mxu0 0.0
        %4347 = vmatprep.subr.mxu0 0.0
        %4348 = vmatpush1.msra.mxu0 0.0
        %4349 = vmatprep.subr.mxu0 0.0
        %4350 = vmatpush1.msra.mxu0 0.0
        %4351 = vmatprep.subr.mxu0 0.0
        %4352 = vmatpush1.msra.mxu0 0.0
        %4353 = vmatprep.subr.mxu0 0.0
        %4354 = vmatpush1.msra.mxu0 0.0
        %4355 = vmatprep.subr.mxu0 0.0
        %4356 = vmatpush1.msra.mxu0 0.0
        %4357 = vmatprep.subr.mxu0 0.0
        %4358 = vmatpush1.msra.mxu0 0.0
        %4359 = vmatprep.subr.mxu0 0.0
        %4360 = vmatpush1.msra.mxu0 0.0
        %4361 = vmatprep.subr.mxu0 0.0
        %4362 = vmatpush1.msra.mxu0 0.0
        %4363 = vmatprep.subr.mxu0 0.0
        %4364 = vmatpush1.msra.mxu0 0.0
        %4365 = vmatprep.subr.mxu0 0.0
        %4366 = vmatpush1.msra.mxu0 0.0
        %4367 = vmatprep.subr.mxu0 0.0
        %4368 = vmatpush1.msra.mxu0 0.0
        %4369 = vmatprep.subr.mxu0 0.0
        %4370 = vmatpush1.msra.mxu0 0.0
        %4371 = vmatprep.subr.mxu0 0.0
        %4372 = vmatpush1.msra.mxu0 0.0
        %4373 = vmatprep.subr.mxu0 0.0
        %4374 = vmatpush1.msra.mxu0 0.0
        %4375 = vmatprep.subr.mxu0 0.0
        %4376 = vmatpush1.msra.mxu0 0.0
        %4377 = vmatprep.subr.mxu0 0.0
        %4378 = vmatpush1.msra.mxu0 0.0
        %4379 = vmatprep.subr.mxu0 0.0
        %4380 = vmatpush1.msra.mxu0 0.0
        %4381 = vmatprep.subr.mxu0 0.0
        %4382 = vmatpush1.msra.mxu0 0.0
        %4383 = vmatprep.subr.mxu0 0.0
        %4384 = vmatpush1.msra.mxu0 0.0
        %4385 = vmatprep.subr.mxu0 0.0
        %4386 = vmatpush1.msra.mxu0 0.0
        %4387 = vmatprep.subr.mxu0 0.0
        %4388 = vmatpush1.msra.mxu0 0.0
        %4389 = vmatprep.subr.mxu0 0.0
        %4390 = vmatpush1.msra.mxu0 0.0
        %4391 = vmatprep.subr.mxu0 0.0
        %4392 = vmatpush1.msra.mxu0 0.0
        %4393 = vmatprep.subr.mxu0 0.0
        %4394 = vmatpush1.msra.mxu0 0.0
        %4395 = vmatprep.subr.mxu0 0.0
        %4396 = vmatpush1.msra.mxu0 0.0
        %4397 = vmatprep.subr.mxu0 0.0
        %4398 = vmatpush1.msra.mxu0 0.0
        %4399 = vmatprep.subr.mxu0 0.0
        %4400 = vmatpush1.msra.mxu0 0.0
        %4401 = vmatprep.subr.mxu0 0.0
        %4402 = vmatpush1.msra.mxu0 0.0
        %4403 = vmatprep.subr.mxu0 0.0
        %4404 = vmatpush1.msra.mxu0 0.0
        %4405 = vmatprep.subr.mxu0 0.0
        %4406 = vmatpush1.msra.mxu0 0.0
        %4407 = vmatprep.mubr.f32.mxu0 0.0
        %v4408 = vand.u32 %v4260, 4294901760
        %4409 = vmatmul.mubr.f32.gmra.mrb[0].mxu0 %v4408
        %v4410 = vpop.f32.mrb[0].mxu0
        %v4411 = vadd.f32 %v4335, %v4410
        %v4412 = vpop.f32.mrb[0].mxu0
        %4413 = vdwg.mxu0
        %4414 = vmatprep.subr.mxu0 0.0
        %v4415 = vand.u32 %v4257, 4294901760
        %v4416 = vsub.f32 %v4257, %v4415
        %4417 = vmatpush1.msra.mxu0 %v4416
        %4418 = vmatprep.subr.mxu0 0.0
        %4419 = vmatpush1.msra.mxu0 0.0
        %4420 = vmatprep.subr.mxu0 0.0
        %4421 = vmatpush1.msra.mxu0 0.0
        %4422 = vmatprep.subr.mxu0 0.0
        %4423 = vmatpush1.msra.mxu0 0.0
        %4424 = vmatprep.subr.mxu0 0.0
        %4425 = vmatpush1.msra.mxu0 0.0
        %4426 = vmatprep.subr.mxu0 0.0
        %4427 = vmatpush1.msra.mxu0 0.0
        %4428 = vmatprep.subr.mxu0 0.0
        %4429 = vmatpush1.msra.mxu0 0.0
        %4430 = vmatprep.subr.mxu0 0.0
        %4431 = vmatpush1.msra.mxu0 0.0
        %4432 = vmatprep.subr.mxu0 0.0
        %4433 = vmatpush1.msra.mxu0 0.0
        %4434 = vmatprep.subr.mxu0 0.0
        %4435 = vmatpush1.msra.mxu0 0.0
        %4436 = vmatprep.subr.mxu0 0.0
        %4437 = vmatpush1.msra.mxu0 0.0
        %4438 = vmatprep.subr.mxu0 0.0
        %4439 = vmatpush1.msra.mxu0 0.0
        %4440 = vmatprep.subr.mxu0 0.0
        %4441 = vmatpush1.msra.mxu0 0.0
        %4442 = vmatprep.subr.mxu0 0.0
        %4443 = vmatpush1.msra.mxu0 0.0
        %4444 = vmatprep.subr.mxu0 0.0
        %4445 = vmatpush1.msra.mxu0 0.0
        %4446 = vmatprep.subr.mxu0 0.0
        %4447 = vmatpush1.msra.mxu0 0.0
        %4448 = vmatprep.subr.mxu0 0.0
        %4449 = vmatpush1.msra.mxu0 0.0
        %4450 = vmatprep.subr.mxu0 0.0
        %4451 = vmatpush1.msra.mxu0 0.0
        %4452 = vmatprep.subr.mxu0 0.0
        %4453 = vmatpush1.msra.mxu0 0.0
        %4454 = vmatprep.subr.mxu0 0.0
        %4455 = vmatpush1.msra.mxu0 0.0
        %4456 = vmatprep.subr.mxu0 0.0
        %4457 = vmatpush1.msra.mxu0 0.0
        %4458 = vmatprep.subr.mxu0 0.0
        %4459 = vmatpush1.msra.mxu0 0.0
        %4460 = vmatprep.subr.mxu0 0.0
        %4461 = vmatpush1.msra.mxu0 0.0
        %4462 = vmatprep.subr.mxu0 0.0
        %4463 = vmatpush1.msra.mxu0 0.0
        %4464 = vmatprep.subr.mxu0 0.0
        %4465 = vmatpush1.msra.mxu0 0.0
        %4466 = vmatprep.subr.mxu0 0.0
        %4467 = vmatpush1.msra.mxu0 0.0
        %4468 = vmatprep.subr.mxu0 0.0
        %4469 = vmatpush1.msra.mxu0 0.0
        %4470 = vmatprep.subr.mxu0 0.0
        %4471 = vmatpush1.msra.mxu0 0.0
        %4472 = vmatprep.subr.mxu0 0.0
        %4473 = vmatpush1.msra.mxu0 0.0
        %4474 = vmatprep.subr.mxu0 0.0
        %4475 = vmatpush1.msra.mxu0 0.0
        %4476 = vmatprep.subr.mxu0 0.0
        %4477 = vmatpush1.msra.mxu0 0.0
        %4478 = vmatprep.subr.mxu0 0.0
        %4479 = vmatpush1.msra.mxu0 0.0
        %4480 = vmatprep.mubr.f32.mxu0 0.0
        %v4481 = vand.u32 %v4260, 4294901760
        %v4482 = vsub.f32 %v4260, %v4481
        %4483 = vmatmul.mubr.f32.gmra.mrb[0].mxu0 %v4482
        %v4484 = vpop.f32.mrb[0].mxu0
        %v4485 = vadd.f32 %v4411, %v4484
        %v4486 = vpop.f32.mrb[0].mxu0
        %4487 = vdwg.mxu0
        %4488 = vmatprep.subr.mxu0 0.0
        %v4489 = vand.u32 %v4257, 4294901760
        %4490 = vmatpush1.msra.mxu0 %v4489
        %4491 = vmatprep.subr.mxu0 0.0
        %4492 = vmatpush1.msra.mxu0 0.0
        %4493 = vmatprep.subr.mxu0 0.0
        %4494 = vmatpush1.msra.mxu0 0.0
        %4495 = vmatprep.subr.mxu0 0.0
        %4496 = vmatpush1.msra.mxu0 0.0
        %4497 = vmatprep.subr.mxu0 0.0
        %4498 = vmatpush1.msra.mxu0 0.0
        %4499 = vmatprep.subr.mxu0 0.0
        %4500 = vmatpush1.msra.mxu0 0.0
        %4501 = vmatprep.subr.mxu0 0.0
        %4502 = vmatpush1.msra.mxu0 0.0
        %4503 = vmatprep.subr.mxu0 0.0
        %4504 = vmatpush1.msra.mxu0 0.0
        %4505 = vmatprep.subr.mxu0 0.0
        %4506 = vmatpush1.msra.mxu0 0.0
        %4507 = vmatprep.subr.mxu0 0.0
        %4508 = vmatpush1.msra.mxu0 0.0
        %4509 = vmatprep.subr.mxu0 0.0
        %4510 = vmatpush1.msra.mxu0 0.0
        %4511 = vmatprep.subr.mxu0 0.0
        %4512 = vmatpush1.msra.mxu0 0.0
        %4513 = vmatprep.subr.mxu0 0.0
        %4514 = vmatpush1.msra.mxu0 0.0
        %4515 = vmatprep.subr.mxu0 0.0
        %4516 = vmatpush1.msra.mxu0 0.0
        %4517 = vmatprep.subr.mxu0 0.0
        %4518 = vmatpush1.msra.mxu0 0.0
        %4519 = vmatprep.subr.mxu0 0.0
        %4520 = vmatpush1.msra.mxu0 0.0
        %4521 = vmatprep.subr.mxu0 0.0
        %4522 = vmatpush1.msra.mxu0 0.0
        %4523 = vmatprep.subr.mxu0 0.0
        %4524 = vmatpush1.msra.mxu0 0.0
        %4525 = vmatprep.subr.mxu0 0.0
        %4526 = vmatpush1.msra.mxu0 0.0
        %4527 = vmatprep.subr.mxu0 0.0
        %4528 = vmatpush1.msra.mxu0 0.0
        %4529 = vmatprep.subr.mxu0 0.0
        %4530 = vmatpush1.msra.mxu0 0.0
        %4531 = vmatprep.subr.mxu0 0.0
        %4532 = vmatpush1.msra.mxu0 0.0
        %4533 = vmatprep.subr.mxu0 0.0
        %4534 = vmatpush1.msra.mxu0 0.0
        %4535 = vmatprep.subr.mxu0 0.0
        %4536 = vmatpush1.msra.mxu0 0.0
        %4537 = vmatprep.subr.mxu0 0.0
        %4538 = vmatpush1.msra.mxu0 0.0
        %4539 = vmatprep.subr.mxu0 0.0
        %4540 = vmatpush1.msra.mxu0 0.0
        %4541 = vmatprep.subr.mxu0 0.0
        %4542 = vmatpush1.msra.mxu0 0.0
        %4543 = vmatprep.subr.mxu0 0.0
        %4544 = vmatpush1.msra.mxu0 0.0
        %4545 = vmatprep.subr.mxu0 0.0
        %4546 = vmatpush1.msra.mxu0 0.0
        %4547 = vmatprep.subr.mxu0 0.0
        %4548 = vmatpush1.msra.mxu0 0.0
        %4549 = vmatprep.subr.mxu0 0.0
        %4550 = vmatpush1.msra.mxu0 0.0
        %4551 = vmatprep.subr.mxu0 0.0
        %4552 = vmatpush1.msra.mxu0 0.0
        %4553 = vmatprep.mubr.f32.mxu0 0.0
        %v4554 = vand.u32 %v4260, 4294901760
        %v4555 = vsub.f32 %v4260, %v4554
        %v4556 = vand.u32 %v4555, 4294901760
        %4557 = vmatmul.mubr.f32.gmra.mrb[0].mxu0 %v4556
        %v4558 = vpop.f32.mrb[0].mxu0
        %v4559 = vadd.f32 %v4485, %v4558
        %v4560 = vpop.f32.mrb[0].mxu0
        %4561 = vdwg.mxu0
        %4562 = vmatprep.subr.mxu0 0.0
        %v4563 = vand.u32 %v4257, 4294901760
        %v4564 = vsub.f32 %v4257, %v4563
        %v4565 = vand.u32 %v4564, 4294901760
        %4566 = vmatpush1.msra.mxu0 %v4565
        %4567 = vmatprep.subr.mxu0 0.0
        %4568 = vmatpush1.msra.mxu0 0.0
        %4569 = vmatprep.subr.mxu0 0.0
        %4570 = vmatpush1.msra.mxu0 0.0
        %4571 = vmatprep.subr.mxu0 0.0
        %4572 = vmatpush1.msra.mxu0 0.0
        %4573 = vmatprep.subr.mxu0 0.0
        %4574 = vmatpush1.msra.mxu0 0.0
        %4575 = vmatprep.subr.mxu0 0.0
        %4576 = vmatpush1.msra.mxu0 0.0
        %4577 = vmatprep.subr.mxu0 0.0
        %4578 = vmatpush1.msra.mxu0 0.0
        %4579 = vmatprep.subr.mxu0 0.0
        %4580 = vmatpush1.msra.mxu0 0.0
        %4581 = vmatprep.subr.mxu0 0.0
        %4582 = vmatpush1.msra.mxu0 0.0
        %4583 = vmatprep.subr.mxu0 0.0
        %4584 = vmatpush1.msra.mxu0 0.0
        %4585 = vmatprep.subr.mxu0 0.0
        %4586 = vmatpush1.msra.mxu0 0.0
        %4587 = vmatprep.subr.mxu0 0.0
        %4588 = vmatpush1.msra.mxu0 0.0
        %4589 = vmatprep.subr.mxu0 0.0
        %4590 = vmatpush1.msra.mxu0 0.0
        %4591 = vmatprep.subr.mxu0 0.0
        %4592 = vmatpush1.msra.mxu0 0.0
        %4593 = vmatprep.subr.mxu0 0.0
        %4594 = vmatpush1.msra.mxu0 0.0
        %4595 = vmatprep.subr.mxu0 0.0
        %4596 = vmatpush1.msra.mxu0 0.0
        %4597 = vmatprep.subr.mxu0 0.0
        %4598 = vmatpush1.msra.mxu0 0.0
        %4599 = vmatprep.subr.mxu0 0.0
        %4600 = vmatpush1.msra.mxu0 0.0
        %4601 = vmatprep.subr.mxu0 0.0
        %4602 = vmatpush1.msra.mxu0 0.0
        %4603 = vmatprep.subr.mxu0 0.0
        %4604 = vmatpush1.msra.mxu0 0.0
        %4605 = vmatprep.subr.mxu0 0.0
        %4606 = vmatpush1.msra.mxu0 0.0
        %4607 = vmatprep.subr.mxu0 0.0
        %4608 = vmatpush1.msra.mxu0 0.0
        %4609 = vmatprep.subr.mxu0 0.0
        %4610 = vmatpush1.msra.mxu0 0.0
        %4611 = vmatprep.subr.mxu0 0.0
        %4612 = vmatpush1.msra.mxu0 0.0
        %4613 = vmatprep.subr.mxu0 0.0
        %4614 = vmatpush1.msra.mxu0 0.0
        %4615 = vmatprep.subr.mxu0 0.0
        %4616 = vmatpush1.msra.mxu0 0.0
        %4617 = vmatprep.subr.mxu0 0.0
        %4618 = vmatpush1.msra.mxu0 0.0
        %4619 = vmatprep.subr.mxu0 0.0
        %4620 = vmatpush1.msra.mxu0 0.0
        %4621 = vmatprep.subr.mxu0 0.0
        %4622 = vmatpush1.msra.mxu0 0.0
        %4623 = vmatprep.subr.mxu0 0.0
        %4624 = vmatpush1.msra.mxu0 0.0
        %4625 = vmatprep.subr.mxu0 0.0
        %4626 = vmatpush1.msra.mxu0 0.0
        %4627 = vmatprep.subr.mxu0 0.0
        %4628 = vmatpush1.msra.mxu0 0.0
        %4629 = vmatprep.mubr.f32.mxu0 0.0
        %v4630 = vand.u32 %v4260, 4294901760
        %4631 = vmatmul.mubr.f32.gmra.mrb[0].mxu0 %v4630
        %v4632 = vpop.f32.mrb[0].mxu0
        %v4633 = vadd.f32 %v4559, %v4632
        %v4634 = vpop.f32.mrb[0].mxu0
        %4635 = vdwg.mxu0
        %4636 = vmatprep.subr.mxu0 0.0
        %v4637 = vand.u32 %v4257, 4294901760
        %4638 = vmatpush1.msra.mxu0 %v4637
        %4639 = vmatprep.subr.mxu0 0.0
        %4640 = vmatpush1.msra.mxu0 0.0
        %4641 = vmatprep.subr.mxu0 0.0
        %4642 = vmatpush1.msra.mxu0 0.0
        %4643 = vmatprep.subr.mxu0 0.0
        %4644 = vmatpush1.msra.mxu0 0.0
        %4645 = vmatprep.subr.mxu0 0.0
        %4646 = vmatpush1.msra.mxu0 0.0
        %4647 = vmatprep.subr.mxu0 0.0
        %4648 = vmatpush1.msra.mxu0 0.0
        %4649 = vmatprep.subr.mxu0 0.0
        %4650 = vmatpush1.msra.mxu0 0.0
        %4651 = vmatprep.subr.mxu0 0.0
        %4652 = vmatpush1.msra.mxu0 0.0
        %4653 = vmatprep.subr.mxu0 0.0
        %4654 = vmatpush1.msra.mxu0 0.0
        %4655 = vmatprep.subr.mxu0 0.0
        %4656 = vmatpush1.msra.mxu0 0.0
        %4657 = vmatprep.subr.mxu0 0.0
        %4658 = vmatpush1.msra.mxu0 0.0
        %4659 = vmatprep.subr.mxu0 0.0
        %4660 = vmatpush1.msra.mxu0 0.0
        %4661 = vmatprep.subr.mxu0 0.0
        %4662 = vmatpush1.msra.mxu0 0.0
        %4663 = vmatprep.subr.mxu0 0.0
        %4664 = vmatpush1.msra.mxu0 0.0
        %4665 = vmatprep.subr.mxu0 0.0
        %4666 = vmatpush1.msra.mxu0 0.0
        %4667 = vmatprep.subr.mxu0 0.0
        %4668 = vmatpush1.msra.mxu0 0.0
        %4669 = vmatprep.subr.mxu0 0.0
        %4670 = vmatpush1.msra.mxu0 0.0
        %4671 = vmatprep.subr.mxu0 0.0
        %4672 = vmatpush1.msra.mxu0 0.0
        %4673 = vmatprep.subr.mxu0 0.0
        %4674 = vmatpush1.msra.mxu0 0.0
        %4675 = vmatprep.subr.mxu0 0.0
        %4676 = vmatpush1.msra.mxu0 0.0
        %4677 = vmatprep.subr.mxu0 0.0
        %4678 = vmatpush1.msra.mxu0 0.0
        %4679 = vmatprep.subr.mxu0 0.0
        %4680 = vmatpush1.msra.mxu0 0.0
        %4681 = vmatprep.subr.mxu0 0.0
        %4682 = vmatpush1.msra.mxu0 0.0
        %4683 = vmatprep.subr.mxu0 0.0
        %4684 = vmatpush1.msra.mxu0 0.0
        %4685 = vmatprep.subr.mxu0 0.0
        %4686 = vmatpush1.msra.mxu0 0.0
        %4687 = vmatprep.subr.mxu0 0.0
        %4688 = vmatpush1.msra.mxu0 0.0
        %4689 = vmatprep.subr.mxu0 0.0
        %4690 = vmatpush1.msra.mxu0 0.0
        %4691 = vmatprep.subr.mxu0 0.0
        %4692 = vmatpush1.msra.mxu0 0.0
        %4693 = vmatprep.subr.mxu0 0.0
        %4694 = vmatpush1.msra.mxu0 0.0
        %4695 = vmatprep.subr.mxu0 0.0
        %4696 = vmatpush1.msra.mxu0 0.0
        %4697 = vmatprep.subr.mxu0 0.0
        %4698 = vmatpush1.msra.mxu0 0.0
        %4699 = vmatprep.subr.mxu0 0.0
        %4700 = vmatpush1.msra.mxu0 0.0
        %4701 = vmatprep.mubr.f32.mxu0 0.0
        %v4702 = vand.u32 %v4260, 4294901760
        %4703 = vmatmul.mubr.f32.gmra.mrb[0].mxu0 %v4702
        %v4704 = vpop.f32.mrb[0].mxu0
        %v4705 = vadd.f32 %v4633, %v4704
        %v4706 = vpop.f32.mrb[0].mxu0
        %4707 = vdwg.mxu0
        %4708 = vrot.lane.b32.xlu0 %v1536, 64
        %v4709 = vpop.permute.xlu0 %4708
        %4710 = vrot.lane.b32.xlu0 %v2200, 64
        %v4711 = vpop.permute.xlu0 %4710
        %v4712 = vsel %vm2872, %v4709, 0
        %v4714 = vsel %vm2872, %v4711, 0
        %4716 = vmatprep.subr.mxu0 0.0
        %v4717 = vand.u32 %v4714, 4294901760
        %4718 = vmatpush1.xpose.msra.mxu0 %v4717
        %4719 = vmatprep.subr.mxu0 0.0
        %4720 = vmatpush1.xpose.msra.mxu0 0.0
        %4721 = vmatprep.subr.mxu0 0.0
        %4722 = vmatpush1.xpose.msra.mxu0 0.0
        %4723 = vmatprep.subr.mxu0 0.0
        %4724 = vmatpush1.xpose.msra.mxu0 0.0
        %4725 = vmatprep.subr.mxu0 0.0
        %4726 = vmatpush1.xpose.msra.mxu0 0.0
        %4727 = vmatprep.subr.mxu0 0.0
        %4728 = vmatpush1.xpose.msra.mxu0 0.0
        %4729 = vmatprep.subr.mxu0 0.0
        %4730 = vmatpush1.xpose.msra.mxu0 0.0
        %4731 = vmatprep.subr.mxu0 0.0
        %4732 = vmatpush1.xpose.msra.mxu0 0.0
        %4733 = vmatprep.subr.mxu0 0.0
        %4734 = vmatpush1.xpose.msra.mxu0 0.0
        %4735 = vmatprep.subr.mxu0 0.0
        %4736 = vmatpush1.xpose.msra.mxu0 0.0
        %4737 = vmatprep.subr.mxu0 0.0
        %4738 = vmatpush1.xpose.msra.mxu0 0.0
        %4739 = vmatprep.subr.mxu0 0.0
        %4740 = vmatpush1.xpose.msra.mxu0 0.0
        %4741 = vmatprep.subr.mxu0 0.0
        %4742 = vmatpush1.xpose.msra.mxu0 0.0
        %4743 = vmatprep.subr.mxu0 0.0
        %4744 = vmatpush1.xpose.msra.mxu0 0.0
        %4745 = vmatprep.subr.mxu0 0.0
        %4746 = vmatpush1.xpose.msra.mxu0 0.0
        %4747 = vmatprep.subr.mxu0 0.0
        %4748 = vmatpush1.xpose.msra.mxu0 0.0
        %4749 = vmatprep.subr.mxu0 0.0
        %4750 = vmatpush1.xpose.msra.mxu0 0.0
        %4751 = vmatprep.subr.mxu0 0.0
        %4752 = vmatpush1.xpose.msra.mxu0 0.0
        %4753 = vmatprep.subr.mxu0 0.0
        %4754 = vmatpush1.xpose.msra.mxu0 0.0
        %4755 = vmatprep.subr.mxu0 0.0
        %4756 = vmatpush1.xpose.msra.mxu0 0.0
        %4757 = vmatprep.subr.mxu0 0.0
        %4758 = vmatpush1.xpose.msra.mxu0 0.0
        %4759 = vmatprep.subr.mxu0 0.0
        %4760 = vmatpush1.xpose.msra.mxu0 0.0
        %4761 = vmatprep.subr.mxu0 0.0
        %4762 = vmatpush1.xpose.msra.mxu0 0.0
        %4763 = vmatprep.subr.mxu0 0.0
        %4764 = vmatpush1.xpose.msra.mxu0 0.0
        %4765 = vmatprep.subr.mxu0 0.0
        %4766 = vmatpush1.xpose.msra.mxu0 0.0
        %4767 = vmatprep.subr.mxu0 0.0
        %4768 = vmatpush1.xpose.msra.mxu0 0.0
        %4769 = vmatprep.subr.mxu0 0.0
        %4770 = vmatpush1.xpose.msra.mxu0 0.0
        %4771 = vmatprep.subr.mxu0 0.0
        %4772 = vmatpush1.xpose.msra.mxu0 0.0
        %4773 = vmatprep.subr.mxu0 0.0
        %4774 = vmatpush1.xpose.msra.mxu0 0.0
        %4775 = vmatprep.subr.mxu0 0.0
        %4776 = vmatpush1.xpose.msra.mxu0 0.0
        %4777 = vmatprep.subr.mxu0 0.0
        %4778 = vmatpush1.xpose.msra.mxu0 0.0
        %4779 = vmatprep.subr.mxu0 0.0
        %4780 = vmatpush1.xpose.msra.mxu0 0.0
        %4781 = vmatprep.mubr.f32.mxu0 0.0
        %v4782 = vand.u32 %v4712, 4294901760
        %v4783 = vsub.f32 %v4712, %v4782
        %v4784 = vand.u32 %v4783, 4294901760
        %v4785 = vsub.f32 %v4783, %v4784
        %v4786 = vand.u32 %v4785, 4294901760
        %4787 = vmatmul.mubr.f32.gmra.mrb[0].mxu0 %v4786
        %v4788 = vpop.f32.mrb[0].mxu0
        %v4789 = vadd.f32 0.0, %v4788
        %v4790 = vpop.f32.mrb[0].mxu0
        %4791 = vdwg.mxu0
        %4792 = vmatprep.subr.mxu0 0.0
        %v4793 = vand.u32 %v4714, 4294901760
        %v4794 = vsub.f32 %v4714, %v4793
        %v4795 = vand.u32 %v4794, 4294901760
        %v4796 = vsub.f32 %v4794, %v4795
        %v4797 = vand.u32 %v4796, 4294901760
        %4798 = vmatpush1.xpose.msra.mxu0 %v4797
        %4799 = vmatprep.subr.mxu0 0.0
        %4800 = vmatpush1.xpose.msra.mxu0 0.0
        %4801 = vmatprep.subr.mxu0 0.0
        %4802 = vmatpush1.xpose.msra.mxu0 0.0
        %4803 = vmatprep.subr.mxu0 0.0
        %4804 = vmatpush1.xpose.msra.mxu0 0.0
        %4805 = vmatprep.subr.mxu0 0.0
        %4806 = vmatpush1.xpose.msra.mxu0 0.0
        %4807 = vmatprep.subr.mxu0 0.0
        %4808 = vmatpush1.xpose.msra.mxu0 0.0
        %4809 = vmatprep.subr.mxu0 0.0
        %4810 = vmatpush1.xpose.msra.mxu0 0.0
        %4811 = vmatprep.subr.mxu0 0.0
        %4812 = vmatpush1.xpose.msra.mxu0 0.0
        %4813 = vmatprep.subr.mxu0 0.0
        %4814 = vmatpush1.xpose.msra.mxu0 0.0
        %4815 = vmatprep.subr.mxu0 0.0
        %4816 = vmatpush1.xpose.msra.mxu0 0.0
        %4817 = vmatprep.subr.mxu0 0.0
        %4818 = vmatpush1.xpose.msra.mxu0 0.0
        %4819 = vmatprep.subr.mxu0 0.0
        %4820 = vmatpush1.xpose.msra.mxu0 0.0
        %4821 = vmatprep.subr.mxu0 0.0
        %4822 = vmatpush1.xpose.msra.mxu0 0.0
        %4823 = vmatprep.subr.mxu0 0.0
        %4824 = vmatpush1.xpose.msra.mxu0 0.0
        %4825 = vmatprep.subr.mxu0 0.0
        %4826 = vmatpush1.xpose.msra.mxu0 0.0
        %4827 = vmatprep.subr.mxu0 0.0
        %4828 = vmatpush1.xpose.msra.mxu0 0.0
        %4829 = vmatprep.subr.mxu0 0.0
        %4830 = vmatpush1.xpose.msra.mxu0 0.0
        %4831 = vmatprep.subr.mxu0 0.0
        %4832 = vmatpush1.xpose.msra.mxu0 0.0
        %4833 = vmatprep.subr.mxu0 0.0
        %4834 = vmatpush1.xpose.msra.mxu0 0.0
        %4835 = vmatprep.subr.mxu0 0.0
        %4836 = vmatpush1.xpose.msra.mxu0 0.0
        %4837 = vmatprep.subr.mxu0 0.0
        %4838 = vmatpush1.xpose.msra.mxu0 0.0
        %4839 = vmatprep.subr.mxu0 0.0
        %4840 = vmatpush1.xpose.msra.mxu0 0.0
        %4841 = vmatprep.subr.mxu0 0.0
        %4842 = vmatpush1.xpose.msra.mxu0 0.0
        %4843 = vmatprep.subr.mxu0 0.0
        %4844 = vmatpush1.xpose.msra.mxu0 0.0
        %4845 = vmatprep.subr.mxu0 0.0
        %4846 = vmatpush1.xpose.msra.mxu0 0.0
        %4847 = vmatprep.subr.mxu0 0.0
        %4848 = vmatpush1.xpose.msra.mxu0 0.0
        %4849 = vmatprep.subr.mxu0 0.0
        %4850 = vmatpush1.xpose.msra.mxu0 0.0
        %4851 = vmatprep.subr.mxu0 0.0
        %4852 = vmatpush1.xpose.msra.mxu0 0.0
        %4853 = vmatprep.subr.mxu0 0.0
        %4854 = vmatpush1.xpose.msra.mxu0 0.0
        %4855 = vmatprep.subr.mxu0 0.0
        %4856 = vmatpush1.xpose.msra.mxu0 0.0
        %4857 = vmatprep.subr.mxu0 0.0
        %4858 = vmatpush1.xpose.msra.mxu0 0.0
        %4859 = vmatprep.subr.mxu0 0.0
        %4860 = vmatpush1.xpose.msra.mxu0 0.0
        %4861 = vmatprep.mubr.f32.mxu0 0.0
        %v4862 = vand.u32 %v4712, 4294901760
        %4863 = vmatmul.mubr.f32.gmra.mrb[0].mxu0 %v4862
        %v4864 = vpop.f32.mrb[0].mxu0
        %v4865 = vadd.f32 %v4789, %v4864
        %v4866 = vpop.f32.mrb[0].mxu0
        %4867 = vdwg.mxu0
        %4868 = vmatprep.subr.mxu0 0.0
        %v4869 = vand.u32 %v4714, 4294901760
        %v4870 = vsub.f32 %v4714, %v4869
        %4871 = vmatpush1.xpose.msra.mxu0 %v4870
        %4872 = vmatprep.subr.mxu0 0.0
        %4873 = vmatpush1.xpose.msra.mxu0 0.0
        %4874 = vmatprep.subr.mxu0 0.0
        %4875 = vmatpush1.xpose.msra.mxu0 0.0
        %4876 = vmatprep.subr.mxu0 0.0
        %4877 = vmatpush1.xpose.msra.mxu0 0.0
        %4878 = vmatprep.subr.mxu0 0.0
        %4879 = vmatpush1.xpose.msra.mxu0 0.0
        %4880 = vmatprep.subr.mxu0 0.0
        %4881 = vmatpush1.xpose.msra.mxu0 0.0
        %4882 = vmatprep.subr.mxu0 0.0
        %4883 = vmatpush1.xpose.msra.mxu0 0.0
        %4884 = vmatprep.subr.mxu0 0.0
        %4885 = vmatpush1.xpose.msra.mxu0 0.0
        %4886 = vmatprep.subr.mxu0 0.0
        %4887 = vmatpush1.xpose.msra.mxu0 0.0
        %4888 = vmatprep.subr.mxu0 0.0
        %4889 = vmatpush1.xpose.msra.mxu0 0.0
        %4890 = vmatprep.subr.mxu0 0.0
        %4891 = vmatpush1.xpose.msra.mxu0 0.0
        %4892 = vmatprep.subr.mxu0 0.0
        %4893 = vmatpush1.xpose.msra.mxu0 0.0
        %4894 = vmatprep.subr.mxu0 0.0
        %4895 = vmatpush1.xpose.msra.mxu0 0.0
        %4896 = vmatprep.subr.mxu0 0.0
        %4897 = vmatpush1.xpose.msra.mxu0 0.0
        %4898 = vmatprep.subr.mxu0 0.0
        %4899 = vmatpush1.xpose.msra.mxu0 0.0
        %4900 = vmatprep.subr.mxu0 0.0
        %4901 = vmatpush1.xpose.msra.mxu0 0.0
        %4902 = vmatprep.subr.mxu0 0.0
        %4903 = vmatpush1.xpose.msra.mxu0 0.0
        %4904 = vmatprep.subr.mxu0 0.0
        %4905 = vmatpush1.xpose.msra.mxu0 0.0
        %4906 = vmatprep.subr.mxu0 0.0
        %4907 = vmatpush1.xpose.msra.mxu0 0.0
        %4908 = vmatprep.subr.mxu0 0.0
        %4909 = vmatpush1.xpose.msra.mxu0 0.0
        %4910 = vmatprep.subr.mxu0 0.0
        %4911 = vmatpush1.xpose.msra.mxu0 0.0
        %4912 = vmatprep.subr.mxu0 0.0
        %4913 = vmatpush1.xpose.msra.mxu0 0.0
        %4914 = vmatprep.subr.mxu0 0.0
        %4915 = vmatpush1.xpose.msra.mxu0 0.0
        %4916 = vmatprep.subr.mxu0 0.0
        %4917 = vmatpush1.xpose.msra.mxu0 0.0
        %4918 = vmatprep.subr.mxu0 0.0
        %4919 = vmatpush1.xpose.msra.mxu0 0.0
        %4920 = vmatprep.subr.mxu0 0.0
        %4921 = vmatpush1.xpose.msra.mxu0 0.0
        %4922 = vmatprep.subr.mxu0 0.0
        %4923 = vmatpush1.xpose.msra.mxu0 0.0
        %4924 = vmatprep.subr.mxu0 0.0
        %4925 = vmatpush1.xpose.msra.mxu0 0.0
        %4926 = vmatprep.subr.mxu0 0.0
        %4927 = vmatpush1.xpose.msra.mxu0 0.0
        %4928 = vmatprep.subr.mxu0 0.0
        %4929 = vmatpush1.xpose.msra.mxu0 0.0
        %4930 = vmatprep.subr.mxu0 0.0
        %4931 = vmatpush1.xpose.msra.mxu0 0.0
        %4932 = vmatprep.subr.mxu0 0.0
        %4933 = vmatpush1.xpose.msra.mxu0 0.0
        %4934 = vmatprep.mubr.f32.mxu0 0.0
        %v4935 = vand.u32 %v4712, 4294901760
        %v4936 = vsub.f32 %v4712, %v4935
        %4937 = vmatmul.mubr.f32.gmra.mrb[0].mxu0 %v4936
        %v4938 = vpop.f32.mrb[0].mxu0
        %v4939 = vadd.f32 %v4865, %v4938
        %v4940 = vpop.f32.mrb[0].mxu0
        %4941 = vdwg.mxu0
        %4942 = vmatprep.subr.mxu0 0.0
        %v4943 = vand.u32 %v4714, 4294901760
        %4944 = vmatpush1.xpose.msra.mxu0 %v4943
        %4945 = vmatprep.subr.mxu0 0.0
        %4946 = vmatpush1.xpose.msra.mxu0 0.0
        %4947 = vmatprep.subr.mxu0 0.0
        %4948 = vmatpush1.xpose.msra.mxu0 0.0
        %4949 = vmatprep.subr.mxu0 0.0
        %4950 = vmatpush1.xpose.msra.mxu0 0.0
        %4951 = vmatprep.subr.mxu0 0.0
        %4952 = vmatpush1.xpose.msra.mxu0 0.0
        %4953 = vmatprep.subr.mxu0 0.0
        %4954 = vmatpush1.xpose.msra.mxu0 0.0
        %4955 = vmatprep.subr.mxu0 0.0
        %4956 = vmatpush1.xpose.msra.mxu0 0.0
        %4957 = vmatprep.subr.mxu0 0.0
        %4958 = vmatpush1.xpose.msra.mxu0 0.0
        %4959 = vmatprep.subr.mxu0 0.0
        %4960 = vmatpush1.xpose.msra.mxu0 0.0
        %4961 = vmatprep.subr.mxu0 0.0
        %4962 = vmatpush1.xpose.msra.mxu0 0.0
        %4963 = vmatprep.subr.mxu0 0.0
        %4964 = vmatpush1.xpose.msra.mxu0 0.0
        %4965 = vmatprep.subr.mxu0 0.0
        %4966 = vmatpush1.xpose.msra.mxu0 0.0
        %4967 = vmatprep.subr.mxu0 0.0
        %4968 = vmatpush1.xpose.msra.mxu0 0.0
        %4969 = vmatprep.subr.mxu0 0.0
        %4970 = vmatpush1.xpose.msra.mxu0 0.0
        %4971 = vmatprep.subr.mxu0 0.0
        %4972 = vmatpush1.xpose.msra.mxu0 0.0
        %4973 = vmatprep.subr.mxu0 0.0
        %4974 = vmatpush1.xpose.msra.mxu0 0.0
        %4975 = vmatprep.subr.mxu0 0.0
        %4976 = vmatpush1.xpose.msra.mxu0 0.0
        %4977 = vmatprep.subr.mxu0 0.0
        %4978 = vmatpush1.xpose.msra.mxu0 0.0
        %4979 = vmatprep.subr.mxu0 0.0
        %4980 = vmatpush1.xpose.msra.mxu0 0.0
        %4981 = vmatprep.subr.mxu0 0.0
        %4982 = vmatpush1.xpose.msra.mxu0 0.0
        %4983 = vmatprep.subr.mxu0 0.0
        %4984 = vmatpush1.xpose.msra.mxu0 0.0
        %4985 = vmatprep.subr.mxu0 0.0
        %4986 = vmatpush1.xpose.msra.mxu0 0.0
        %4987 = vmatprep.subr.mxu0 0.0
        %4988 = vmatpush1.xpose.msra.mxu0 0.0
        %4989 = vmatprep.subr.mxu0 0.0
        %4990 = vmatpush1.xpose.msra.mxu0 0.0
        %4991 = vmatprep.subr.mxu0 0.0
        %4992 = vmatpush1.xpose.msra.mxu0 0.0
        %4993 = vmatprep.subr.mxu0 0.0
        %4994 = vmatpush1.xpose.msra.mxu0 0.0
        %4995 = vmatprep.subr.mxu0 0.0
        %4996 = vmatpush1.xpose.msra.mxu0 0.0
        %4997 = vmatprep.subr.mxu0 0.0
        %4998 = vmatpush1.xpose.msra.mxu0 0.0
        %4999 = vmatprep.subr.mxu0 0.0
        %5000 = vmatpush1.xpose.msra.mxu0 0.0
        %5001 = vmatprep.subr.mxu0 0.0
        %5002 = vmatpush1.xpose.msra.mxu0 0.0
        %5003 = vmatprep.subr.mxu0 0.0
        %5004 = vmatpush1.xpose.msra.mxu0 0.0
        %5005 = vmatprep.subr.mxu0 0.0
        %5006 = vmatpush1.xpose.msra.mxu0 0.0
        %5007 = vmatprep.mubr.f32.mxu0 0.0
        %v5008 = vand.u32 %v4712, 4294901760
        %v5009 = vsub.f32 %v4712, %v5008
        %v5010 = vand.u32 %v5009, 4294901760
        %5011 = vmatmul.mubr.f32.gmra.mrb[0].mxu0 %v5010
        %v5012 = vpop.f32.mrb[0].mxu0
        %v5013 = vadd.f32 %v4939, %v5012
        %v5014 = vpop.f32.mrb[0].mxu0
        %5015 = vdwg.mxu0
        %5016 = vmatprep.subr.mxu0 0.0
        %v5017 = vand.u32 %v4714, 4294901760
        %v5018 = vsub.f32 %v4714, %v5017
        %v5019 = vand.u32 %v5018, 4294901760
        %5020 = vmatpush1.xpose.msra.mxu0 %v5019
        %5021 = vmatprep.subr.mxu0 0.0
        %5022 = vmatpush1.xpose.msra.mxu0 0.0
        %5023 = vmatprep.subr.mxu0 0.0
        %5024 = vmatpush1.xpose.msra.mxu0 0.0
        %5025 = vmatprep.subr.mxu0 0.0
        %5026 = vmatpush1.xpose.msra.mxu0 0.0
        %5027 = vmatprep.subr.mxu0 0.0
        %5028 = vmatpush1.xpose.msra.mxu0 0.0
        %5029 = vmatprep.subr.mxu0 0.0
        %5030 = vmatpush1.xpose.msra.mxu0 0.0
        %5031 = vmatprep.subr.mxu0 0.0
        %5032 = vmatpush1.xpose.msra.mxu0 0.0
        %5033 = vmatprep.subr.mxu0 0.0
        %5034 = vmatpush1.xpose.msra.mxu0 0.0
        %5035 = vmatprep.subr.mxu0 0.0
        %5036 = vmatpush1.xpose.msra.mxu0 0.0
        %5037 = vmatprep.subr.mxu0 0.0
        %5038 = vmatpush1.xpose.msra.mxu0 0.0
        %5039 = vmatprep.subr.mxu0 0.0
        %5040 = vmatpush1.xpose.msra.mxu0 0.0
        %5041 = vmatprep.subr.mxu0 0.0
        %5042 = vmatpush1.xpose.msra.mxu0 0.0
        %5043 = vmatprep.subr.mxu0 0.0
        %5044 = vmatpush1.xpose.msra.mxu0 0.0
        %5045 = vmatprep.subr.mxu0 0.0
        %5046 = vmatpush1.xpose.msra.mxu0 0.0
        %5047 = vmatprep.subr.mxu0 0.0
        %5048 = vmatpush1.xpose.msra.mxu0 0.0
        %5049 = vmatprep.subr.mxu0 0.0
        %5050 = vmatpush1.xpose.msra.mxu0 0.0
        %5051 = vmatprep.subr.mxu0 0.0
        %5052 = vmatpush1.xpose.msra.mxu0 0.0
        %5053 = vmatprep.subr.mxu0 0.0
        %5054 = vmatpush1.xpose.msra.mxu0 0.0
        %5055 = vmatprep.subr.mxu0 0.0
        %5056 = vmatpush1.xpose.msra.mxu0 0.0
        %5057 = vmatprep.subr.mxu0 0.0
        %5058 = vmatpush1.xpose.msra.mxu0 0.0
        %5059 = vmatprep.subr.mxu0 0.0
        %5060 = vmatpush1.xpose.msra.mxu0 0.0
        %5061 = vmatprep.subr.mxu0 0.0
        %5062 = vmatpush1.xpose.msra.mxu0 0.0
        %5063 = vmatprep.subr.mxu0 0.0
        %5064 = vmatpush1.xpose.msra.mxu0 0.0
        %5065 = vmatprep.subr.mxu0 0.0
        %5066 = vmatpush1.xpose.msra.mxu0 0.0
        %5067 = vmatprep.subr.mxu0 0.0
        %5068 = vmatpush1.xpose.msra.mxu0 0.0
        %5069 = vmatprep.subr.mxu0 0.0
        %5070 = vmatpush1.xpose.msra.mxu0 0.0
        %5071 = vmatprep.subr.mxu0 0.0
        %5072 = vmatpush1.xpose.msra.mxu0 0.0
        %5073 = vmatprep.subr.mxu0 0.0
        %5074 = vmatpush1.xpose.msra.mxu0 0.0
        %5075 = vmatprep.subr.mxu0 0.0
        %5076 = vmatpush1.xpose.msra.mxu0 0.0
        %5077 = vmatprep.subr.mxu0 0.0
        %5078 = vmatpush1.xpose.msra.mxu0 0.0
        %5079 = vmatprep.subr.mxu0 0.0
        %5080 = vmatpush1.xpose.msra.mxu0 0.0
        %5081 = vmatprep.subr.mxu0 0.0
        %5082 = vmatpush1.xpose.msra.mxu0 0.0
        %5083 = vmatprep.mubr.f32.mxu0 0.0
        %v5084 = vand.u32 %v4712, 4294901760
        %5085 = vmatmul.mubr.f32.gmra.mrb[0].mxu0 %v5084
        %v5086 = vpop.f32.mrb[0].mxu0
        %v5087 = vadd.f32 %v5013, %v5086
        %v5088 = vpop.f32.mrb[0].mxu0
        %5089 = vdwg.mxu0
        %5090 = vmatprep.subr.mxu0 0.0
        %v5091 = vand.u32 %v4714, 4294901760
        %5092 = vmatpush1.xpose.msra.mxu0 %v5091
        %5093 = vmatprep.subr.mxu0 0.0
        %5094 = vmatpush1.xpose.msra.mxu0 0.0
        %5095 = vmatprep.subr.mxu0 0.0
        %5096 = vmatpush1.xpose.msra.mxu0 0.0
        %5097 = vmatprep.subr.mxu0 0.0
        %5098 = vmatpush1.xpose.msra.mxu0 0.0
        %5099 = vmatprep.subr.mxu0 0.0
        %5100 = vmatpush1.xpose.msra.mxu0 0.0
        %5101 = vmatprep.subr.mxu0 0.0
        %5102 = vmatpush1.xpose.msra.mxu0 0.0
        %5103 = vmatprep.subr.mxu0 0.0
        %5104 = vmatpush1.xpose.msra.mxu0 0.0
        %5105 = vmatprep.subr.mxu0 0.0
        %5106 = vmatpush1.xpose.msra.mxu0 0.0
        %5107 = vmatprep.subr.mxu0 0.0
        %5108 = vmatpush1.xpose.msra.mxu0 0.0
        %5109 = vmatprep.subr.mxu0 0.0
        %5110 = vmatpush1.xpose.msra.mxu0 0.0
        %5111 = vmatprep.subr.mxu0 0.0
        %5112 = vmatpush1.xpose.msra.mxu0 0.0
        %5113 = vmatprep.subr.mxu0 0.0
        %5114 = vmatpush1.xpose.msra.mxu0 0.0
        %5115 = vmatprep.subr.mxu0 0.0
        %5116 = vmatpush1.xpose.msra.mxu0 0.0
        %5117 = vmatprep.subr.mxu0 0.0
        %5118 = vmatpush1.xpose.msra.mxu0 0.0
        %5119 = vmatprep.subr.mxu0 0.0
        %5120 = vmatpush1.xpose.msra.mxu0 0.0
        %5121 = vmatprep.subr.mxu0 0.0
        %5122 = vmatpush1.xpose.msra.mxu0 0.0
        %5123 = vmatprep.subr.mxu0 0.0
        %5124 = vmatpush1.xpose.msra.mxu0 0.0
        %5125 = vmatprep.subr.mxu0 0.0
        %5126 = vmatpush1.xpose.msra.mxu0 0.0
        %5127 = vmatprep.subr.mxu0 0.0
        %5128 = vmatpush1.xpose.msra.mxu0 0.0
        %5129 = vmatprep.subr.mxu0 0.0
        %5130 = vmatpush1.xpose.msra.mxu0 0.0
        %5131 = vmatprep.subr.mxu0 0.0
        %5132 = vmatpush1.xpose.msra.mxu0 0.0
        %5133 = vmatprep.subr.mxu0 0.0
        %5134 = vmatpush1.xpose.msra.mxu0 0.0
        %5135 = vmatprep.subr.mxu0 0.0
        %5136 = vmatpush1.xpose.msra.mxu0 0.0
        %5137 = vmatprep.subr.mxu0 0.0
        %5138 = vmatpush1.xpose.msra.mxu0 0.0
        %5139 = vmatprep.subr.mxu0 0.0
        %5140 = vmatpush1.xpose.msra.mxu0 0.0
        %5141 = vmatprep.subr.mxu0 0.0
        %5142 = vmatpush1.xpose.msra.mxu0 0.0
        %5143 = vmatprep.subr.mxu0 0.0
        %5144 = vmatpush1.xpose.msra.mxu0 0.0
        %5145 = vmatprep.subr.mxu0 0.0
        %5146 = vmatpush1.xpose.msra.mxu0 0.0
        %5147 = vmatprep.subr.mxu0 0.0
        %5148 = vmatpush1.xpose.msra.mxu0 0.0
        %5149 = vmatprep.subr.mxu0 0.0
        %5150 = vmatpush1.xpose.msra.mxu0 0.0
        %5151 = vmatprep.subr.mxu0 0.0
        %5152 = vmatpush1.xpose.msra.mxu0 0.0
        %5153 = vmatprep.subr.mxu0 0.0
        %5154 = vmatpush1.xpose.msra.mxu0 0.0
        %5155 = vmatprep.mubr.f32.mxu0 0.0
        %v5156 = vand.u32 %v4712, 4294901760
        %5157 = vmatmul.mubr.f32.gmra.mrb[0].mxu0 %v5156
        %v5158 = vpop.f32.mrb[0].mxu0
        %v5159 = vadd.f32 %v5087, %v5158
        %v5160 = vpop.f32.mrb[0].mxu0
        %5161 = vdwg.mxu0
        %v5162 = vmul.f32 %v5159, 0.17677669
        %v5163 = vsel %vm2871, %v5162, -1e+30
        %v5164 = vsel %vm3327, %v5163, -inf
        %5165 = vmax.xlane.f32.xlu0 %v5164
        %v5166 = vpop.xlane.xlu0 %5165
        %v5167 = vsub.f32 %v5163, %v5166
        %v5168 = vmul.f32 %v5167, 1.442695
        %v5169 = vpow.pop %v5168
        %v5170 = vsel %vm3327, %v5169, 0.0
        %5171 = vadd.xlane.f32.xlu0 %v5170
        %v5172 = vpop.xlane.xlu0 %5171
        %v5173 = vrcp.pop %v5172
        %v5174 = vmul.f32 %v5169, %v5173
        %5175 = vrot.lane.b32.xlu0 %v2864, 64
        %v5176 = vpop.permute.xlu0 %5175
        %v5179 = vsel %vm3327, %v5174, 0
        %5181 = vmatprep.subr.mxu0 0.0
        %v5182 = vand.u32 %v5176, 4294901760
        %5183 = vmatpush1.msra.mxu0 %v5182
        %5184 = vmatprep.subr.mxu0 0.0
        %5185 = vmatpush1.msra.mxu0 0.0
        %5186 = vmatprep.subr.mxu0 0.0
        %5187 = vmatpush1.msra.mxu0 0.0
        %5188 = vmatprep.subr.mxu0 0.0
        %5189 = vmatpush1.msra.mxu0 0.0
        %5190 = vmatprep.subr.mxu0 0.0
        %5191 = vmatpush1.msra.mxu0 0.0
        %5192 = vmatprep.subr.mxu0 0.0
        %5193 = vmatpush1.msra.mxu0 0.0
        %5194 = vmatprep.subr.mxu0 0.0
        %5195 = vmatpush1.msra.mxu0 0.0
        %5196 = vmatprep.subr.mxu0 0.0
        %5197 = vmatpush1.msra.mxu0 0.0
        %5198 = vmatprep.subr.mxu0 0.0
        %5199 = vmatpush1.msra.mxu0 0.0
        %5200 = vmatprep.subr.mxu0 0.0
        %5201 = vmatpush1.msra.mxu0 0.0
        %5202 = vmatprep.subr.mxu0 0.0
        %5203 = vmatpush1.msra.mxu0 0.0
        %5204 = vmatprep.subr.mxu0 0.0
        %5205 = vmatpush1.msra.mxu0 0.0
        %5206 = vmatprep.subr.mxu0 0.0
        %5207 = vmatpush1.msra.mxu0 0.0
        %5208 = vmatprep.subr.mxu0 0.0
        %5209 = vmatpush1.msra.mxu0 0.0
        %5210 = vmatprep.subr.mxu0 0.0
        %5211 = vmatpush1.msra.mxu0 0.0
        %5212 = vmatprep.subr.mxu0 0.0
        %5213 = vmatpush1.msra.mxu0 0.0
        %5214 = vmatprep.subr.mxu0 0.0
        %5215 = vmatpush1.msra.mxu0 0.0
        %5216 = vmatprep.subr.mxu0 0.0
        %5217 = vmatpush1.msra.mxu0 0.0
        %5218 = vmatprep.subr.mxu0 0.0
        %5219 = vmatpush1.msra.mxu0 0.0
        %5220 = vmatprep.subr.mxu0 0.0
        %5221 = vmatpush1.msra.mxu0 0.0
        %5222 = vmatprep.subr.mxu0 0.0
        %5223 = vmatpush1.msra.mxu0 0.0
        %5224 = vmatprep.subr.mxu0 0.0
        %5225 = vmatpush1.msra.mxu0 0.0
        %5226 = vmatprep.subr.mxu0 0.0
        %5227 = vmatpush1.msra.mxu0 0.0
        %5228 = vmatprep.subr.mxu0 0.0
        %5229 = vmatpush1.msra.mxu0 0.0
        %5230 = vmatprep.subr.mxu0 0.0
        %5231 = vmatpush1.msra.mxu0 0.0
        %5232 = vmatprep.subr.mxu0 0.0
        %5233 = vmatpush1.msra.mxu0 0.0
        %5234 = vmatprep.subr.mxu0 0.0
        %5235 = vmatpush1.msra.mxu0 0.0
        %5236 = vmatprep.subr.mxu0 0.0
        %5237 = vmatpush1.msra.mxu0 0.0
        %5238 = vmatprep.subr.mxu0 0.0
        %5239 = vmatpush1.msra.mxu0 0.0
        %5240 = vmatprep.subr.mxu0 0.0
        %5241 = vmatpush1.msra.mxu0 0.0
        %5242 = vmatprep.subr.mxu0 0.0
        %5243 = vmatpush1.msra.mxu0 0.0
        %5244 = vmatprep.subr.mxu0 0.0
        %5245 = vmatpush1.msra.mxu0 0.0
        %5246 = vmatprep.mubr.f32.mxu0 0.0
        %v5247 = vand.u32 %v5179, 4294901760
        %v5248 = vsub.f32 %v5179, %v5247
        %v5249 = vand.u32 %v5248, 4294901760
        %v5250 = vsub.f32 %v5248, %v5249
        %v5251 = vand.u32 %v5250, 4294901760
        %5252 = vmatmul.mubr.f32.gmra.mrb[0].mxu0 %v5251
        %v5253 = vpop.f32.mrb[0].mxu0
        %v5254 = vadd.f32 0.0, %v5253
        %v5255 = vpop.f32.mrb[0].mxu0
        %5256 = vdwg.mxu0
        %5257 = vmatprep.subr.mxu0 0.0
        %v5258 = vand.u32 %v5176, 4294901760
        %v5259 = vsub.f32 %v5176, %v5258
        %v5260 = vand.u32 %v5259, 4294901760
        %v5261 = vsub.f32 %v5259, %v5260
        %v5262 = vand.u32 %v5261, 4294901760
        %5263 = vmatpush1.msra.mxu0 %v5262
        %5264 = vmatprep.subr.mxu0 0.0
        %5265 = vmatpush1.msra.mxu0 0.0
        %5266 = vmatprep.subr.mxu0 0.0
        %5267 = vmatpush1.msra.mxu0 0.0
        %5268 = vmatprep.subr.mxu0 0.0
        %5269 = vmatpush1.msra.mxu0 0.0
        %5270 = vmatprep.subr.mxu0 0.0
        %5271 = vmatpush1.msra.mxu0 0.0
        %5272 = vmatprep.subr.mxu0 0.0
        %5273 = vmatpush1.msra.mxu0 0.0
        %5274 = vmatprep.subr.mxu0 0.0
        %5275 = vmatpush1.msra.mxu0 0.0
        %5276 = vmatprep.subr.mxu0 0.0
        %5277 = vmatpush1.msra.mxu0 0.0
        %5278 = vmatprep.subr.mxu0 0.0
        %5279 = vmatpush1.msra.mxu0 0.0
        %5280 = vmatprep.subr.mxu0 0.0
        %5281 = vmatpush1.msra.mxu0 0.0
        %5282 = vmatprep.subr.mxu0 0.0
        %5283 = vmatpush1.msra.mxu0 0.0
        %5284 = vmatprep.subr.mxu0 0.0
        %5285 = vmatpush1.msra.mxu0 0.0
        %5286 = vmatprep.subr.mxu0 0.0
        %5287 = vmatpush1.msra.mxu0 0.0
        %5288 = vmatprep.subr.mxu0 0.0
        %5289 = vmatpush1.msra.mxu0 0.0
        %5290 = vmatprep.subr.mxu0 0.0
        %5291 = vmatpush1.msra.mxu0 0.0
        %5292 = vmatprep.subr.mxu0 0.0
        %5293 = vmatpush1.msra.mxu0 0.0
        %5294 = vmatprep.subr.mxu0 0.0
        %5295 = vmatpush1.msra.mxu0 0.0
        %5296 = vmatprep.subr.mxu0 0.0
        %5297 = vmatpush1.msra.mxu0 0.0
        %5298 = vmatprep.subr.mxu0 0.0
        %5299 = vmatpush1.msra.mxu0 0.0
        %5300 = vmatprep.subr.mxu0 0.0
        %5301 = vmatpush1.msra.mxu0 0.0
        %5302 = vmatprep.subr.mxu0 0.0
        %5303 = vmatpush1.msra.mxu0 0.0
        %5304 = vmatprep.subr.mxu0 0.0
        %5305 = vmatpush1.msra.mxu0 0.0
        %5306 = vmatprep.subr.mxu0 0.0
        %5307 = vmatpush1.msra.mxu0 0.0
        %5308 = vmatprep.subr.mxu0 0.0
        %5309 = vmatpush1.msra.mxu0 0.0
        %5310 = vmatprep.subr.mxu0 0.0
        %5311 = vmatpush1.msra.mxu0 0.0
        %5312 = vmatprep.subr.mxu0 0.0
        %5313 = vmatpush1.msra.mxu0 0.0
        %5314 = vmatprep.subr.mxu0 0.0
        %5315 = vmatpush1.msra.mxu0 0.0
        %5316 = vmatprep.subr.mxu0 0.0
        %5317 = vmatpush1.msra.mxu0 0.0
        %5318 = vmatprep.subr.mxu0 0.0
        %5319 = vmatpush1.msra.mxu0 0.0
        %5320 = vmatprep.subr.mxu0 0.0
        %5321 = vmatpush1.msra.mxu0 0.0
        %5322 = vmatprep.subr.mxu0 0.0
        %5323 = vmatpush1.msra.mxu0 0.0
        %5324 = vmatprep.subr.mxu0 0.0
        %5325 = vmatpush1.msra.mxu0 0.0
        %5326 = vmatprep.mubr.f32.mxu0 0.0
        %v5327 = vand.u32 %v5179, 4294901760
        %5328 = vmatmul.mubr.f32.gmra.mrb[0].mxu0 %v5327
        %v5329 = vpop.f32.mrb[0].mxu0
        %v5330 = vadd.f32 %v5254, %v5329
        %v5331 = vpop.f32.mrb[0].mxu0
        %5332 = vdwg.mxu0
        %5333 = vmatprep.subr.mxu0 0.0
        %v5334 = vand.u32 %v5176, 4294901760
        %v5335 = vsub.f32 %v5176, %v5334
        %5336 = vmatpush1.msra.mxu0 %v5335
        %5337 = vmatprep.subr.mxu0 0.0
        %5338 = vmatpush1.msra.mxu0 0.0
        %5339 = vmatprep.subr.mxu0 0.0
        %5340 = vmatpush1.msra.mxu0 0.0
        %5341 = vmatprep.subr.mxu0 0.0
        %5342 = vmatpush1.msra.mxu0 0.0
        %5343 = vmatprep.subr.mxu0 0.0
        %5344 = vmatpush1.msra.mxu0 0.0
        %5345 = vmatprep.subr.mxu0 0.0
        %5346 = vmatpush1.msra.mxu0 0.0
        %5347 = vmatprep.subr.mxu0 0.0
        %5348 = vmatpush1.msra.mxu0 0.0
        %5349 = vmatprep.subr.mxu0 0.0
        %5350 = vmatpush1.msra.mxu0 0.0
        %5351 = vmatprep.subr.mxu0 0.0
        %5352 = vmatpush1.msra.mxu0 0.0
        %5353 = vmatprep.subr.mxu0 0.0
        %5354 = vmatpush1.msra.mxu0 0.0
        %5355 = vmatprep.subr.mxu0 0.0
        %5356 = vmatpush1.msra.mxu0 0.0
        %5357 = vmatprep.subr.mxu0 0.0
        %5358 = vmatpush1.msra.mxu0 0.0
        %5359 = vmatprep.subr.mxu0 0.0
        %5360 = vmatpush1.msra.mxu0 0.0
        %5361 = vmatprep.subr.mxu0 0.0
        %5362 = vmatpush1.msra.mxu0 0.0
        %5363 = vmatprep.subr.mxu0 0.0
        %5364 = vmatpush1.msra.mxu0 0.0
        %5365 = vmatprep.subr.mxu0 0.0
        %5366 = vmatpush1.msra.mxu0 0.0
        %5367 = vmatprep.subr.mxu0 0.0
        %5368 = vmatpush1.msra.mxu0 0.0
        %5369 = vmatprep.subr.mxu0 0.0
        %5370 = vmatpush1.msra.mxu0 0.0
        %5371 = vmatprep.subr.mxu0 0.0
        %5372 = vmatpush1.msra.mxu0 0.0
        %5373 = vmatprep.subr.mxu0 0.0
        %5374 = vmatpush1.msra.mxu0 0.0
        %5375 = vmatprep.subr.mxu0 0.0
        %5376 = vmatpush1.msra.mxu0 0.0
        %5377 = vmatprep.subr.mxu0 0.0
        %5378 = vmatpush1.msra.mxu0 0.0
        %5379 = vmatprep.subr.mxu0 0.0
        %5380 = vmatpush1.msra.mxu0 0.0
        %5381 = vmatprep.subr.mxu0 0.0
        %5382 = vmatpush1.msra.mxu0 0.0
        %5383 = vmatprep.subr.mxu0 0.0
        %5384 = vmatpush1.msra.mxu0 0.0
        %5385 = vmatprep.subr.mxu0 0.0
        %5386 = vmatpush1.msra.mxu0 0.0
        %5387 = vmatprep.subr.mxu0 0.0
        %5388 = vmatpush1.msra.mxu0 0.0
        %5389 = vmatprep.subr.mxu0 0.0
        %5390 = vmatpush1.msra.mxu0 0.0
        %5391 = vmatprep.subr.mxu0 0.0
        %5392 = vmatpush1.msra.mxu0 0.0
        %5393 = vmatprep.subr.mxu0 0.0
        %5394 = vmatpush1.msra.mxu0 0.0
        %5395 = vmatprep.subr.mxu0 0.0
        %5396 = vmatpush1.msra.mxu0 0.0
        %5397 = vmatprep.subr.mxu0 0.0
        %5398 = vmatpush1.msra.mxu0 0.0
        %5399 = vmatprep.mubr.f32.mxu0 0.0
        %v5400 = vand.u32 %v5179, 4294901760
        %v5401 = vsub.f32 %v5179, %v5400
        %5402 = vmatmul.mubr.f32.gmra.mrb[0].mxu0 %v5401
        %v5403 = vpop.f32.mrb[0].mxu0
        %v5404 = vadd.f32 %v5330, %v5403
        %v5405 = vpop.f32.mrb[0].mxu0
        %5406 = vdwg.mxu0
        %5407 = vmatprep.subr.mxu0 0.0
        %v5408 = vand.u32 %v5176, 4294901760
        %5409 = vmatpush1.msra.mxu0 %v5408
        %5410 = vmatprep.subr.mxu0 0.0
        %5411 = vmatpush1.msra.mxu0 0.0
        %5412 = vmatprep.subr.mxu0 0.0
        %5413 = vmatpush1.msra.mxu0 0.0
        %5414 = vmatprep.subr.mxu0 0.0
        %5415 = vmatpush1.msra.mxu0 0.0
        %5416 = vmatprep.subr.mxu0 0.0
        %5417 = vmatpush1.msra.mxu0 0.0
        %5418 = vmatprep.subr.mxu0 0.0
        %5419 = vmatpush1.msra.mxu0 0.0
        %5420 = vmatprep.subr.mxu0 0.0
        %5421 = vmatpush1.msra.mxu0 0.0
        %5422 = vmatprep.subr.mxu0 0.0
        %5423 = vmatpush1.msra.mxu0 0.0
        %5424 = vmatprep.subr.mxu0 0.0
        %5425 = vmatpush1.msra.mxu0 0.0
        %5426 = vmatprep.subr.mxu0 0.0
        %5427 = vmatpush1.msra.mxu0 0.0
        %5428 = vmatprep.subr.mxu0 0.0
        %5429 = vmatpush1.msra.mxu0 0.0
        %5430 = vmatprep.subr.mxu0 0.0
        %5431 = vmatpush1.msra.mxu0 0.0
        %5432 = vmatprep.subr.mxu0 0.0
        %5433 = vmatpush1.msra.mxu0 0.0
        %5434 = vmatprep.subr.mxu0 0.0
        %5435 = vmatpush1.msra.mxu0 0.0
        %5436 = vmatprep.subr.mxu0 0.0
        %5437 = vmatpush1.msra.mxu0 0.0
        %5438 = vmatprep.subr.mxu0 0.0
        %5439 = vmatpush1.msra.mxu0 0.0
        %5440 = vmatprep.subr.mxu0 0.0
        %5441 = vmatpush1.msra.mxu0 0.0
        %5442 = vmatprep.subr.mxu0 0.0
        %5443 = vmatpush1.msra.mxu0 0.0
        %5444 = vmatprep.subr.mxu0 0.0
        %5445 = vmatpush1.msra.mxu0 0.0
        %5446 = vmatprep.subr.mxu0 0.0
        %5447 = vmatpush1.msra.mxu0 0.0
        %5448 = vmatprep.subr.mxu0 0.0
        %5449 = vmatpush1.msra.mxu0 0.0
        %5450 = vmatprep.subr.mxu0 0.0
        %5451 = vmatpush1.msra.mxu0 0.0
        %5452 = vmatprep.subr.mxu0 0.0
        %5453 = vmatpush1.msra.mxu0 0.0
        %5454 = vmatprep.subr.mxu0 0.0
        %5455 = vmatpush1.msra.mxu0 0.0
        %5456 = vmatprep.subr.mxu0 0.0
        %5457 = vmatpush1.msra.mxu0 0.0
        %5458 = vmatprep.subr.mxu0 0.0
        %5459 = vmatpush1.msra.mxu0 0.0
        %5460 = vmatprep.subr.mxu0 0.0
        %5461 = vmatpush1.msra.mxu0 0.0
        %5462 = vmatprep.subr.mxu0 0.0
        %5463 = vmatpush1.msra.mxu0 0.0
        %5464 = vmatprep.subr.mxu0 0.0
        %5465 = vmatpush1.msra.mxu0 0.0
        %5466 = vmatprep.subr.mxu0 0.0
        %5467 = vmatpush1.msra.mxu0 0.0
        %5468 = vmatprep.subr.mxu0 0.0
        %5469 = vmatpush1.msra.mxu0 0.0
        %5470 = vmatprep.subr.mxu0 0.0
        %5471 = vmatpush1.msra.mxu0 0.0
        %5472 = vmatprep.mubr.f32.mxu0 0.0
        %v5473 = vand.u32 %v5179, 4294901760
        %v5474 = vsub.f32 %v5179, %v5473
        %v5475 = vand.u32 %v5474, 4294901760
        %5476 = vmatmul.mubr.f32.gmra.mrb[0].mxu0 %v5475
        %v5477 = vpop.f32.mrb[0].mxu0
        %v5478 = vadd.f32 %v5404, %v5477
        %v5479 = vpop.f32.mrb[0].mxu0
        %5480 = vdwg.mxu0
        %5481 = vmatprep.subr.mxu0 0.0
        %v5482 = vand.u32 %v5176, 4294901760
        %v5483 = vsub.f32 %v5176, %v5482
        %v5484 = vand.u32 %v5483, 4294901760
        %5485 = vmatpush1.msra.mxu0 %v5484
        %5486 = vmatprep.subr.mxu0 0.0
        %5487 = vmatpush1.msra.mxu0 0.0
        %5488 = vmatprep.subr.mxu0 0.0
        %5489 = vmatpush1.msra.mxu0 0.0
        %5490 = vmatprep.subr.mxu0 0.0
        %5491 = vmatpush1.msra.mxu0 0.0
        %5492 = vmatprep.subr.mxu0 0.0
        %5493 = vmatpush1.msra.mxu0 0.0
        %5494 = vmatprep.subr.mxu0 0.0
        %5495 = vmatpush1.msra.mxu0 0.0
        %5496 = vmatprep.subr.mxu0 0.0
        %5497 = vmatpush1.msra.mxu0 0.0
        %5498 = vmatprep.subr.mxu0 0.0
        %5499 = vmatpush1.msra.mxu0 0.0
        %5500 = vmatprep.subr.mxu0 0.0
        %5501 = vmatpush1.msra.mxu0 0.0
        %5502 = vmatprep.subr.mxu0 0.0
        %5503 = vmatpush1.msra.mxu0 0.0
        %5504 = vmatprep.subr.mxu0 0.0
        %5505 = vmatpush1.msra.mxu0 0.0
        %5506 = vmatprep.subr.mxu0 0.0
        %5507 = vmatpush1.msra.mxu0 0.0
        %5508 = vmatprep.subr.mxu0 0.0
        %5509 = vmatpush1.msra.mxu0 0.0
        %5510 = vmatprep.subr.mxu0 0.0
        %5511 = vmatpush1.msra.mxu0 0.0
        %5512 = vmatprep.subr.mxu0 0.0
        %5513 = vmatpush1.msra.mxu0 0.0
        %5514 = vmatprep.subr.mxu0 0.0
        %5515 = vmatpush1.msra.mxu0 0.0
        %5516 = vmatprep.subr.mxu0 0.0
        %5517 = vmatpush1.msra.mxu0 0.0
        %5518 = vmatprep.subr.mxu0 0.0
        %5519 = vmatpush1.msra.mxu0 0.0
        %5520 = vmatprep.subr.mxu0 0.0
        %5521 = vmatpush1.msra.mxu0 0.0
        %5522 = vmatprep.subr.mxu0 0.0
        %5523 = vmatpush1.msra.mxu0 0.0
        %5524 = vmatprep.subr.mxu0 0.0
        %5525 = vmatpush1.msra.mxu0 0.0
        %5526 = vmatprep.subr.mxu0 0.0
        %5527 = vmatpush1.msra.mxu0 0.0
        %5528 = vmatprep.subr.mxu0 0.0
        %5529 = vmatpush1.msra.mxu0 0.0
        %5530 = vmatprep.subr.mxu0 0.0
        %5531 = vmatpush1.msra.mxu0 0.0
        %5532 = vmatprep.subr.mxu0 0.0
        %5533 = vmatpush1.msra.mxu0 0.0
        %5534 = vmatprep.subr.mxu0 0.0
        %5535 = vmatpush1.msra.mxu0 0.0
        %5536 = vmatprep.subr.mxu0 0.0
        %5537 = vmatpush1.msra.mxu0 0.0
        %5538 = vmatprep.subr.mxu0 0.0
        %5539 = vmatpush1.msra.mxu0 0.0
        %5540 = vmatprep.subr.mxu0 0.0
        %5541 = vmatpush1.msra.mxu0 0.0
        %5542 = vmatprep.subr.mxu0 0.0
        %5543 = vmatpush1.msra.mxu0 0.0
        %5544 = vmatprep.subr.mxu0 0.0
        %5545 = vmatpush1.msra.mxu0 0.0
        %5546 = vmatprep.subr.mxu0 0.0
        %5547 = vmatpush1.msra.mxu0 0.0
        %5548 = vmatprep.mubr.f32.mxu0 0.0
        %v5549 = vand.u32 %v5179, 4294901760
        %5550 = vmatmul.mubr.f32.gmra.mrb[0].mxu0 %v5549
        %v5551 = vpop.f32.mrb[0].mxu0
        %v5552 = vadd.f32 %v5478, %v5551
        %v5553 = vpop.f32.mrb[0].mxu0
        %5554 = vdwg.mxu0
        %5555 = vmatprep.subr.mxu0 0.0
        %v5556 = vand.u32 %v5176, 4294901760
        %5557 = vmatpush1.msra.mxu0 %v5556
        %5558 = vmatprep.subr.mxu0 0.0
        %5559 = vmatpush1.msra.mxu0 0.0
        %5560 = vmatprep.subr.mxu0 0.0
        %5561 = vmatpush1.msra.mxu0 0.0
        %5562 = vmatprep.subr.mxu0 0.0
        %5563 = vmatpush1.msra.mxu0 0.0
        %5564 = vmatprep.subr.mxu0 0.0
        %5565 = vmatpush1.msra.mxu0 0.0
        %5566 = vmatprep.subr.mxu0 0.0
        %5567 = vmatpush1.msra.mxu0 0.0
        %5568 = vmatprep.subr.mxu0 0.0
        %5569 = vmatpush1.msra.mxu0 0.0
        %5570 = vmatprep.subr.mxu0 0.0
        %5571 = vmatpush1.msra.mxu0 0.0
        %5572 = vmatprep.subr.mxu0 0.0
        %5573 = vmatpush1.msra.mxu0 0.0
        %5574 = vmatprep.subr.mxu0 0.0
        %5575 = vmatpush1.msra.mxu0 0.0
        %5576 = vmatprep.subr.mxu0 0.0
        %5577 = vmatpush1.msra.mxu0 0.0
        %5578 = vmatprep.subr.mxu0 0.0
        %5579 = vmatpush1.msra.mxu0 0.0
        %5580 = vmatprep.subr.mxu0 0.0
        %5581 = vmatpush1.msra.mxu0 0.0
        %5582 = vmatprep.subr.mxu0 0.0
        %5583 = vmatpush1.msra.mxu0 0.0
        %5584 = vmatprep.subr.mxu0 0.0
        %5585 = vmatpush1.msra.mxu0 0.0
        %5586 = vmatprep.subr.mxu0 0.0
        %5587 = vmatpush1.msra.mxu0 0.0
        %5588 = vmatprep.subr.mxu0 0.0
        %5589 = vmatpush1.msra.mxu0 0.0
        %5590 = vmatprep.subr.mxu0 0.0
        %5591 = vmatpush1.msra.mxu0 0.0
        %5592 = vmatprep.subr.mxu0 0.0
        %5593 = vmatpush1.msra.mxu0 0.0
        %5594 = vmatprep.subr.mxu0 0.0
        %5595 = vmatpush1.msra.mxu0 0.0
        %5596 = vmatprep.subr.mxu0 0.0
        %5597 = vmatpush1.msra.mxu0 0.0
        %5598 = vmatprep.subr.mxu0 0.0
        %5599 = vmatpush1.msra.mxu0 0.0
        %5600 = vmatprep.subr.mxu0 0.0
        %5601 = vmatpush1.msra.mxu0 0.0
        %5602 = vmatprep.subr.mxu0 0.0
        %5603 = vmatpush1.msra.mxu0 0.0
        %5604 = vmatprep.subr.mxu0 0.0
        %5605 = vmatpush1.msra.mxu0 0.0
        %5606 = vmatprep.subr.mxu0 0.0
        %5607 = vmatpush1.msra.mxu0 0.0
        %5608 = vmatprep.subr.mxu0 0.0
        %5609 = vmatpush1.msra.mxu0 0.0
        %5610 = vmatprep.subr.mxu0 0.0
        %5611 = vmatpush1.msra.mxu0 0.0
        %5612 = vmatprep.subr.mxu0 0.0
        %5613 = vmatpush1.msra.mxu0 0.0
        %5614 = vmatprep.subr.mxu0 0.0
        %5615 = vmatpush1.msra.mxu0 0.0
        %5616 = vmatprep.subr.mxu0 0.0
        %5617 = vmatpush1.msra.mxu0 0.0
        %5618 = vmatprep.subr.mxu0 0.0
        %5619 = vmatpush1.msra.mxu0 0.0
        %5620 = vmatprep.mubr.f32.mxu0 0.0
        %v5621 = vand.u32 %v5179, 4294901760
        %5622 = vmatmul.mubr.f32.gmra.mrb[0].mxu0 %v5621
        %v5623 = vpop.f32.mrb[0].mxu0
        %v5624 = vadd.f32 %v5552, %v5623
        %v5625 = vpop.f32.mrb[0].mxu0
        %5626 = vdwg.mxu0
        %5627 = vrot.lane.b32.xlu0 %v1536, 32
        %v5628 = vpop.permute.xlu0 %5627
        %5629 = vrot.lane.b32.xlu0 %v2200, 32
        %v5630 = vpop.permute.xlu0 %5629
        %v5631 = vsel %vm2872, %v5628, 0
        %v5633 = vsel %vm2872, %v5630, 0
        %5635 = vmatprep.subr.mxu0 0.0
        %v5636 = vand.u32 %v5633, 4294901760
        %5637 = vmatpush1.xpose.msra.mxu0 %v5636
        %5638 = vmatprep.subr.mxu0 0.0
        %5639 = vmatpush1.xpose.msra.mxu0 0.0
        %5640 = vmatprep.subr.mxu0 0.0
        %5641 = vmatpush1.xpose.msra.mxu0 0.0
        %5642 = vmatprep.subr.mxu0 0.0
        %5643 = vmatpush1.xpose.msra.mxu0 0.0
        %5644 = vmatprep.subr.mxu0 0.0
        %5645 = vmatpush1.xpose.msra.mxu0 0.0
        %5646 = vmatprep.subr.mxu0 0.0
        %5647 = vmatpush1.xpose.msra.mxu0 0.0
        %5648 = vmatprep.subr.mxu0 0.0
        %5649 = vmatpush1.xpose.msra.mxu0 0.0
        %5650 = vmatprep.subr.mxu0 0.0
        %5651 = vmatpush1.xpose.msra.mxu0 0.0
        %5652 = vmatprep.subr.mxu0 0.0
        %5653 = vmatpush1.xpose.msra.mxu0 0.0
        %5654 = vmatprep.subr.mxu0 0.0
        %5655 = vmatpush1.xpose.msra.mxu0 0.0
        %5656 = vmatprep.subr.mxu0 0.0
        %5657 = vmatpush1.xpose.msra.mxu0 0.0
        %5658 = vmatprep.subr.mxu0 0.0
        %5659 = vmatpush1.xpose.msra.mxu0 0.0
        %5660 = vmatprep.subr.mxu0 0.0
        %5661 = vmatpush1.xpose.msra.mxu0 0.0
        %5662 = vmatprep.subr.mxu0 0.0
        %5663 = vmatpush1.xpose.msra.mxu0 0.0
        %5664 = vmatprep.subr.mxu0 0.0
        %5665 = vmatpush1.xpose.msra.mxu0 0.0
        %5666 = vmatprep.subr.mxu0 0.0
        %5667 = vmatpush1.xpose.msra.mxu0 0.0
        %5668 = vmatprep.subr.mxu0 0.0
        %5669 = vmatpush1.xpose.msra.mxu0 0.0
        %5670 = vmatprep.subr.mxu0 0.0
        %5671 = vmatpush1.xpose.msra.mxu0 0.0
        %5672 = vmatprep.subr.mxu0 0.0
        %5673 = vmatpush1.xpose.msra.mxu0 0.0
        %5674 = vmatprep.subr.mxu0 0.0
        %5675 = vmatpush1.xpose.msra.mxu0 0.0
        %5676 = vmatprep.subr.mxu0 0.0
        %5677 = vmatpush1.xpose.msra.mxu0 0.0
        %5678 = vmatprep.subr.mxu0 0.0
        %5679 = vmatpush1.xpose.msra.mxu0 0.0
        %5680 = vmatprep.subr.mxu0 0.0
        %5681 = vmatpush1.xpose.msra.mxu0 0.0
        %5682 = vmatprep.subr.mxu0 0.0
        %5683 = vmatpush1.xpose.msra.mxu0 0.0
        %5684 = vmatprep.subr.mxu0 0.0
        %5685 = vmatpush1.xpose.msra.mxu0 0.0
        %5686 = vmatprep.subr.mxu0 0.0
        %5687 = vmatpush1.xpose.msra.mxu0 0.0
        %5688 = vmatprep.subr.mxu0 0.0
        %5689 = vmatpush1.xpose.msra.mxu0 0.0
        %5690 = vmatprep.subr.mxu0 0.0
        %5691 = vmatpush1.xpose.msra.mxu0 0.0
        %5692 = vmatprep.subr.mxu0 0.0
        %5693 = vmatpush1.xpose.msra.mxu0 0.0
        %5694 = vmatprep.subr.mxu0 0.0
        %5695 = vmatpush1.xpose.msra.mxu0 0.0
        %5696 = vmatprep.subr.mxu0 0.0
        %5697 = vmatpush1.xpose.msra.mxu0 0.0
        %5698 = vmatprep.subr.mxu0 0.0
        %5699 = vmatpush1.xpose.msra.mxu0 0.0
        %5700 = vmatprep.mubr.f32.mxu0 0.0
        %v5701 = vand.u32 %v5631, 4294901760
        %v5702 = vsub.f32 %v5631, %v5701
        %v5703 = vand.u32 %v5702, 4294901760
        %v5704 = vsub.f32 %v5702, %v5703
        %v5705 = vand.u32 %v5704, 4294901760
        %5706 = vmatmul.mubr.f32.gmra.mrb[0].mxu0 %v5705
        %v5707 = vpop.f32.mrb[0].mxu0
        %v5708 = vadd.f32 0.0, %v5707
        %v5709 = vpop.f32.mrb[0].mxu0
        %5710 = vdwg.mxu0
        %5711 = vmatprep.subr.mxu0 0.0
        %v5712 = vand.u32 %v5633, 4294901760
        %v5713 = vsub.f32 %v5633, %v5712
        %v5714 = vand.u32 %v5713, 4294901760
        %v5715 = vsub.f32 %v5713, %v5714
        %v5716 = vand.u32 %v5715, 4294901760
        %5717 = vmatpush1.xpose.msra.mxu0 %v5716
        %5718 = vmatprep.subr.mxu0 0.0
        %5719 = vmatpush1.xpose.msra.mxu0 0.0
        %5720 = vmatprep.subr.mxu0 0.0
        %5721 = vmatpush1.xpose.msra.mxu0 0.0
        %5722 = vmatprep.subr.mxu0 0.0
        %5723 = vmatpush1.xpose.msra.mxu0 0.0
        %5724 = vmatprep.subr.mxu0 0.0
        %5725 = vmatpush1.xpose.msra.mxu0 0.0
        %5726 = vmatprep.subr.mxu0 0.0
        %5727 = vmatpush1.xpose.msra.mxu0 0.0
        %5728 = vmatprep.subr.mxu0 0.0
        %5729 = vmatpush1.xpose.msra.mxu0 0.0
        %5730 = vmatprep.subr.mxu0 0.0
        %5731 = vmatpush1.xpose.msra.mxu0 0.0
        %5732 = vmatprep.subr.mxu0 0.0
        %5733 = vmatpush1.xpose.msra.mxu0 0.0
        %5734 = vmatprep.subr.mxu0 0.0
        %5735 = vmatpush1.xpose.msra.mxu0 0.0
        %5736 = vmatprep.subr.mxu0 0.0
        %5737 = vmatpush1.xpose.msra.mxu0 0.0
        %5738 = vmatprep.subr.mxu0 0.0
        %5739 = vmatpush1.xpose.msra.mxu0 0.0
        %5740 = vmatprep.subr.mxu0 0.0
        %5741 = vmatpush1.xpose.msra.mxu0 0.0
        %5742 = vmatprep.subr.mxu0 0.0
        %5743 = vmatpush1.xpose.msra.mxu0 0.0
        %5744 = vmatprep.subr.mxu0 0.0
        %5745 = vmatpush1.xpose.msra.mxu0 0.0
        %5746 = vmatprep.subr.mxu0 0.0
        %5747 = vmatpush1.xpose.msra.mxu0 0.0
        %5748 = vmatprep.subr.mxu0 0.0
        %5749 = vmatpush1.xpose.msra.mxu0 0.0
        %5750 = vmatprep.subr.mxu0 0.0
        %5751 = vmatpush1.xpose.msra.mxu0 0.0
        %5752 = vmatprep.subr.mxu0 0.0
        %5753 = vmatpush1.xpose.msra.mxu0 0.0
        %5754 = vmatprep.subr.mxu0 0.0
        %5755 = vmatpush1.xpose.msra.mxu0 0.0
        %5756 = vmatprep.subr.mxu0 0.0
        %5757 = vmatpush1.xpose.msra.mxu0 0.0
        %5758 = vmatprep.subr.mxu0 0.0
        %5759 = vmatpush1.xpose.msra.mxu0 0.0
        %5760 = vmatprep.subr.mxu0 0.0
        %5761 = vmatpush1.xpose.msra.mxu0 0.0
        %5762 = vmatprep.subr.mxu0 0.0
        %5763 = vmatpush1.xpose.msra.mxu0 0.0
        %5764 = vmatprep.subr.mxu0 0.0
        %5765 = vmatpush1.xpose.msra.mxu0 0.0
        %5766 = vmatprep.subr.mxu0 0.0
        %5767 = vmatpush1.xpose.msra.mxu0 0.0
        %5768 = vmatprep.subr.mxu0 0.0
        %5769 = vmatpush1.xpose.msra.mxu0 0.0
        %5770 = vmatprep.subr.mxu0 0.0
        %5771 = vmatpush1.xpose.msra.mxu0 0.0
        %5772 = vmatprep.subr.mxu0 0.0
        %5773 = vmatpush1.xpose.msra.mxu0 0.0
        %5774 = vmatprep.subr.mxu0 0.0
        %5775 = vmatpush1.xpose.msra.mxu0 0.0
        %5776 = vmatprep.subr.mxu0 0.0
        %5777 = vmatpush1.xpose.msra.mxu0 0.0
        %5778 = vmatprep.subr.mxu0 0.0
        %5779 = vmatpush1.xpose.msra.mxu0 0.0
        %5780 = vmatprep.mubr.f32.mxu0 0.0
        %v5781 = vand.u32 %v5631, 4294901760
        %5782 = vmatmul.mubr.f32.gmra.mrb[0].mxu0 %v5781
        %v5783 = vpop.f32.mrb[0].mxu0
        %v5784 = vadd.f32 %v5708, %v5783
        %v5785 = vpop.f32.mrb[0].mxu0
        %5786 = vdwg.mxu0
        %5787 = vmatprep.subr.mxu0 0.0
        %v5788 = vand.u32 %v5633, 4294901760
        %v5789 = vsub.f32 %v5633, %v5788
        %5790 = vmatpush1.xpose.msra.mxu0 %v5789
        %5791 = vmatprep.subr.mxu0 0.0
        %5792 = vmatpush1.xpose.msra.mxu0 0.0
        %5793 = vmatprep.subr.mxu0 0.0
        %5794 = vmatpush1.xpose.msra.mxu0 0.0
        %5795 = vmatprep.subr.mxu0 0.0
        %5796 = vmatpush1.xpose.msra.mxu0 0.0
        %5797 = vmatprep.subr.mxu0 0.0
        %5798 = vmatpush1.xpose.msra.mxu0 0.0
        %5799 = vmatprep.subr.mxu0 0.0
        %5800 = vmatpush1.xpose.msra.mxu0 0.0
        %5801 = vmatprep.subr.mxu0 0.0
        %5802 = vmatpush1.xpose.msra.mxu0 0.0
        %5803 = vmatprep.subr.mxu0 0.0
        %5804 = vmatpush1.xpose.msra.mxu0 0.0
        %5805 = vmatprep.subr.mxu0 0.0
        %5806 = vmatpush1.xpose.msra.mxu0 0.0
        %5807 = vmatprep.subr.mxu0 0.0
        %5808 = vmatpush1.xpose.msra.mxu0 0.0
        %5809 = vmatprep.subr.mxu0 0.0
        %5810 = vmatpush1.xpose.msra.mxu0 0.0
        %5811 = vmatprep.subr.mxu0 0.0
        %5812 = vmatpush1.xpose.msra.mxu0 0.0
        %5813 = vmatprep.subr.mxu0 0.0
        %5814 = vmatpush1.xpose.msra.mxu0 0.0
        %5815 = vmatprep.subr.mxu0 0.0
        %5816 = vmatpush1.xpose.msra.mxu0 0.0
        %5817 = vmatprep.subr.mxu0 0.0
        %5818 = vmatpush1.xpose.msra.mxu0 0.0
        %5819 = vmatprep.subr.mxu0 0.0
        %5820 = vmatpush1.xpose.msra.mxu0 0.0
        %5821 = vmatprep.subr.mxu0 0.0
        %5822 = vmatpush1.xpose.msra.mxu0 0.0
        %5823 = vmatprep.subr.mxu0 0.0
        %5824 = vmatpush1.xpose.msra.mxu0 0.0
        %5825 = vmatprep.subr.mxu0 0.0
        %5826 = vmatpush1.xpose.msra.mxu0 0.0
        %5827 = vmatprep.subr.mxu0 0.0
        %5828 = vmatpush1.xpose.msra.mxu0 0.0
        %5829 = vmatprep.subr.mxu0 0.0
        %5830 = vmatpush1.xpose.msra.mxu0 0.0
        %5831 = vmatprep.subr.mxu0 0.0
        %5832 = vmatpush1.xpose.msra.mxu0 0.0
        %5833 = vmatprep.subr.mxu0 0.0
        %5834 = vmatpush1.xpose.msra.mxu0 0.0
        %5835 = vmatprep.subr.mxu0 0.0
        %5836 = vmatpush1.xpose.msra.mxu0 0.0
        %5837 = vmatprep.subr.mxu0 0.0
        %5838 = vmatpush1.xpose.msra.mxu0 0.0
        %5839 = vmatprep.subr.mxu0 0.0
        %5840 = vmatpush1.xpose.msra.mxu0 0.0
        %5841 = vmatprep.subr.mxu0 0.0
        %5842 = vmatpush1.xpose.msra.mxu0 0.0
        %5843 = vmatprep.subr.mxu0 0.0
        %5844 = vmatpush1.xpose.msra.mxu0 0.0
        %5845 = vmatprep.subr.mxu0 0.0
        %5846 = vmatpush1.xpose.msra.mxu0 0.0
        %5847 = vmatprep.subr.mxu0 0.0
        %5848 = vmatpush1.xpose.msra.mxu0 0.0
        %5849 = vmatprep.subr.mxu0 0.0
        %5850 = vmatpush1.xpose.msra.mxu0 0.0
        %5851 = vmatprep.subr.mxu0 0.0
        %5852 = vmatpush1.xpose.msra.mxu0 0.0
        %5853 = vmatprep.mubr.f32.mxu0 0.0
        %v5854 = vand.u32 %v5631, 4294901760
        %v5855 = vsub.f32 %v5631, %v5854
        %5856 = vmatmul.mubr.f32.gmra.mrb[0].mxu0 %v5855
        %v5857 = vpop.f32.mrb[0].mxu0
        %v5858 = vadd.f32 %v5784, %v5857
        %v5859 = vpop.f32.mrb[0].mxu0
        %5860 = vdwg.mxu0
        %5861 = vmatprep.subr.mxu0 0.0
        %v5862 = vand.u32 %v5633, 4294901760
        %5863 = vmatpush1.xpose.msra.mxu0 %v5862
        %5864 = vmatprep.subr.mxu0 0.0
        %5865 = vmatpush1.xpose.msra.mxu0 0.0
        %5866 = vmatprep.subr.mxu0 0.0
        %5867 = vmatpush1.xpose.msra.mxu0 0.0
        %5868 = vmatprep.subr.mxu0 0.0
        %5869 = vmatpush1.xpose.msra.mxu0 0.0
        %5870 = vmatprep.subr.mxu0 0.0
        %5871 = vmatpush1.xpose.msra.mxu0 0.0
        %5872 = vmatprep.subr.mxu0 0.0
        %5873 = vmatpush1.xpose.msra.mxu0 0.0
        %5874 = vmatprep.subr.mxu0 0.0
        %5875 = vmatpush1.xpose.msra.mxu0 0.0
        %5876 = vmatprep.subr.mxu0 0.0
        %5877 = vmatpush1.xpose.msra.mxu0 0.0
        %5878 = vmatprep.subr.mxu0 0.0
        %5879 = vmatpush1.xpose.msra.mxu0 0.0
        %5880 = vmatprep.subr.mxu0 0.0
        %5881 = vmatpush1.xpose.msra.mxu0 0.0
        %5882 = vmatprep.subr.mxu0 0.0
        %5883 = vmatpush1.xpose.msra.mxu0 0.0
        %5884 = vmatprep.subr.mxu0 0.0
        %5885 = vmatpush1.xpose.msra.mxu0 0.0
        %5886 = vmatprep.subr.mxu0 0.0
        %5887 = vmatpush1.xpose.msra.mxu0 0.0
        %5888 = vmatprep.subr.mxu0 0.0
        %5889 = vmatpush1.xpose.msra.mxu0 0.0
        %5890 = vmatprep.subr.mxu0 0.0
        %5891 = vmatpush1.xpose.msra.mxu0 0.0
        %5892 = vmatprep.subr.mxu0 0.0
        %5893 = vmatpush1.xpose.msra.mxu0 0.0
        %5894 = vmatprep.subr.mxu0 0.0
        %5895 = vmatpush1.xpose.msra.mxu0 0.0
        %5896 = vmatprep.subr.mxu0 0.0
        %5897 = vmatpush1.xpose.msra.mxu0 0.0
        %5898 = vmatprep.subr.mxu0 0.0
        %5899 = vmatpush1.xpose.msra.mxu0 0.0
        %5900 = vmatprep.subr.mxu0 0.0
        %5901 = vmatpush1.xpose.msra.mxu0 0.0
        %5902 = vmatprep.subr.mxu0 0.0
        %5903 = vmatpush1.xpose.msra.mxu0 0.0
        %5904 = vmatprep.subr.mxu0 0.0
        %5905 = vmatpush1.xpose.msra.mxu0 0.0
        %5906 = vmatprep.subr.mxu0 0.0
        %5907 = vmatpush1.xpose.msra.mxu0 0.0
        %5908 = vmatprep.subr.mxu0 0.0
        %5909 = vmatpush1.xpose.msra.mxu0 0.0
        %5910 = vmatprep.subr.mxu0 0.0
        %5911 = vmatpush1.xpose.msra.mxu0 0.0
        %5912 = vmatprep.subr.mxu0 0.0
        %5913 = vmatpush1.xpose.msra.mxu0 0.0
        %5914 = vmatprep.subr.mxu0 0.0
        %5915 = vmatpush1.xpose.msra.mxu0 0.0
        %5916 = vmatprep.subr.mxu0 0.0
        %5917 = vmatpush1.xpose.msra.mxu0 0.0
        %5918 = vmatprep.subr.mxu0 0.0
        %5919 = vmatpush1.xpose.msra.mxu0 0.0
        %5920 = vmatprep.subr.mxu0 0.0
        %5921 = vmatpush1.xpose.msra.mxu0 0.0
        %5922 = vmatprep.subr.mxu0 0.0
        %5923 = vmatpush1.xpose.msra.mxu0 0.0
        %5924 = vmatprep.subr.mxu0 0.0
        %5925 = vmatpush1.xpose.msra.mxu0 0.0
        %5926 = vmatprep.mubr.f32.mxu0 0.0
        %v5927 = vand.u32 %v5631, 4294901760
        %v5928 = vsub.f32 %v5631, %v5927
        %v5929 = vand.u32 %v5928, 4294901760
        %5930 = vmatmul.mubr.f32.gmra.mrb[0].mxu0 %v5929
        %v5931 = vpop.f32.mrb[0].mxu0
        %v5932 = vadd.f32 %v5858, %v5931
        %v5933 = vpop.f32.mrb[0].mxu0
        %5934 = vdwg.mxu0
        %5935 = vmatprep.subr.mxu0 0.0
        %v5936 = vand.u32 %v5633, 4294901760
        %v5937 = vsub.f32 %v5633, %v5936
        %v5938 = vand.u32 %v5937, 4294901760
        %5939 = vmatpush1.xpose.msra.mxu0 %v5938
        %5940 = vmatprep.subr.mxu0 0.0
        %5941 = vmatpush1.xpose.msra.mxu0 0.0
        %5942 = vmatprep.subr.mxu0 0.0
        %5943 = vmatpush1.xpose.msra.mxu0 0.0
        %5944 = vmatprep.subr.mxu0 0.0
        %5945 = vmatpush1.xpose.msra.mxu0 0.0
        %5946 = vmatprep.subr.mxu0 0.0
        %5947 = vmatpush1.xpose.msra.mxu0 0.0
        %5948 = vmatprep.subr.mxu0 0.0
        %5949 = vmatpush1.xpose.msra.mxu0 0.0
        %5950 = vmatprep.subr.mxu0 0.0
        %5951 = vmatpush1.xpose.msra.mxu0 0.0
        %5952 = vmatprep.subr.mxu0 0.0
        %5953 = vmatpush1.xpose.msra.mxu0 0.0
        %5954 = vmatprep.subr.mxu0 0.0
        %5955 = vmatpush1.xpose.msra.mxu0 0.0
        %5956 = vmatprep.subr.mxu0 0.0
        %5957 = vmatpush1.xpose.msra.mxu0 0.0
        %5958 = vmatprep.subr.mxu0 0.0
        %5959 = vmatpush1.xpose.msra.mxu0 0.0
        %5960 = vmatprep.subr.mxu0 0.0
        %5961 = vmatpush1.xpose.msra.mxu0 0.0
        %5962 = vmatprep.subr.mxu0 0.0
        %5963 = vmatpush1.xpose.msra.mxu0 0.0
        %5964 = vmatprep.subr.mxu0 0.0
        %5965 = vmatpush1.xpose.msra.mxu0 0.0
        %5966 = vmatprep.subr.mxu0 0.0
        %5967 = vmatpush1.xpose.msra.mxu0 0.0
        %5968 = vmatprep.subr.mxu0 0.0
        %5969 = vmatpush1.xpose.msra.mxu0 0.0
        %5970 = vmatprep.subr.mxu0 0.0
        %5971 = vmatpush1.xpose.msra.mxu0 0.0
        %5972 = vmatprep.subr.mxu0 0.0
        %5973 = vmatpush1.xpose.msra.mxu0 0.0
        %5974 = vmatprep.subr.mxu0 0.0
        %5975 = vmatpush1.xpose.msra.mxu0 0.0
        %5976 = vmatprep.subr.mxu0 0.0
        %5977 = vmatpush1.xpose.msra.mxu0 0.0
        %5978 = vmatprep.subr.mxu0 0.0
        %5979 = vmatpush1.xpose.msra.mxu0 0.0
        %5980 = vmatprep.subr.mxu0 0.0
        %5981 = vmatpush1.xpose.msra.mxu0 0.0
        %5982 = vmatprep.subr.mxu0 0.0
        %5983 = vmatpush1.xpose.msra.mxu0 0.0
        %5984 = vmatprep.subr.mxu0 0.0
        %5985 = vmatpush1.xpose.msra.mxu0 0.0
        %5986 = vmatprep.subr.mxu0 0.0
        %5987 = vmatpush1.xpose.msra.mxu0 0.0
        %5988 = vmatprep.subr.mxu0 0.0
        %5989 = vmatpush1.xpose.msra.mxu0 0.0
        %5990 = vmatprep.subr.mxu0 0.0
        %5991 = vmatpush1.xpose.msra.mxu0 0.0
        %5992 = vmatprep.subr.mxu0 0.0
        %5993 = vmatpush1.xpose.msra.mxu0 0.0
        %5994 = vmatprep.subr.mxu0 0.0
        %5995 = vmatpush1.xpose.msra.mxu0 0.0
        %5996 = vmatprep.subr.mxu0 0.0
        %5997 = vmatpush1.xpose.msra.mxu0 0.0
        %5998 = vmatprep.subr.mxu0 0.0
        %5999 = vmatpush1.xpose.msra.mxu0 0.0
        %6000 = vmatprep.subr.mxu0 0.0
        %6001 = vmatpush1.xpose.msra.mxu0 0.0
        %6002 = vmatprep.mubr.f32.mxu0 0.0
        %v6003 = vand.u32 %v5631, 4294901760
        %6004 = vmatmul.mubr.f32.gmra.mrb[0].mxu0 %v6003
        %v6005 = vpop.f32.mrb[0].mxu0
        %v6006 = vadd.f32 %v5932, %v6005
        %v6007 = vpop.f32.mrb[0].mxu0
        %6008 = vdwg.mxu0
        %6009 = vmatprep.subr.mxu0 0.0
        %v6010 = vand.u32 %v5633, 4294901760
        %6011 = vmatpush1.xpose.msra.mxu0 %v6010
        %6012 = vmatprep.subr.mxu0 0.0
        %6013 = vmatpush1.xpose.msra.mxu0 0.0
        %6014 = vmatprep.subr.mxu0 0.0
        %6015 = vmatpush1.xpose.msra.mxu0 0.0
        %6016 = vmatprep.subr.mxu0 0.0
        %6017 = vmatpush1.xpose.msra.mxu0 0.0
        %6018 = vmatprep.subr.mxu0 0.0
        %6019 = vmatpush1.xpose.msra.mxu0 0.0
        %6020 = vmatprep.subr.mxu0 0.0
        %6021 = vmatpush1.xpose.msra.mxu0 0.0
        %6022 = vmatprep.subr.mxu0 0.0
        %6023 = vmatpush1.xpose.msra.mxu0 0.0
        %6024 = vmatprep.subr.mxu0 0.0
        %6025 = vmatpush1.xpose.msra.mxu0 0.0
        %6026 = vmatprep.subr.mxu0 0.0
        %6027 = vmatpush1.xpose.msra.mxu0 0.0
        %6028 = vmatprep.subr.mxu0 0.0
        %6029 = vmatpush1.xpose.msra.mxu0 0.0
        %6030 = vmatprep.subr.mxu0 0.0
        %6031 = vmatpush1.xpose.msra.mxu0 0.0
        %6032 = vmatprep.subr.mxu0 0.0
        %6033 = vmatpush1.xpose.msra.mxu0 0.0
        %6034 = vmatprep.subr.mxu0 0.0
        %6035 = vmatpush1.xpose.msra.mxu0 0.0
        %6036 = vmatprep.subr.mxu0 0.0
        %6037 = vmatpush1.xpose.msra.mxu0 0.0
        %6038 = vmatprep.subr.mxu0 0.0
        %6039 = vmatpush1.xpose.msra.mxu0 0.0
        %6040 = vmatprep.subr.mxu0 0.0
        %6041 = vmatpush1.xpose.msra.mxu0 0.0
        %6042 = vmatprep.subr.mxu0 0.0
        %6043 = vmatpush1.xpose.msra.mxu0 0.0
        %6044 = vmatprep.subr.mxu0 0.0
        %6045 = vmatpush1.xpose.msra.mxu0 0.0
        %6046 = vmatprep.subr.mxu0 0.0
        %6047 = vmatpush1.xpose.msra.mxu0 0.0
        %6048 = vmatprep.subr.mxu0 0.0
        %6049 = vmatpush1.xpose.msra.mxu0 0.0
        %6050 = vmatprep.subr.mxu0 0.0
        %6051 = vmatpush1.xpose.msra.mxu0 0.0
        %6052 = vmatprep.subr.mxu0 0.0
        %6053 = vmatpush1.xpose.msra.mxu0 0.0
        %6054 = vmatprep.subr.mxu0 0.0
        %6055 = vmatpush1.xpose.msra.mxu0 0.0
        %6056 = vmatprep.subr.mxu0 0.0
        %6057 = vmatpush1.xpose.msra.mxu0 0.0
        %6058 = vmatprep.subr.mxu0 0.0
        %6059 = vmatpush1.xpose.msra.mxu0 0.0
        %6060 = vmatprep.subr.mxu0 0.0
        %6061 = vmatpush1.xpose.msra.mxu0 0.0
        %6062 = vmatprep.subr.mxu0 0.0
        %6063 = vmatpush1.xpose.msra.mxu0 0.0
        %6064 = vmatprep.subr.mxu0 0.0
        %6065 = vmatpush1.xpose.msra.mxu0 0.0
        %6066 = vmatprep.subr.mxu0 0.0
        %6067 = vmatpush1.xpose.msra.mxu0 0.0
        %6068 = vmatprep.subr.mxu0 0.0
        %6069 = vmatpush1.xpose.msra.mxu0 0.0
        %6070 = vmatprep.subr.mxu0 0.0
        %6071 = vmatpush1.xpose.msra.mxu0 0.0
        %6072 = vmatprep.subr.mxu0 0.0
        %6073 = vmatpush1.xpose.msra.mxu0 0.0
        %6074 = vmatprep.mubr.f32.mxu0 0.0
        %v6075 = vand.u32 %v5631, 4294901760
        %6076 = vmatmul.mubr.f32.gmra.mrb[0].mxu0 %v6075
        %v6077 = vpop.f32.mrb[0].mxu0
        %v6078 = vadd.f32 %v6006, %v6077
        %v6079 = vpop.f32.mrb[0].mxu0
        %6080 = vdwg.mxu0
        %v6081 = vmul.f32 %v6078, 0.17677669
        %v6082 = vsel %vm2871, %v6081, -1e+30
        %v6083 = vsel %vm3327, %v6082, -inf
        %6084 = vmax.xlane.f32.xlu0 %v6083
        %v6085 = vpop.xlane.xlu0 %6084
        %v6086 = vsub.f32 %v6082, %v6085
        %v6087 = vmul.f32 %v6086, 1.442695
        %v6088 = vpow.pop %v6087
        %v6089 = vsel %vm3327, %v6088, 0.0
        %6090 = vadd.xlane.f32.xlu0 %v6089
        %v6091 = vpop.xlane.xlu0 %6090
        %v6092 = vrcp.pop %v6091
        %v6093 = vmul.f32 %v6088, %v6092
        %6094 = vrot.lane.b32.xlu0 %v2864, 32
        %v6095 = vpop.permute.xlu0 %6094
        %v6098 = vsel %vm3327, %v6093, 0
        %6100 = vmatprep.subr.mxu0 0.0
        %v6101 = vand.u32 %v6095, 4294901760
        %6102 = vmatpush1.msra.mxu0 %v6101
        %6103 = vmatprep.subr.mxu0 0.0
        %6104 = vmatpush1.msra.mxu0 0.0
        %6105 = vmatprep.subr.mxu0 0.0
        %6106 = vmatpush1.msra.mxu0 0.0
        %6107 = vmatprep.subr.mxu0 0.0
        %6108 = vmatpush1.msra.mxu0 0.0
        %6109 = vmatprep.subr.mxu0 0.0
        %6110 = vmatpush1.msra.mxu0 0.0
        %6111 = vmatprep.subr.mxu0 0.0
        %6112 = vmatpush1.msra.mxu0 0.0
        %6113 = vmatprep.subr.mxu0 0.0
        %6114 = vmatpush1.msra.mxu0 0.0
        %6115 = vmatprep.subr.mxu0 0.0
        %6116 = vmatpush1.msra.mxu0 0.0
        %6117 = vmatprep.subr.mxu0 0.0
        %6118 = vmatpush1.msra.mxu0 0.0
        %6119 = vmatprep.subr.mxu0 0.0
        %6120 = vmatpush1.msra.mxu0 0.0
        %6121 = vmatprep.subr.mxu0 0.0
        %6122 = vmatpush1.msra.mxu0 0.0
        %6123 = vmatprep.subr.mxu0 0.0
        %6124 = vmatpush1.msra.mxu0 0.0
        %6125 = vmatprep.subr.mxu0 0.0
        %6126 = vmatpush1.msra.mxu0 0.0
        %6127 = vmatprep.subr.mxu0 0.0
        %6128 = vmatpush1.msra.mxu0 0.0
        %6129 = vmatprep.subr.mxu0 0.0
        %6130 = vmatpush1.msra.mxu0 0.0
        %6131 = vmatprep.subr.mxu0 0.0
        %6132 = vmatpush1.msra.mxu0 0.0
        %6133 = vmatprep.subr.mxu0 0.0
        %6134 = vmatpush1.msra.mxu0 0.0
        %6135 = vmatprep.subr.mxu0 0.0
        %6136 = vmatpush1.msra.mxu0 0.0
        %6137 = vmatprep.subr.mxu0 0.0
        %6138 = vmatpush1.msra.mxu0 0.0
        %6139 = vmatprep.subr.mxu0 0.0
        %6140 = vmatpush1.msra.mxu0 0.0
        %6141 = vmatprep.subr.mxu0 0.0
        %6142 = vmatpush1.msra.mxu0 0.0
        %6143 = vmatprep.subr.mxu0 0.0
        %6144 = vmatpush1.msra.mxu0 0.0
        %6145 = vmatprep.subr.mxu0 0.0
        %6146 = vmatpush1.msra.mxu0 0.0
        %6147 = vmatprep.subr.mxu0 0.0
        %6148 = vmatpush1.msra.mxu0 0.0
        %6149 = vmatprep.subr.mxu0 0.0
        %6150 = vmatpush1.msra.mxu0 0.0
        %6151 = vmatprep.subr.mxu0 0.0
        %6152 = vmatpush1.msra.mxu0 0.0
        %6153 = vmatprep.subr.mxu0 0.0
        %6154 = vmatpush1.msra.mxu0 0.0
        %6155 = vmatprep.subr.mxu0 0.0
        %6156 = vmatpush1.msra.mxu0 0.0
        %6157 = vmatprep.subr.mxu0 0.0
        %6158 = vmatpush1.msra.mxu0 0.0
        %6159 = vmatprep.subr.mxu0 0.0
        %6160 = vmatpush1.msra.mxu0 0.0
        %6161 = vmatprep.subr.mxu0 0.0
        %6162 = vmatpush1.msra.mxu0 0.0
        %6163 = vmatprep.subr.mxu0 0.0
        %6164 = vmatpush1.msra.mxu0 0.0
        %6165 = vmatprep.mubr.f32.mxu0 0.0
        %v6166 = vand.u32 %v6098, 4294901760
        %v6167 = vsub.f32 %v6098, %v6166
        %v6168 = vand.u32 %v6167, 4294901760
        %v6169 = vsub.f32 %v6167, %v6168
        %v6170 = vand.u32 %v6169, 4294901760
        %6171 = vmatmul.mubr.f32.gmra.mrb[0].mxu0 %v6170
        %v6172 = vpop.f32.mrb[0].mxu0
        %v6173 = vadd.f32 0.0, %v6172
        %v6174 = vpop.f32.mrb[0].mxu0
        %6175 = vdwg.mxu0
        %6176 = vmatprep.subr.mxu0 0.0
        %v6177 = vand.u32 %v6095, 4294901760
        %v6178 = vsub.f32 %v6095, %v6177
        %v6179 = vand.u32 %v6178, 4294901760
        %v6180 = vsub.f32 %v6178, %v6179
        %v6181 = vand.u32 %v6180, 4294901760
        %6182 = vmatpush1.msra.mxu0 %v6181
        %6183 = vmatprep.subr.mxu0 0.0
        %6184 = vmatpush1.msra.mxu0 0.0
        %6185 = vmatprep.subr.mxu0 0.0
        %6186 = vmatpush1.msra.mxu0 0.0
        %6187 = vmatprep.subr.mxu0 0.0
        %6188 = vmatpush1.msra.mxu0 0.0
        %6189 = vmatprep.subr.mxu0 0.0
        %6190 = vmatpush1.msra.mxu0 0.0
        %6191 = vmatprep.subr.mxu0 0.0
        %6192 = vmatpush1.msra.mxu0 0.0
        %6193 = vmatprep.subr.mxu0 0.0
        %6194 = vmatpush1.msra.mxu0 0.0
        %6195 = vmatprep.subr.mxu0 0.0
        %6196 = vmatpush1.msra.mxu0 0.0
        %6197 = vmatprep.subr.mxu0 0.0
        %6198 = vmatpush1.msra.mxu0 0.0
        %6199 = vmatprep.subr.mxu0 0.0
        %6200 = vmatpush1.msra.mxu0 0.0
        %6201 = vmatprep.subr.mxu0 0.0
        %6202 = vmatpush1.msra.mxu0 0.0
        %6203 = vmatprep.subr.mxu0 0.0
        %6204 = vmatpush1.msra.mxu0 0.0
        %6205 = vmatprep.subr.mxu0 0.0
        %6206 = vmatpush1.msra.mxu0 0.0
        %6207 = vmatprep.subr.mxu0 0.0
        %6208 = vmatpush1.msra.mxu0 0.0
        %6209 = vmatprep.subr.mxu0 0.0
        %6210 = vmatpush1.msra.mxu0 0.0
        %6211 = vmatprep.subr.mxu0 0.0
        %6212 = vmatpush1.msra.mxu0 0.0
        %6213 = vmatprep.subr.mxu0 0.0
        %6214 = vmatpush1.msra.mxu0 0.0
        %6215 = vmatprep.subr.mxu0 0.0
        %6216 = vmatpush1.msra.mxu0 0.0
        %6217 = vmatprep.subr.mxu0 0.0
        %6218 = vmatpush1.msra.mxu0 0.0
        %6219 = vmatprep.subr.mxu0 0.0
        %6220 = vmatpush1.msra.mxu0 0.0
        %6221 = vmatprep.subr.mxu0 0.0
        %6222 = vmatpush1.msra.mxu0 0.0
        %6223 = vmatprep.subr.mxu0 0.0
        %6224 = vmatpush1.msra.mxu0 0.0
        %6225 = vmatprep.subr.mxu0 0.0
        %6226 = vmatpush1.msra.mxu0 0.0
        %6227 = vmatprep.subr.mxu0 0.0
        %6228 = vmatpush1.msra.mxu0 0.0
        %6229 = vmatprep.subr.mxu0 0.0
        %6230 = vmatpush1.msra.mxu0 0.0
        %6231 = vmatprep.subr.mxu0 0.0
        %6232 = vmatpush1.msra.mxu0 0.0
        %6233 = vmatprep.subr.mxu0 0.0
        %6234 = vmatpush1.msra.mxu0 0.0
        %6235 = vmatprep.subr.mxu0 0.0
        %6236 = vmatpush1.msra.mxu0 0.0
        %6237 = vmatprep.subr.mxu0 0.0
        %6238 = vmatpush1.msra.mxu0 0.0
        %6239 = vmatprep.subr.mxu0 0.0
        %6240 = vmatpush1.msra.mxu0 0.0
        %6241 = vmatprep.subr.mxu0 0.0
        %6242 = vmatpush1.msra.mxu0 0.0
        %6243 = vmatprep.subr.mxu0 0.0
        %6244 = vmatpush1.msra.mxu0 0.0
        %6245 = vmatprep.mubr.f32.mxu0 0.0
        %v6246 = vand.u32 %v6098, 4294901760
        %6247 = vmatmul.mubr.f32.gmra.mrb[0].mxu0 %v6246
        %v6248 = vpop.f32.mrb[0].mxu0
        %v6249 = vadd.f32 %v6173, %v6248
        %v6250 = vpop.f32.mrb[0].mxu0
        %6251 = vdwg.mxu0
        %6252 = vmatprep.subr.mxu0 0.0
        %v6253 = vand.u32 %v6095, 4294901760
        %v6254 = vsub.f32 %v6095, %v6253
        %6255 = vmatpush1.msra.mxu0 %v6254
        %6256 = vmatprep.subr.mxu0 0.0
        %6257 = vmatpush1.msra.mxu0 0.0
        %6258 = vmatprep.subr.mxu0 0.0
        %6259 = vmatpush1.msra.mxu0 0.0
        %6260 = vmatprep.subr.mxu0 0.0
        %6261 = vmatpush1.msra.mxu0 0.0
        %6262 = vmatprep.subr.mxu0 0.0
        %6263 = vmatpush1.msra.mxu0 0.0
        %6264 = vmatprep.subr.mxu0 0.0
        %6265 = vmatpush1.msra.mxu0 0.0
        %6266 = vmatprep.subr.mxu0 0.0
        %6267 = vmatpush1.msra.mxu0 0.0
        %6268 = vmatprep.subr.mxu0 0.0
        %6269 = vmatpush1.msra.mxu0 0.0
        %6270 = vmatprep.subr.mxu0 0.0
        %6271 = vmatpush1.msra.mxu0 0.0
        %6272 = vmatprep.subr.mxu0 0.0
        %6273 = vmatpush1.msra.mxu0 0.0
        %6274 = vmatprep.subr.mxu0 0.0
        %6275 = vmatpush1.msra.mxu0 0.0
        %6276 = vmatprep.subr.mxu0 0.0
        %6277 = vmatpush1.msra.mxu0 0.0
        %6278 = vmatprep.subr.mxu0 0.0
        %6279 = vmatpush1.msra.mxu0 0.0
        %6280 = vmatprep.subr.mxu0 0.0
        %6281 = vmatpush1.msra.mxu0 0.0
        %6282 = vmatprep.subr.mxu0 0.0
        %6283 = vmatpush1.msra.mxu0 0.0
        %6284 = vmatprep.subr.mxu0 0.0
        %6285 = vmatpush1.msra.mxu0 0.0
        %6286 = vmatprep.subr.mxu0 0.0
        %6287 = vmatpush1.msra.mxu0 0.0
        %6288 = vmatprep.subr.mxu0 0.0
        %6289 = vmatpush1.msra.mxu0 0.0
        %6290 = vmatprep.subr.mxu0 0.0
        %6291 = vmatpush1.msra.mxu0 0.0
        %6292 = vmatprep.subr.mxu0 0.0
        %6293 = vmatpush1.msra.mxu0 0.0
        %6294 = vmatprep.subr.mxu0 0.0
        %6295 = vmatpush1.msra.mxu0 0.0
        %6296 = vmatprep.subr.mxu0 0.0
        %6297 = vmatpush1.msra.mxu0 0.0
        %6298 = vmatprep.subr.mxu0 0.0
        %6299 = vmatpush1.msra.mxu0 0.0
        %6300 = vmatprep.subr.mxu0 0.0
        %6301 = vmatpush1.msra.mxu0 0.0
        %6302 = vmatprep.subr.mxu0 0.0
        %6303 = vmatpush1.msra.mxu0 0.0
        %6304 = vmatprep.subr.mxu0 0.0
        %6305 = vmatpush1.msra.mxu0 0.0
        %6306 = vmatprep.subr.mxu0 0.0
        %6307 = vmatpush1.msra.mxu0 0.0
        %6308 = vmatprep.subr.mxu0 0.0
        %6309 = vmatpush1.msra.mxu0 0.0
        %6310 = vmatprep.subr.mxu0 0.0
        %6311 = vmatpush1.msra.mxu0 0.0
        %6312 = vmatprep.subr.mxu0 0.0
        %6313 = vmatpush1.msra.mxu0 0.0
        %6314 = vmatprep.subr.mxu0 0.0
        %6315 = vmatpush1.msra.mxu0 0.0
        %6316 = vmatprep.subr.mxu0 0.0
        %6317 = vmatpush1.msra.mxu0 0.0
        %6318 = vmatprep.mubr.f32.mxu0 0.0
        %v6319 = vand.u32 %v6098, 4294901760
        %v6320 = vsub.f32 %v6098, %v6319
        %6321 = vmatmul.mubr.f32.gmra.mrb[0].mxu0 %v6320
        %v6322 = vpop.f32.mrb[0].mxu0
        %v6323 = vadd.f32 %v6249, %v6322
        %v6324 = vpop.f32.mrb[0].mxu0
        %6325 = vdwg.mxu0
        %6326 = vmatprep.subr.mxu0 0.0
        %v6327 = vand.u32 %v6095, 4294901760
        %6328 = vmatpush1.msra.mxu0 %v6327
        %6329 = vmatprep.subr.mxu0 0.0
        %6330 = vmatpush1.msra.mxu0 0.0
        %6331 = vmatprep.subr.mxu0 0.0
        %6332 = vmatpush1.msra.mxu0 0.0
        %6333 = vmatprep.subr.mxu0 0.0
        %6334 = vmatpush1.msra.mxu0 0.0
        %6335 = vmatprep.subr.mxu0 0.0
        %6336 = vmatpush1.msra.mxu0 0.0
        %6337 = vmatprep.subr.mxu0 0.0
        %6338 = vmatpush1.msra.mxu0 0.0
        %6339 = vmatprep.subr.mxu0 0.0
        %6340 = vmatpush1.msra.mxu0 0.0
        %6341 = vmatprep.subr.mxu0 0.0
        %6342 = vmatpush1.msra.mxu0 0.0
        %6343 = vmatprep.subr.mxu0 0.0
        %6344 = vmatpush1.msra.mxu0 0.0
        %6345 = vmatprep.subr.mxu0 0.0
        %6346 = vmatpush1.msra.mxu0 0.0
        %6347 = vmatprep.subr.mxu0 0.0
        %6348 = vmatpush1.msra.mxu0 0.0
        %6349 = vmatprep.subr.mxu0 0.0
        %6350 = vmatpush1.msra.mxu0 0.0
        %6351 = vmatprep.subr.mxu0 0.0
        %6352 = vmatpush1.msra.mxu0 0.0
        %6353 = vmatprep.subr.mxu0 0.0
        %6354 = vmatpush1.msra.mxu0 0.0
        %6355 = vmatprep.subr.mxu0 0.0
        %6356 = vmatpush1.msra.mxu0 0.0
        %6357 = vmatprep.subr.mxu0 0.0
        %6358 = vmatpush1.msra.mxu0 0.0
        %6359 = vmatprep.subr.mxu0 0.0
        %6360 = vmatpush1.msra.mxu0 0.0
        %6361 = vmatprep.subr.mxu0 0.0
        %6362 = vmatpush1.msra.mxu0 0.0
        %6363 = vmatprep.subr.mxu0 0.0
        %6364 = vmatpush1.msra.mxu0 0.0
        %6365 = vmatprep.subr.mxu0 0.0
        %6366 = vmatpush1.msra.mxu0 0.0
        %6367 = vmatprep.subr.mxu0 0.0
        %6368 = vmatpush1.msra.mxu0 0.0
        %6369 = vmatprep.subr.mxu0 0.0
        %6370 = vmatpush1.msra.mxu0 0.0
        %6371 = vmatprep.subr.mxu0 0.0
        %6372 = vmatpush1.msra.mxu0 0.0
        %6373 = vmatprep.subr.mxu0 0.0
        %6374 = vmatpush1.msra.mxu0 0.0
        %6375 = vmatprep.subr.mxu0 0.0
        %6376 = vmatpush1.msra.mxu0 0.0
        %6377 = vmatprep.subr.mxu0 0.0
        %6378 = vmatpush1.msra.mxu0 0.0
        %6379 = vmatprep.subr.mxu0 0.0
        %6380 = vmatpush1.msra.mxu0 0.0
        %6381 = vmatprep.subr.mxu0 0.0
        %6382 = vmatpush1.msra.mxu0 0.0
        %6383 = vmatprep.subr.mxu0 0.0
        %6384 = vmatpush1.msra.mxu0 0.0
        %6385 = vmatprep.subr.mxu0 0.0
        %6386 = vmatpush1.msra.mxu0 0.0
        %6387 = vmatprep.subr.mxu0 0.0
        %6388 = vmatpush1.msra.mxu0 0.0
        %6389 = vmatprep.subr.mxu0 0.0
        %6390 = vmatpush1.msra.mxu0 0.0
        %6391 = vmatprep.mubr.f32.mxu0 0.0
        %v6392 = vand.u32 %v6098, 4294901760
        %v6393 = vsub.f32 %v6098, %v6392
        %v6394 = vand.u32 %v6393, 4294901760
        %6395 = vmatmul.mubr.f32.gmra.mrb[0].mxu0 %v6394
        %v6396 = vpop.f32.mrb[0].mxu0
        %v6397 = vadd.f32 %v6323, %v6396
        %v6398 = vpop.f32.mrb[0].mxu0
        %6399 = vdwg.mxu0
        %6400 = vmatprep.subr.mxu0 0.0
        %v6401 = vand.u32 %v6095, 4294901760
        %v6402 = vsub.f32 %v6095, %v6401
        %v6403 = vand.u32 %v6402, 4294901760
        %6404 = vmatpush1.msra.mxu0 %v6403
        %6405 = vmatprep.subr.mxu0 0.0
        %6406 = vmatpush1.msra.mxu0 0.0
        %6407 = vmatprep.subr.mxu0 0.0
        %6408 = vmatpush1.msra.mxu0 0.0
        %6409 = vmatprep.subr.mxu0 0.0
        %6410 = vmatpush1.msra.mxu0 0.0
        %6411 = vmatprep.subr.mxu0 0.0
        %6412 = vmatpush1.msra.mxu0 0.0
        %6413 = vmatprep.subr.mxu0 0.0
        %6414 = vmatpush1.msra.mxu0 0.0
        %6415 = vmatprep.subr.mxu0 0.0
        %6416 = vmatpush1.msra.mxu0 0.0
        %6417 = vmatprep.subr.mxu0 0.0
        %6418 = vmatpush1.msra.mxu0 0.0
        %6419 = vmatprep.subr.mxu0 0.0
        %6420 = vmatpush1.msra.mxu0 0.0
        %6421 = vmatprep.subr.mxu0 0.0
        %6422 = vmatpush1.msra.mxu0 0.0
        %6423 = vmatprep.subr.mxu0 0.0
        %6424 = vmatpush1.msra.mxu0 0.0
        %6425 = vmatprep.subr.mxu0 0.0
        %6426 = vmatpush1.msra.mxu0 0.0
        %6427 = vmatprep.subr.mxu0 0.0
        %6428 = vmatpush1.msra.mxu0 0.0
        %6429 = vmatprep.subr.mxu0 0.0
        %6430 = vmatpush1.msra.mxu0 0.0
        %6431 = vmatprep.subr.mxu0 0.0
        %6432 = vmatpush1.msra.mxu0 0.0
        %6433 = vmatprep.subr.mxu0 0.0
        %6434 = vmatpush1.msra.mxu0 0.0
        %6435 = vmatprep.subr.mxu0 0.0
        %6436 = vmatpush1.msra.mxu0 0.0
        %6437 = vmatprep.subr.mxu0 0.0
        %6438 = vmatpush1.msra.mxu0 0.0
        %6439 = vmatprep.subr.mxu0 0.0
        %6440 = vmatpush1.msra.mxu0 0.0
        %6441 = vmatprep.subr.mxu0 0.0
        %6442 = vmatpush1.msra.mxu0 0.0
        %6443 = vmatprep.subr.mxu0 0.0
        %6444 = vmatpush1.msra.mxu0 0.0
        %6445 = vmatprep.subr.mxu0 0.0
        %6446 = vmatpush1.msra.mxu0 0.0
        %6447 = vmatprep.subr.mxu0 0.0
        %6448 = vmatpush1.msra.mxu0 0.0
        %6449 = vmatprep.subr.mxu0 0.0
        %6450 = vmatpush1.msra.mxu0 0.0
        %6451 = vmatprep.subr.mxu0 0.0
        %6452 = vmatpush1.msra.mxu0 0.0
        %6453 = vmatprep.subr.mxu0 0.0
        %6454 = vmatpush1.msra.mxu0 0.0
        %6455 = vmatprep.subr.mxu0 0.0
        %6456 = vmatpush1.msra.mxu0 0.0
        %6457 = vmatprep.subr.mxu0 0.0
        %6458 = vmatpush1.msra.mxu0 0.0
        %6459 = vmatprep.subr.mxu0 0.0
        %6460 = vmatpush1.msra.mxu0 0.0
        %6461 = vmatprep.subr.mxu0 0.0
        %6462 = vmatpush1.msra.mxu0 0.0
        %6463 = vmatprep.subr.mxu0 0.0
        %6464 = vmatpush1.msra.mxu0 0.0
        %6465 = vmatprep.subr.mxu0 0.0
        %6466 = vmatpush1.msra.mxu0 0.0
        %6467 = vmatprep.mubr.f32.mxu0 0.0
        %v6468 = vand.u32 %v6098, 4294901760
        %6469 = vmatmul.mubr.f32.gmra.mrb[0].mxu0 %v6468
        %v6470 = vpop.f32.mrb[0].mxu0
        %v6471 = vadd.f32 %v6397, %v6470
        %v6472 = vpop.f32.mrb[0].mxu0
        %6473 = vdwg.mxu0
        %6474 = vmatprep.subr.mxu0 0.0
        %v6475 = vand.u32 %v6095, 4294901760
        %6476 = vmatpush1.msra.mxu0 %v6475
        %6477 = vmatprep.subr.mxu0 0.0
        %6478 = vmatpush1.msra.mxu0 0.0
        %6479 = vmatprep.subr.mxu0 0.0
        %6480 = vmatpush1.msra.mxu0 0.0
        %6481 = vmatprep.subr.mxu0 0.0
        %6482 = vmatpush1.msra.mxu0 0.0
        %6483 = vmatprep.subr.mxu0 0.0
        %6484 = vmatpush1.msra.mxu0 0.0
        %6485 = vmatprep.subr.mxu0 0.0
        %6486 = vmatpush1.msra.mxu0 0.0
        %6487 = vmatprep.subr.mxu0 0.0
        %6488 = vmatpush1.msra.mxu0 0.0
        %6489 = vmatprep.subr.mxu0 0.0
        %6490 = vmatpush1.msra.mxu0 0.0
        %6491 = vmatprep.subr.mxu0 0.0
        %6492 = vmatpush1.msra.mxu0 0.0
        %6493 = vmatprep.subr.mxu0 0.0
        %6494 = vmatpush1.msra.mxu0 0.0
        %6495 = vmatprep.subr.mxu0 0.0
        %6496 = vmatpush1.msra.mxu0 0.0
        %6497 = vmatprep.subr.mxu0 0.0
        %6498 = vmatpush1.msra.mxu0 0.0
        %6499 = vmatprep.subr.mxu0 0.0
        %6500 = vmatpush1.msra.mxu0 0.0
        %6501 = vmatprep.subr.mxu0 0.0
        %6502 = vmatpush1.msra.mxu0 0.0
        %6503 = vmatprep.subr.mxu0 0.0
        %6504 = vmatpush1.msra.mxu0 0.0
        %6505 = vmatprep.subr.mxu0 0.0
        %6506 = vmatpush1.msra.mxu0 0.0
        %6507 = vmatprep.subr.mxu0 0.0
        %6508 = vmatpush1.msra.mxu0 0.0
        %6509 = vmatprep.subr.mxu0 0.0
        %6510 = vmatpush1.msra.mxu0 0.0
        %6511 = vmatprep.subr.mxu0 0.0
        %6512 = vmatpush1.msra.mxu0 0.0
        %6513 = vmatprep.subr.mxu0 0.0
        %6514 = vmatpush1.msra.mxu0 0.0
        %6515 = vmatprep.subr.mxu0 0.0
        %6516 = vmatpush1.msra.mxu0 0.0
        %6517 = vmatprep.subr.mxu0 0.0
        %6518 = vmatpush1.msra.mxu0 0.0
        %6519 = vmatprep.subr.mxu0 0.0
        %6520 = vmatpush1.msra.mxu0 0.0
        %6521 = vmatprep.subr.mxu0 0.0
        %6522 = vmatpush1.msra.mxu0 0.0
        %6523 = vmatprep.subr.mxu0 0.0
        %6524 = vmatpush1.msra.mxu0 0.0
        %6525 = vmatprep.subr.mxu0 0.0
        %6526 = vmatpush1.msra.mxu0 0.0
        %6527 = vmatprep.subr.mxu0 0.0
        %6528 = vmatpush1.msra.mxu0 0.0
        %6529 = vmatprep.subr.mxu0 0.0
        %6530 = vmatpush1.msra.mxu0 0.0
        %6531 = vmatprep.subr.mxu0 0.0
        %6532 = vmatpush1.msra.mxu0 0.0
        %6533 = vmatprep.subr.mxu0 0.0
        %6534 = vmatpush1.msra.mxu0 0.0
        %6535 = vmatprep.subr.mxu0 0.0
        %6536 = vmatpush1.msra.mxu0 0.0
        %6537 = vmatprep.subr.mxu0 0.0
        %6538 = vmatpush1.msra.mxu0 0.0
        %6539 = vmatprep.mubr.f32.mxu0 0.0
        %v6540 = vand.u32 %v6098, 4294901760
        %6541 = vmatmul.mubr.f32.gmra.mrb[0].mxu0 %v6540
        %v6542 = vpop.f32.mrb[0].mxu0
        %v6543 = vadd.f32 %v6471, %v6542
        %v6544 = vpop.f32.mrb[0].mxu0
        %6545 = vdwg.mxu0
        %6547 = vrot.lane.b32.xlu0 %v4705, 32
        %v6548 = vpop.permute.xlu0 %6547
        %6551 = vrot.lane.b32.xlu0 %v5624, 64
        %v6552 = vpop.permute.xlu0 %6551
        %6555 = vrot.lane.b32.xlu0 %v6543, 96
        %v6556 = vpop.permute.xlu0 %6555
        %v6558 = vsel %vm2872, %v3785, %v6548
        %vm6559 = vcmask 523264
        %v6560 = vsel %vm6559, %v6558, %v6552
        %vm6561 = vcmask 785408
        %v6562 = vsel %vm6561, %v6560, %v6556
        %v6563 = vld [vmem:[#allocation16] sm:$0xff]
        %v6564 = vld [vmem:[#allocation16 + $0x8] sm:$0xff]
        %v6565 = vld [vmem:[#allocation16 + $0x10] sm:$0xff]
        %v6566 = vld [vmem:[#allocation16 + $0x18] sm:$0xff]
        %v6567 = vld [vmem:[#allocation16 + $0x20] sm:$0xff]
        %v6568 = vld [vmem:[#allocation16 + $0x28] sm:$0xff]
        %v6569 = vld [vmem:[#allocation16 + $0x30] sm:$0xff]
        %v6570 = vld [vmem:[#allocation16 + $0x38] sm:$0xff]
        %v6571 = vld [vmem:[#allocation16 + $0x40] sm:$0xff]
        %v6572 = vld [vmem:[#allocation16 + $0x48] sm:$0xff]
        %v6573 = vld [vmem:[#allocation16 + $0x50] sm:$0xff]
        %v6574 = vld [vmem:[#allocation16 + $0x58] sm:$0xff]
        %v6575 = vld [vmem:[#allocation16 + $0x60] sm:$0xff]
        %v6576 = vld [vmem:[#allocation16 + $0x68] sm:$0xff]
        %v6577 = vld [vmem:[#allocation16 + $0x70] sm:$0xff]
        %v6578 = vld [vmem:[#allocation16 + $0x78] sm:$0xff]
        %v6579 = vld [vmem:[#allocation17] sm:$0x1]
        %v6581 = vlaneseq
        %v6582 = vshrl.u32 %v6581, 7
        %v6583 = vsub.s32 0, %v6582
        %v6584 = vrot.slane %v6579, %v6583
        %6586 = vmatprep.subr.mxu0 0.0
        %v6587 = vand.u32 %v6563, 4294901760
        %6588 = vmatpush1.msra.mxu0 %v6587
        %6589 = vmatprep.subr.mxu0 0.0
        %v6590 = vand.u32 %v6564, 4294901760
        %6591 = vmatpush1.msra.mxu0 %v6590
        %6592 = vmatprep.subr.mxu0 0.0
        %v6593 = vand.u32 %v6565, 4294901760
        %6594 = vmatpush1.msra.mxu0 %v6593
        %6595 = vmatprep.subr.mxu0 0.0
        %v6596 = vand.u32 %v6566, 4294901760
        %6597 = vmatpush1.msra.mxu0 %v6596
        %6598 = vmatprep.subr.mxu0 0.0
        %v6599 = vand.u32 %v6567, 4294901760
        %6600 = vmatpush1.msra.mxu0 %v6599
        %6601 = vmatprep.subr.mxu0 0.0
        %v6602 = vand.u32 %v6568, 4294901760
        %6603 = vmatpush1.msra.mxu0 %v6602
        %6604 = vmatprep.subr.mxu0 0.0
        %v6605 = vand.u32 %v6569, 4294901760
        %6606 = vmatpush1.msra.mxu0 %v6605
        %6607 = vmatprep.subr.mxu0 0.0
        %v6608 = vand.u32 %v6570, 4294901760
        %6609 = vmatpush1.msra.mxu0 %v6608
        %6610 = vmatprep.subr.mxu0 0.0
        %v6611 = vand.u32 %v6571, 4294901760
        %6612 = vmatpush1.msra.mxu0 %v6611
        %6613 = vmatprep.subr.mxu0 0.0
        %v6614 = vand.u32 %v6572, 4294901760
        %6615 = vmatpush1.msra.mxu0 %v6614
        %6616 = vmatprep.subr.mxu0 0.0
        %v6617 = vand.u32 %v6573, 4294901760
        %6618 = vmatpush1.msra.mxu0 %v6617
        %6619 = vmatprep.subr.mxu0 0.0
        %v6620 = vand.u32 %v6574, 4294901760
        %6621 = vmatpush1.msra.mxu0 %v6620
        %6622 = vmatprep.subr.mxu0 0.0
        %v6623 = vand.u32 %v6575, 4294901760
        %6624 = vmatpush1.msra.mxu0 %v6623
        %6625 = vmatprep.subr.mxu0 0.0
        %v6626 = vand.u32 %v6576, 4294901760
        %6627 = vmatpush1.msra.mxu0 %v6626
        %6628 = vmatprep.subr.mxu0 0.0
        %v6629 = vand.u32 %v6577, 4294901760
        %6630 = vmatpush1.msra.mxu0 %v6629
        %6631 = vmatprep.subr.mxu0 0.0
        %v6632 = vand.u32 %v6578, 4294901760
        %6633 = vmatpush1.msra.mxu0 %v6632
        %6634 = vmatprep.subr.mxu0 0.0
        %6635 = vmatpush1.msra.mxu0 0.0
        %6636 = vmatprep.subr.mxu0 0.0
        %6637 = vmatpush1.msra.mxu0 0.0
        %6638 = vmatprep.subr.mxu0 0.0
        %6639 = vmatpush1.msra.mxu0 0.0
        %6640 = vmatprep.subr.mxu0 0.0
        %6641 = vmatpush1.msra.mxu0 0.0
        %6642 = vmatprep.subr.mxu0 0.0
        %6643 = vmatpush1.msra.mxu0 0.0
        %6644 = vmatprep.subr.mxu0 0.0
        %6645 = vmatpush1.msra.mxu0 0.0
        %6646 = vmatprep.subr.mxu0 0.0
        %6647 = vmatpush1.msra.mxu0 0.0
        %6648 = vmatprep.subr.mxu0 0.0
        %6649 = vmatpush1.msra.mxu0 0.0
        %6650 = vmatprep.subr.mxu0 0.0
        %6651 = vmatpush1.msra.mxu0 0.0
        %6652 = vmatprep.subr.mxu0 0.0
        %6653 = vmatpush1.msra.mxu0 0.0
        %6654 = vmatprep.subr.mxu0 0.0
        %6655 = vmatpush1.msra.mxu0 0.0
        %6656 = vmatprep.subr.mxu0 0.0
        %6657 = vmatpush1.msra.mxu0 0.0
        %6658 = vmatprep.subr.mxu0 0.0
        %6659 = vmatpush1.msra.mxu0 0.0
        %6660 = vmatprep.subr.mxu0 0.0
        %6661 = vmatpush1.msra.mxu0 0.0
        %6662 = vmatprep.subr.mxu0 0.0
        %6663 = vmatpush1.msra.mxu0 0.0
        %6664 = vmatprep.subr.mxu0 0.0
        %6665 = vmatpush1.msra.mxu0 0.0
        %6666 = vmatprep.mubr.f32.mxu0 0.0
        %v6667 = vand.u32 %v6562, 4294901760
        %v6668 = vsub.f32 %v6562, %v6667
        %v6669 = vand.u32 %v6668, 4294901760
        %v6670 = vsub.f32 %v6668, %v6669
        %v6671 = vand.u32 %v6670, 4294901760
        %6672 = vmatmul.mubr.f32.gmra.mrb[0].mxu0 %v6671
        %v6673 = vpop.f32.mrb[0].mxu0
        %v6674 = vadd.f32 %v6584, %v6673
        %v6675 = vpop.f32.mrb[0].mxu0
        %6676 = vdwg.mxu0
        %6677 = vmatprep.subr.mxu0 0.0
        %v6678 = vand.u32 %v6563, 4294901760
        %v6679 = vsub.f32 %v6563, %v6678
        %v6680 = vand.u32 %v6679, 4294901760
        %v6681 = vsub.f32 %v6679, %v6680
        %v6682 = vand.u32 %v6681, 4294901760
        %6683 = vmatpush1.msra.mxu0 %v6682
        %6684 = vmatprep.subr.mxu0 0.0
        %v6685 = vand.u32 %v6564, 4294901760
        %v6686 = vsub.f32 %v6564, %v6685
        %v6687 = vand.u32 %v6686, 4294901760
        %v6688 = vsub.f32 %v6686, %v6687
        %v6689 = vand.u32 %v6688, 4294901760
        %6690 = vmatpush1.msra.mxu0 %v6689
        %6691 = vmatprep.subr.mxu0 0.0
        %v6692 = vand.u32 %v6565, 4294901760
        %v6693 = vsub.f32 %v6565, %v6692
        %v6694 = vand.u32 %v6693, 4294901760
        %v6695 = vsub.f32 %v6693, %v6694
        %v6696 = vand.u32 %v6695, 4294901760
        %6697 = vmatpush1.msra.mxu0 %v6696
        %6698 = vmatprep.subr.mxu0 0.0
        %v6699 = vand.u32 %v6566, 4294901760
        %v6700 = vsub.f32 %v6566, %v6699
        %v6701 = vand.u32 %v6700, 4294901760
        %v6702 = vsub.f32 %v6700, %v6701
        %v6703 = vand.u32 %v6702, 4294901760
        %6704 = vmatpush1.msra.mxu0 %v6703
        %6705 = vmatprep.subr.mxu0 0.0
        %v6706 = vand.u32 %v6567, 4294901760
        %v6707 = vsub.f32 %v6567, %v6706
        %v6708 = vand.u32 %v6707, 4294901760
        %v6709 = vsub.f32 %v6707, %v6708
        %v6710 = vand.u32 %v6709, 4294901760
        %6711 = vmatpush1.msra.mxu0 %v6710
        %6712 = vmatprep.subr.mxu0 0.0
        %v6713 = vand.u32 %v6568, 4294901760
        %v6714 = vsub.f32 %v6568, %v6713
        %v6715 = vand.u32 %v6714, 4294901760
        %v6716 = vsub.f32 %v6714, %v6715
        %v6717 = vand.u32 %v6716, 4294901760
        %6718 = vmatpush1.msra.mxu0 %v6717
        %6719 = vmatprep.subr.mxu0 0.0
        %v6720 = vand.u32 %v6569, 4294901760
        %v6721 = vsub.f32 %v6569, %v6720
        %v6722 = vand.u32 %v6721, 4294901760
        %v6723 = vsub.f32 %v6721, %v6722
        %v6724 = vand.u32 %v6723, 4294901760
        %6725 = vmatpush1.msra.mxu0 %v6724
        %6726 = vmatprep.subr.mxu0 0.0
        %v6727 = vand.u32 %v6570, 4294901760
        %v6728 = vsub.f32 %v6570, %v6727
        %v6729 = vand.u32 %v6728, 4294901760
        %v6730 = vsub.f32 %v6728, %v6729
        %v6731 = vand.u32 %v6730, 4294901760
        %6732 = vmatpush1.msra.mxu0 %v6731
        %6733 = vmatprep.subr.mxu0 0.0
        %v6734 = vand.u32 %v6571, 4294901760
        %v6735 = vsub.f32 %v6571, %v6734
        %v6736 = vand.u32 %v6735, 4294901760
        %v6737 = vsub.f32 %v6735, %v6736
        %v6738 = vand.u32 %v6737, 4294901760
        %6739 = vmatpush1.msra.mxu0 %v6738
        %6740 = vmatprep.subr.mxu0 0.0
        %v6741 = vand.u32 %v6572, 4294901760
        %v6742 = vsub.f32 %v6572, %v6741
        %v6743 = vand.u32 %v6742, 4294901760
        %v6744 = vsub.f32 %v6742, %v6743
        %v6745 = vand.u32 %v6744, 4294901760
        %6746 = vmatpush1.msra.mxu0 %v6745
        %6747 = vmatprep.subr.mxu0 0.0
        %v6748 = vand.u32 %v6573, 4294901760
        %v6749 = vsub.f32 %v6573, %v6748
        %v6750 = vand.u32 %v6749, 4294901760
        %v6751 = vsub.f32 %v6749, %v6750
        %v6752 = vand.u32 %v6751, 4294901760
        %6753 = vmatpush1.msra.mxu0 %v6752
        %6754 = vmatprep.subr.mxu0 0.0
        %v6755 = vand.u32 %v6574, 4294901760
        %v6756 = vsub.f32 %v6574, %v6755
        %v6757 = vand.u32 %v6756, 4294901760
        %v6758 = vsub.f32 %v6756, %v6757
        %v6759 = vand.u32 %v6758, 4294901760
        %6760 = vmatpush1.msra.mxu0 %v6759
        %6761 = vmatprep.subr.mxu0 0.0
        %v6762 = vand.u32 %v6575, 4294901760
        %v6763 = vsub.f32 %v6575, %v6762
        %v6764 = vand.u32 %v6763, 4294901760
        %v6765 = vsub.f32 %v6763, %v6764
        %v6766 = vand.u32 %v6765, 4294901760
        %6767 = vmatpush1.msra.mxu0 %v6766
        %6768 = vmatprep.subr.mxu0 0.0
        %v6769 = vand.u32 %v6576, 4294901760
        %v6770 = vsub.f32 %v6576, %v6769
        %v6771 = vand.u32 %v6770, 4294901760
        %v6772 = vsub.f32 %v6770, %v6771
        %v6773 = vand.u32 %v6772, 4294901760
        %6774 = vmatpush1.msra.mxu0 %v6773
        %6775 = vmatprep.subr.mxu0 0.0
        %v6776 = vand.u32 %v6577, 4294901760
        %v6777 = vsub.f32 %v6577, %v6776
        %v6778 = vand.u32 %v6777, 4294901760
        %v6779 = vsub.f32 %v6777, %v6778
        %v6780 = vand.u32 %v6779, 4294901760
        %6781 = vmatpush1.msra.mxu0 %v6780
        %6782 = vmatprep.subr.mxu0 0.0
        %v6783 = vand.u32 %v6578, 4294901760
        %v6784 = vsub.f32 %v6578, %v6783
        %v6785 = vand.u32 %v6784, 4294901760
        %v6786 = vsub.f32 %v6784, %v6785
        %v6787 = vand.u32 %v6786, 4294901760
        %6788 = vmatpush1.msra.mxu0 %v6787
        %6789 = vmatprep.subr.mxu0 0.0
        %6790 = vmatpush1.msra.mxu0 0.0
        %6791 = vmatprep.subr.mxu0 0.0
        %6792 = vmatpush1.msra.mxu0 0.0
        %6793 = vmatprep.subr.mxu0 0.0
        %6794 = vmatpush1.msra.mxu0 0.0
        %6795 = vmatprep.subr.mxu0 0.0
        %6796 = vmatpush1.msra.mxu0 0.0
        %6797 = vmatprep.subr.mxu0 0.0
        %6798 = vmatpush1.msra.mxu0 0.0
        %6799 = vmatprep.subr.mxu0 0.0
        %6800 = vmatpush1.msra.mxu0 0.0
        %6801 = vmatprep.subr.mxu0 0.0
        %6802 = vmatpush1.msra.mxu0 0.0
        %6803 = vmatprep.subr.mxu0 0.0
        %6804 = vmatpush1.msra.mxu0 0.0
        %6805 = vmatprep.subr.mxu0 0.0
        %6806 = vmatpush1.msra.mxu0 0.0
        %6807 = vmatprep.subr.mxu0 0.0
        %6808 = vmatpush1.msra.mxu0 0.0
        %6809 = vmatprep.subr.mxu0 0.0
        %6810 = vmatpush1.msra.mxu0 0.0
        %6811 = vmatprep.subr.mxu0 0.0
        %6812 = vmatpush1.msra.mxu0 0.0
        %6813 = vmatprep.subr.mxu0 0.0
        %6814 = vmatpush1.msra.mxu0 0.0
        %6815 = vmatprep.subr.mxu0 0.0
        %6816 = vmatpush1.msra.mxu0 0.0
        %6817 = vmatprep.subr.mxu0 0.0
        %6818 = vmatpush1.msra.mxu0 0.0
        %6819 = vmatprep.subr.mxu0 0.0
        %6820 = vmatpush1.msra.mxu0 0.0
        %6821 = vmatprep.mubr.f32.mxu0 0.0
        %v6822 = vand.u32 %v6562, 4294901760
        %6823 = vmatmul.mubr.f32.gmra.mrb[0].mxu0 %v6822
        %v6824 = vpop.f32.mrb[0].mxu0
        %v6825 = vadd.f32 %v6674, %v6824
        %v6826 = vpop.f32.mrb[0].mxu0
        %6827 = vdwg.mxu0
        %6828 = vmatprep.subr.mxu0 0.0
        %v6829 = vand.u32 %v6563, 4294901760
        %v6830 = vsub.f32 %v6563, %v6829
        %6831 = vmatpush1.msra.mxu0 %v6830
        %6832 = vmatprep.subr.mxu0 0.0
        %v6833 = vand.u32 %v6564, 4294901760
        %v6834 = vsub.f32 %v6564, %v6833
        %6835 = vmatpush1.msra.mxu0 %v6834
        %6836 = vmatprep.subr.mxu0 0.0
        %v6837 = vand.u32 %v6565, 4294901760
        %v6838 = vsub.f32 %v6565, %v6837
        %6839 = vmatpush1.msra.mxu0 %v6838
        %6840 = vmatprep.subr.mxu0 0.0
        %v6841 = vand.u32 %v6566, 4294901760
        %v6842 = vsub.f32 %v6566, %v6841
        %6843 = vmatpush1.msra.mxu0 %v6842
        %6844 = vmatprep.subr.mxu0 0.0
        %v6845 = vand.u32 %v6567, 4294901760
        %v6846 = vsub.f32 %v6567, %v6845
        %6847 = vmatpush1.msra.mxu0 %v6846
        %6848 = vmatprep.subr.mxu0 0.0
        %v6849 = vand.u32 %v6568, 4294901760
        %v6850 = vsub.f32 %v6568, %v6849
        %6851 = vmatpush1.msra.mxu0 %v6850
        %6852 = vmatprep.subr.mxu0 0.0
        %v6853 = vand.u32 %v6569, 4294901760
        %v6854 = vsub.f32 %v6569, %v6853
        %6855 = vmatpush1.msra.mxu0 %v6854
        %6856 = vmatprep.subr.mxu0 0.0
        %v6857 = vand.u32 %v6570, 4294901760
        %v6858 = vsub.f32 %v6570, %v6857
        %6859 = vmatpush1.msra.mxu0 %v6858
        %6860 = vmatprep.subr.mxu0 0.0
        %v6861 = vand.u32 %v6571, 4294901760
        %v6862 = vsub.f32 %v6571, %v6861
        %6863 = vmatpush1.msra.mxu0 %v6862
        %6864 = vmatprep.subr.mxu0 0.0
        %v6865 = vand.u32 %v6572, 4294901760
        %v6866 = vsub.f32 %v6572, %v6865
        %6867 = vmatpush1.msra.mxu0 %v6866
        %6868 = vmatprep.subr.mxu0 0.0
        %v6869 = vand.u32 %v6573, 4294901760
        %v6870 = vsub.f32 %v6573, %v6869
        %6871 = vmatpush1.msra.mxu0 %v6870
        %6872 = vmatprep.subr.mxu0 0.0
        %v6873 = vand.u32 %v6574, 4294901760
        %v6874 = vsub.f32 %v6574, %v6873
        %6875 = vmatpush1.msra.mxu0 %v6874
        %6876 = vmatprep.subr.mxu0 0.0
        %v6877 = vand.u32 %v6575, 4294901760
        %v6878 = vsub.f32 %v6575, %v6877
        %6879 = vmatpush1.msra.mxu0 %v6878
        %6880 = vmatprep.subr.mxu0 0.0
        %v6881 = vand.u32 %v6576, 4294901760
        %v6882 = vsub.f32 %v6576, %v6881
        %6883 = vmatpush1.msra.mxu0 %v6882
        %6884 = vmatprep.subr.mxu0 0.0
        %v6885 = vand.u32 %v6577, 4294901760
        %v6886 = vsub.f32 %v6577, %v6885
        %6887 = vmatpush1.msra.mxu0 %v6886
        %6888 = vmatprep.subr.mxu0 0.0
        %v6889 = vand.u32 %v6578, 4294901760
        %v6890 = vsub.f32 %v6578, %v6889
        %6891 = vmatpush1.msra.mxu0 %v6890
        %6892 = vmatprep.subr.mxu0 0.0
        %6893 = vmatpush1.msra.mxu0 0.0
        %6894 = vmatprep.subr.mxu0 0.0
        %6895 = vmatpush1.msra.mxu0 0.0
        %6896 = vmatprep.subr.mxu0 0.0
        %6897 = vmatpush1.msra.mxu0 0.0
        %6898 = vmatprep.subr.mxu0 0.0
        %6899 = vmatpush1.msra.mxu0 0.0
        %6900 = vmatprep.subr.mxu0 0.0
        %6901 = vmatpush1.msra.mxu0 0.0
        %6902 = vmatprep.subr.mxu0 0.0
        %6903 = vmatpush1.msra.mxu0 0.0
        %6904 = vmatprep.subr.mxu0 0.0
        %6905 = vmatpush1.msra.mxu0 0.0
        %6906 = vmatprep.subr.mxu0 0.0
        %6907 = vmatpush1.msra.mxu0 0.0
        %6908 = vmatprep.subr.mxu0 0.0
        %6909 = vmatpush1.msra.mxu0 0.0
        %6910 = vmatprep.subr.mxu0 0.0
        %6911 = vmatpush1.msra.mxu0 0.0
        %6912 = vmatprep.subr.mxu0 0.0
        %6913 = vmatpush1.msra.mxu0 0.0
        %6914 = vmatprep.subr.mxu0 0.0
        %6915 = vmatpush1.msra.mxu0 0.0
        %6916 = vmatprep.subr.mxu0 0.0
        %6917 = vmatpush1.msra.mxu0 0.0
        %6918 = vmatprep.subr.mxu0 0.0
        %6919 = vmatpush1.msra.mxu0 0.0
        %6920 = vmatprep.subr.mxu0 0.0
        %6921 = vmatpush1.msra.mxu0 0.0
        %6922 = vmatprep.subr.mxu0 0.0
        %6923 = vmatpush1.msra.mxu0 0.0
        %6924 = vmatprep.mubr.f32.mxu0 0.0
        %v6925 = vand.u32 %v6562, 4294901760
        %v6926 = vsub.f32 %v6562, %v6925
        %6927 = vmatmul.mubr.f32.gmra.mrb[0].mxu0 %v6926
        %v6928 = vpop.f32.mrb[0].mxu0
        %v6929 = vadd.f32 %v6825, %v6928
        %v6930 = vpop.f32.mrb[0].mxu0
        %6931 = vdwg.mxu0
        %6932 = vmatprep.subr.mxu0 0.0
        %v6933 = vand.u32 %v6563, 4294901760
        %6934 = vmatpush1.msra.mxu0 %v6933
        %6935 = vmatprep.subr.mxu0 0.0
        %v6936 = vand.u32 %v6564, 4294901760
        %6937 = vmatpush1.msra.mxu0 %v6936
        %6938 = vmatprep.subr.mxu0 0.0
        %v6939 = vand.u32 %v6565, 4294901760
        %6940 = vmatpush1.msra.mxu0 %v6939
        %6941 = vmatprep.subr.mxu0 0.0
        %v6942 = vand.u32 %v6566, 4294901760
        %6943 = vmatpush1.msra.mxu0 %v6942
        %6944 = vmatprep.subr.mxu0 0.0
        %v6945 = vand.u32 %v6567, 4294901760
        %6946 = vmatpush1.msra.mxu0 %v6945
        %6947 = vmatprep.subr.mxu0 0.0
        %v6948 = vand.u32 %v6568, 4294901760
        %6949 = vmatpush1.msra.mxu0 %v6948
        %6950 = vmatprep.subr.mxu0 0.0
        %v6951 = vand.u32 %v6569, 4294901760
        %6952 = vmatpush1.msra.mxu0 %v6951
        %6953 = vmatprep.subr.mxu0 0.0
        %v6954 = vand.u32 %v6570, 4294901760
        %6955 = vmatpush1.msra.mxu0 %v6954
        %6956 = vmatprep.subr.mxu0 0.0
        %v6957 = vand.u32 %v6571, 4294901760
        %6958 = vmatpush1.msra.mxu0 %v6957
        %6959 = vmatprep.subr.mxu0 0.0
        %v6960 = vand.u32 %v6572, 4294901760
        %6961 = vmatpush1.msra.mxu0 %v6960
        %6962 = vmatprep.subr.mxu0 0.0
        %v6963 = vand.u32 %v6573, 4294901760
        %6964 = vmatpush1.msra.mxu0 %v6963
        %6965 = vmatprep.subr.mxu0 0.0
        %v6966 = vand.u32 %v6574, 4294901760
        %6967 = vmatpush1.msra.mxu0 %v6966
        %6968 = vmatprep.subr.mxu0 0.0
        %v6969 = vand.u32 %v6575, 4294901760
        %6970 = vmatpush1.msra.mxu0 %v6969
        %6971 = vmatprep.subr.mxu0 0.0
        %v6972 = vand.u32 %v6576, 4294901760
        %6973 = vmatpush1.msra.mxu0 %v6972
        %6974 = vmatprep.subr.mxu0 0.0
        %v6975 = vand.u32 %v6577, 4294901760
        %6976 = vmatpush1.msra.mxu0 %v6975
        %6977 = vmatprep.subr.mxu0 0.0
        %v6978 = vand.u32 %v6578, 4294901760
        %6979 = vmatpush1.msra.mxu0 %v6978
        %6980 = vmatprep.subr.mxu0 0.0
        %6981 = vmatpush1.msra.mxu0 0.0
        %6982 = vmatprep.subr.mxu0 0.0
        %6983 = vmatpush1.msra.mxu0 0.0
        %6984 = vmatprep.subr.mxu0 0.0
        %6985 = vmatpush1.msra.mxu0 0.0
        %6986 = vmatprep.subr.mxu0 0.0
        %6987 = vmatpush1.msra.mxu0 0.0
        %6988 = vmatprep.subr.mxu0 0.0
        %6989 = vmatpush1.msra.mxu0 0.0
        %6990 = vmatprep.subr.mxu0 0.0
        %6991 = vmatpush1.msra.mxu0 0.0
        %6992 = vmatprep.subr.mxu0 0.0
        %6993 = vmatpush1.msra.mxu0 0.0
        %6994 = vmatprep.subr.mxu0 0.0
        %6995 = vmatpush1.msra.mxu0 0.0
        %6996 = vmatprep.subr.mxu0 0.0
        %6997 = vmatpush1.msra.mxu0 0.0
        %6998 = vmatprep.subr.mxu0 0.0
        %6999 = vmatpush1.msra.mxu0 0.0
        %7000 = vmatprep.subr.mxu0 0.0
        %7001 = vmatpush1.msra.mxu0 0.0
        %7002 = vmatprep.subr.mxu0 0.0
        %7003 = vmatpush1.msra.mxu0 0.0
        %7004 = vmatprep.subr.mxu0 0.0
        %7005 = vmatpush1.msra.mxu0 0.0
        %7006 = vmatprep.subr.mxu0 0.0
        %7007 = vmatpush1.msra.mxu0 0.0
        %7008 = vmatprep.subr.mxu0 0.0
        %7009 = vmatpush1.msra.mxu0 0.0
        %7010 = vmatprep.subr.mxu0 0.0
        %7011 = vmatpush1.msra.mxu0 0.0
        %7012 = vmatprep.mubr.f32.mxu0 0.0
        %v7013 = vand.u32 %v6562, 4294901760
        %v7014 = vsub.f32 %v6562, %v7013
        %v7015 = vand.u32 %v7014, 4294901760
        %7016 = vmatmul.mubr.f32.gmra.mrb[0].mxu0 %v7015
        %v7017 = vpop.f32.mrb[0].mxu0
        %v7018 = vadd.f32 %v6929, %v7017
        %v7019 = vpop.f32.mrb[0].mxu0
        %7020 = vdwg.mxu0
        %7021 = vmatprep.subr.mxu0 0.0
        %v7022 = vand.u32 %v6563, 4294901760
        %v7023 = vsub.f32 %v6563, %v7022
        %v7024 = vand.u32 %v7023, 4294901760
        %7025 = vmatpush1.msra.mxu0 %v7024
        %7026 = vmatprep.subr.mxu0 0.0
        %v7027 = vand.u32 %v6564, 4294901760
        %v7028 = vsub.f32 %v6564, %v7027
        %v7029 = vand.u32 %v7028, 4294901760
        %7030 = vmatpush1.msra.mxu0 %v7029
        %7031 = vmatprep.subr.mxu0 0.0
        %v7032 = vand.u32 %v6565, 4294901760
        %v7033 = vsub.f32 %v6565, %v7032
        %v7034 = vand.u32 %v7033, 4294901760
        %7035 = vmatpush1.msra.mxu0 %v7034
        %7036 = vmatprep.subr.mxu0 0.0
        %v7037 = vand.u32 %v6566, 4294901760
        %v7038 = vsub.f32 %v6566, %v7037
        %v7039 = vand.u32 %v7038, 4294901760
        %7040 = vmatpush1.msra.mxu0 %v7039
        %7041 = vmatprep.subr.mxu0 0.0
        %v7042 = vand.u32 %v6567, 4294901760
        %v7043 = vsub.f32 %v6567, %v7042
        %v7044 = vand.u32 %v7043, 4294901760
        %7045 = vmatpush1.msra.mxu0 %v7044
        %7046 = vmatprep.subr.mxu0 0.0
        %v7047 = vand.u32 %v6568, 4294901760
        %v7048 = vsub.f32 %v6568, %v7047
        %v7049 = vand.u32 %v7048, 4294901760
        %7050 = vmatpush1.msra.mxu0 %v7049
        %7051 = vmatprep.subr.mxu0 0.0
        %v7052 = vand.u32 %v6569, 4294901760
        %v7053 = vsub.f32 %v6569, %v7052
        %v7054 = vand.u32 %v7053, 4294901760
        %7055 = vmatpush1.msra.mxu0 %v7054
        %7056 = vmatprep.subr.mxu0 0.0
        %v7057 = vand.u32 %v6570, 4294901760
        %v7058 = vsub.f32 %v6570, %v7057
        %v7059 = vand.u32 %v7058, 4294901760
        %7060 = vmatpush1.msra.mxu0 %v7059
        %7061 = vmatprep.subr.mxu0 0.0
        %v7062 = vand.u32 %v6571, 4294901760
        %v7063 = vsub.f32 %v6571, %v7062
        %v7064 = vand.u32 %v7063, 4294901760
        %7065 = vmatpush1.msra.mxu0 %v7064
        %7066 = vmatprep.subr.mxu0 0.0
        %v7067 = vand.u32 %v6572, 4294901760
        %v7068 = vsub.f32 %v6572, %v7067
        %v7069 = vand.u32 %v7068, 4294901760
        %7070 = vmatpush1.msra.mxu0 %v7069
        %7071 = vmatprep.subr.mxu0 0.0
        %v7072 = vand.u32 %v6573, 4294901760
        %v7073 = vsub.f32 %v6573, %v7072
        %v7074 = vand.u32 %v7073, 4294901760
        %7075 = vmatpush1.msra.mxu0 %v7074
        %7076 = vmatprep.subr.mxu0 0.0
        %v7077 = vand.u32 %v6574, 4294901760
        %v7078 = vsub.f32 %v6574, %v7077
        %v7079 = vand.u32 %v7078, 4294901760
        %7080 = vmatpush1.msra.mxu0 %v7079
        %7081 = vmatprep.subr.mxu0 0.0
        %v7082 = vand.u32 %v6575, 4294901760
        %v7083 = vsub.f32 %v6575, %v7082
        %v7084 = vand.u32 %v7083, 4294901760
        %7085 = vmatpush1.msra.mxu0 %v7084
        %7086 = vmatprep.subr.mxu0 0.0
        %v7087 = vand.u32 %v6576, 4294901760
        %v7088 = vsub.f32 %v6576, %v7087
        %v7089 = vand.u32 %v7088, 4294901760
        %7090 = vmatpush1.msra.mxu0 %v7089
        %7091 = vmatprep.subr.mxu0 0.0
        %v7092 = vand.u32 %v6577, 4294901760
        %v7093 = vsub.f32 %v6577, %v7092
        %v7094 = vand.u32 %v7093, 4294901760
        %7095 = vmatpush1.msra.mxu0 %v7094
        %7096 = vmatprep.subr.mxu0 0.0
        %v7097 = vand.u32 %v6578, 4294901760
        %v7098 = vsub.f32 %v6578, %v7097
        %v7099 = vand.u32 %v7098, 4294901760
        %7100 = vmatpush1.msra.mxu0 %v7099
        %7101 = vmatprep.subr.mxu0 0.0
        %7102 = vmatpush1.msra.mxu0 0.0
        %7103 = vmatprep.subr.mxu0 0.0
        %7104 = vmatpush1.msra.mxu0 0.0
        %7105 = vmatprep.subr.mxu0 0.0
        %7106 = vmatpush1.msra.mxu0 0.0
        %7107 = vmatprep.subr.mxu0 0.0
        %7108 = vmatpush1.msra.mxu0 0.0
        %7109 = vmatprep.subr.mxu0 0.0
        %7110 = vmatpush1.msra.mxu0 0.0
        %7111 = vmatprep.subr.mxu0 0.0
        %7112 = vmatpush1.msra.mxu0 0.0
        %7113 = vmatprep.subr.mxu0 0.0
        %7114 = vmatpush1.msra.mxu0 0.0
        %7115 = vmatprep.subr.mxu0 0.0
        %7116 = vmatpush1.msra.mxu0 0.0
        %7117 = vmatprep.subr.mxu0 0.0
        %7118 = vmatpush1.msra.mxu0 0.0
        %7119 = vmatprep.subr.mxu0 0.0
        %7120 = vmatpush1.msra.mxu0 0.0
        %7121 = vmatprep.subr.mxu0 0.0
        %7122 = vmatpush1.msra.mxu0 0.0
        %7123 = vmatprep.subr.mxu0 0.0
        %7124 = vmatpush1.msra.mxu0 0.0
        %7125 = vmatprep.subr.mxu0 0.0
        %7126 = vmatpush1.msra.mxu0 0.0
        %7127 = vmatprep.subr.mxu0 0.0
        %7128 = vmatpush1.msra.mxu0 0.0
        %7129 = vmatprep.subr.mxu0 0.0
        %7130 = vmatpush1.msra.mxu0 0.0
        %7131 = vmatprep.subr.mxu0 0.0
        %7132 = vmatpush1.msra.mxu0 0.0
        %7133 = vmatprep.mubr.f32.mxu0 0.0
        %v7134 = vand.u32 %v6562, 4294901760
        %7135 = vmatmul.mubr.f32.gmra.mrb[0].mxu0 %v7134
        %v7136 = vpop.f32.mrb[0].mxu0
        %v7137 = vadd.f32 %v7018, %v7136
        %v7138 = vpop.f32.mrb[0].mxu0
        %7139 = vdwg.mxu0
        %7140 = vmatprep.subr.mxu0 0.0
        %v7141 = vand.u32 %v6563, 4294901760
        %7142 = vmatpush1.msra.mxu0 %v7141
        %7143 = vmatprep.subr.mxu0 0.0
        %v7144 = vand.u32 %v6564, 4294901760
        %7145 = vmatpush1.msra.mxu0 %v7144
        %7146 = vmatprep.subr.mxu0 0.0
        %v7147 = vand.u32 %v6565, 4294901760
        %7148 = vmatpush1.msra.mxu0 %v7147
        %7149 = vmatprep.subr.mxu0 0.0
        %v7150 = vand.u32 %v6566, 4294901760
        %7151 = vmatpush1.msra.mxu0 %v7150
        %7152 = vmatprep.subr.mxu0 0.0
        %v7153 = vand.u32 %v6567, 4294901760
        %7154 = vmatpush1.msra.mxu0 %v7153
        %7155 = vmatprep.subr.mxu0 0.0
        %v7156 = vand.u32 %v6568, 4294901760
        %7157 = vmatpush1.msra.mxu0 %v7156
        %7158 = vmatprep.subr.mxu0 0.0
        %v7159 = vand.u32 %v6569, 4294901760
        %7160 = vmatpush1.msra.mxu0 %v7159
        %7161 = vmatprep.subr.mxu0 0.0
        %v7162 = vand.u32 %v6570, 4294901760
        %7163 = vmatpush1.msra.mxu0 %v7162
        %7164 = vmatprep.subr.mxu0 0.0
        %v7165 = vand.u32 %v6571, 4294901760
        %7166 = vmatpush1.msra.mxu0 %v7165
        %7167 = vmatprep.subr.mxu0 0.0
        %v7168 = vand.u32 %v6572, 4294901760
        %7169 = vmatpush1.msra.mxu0 %v7168
        %7170 = vmatprep.subr.mxu0 0.0
        %v7171 = vand.u32 %v6573, 4294901760
        %7172 = vmatpush1.msra.mxu0 %v7171
        %7173 = vmatprep.subr.mxu0 0.0
        %v7174 = vand.u32 %v6574, 4294901760
        %7175 = vmatpush1.msra.mxu0 %v7174
        %7176 = vmatprep.subr.mxu0 0.0
        %v7177 = vand.u32 %v6575, 4294901760
        %7178 = vmatpush1.msra.mxu0 %v7177
        %7179 = vmatprep.subr.mxu0 0.0
        %v7180 = vand.u32 %v6576, 4294901760
        %7181 = vmatpush1.msra.mxu0 %v7180
        %7182 = vmatprep.subr.mxu0 0.0
        %v7183 = vand.u32 %v6577, 4294901760
        %7184 = vmatpush1.msra.mxu0 %v7183
        %7185 = vmatprep.subr.mxu0 0.0
        %v7186 = vand.u32 %v6578, 4294901760
        %7187 = vmatpush1.msra.mxu0 %v7186
        %7188 = vmatprep.subr.mxu0 0.0
        %7189 = vmatpush1.msra.mxu0 0.0
        %7190 = vmatprep.subr.mxu0 0.0
        %7191 = vmatpush1.msra.mxu0 0.0
        %7192 = vmatprep.subr.mxu0 0.0
        %7193 = vmatpush1.msra.mxu0 0.0
        %7194 = vmatprep.subr.mxu0 0.0
        %7195 = vmatpush1.msra.mxu0 0.0
        %7196 = vmatprep.subr.mxu0 0.0
        %7197 = vmatpush1.msra.mxu0 0.0
        %7198 = vmatprep.subr.mxu0 0.0
        %7199 = vmatpush1.msra.mxu0 0.0
        %7200 = vmatprep.subr.mxu0 0.0
        %7201 = vmatpush1.msra.mxu0 0.0
        %7202 = vmatprep.subr.mxu0 0.0
        %7203 = vmatpush1.msra.mxu0 0.0
        %7204 = vmatprep.subr.mxu0 0.0
        %7205 = vmatpush1.msra.mxu0 0.0
        %7206 = vmatprep.subr.mxu0 0.0
        %7207 = vmatpush1.msra.mxu0 0.0
        %7208 = vmatprep.subr.mxu0 0.0
        %7209 = vmatpush1.msra.mxu0 0.0
        %7210 = vmatprep.subr.mxu0 0.0
        %7211 = vmatpush1.msra.mxu0 0.0
        %7212 = vmatprep.subr.mxu0 0.0
        %7213 = vmatpush1.msra.mxu0 0.0
        %7214 = vmatprep.subr.mxu0 0.0
        %7215 = vmatpush1.msra.mxu0 0.0
        %7216 = vmatprep.subr.mxu0 0.0
        %7217 = vmatpush1.msra.mxu0 0.0
        %7218 = vmatprep.subr.mxu0 0.0
        %7219 = vmatpush1.msra.mxu0 0.0
        %7220 = vmatprep.mubr.f32.mxu0 0.0
        %v7221 = vand.u32 %v6562, 4294901760
        %7222 = vmatmul.mubr.f32.gmra.mrb[0].mxu0 %v7221
        %v7223 = vpop.f32.mrb[0].mxu0
        %v7224 = vadd.f32 %v7137, %v7223
        %v7225 = vpop.f32.mrb[0].mxu0
        %7226 = vdwg.mxu0
        %v7227 = vadd.f32 %v874, %v7224
        %v7228 = vld [vmem:[#allocation19] sm:$0x1]
        %v7229 = vld [vmem:[#allocation20] sm:$0x1]
        %7230 = vadd.xlane.f32.xlu0 %v7227
        %v7231 = vpop.xlane.xlu0 %7230
        %v7232 = vrcp.pop 128.0
        %v7233 = vmul.f32 %v7231, %v7232
        %v7234 = vsub.f32 %v7227, %v7233
        %v7235 = vmul.f32 %v7234, %v7234
        %7236 = vadd.xlane.f32.xlu0 %v7235
        %v7237 = vpop.xlane.xlu0 %7236
        %v7238 = vmul.f32 %v7237, %v7232
        %v7239 = vadd.f32 %v7238, 1e-05
        %v7240 = vrsqrt.pop %v7239
        %v7241 = vmul.f32 %v7234, %v7240
        %v7243 = vlaneseq
        %v7244 = vshrl.u32 %v7243, 7
        %v7245 = vsub.s32 0, %v7244
        %v7246 = vrot.slane %v7228, %v7245
        %v7248 = vmul.f32 %v7241, %v7246
        %v7250 = vlaneseq
        %v7251 = vshrl.u32 %v7250, 7
        %v7252 = vsub.s32 0, %v7251
        %v7253 = vrot.slane %v7229, %v7252
        %v7255 = vadd.f32 %v7248, %v7253
        %v7256 = vld [vmem:[#allocation22] sm:$0xff]
        %v7257 = vld [vmem:[#allocation22 + $0x8] sm:$0xff]
        %v7258 = vld [vmem:[#allocation22 + $0x10] sm:$0xff]
        %v7259 = vld [vmem:[#allocation22 + $0x18] sm:$0xff]
        %v7260 = vld [vmem:[#allocation22 + $0x20] sm:$0xff]
        %v7261 = vld [vmem:[#allocation22 + $0x28] sm:$0xff]
        %v7262 = vld [vmem:[#allocation22 + $0x30] sm:$0xff]
        %v7263 = vld [vmem:[#allocation22 + $0x38] sm:$0xff]
        %v7264 = vld [vmem:[#allocation22 + $0x40] sm:$0xff]
        %v7265 = vld [vmem:[#allocation22 + $0x48] sm:$0xff]
        %v7266 = vld [vmem:[#allocation22 + $0x50] sm:$0xff]
        %v7267 = vld [vmem:[#allocation22 + $0x58] sm:$0xff]
        %v7268 = vld [vmem:[#allocation22 + $0x60] sm:$0xff]
        %v7269 = vld [vmem:[#allocation22 + $0x68] sm:$0xff]
        %v7270 = vld [vmem:[#allocation22 + $0x70] sm:$0xff]
        %v7271 = vld [vmem:[#allocation22 + $0x78] sm:$0xff]
        %v7272 = vld [vmem:[#allocation22 + $0x80] sm:$0xff]
        %v7273 = vld [vmem:[#allocation22 + $0x88] sm:$0xff]
        %v7274 = vld [vmem:[#allocation22 + $0x90] sm:$0xff]
        %v7275 = vld [vmem:[#allocation22 + $0x98] sm:$0xff]
        %v7276 = vld [vmem:[#allocation22 + $0xa0] sm:$0xff]
        %v7277 = vld [vmem:[#allocation22 + $0xa8] sm:$0xff]
        %v7278 = vld [vmem:[#allocation22 + $0xb0] sm:$0xff]
        %v7279 = vld [vmem:[#allocation22 + $0xb8] sm:$0xff]
        %v7280 = vld [vmem:[#allocation22 + $0xc0] sm:$0xff]
        %v7281 = vld [vmem:[#allocation22 + $0xc8] sm:$0xff]
        %v7282 = vld [vmem:[#allocation22 + $0xd0] sm:$0xff]
        %v7283 = vld [vmem:[#allocation22 + $0xd8] sm:$0xff]
        %v7284 = vld [vmem:[#allocation22 + $0xe0] sm:$0xff]
        %v7285 = vld [vmem:[#allocation22 + $0xe8] sm:$0xff]
        %v7286 = vld [vmem:[#allocation22 + $0xf0] sm:$0xff]
        %v7287 = vld [vmem:[#allocation22 + $0xf8] sm:$0xff]
        %v7288 = vld [vmem:[#allocation23] sm:$0x3]
        %v7290 = vlaneseq
        %v7291 = vshrl.u32 %v7290, 7
        %v7292 = vsub.s32 0, %v7291
        %v7293 = vrot.slane %v7288, %v7292
        %v7294 = vlaneseq
        %v7295 = vshrl.u32 %v7294, 7
        %v7296 = vsub.s32 1, %v7295
        %v7297 = vrot.slane %v7288, %v7296
        %v7300 = vand.u32 %v7257, 4294901760
        %7301 = vmatprep.subr.mxu0 %v7300
        %v7302 = vand.u32 %v7256, 4294901760
        %7303 = vmatpush1.msra.mxu0 %v7302
        %v7304 = vand.u32 %v7259, 4294901760
        %7305 = vmatprep.subr.mxu0 %v7304
        %v7306 = vand.u32 %v7258, 4294901760
        %7307 = vmatpush1.msra.mxu0 %v7306
        %v7308 = vand.u32 %v7261, 4294901760
        %7309 = vmatprep.subr.mxu0 %v7308
        %v7310 = vand.u32 %v7260, 4294901760
        %7311 = vmatpush1.msra.mxu0 %v7310
        %v7312 = vand.u32 %v7263, 4294901760
        %7313 = vmatprep.subr.mxu0 %v7312
        %v7314 = vand.u32 %v7262, 4294901760
        %7315 = vmatpush1.msra.mxu0 %v7314
        %v7316 = vand.u32 %v7265, 4294901760
        %7317 = vmatprep.subr.mxu0 %v7316
        %v7318 = vand.u32 %v7264, 4294901760
        %7319 = vmatpush1.msra.mxu0 %v7318
        %v7320 = vand.u32 %v7267, 4294901760
        %7321 = vmatprep.subr.mxu0 %v7320
        %v7322 = vand.u32 %v7266, 4294901760
        %7323 = vmatpush1.msra.mxu0 %v7322
        %v7324 = vand.u32 %v7269, 4294901760
        %7325 = vmatprep.subr.mxu0 %v7324
        %v7326 = vand.u32 %v7268, 4294901760
        %7327 = vmatpush1.msra.mxu0 %v7326
        %v7328 = vand.u32 %v7271, 4294901760
        %7329 = vmatprep.subr.mxu0 %v7328
        %v7330 = vand.u32 %v7270, 4294901760
        %7331 = vmatpush1.msra.mxu0 %v7330
        %v7332 = vand.u32 %v7273, 4294901760
        %7333 = vmatprep.subr.mxu0 %v7332
        %v7334 = vand.u32 %v7272, 4294901760
        %7335 = vmatpush1.msra.mxu0 %v7334
        %v7336 = vand.u32 %v7275, 4294901760
        %7337 = vmatprep.subr.mxu0 %v7336
        %v7338 = vand.u32 %v7274, 4294901760
        %7339 = vmatpush1.msra.mxu0 %v7338
        %v7340 = vand.u32 %v7277, 4294901760
        %7341 = vmatprep.subr.mxu0 %v7340
        %v7342 = vand.u32 %v7276, 4294901760
        %7343 = vmatpush1.msra.mxu0 %v7342
        %v7344 = vand.u32 %v7279, 4294901760
        %7345 = vmatprep.subr.mxu0 %v7344
        %v7346 = vand.u32 %v7278, 4294901760
        %7347 = vmatpush1.msra.mxu0 %v7346
        %v7348 = vand.u32 %v7281, 4294901760
        %7349 = vmatprep.subr.mxu0 %v7348
        %v7350 = vand.u32 %v7280, 4294901760
        %7351 = vmatpush1.msra.mxu0 %v7350
        %v7352 = vand.u32 %v7283, 4294901760
        %7353 = vmatprep.subr.mxu0 %v7352
        %v7354 = vand.u32 %v7282, 4294901760
        %7355 = vmatpush1.msra.mxu0 %v7354
        %v7356 = vand.u32 %v7285, 4294901760
        %7357 = vmatprep.subr.mxu0 %v7356
        %v7358 = vand.u32 %v7284, 4294901760
        %7359 = vmatpush1.msra.mxu0 %v7358
        %v7360 = vand.u32 %v7287, 4294901760
        %7361 = vmatprep.subr.mxu0 %v7360
        %v7362 = vand.u32 %v7286, 4294901760
        %7363 = vmatpush1.msra.mxu0 %v7362
        %7364 = vmatprep.subr.mxu0 0.0
        %7365 = vmatpush1.msra.mxu0 0.0
        %7366 = vmatprep.subr.mxu0 0.0
        %7367 = vmatpush1.msra.mxu0 0.0
        %7368 = vmatprep.subr.mxu0 0.0
        %7369 = vmatpush1.msra.mxu0 0.0
        %7370 = vmatprep.subr.mxu0 0.0
        %7371 = vmatpush1.msra.mxu0 0.0
        %7372 = vmatprep.subr.mxu0 0.0
        %7373 = vmatpush1.msra.mxu0 0.0
        %7374 = vmatprep.subr.mxu0 0.0
        %7375 = vmatpush1.msra.mxu0 0.0
        %7376 = vmatprep.subr.mxu0 0.0
        %7377 = vmatpush1.msra.mxu0 0.0
        %7378 = vmatprep.subr.mxu0 0.0
        %7379 = vmatpush1.msra.mxu0 0.0
        %7380 = vmatprep.subr.mxu0 0.0
        %7381 = vmatpush1.msra.mxu0 0.0
        %7382 = vmatprep.subr.mxu0 0.0
        %7383 = vmatpush1.msra.mxu0 0.0
        %7384 = vmatprep.subr.mxu0 0.0
        %7385 = vmatpush1.msra.mxu0 0.0
        %7386 = vmatprep.subr.mxu0 0.0
        %7387 = vmatpush1.msra.mxu0 0.0
        %7388 = vmatprep.subr.mxu0 0.0
        %7389 = vmatpush1.msra.mxu0 0.0
        %7390 = vmatprep.subr.mxu0 0.0
        %7391 = vmatpush1.msra.mxu0 0.0
        %7392 = vmatprep.subr.mxu0 0.0
        %7393 = vmatpush1.msra.mxu0 0.0
        %7394 = vmatprep.subr.mxu0 0.0
        %7395 = vmatpush1.msra.mxu0 0.0
        %7396 = vmatprep.mubr.f32.mxu0 0.0
        %v7397 = vand.u32 %v7255, 4294901760
        %v7398 = vsub.f32 %v7255, %v7397
        %v7399 = vand.u32 %v7398, 4294901760
        %v7400 = vsub.f32 %v7398, %v7399
        %v7401 = vand.u32 %v7400, 4294901760
        %7402 = vmatmul.mubr.f32.gmra.mrb[0].mxu0 %v7401
        %v7403 = vpop.f32.mrb[0].mxu0
        %v7404 = vadd.f32 %v7293, %v7403
        %v7405 = vpop.f32.mrb[0].mxu0
        %v7406 = vadd.f32 %v7297, %v7405
        %7407 = vdwg.mxu0
        %v7408 = vand.u32 %v7257, 4294901760
        %v7409 = vsub.f32 %v7257, %v7408
        %v7410 = vand.u32 %v7409, 4294901760
        %v7411 = vsub.f32 %v7409, %v7410
        %v7412 = vand.u32 %v7411, 4294901760
        %7413 = vmatprep.subr.mxu0 %v7412
        %v7414 = vand.u32 %v7256, 4294901760
        %v7415 = vsub.f32 %v7256, %v7414
        %v7416 = vand.u32 %v7415, 4294901760
        %v7417 = vsub.f32 %v7415, %v7416
        %v7418 = vand.u32 %v7417, 4294901760
        %7419 = vmatpush1.msra.mxu0 %v7418
        %v7420 = vand.u32 %v7259, 4294901760
        %v7421 = vsub.f32 %v7259, %v7420
        %v7422 = vand.u32 %v7421, 4294901760
        %v7423 = vsub.f32 %v7421, %v7422
        %v7424 = vand.u32 %v7423, 4294901760
        %7425 = vmatprep.subr.mxu0 %v7424
        %v7426 = vand.u32 %v7258, 4294901760
        %v7427 = vsub.f32 %v7258, %v7426
        %v7428 = vand.u32 %v7427, 4294901760
        %v7429 = vsub.f32 %v7427, %v7428
        %v7430 = vand.u32 %v7429, 4294901760
        %7431 = vmatpush1.msra.mxu0 %v7430
        %v7432 = vand.u32 %v7261, 4294901760
        %v7433 = vsub.f32 %v7261, %v7432
        %v7434 = vand.u32 %v7433, 4294901760
        %v7435 = vsub.f32 %v7433, %v7434
        %v7436 = vand.u32 %v7435, 4294901760
        %7437 = vmatprep.subr.mxu0 %v7436
        %v7438 = vand.u32 %v7260, 4294901760
        %v7439 = vsub.f32 %v7260, %v7438
        %v7440 = vand.u32 %v7439, 4294901760
        %v7441 = vsub.f32 %v7439, %v7440
        %v7442 = vand.u32 %v7441, 4294901760
        %7443 = vmatpush1.msra.mxu0 %v7442
        %v7444 = vand.u32 %v7263, 4294901760
        %v7445 = vsub.f32 %v7263, %v7444
        %v7446 = vand.u32 %v7445, 4294901760
        %v7447 = vsub.f32 %v7445, %v7446
        %v7448 = vand.u32 %v7447, 4294901760
        %7449 = vmatprep.subr.mxu0 %v7448
        %v7450 = vand.u32 %v7262, 4294901760
        %v7451 = vsub.f32 %v7262, %v7450
        %v7452 = vand.u32 %v7451, 4294901760
        %v7453 = vsub.f32 %v7451, %v7452
        %v7454 = vand.u32 %v7453, 4294901760
        %7455 = vmatpush1.msra.mxu0 %v7454
        %v7456 = vand.u32 %v7265, 4294901760
        %v7457 = vsub.f32 %v7265, %v7456
        %v7458 = vand.u32 %v7457, 4294901760
        %v7459 = vsub.f32 %v7457, %v7458
        %v7460 = vand.u32 %v7459, 4294901760
        %7461 = vmatprep.subr.mxu0 %v7460
        %v7462 = vand.u32 %v7264, 4294901760
        %v7463 = vsub.f32 %v7264, %v7462
        %v7464 = vand.u32 %v7463, 4294901760
        %v7465 = vsub.f32 %v7463, %v7464
        %v7466 = vand.u32 %v7465, 4294901760
        %7467 = vmatpush1.msra.mxu0 %v7466
        %v7468 = vand.u32 %v7267, 4294901760
        %v7469 = vsub.f32 %v7267, %v7468
        %v7470 = vand.u32 %v7469, 4294901760
        %v7471 = vsub.f32 %v7469, %v7470
        %v7472 = vand.u32 %v7471, 4294901760
        %7473 = vmatprep.subr.mxu0 %v7472
        %v7474 = vand.u32 %v7266, 4294901760
        %v7475 = vsub.f32 %v7266, %v7474
        %v7476 = vand.u32 %v7475, 4294901760
        %v7477 = vsub.f32 %v7475, %v7476
        %v7478 = vand.u32 %v7477, 4294901760
        %7479 = vmatpush1.msra.mxu0 %v7478
        %v7480 = vand.u32 %v7269, 4294901760
        %v7481 = vsub.f32 %v7269, %v7480
        %v7482 = vand.u32 %v7481, 4294901760
        %v7483 = vsub.f32 %v7481, %v7482
        %v7484 = vand.u32 %v7483, 4294901760
        %7485 = vmatprep.subr.mxu0 %v7484
        %v7486 = vand.u32 %v7268, 4294901760
        %v7487 = vsub.f32 %v7268, %v7486
        %v7488 = vand.u32 %v7487, 4294901760
        %v7489 = vsub.f32 %v7487, %v7488
        %v7490 = vand.u32 %v7489, 4294901760
        %7491 = vmatpush1.msra.mxu0 %v7490
        %v7492 = vand.u32 %v7271, 4294901760
        %v7493 = vsub.f32 %v7271, %v7492
        %v7494 = vand.u32 %v7493, 4294901760
        %v7495 = vsub.f32 %v7493, %v7494
        %v7496 = vand.u32 %v7495, 4294901760
        %7497 = vmatprep.subr.mxu0 %v7496
        %v7498 = vand.u32 %v7270, 4294901760
        %v7499 = vsub.f32 %v7270, %v7498
        %v7500 = vand.u32 %v7499, 4294901760
        %v7501 = vsub.f32 %v7499, %v7500
        %v7502 = vand.u32 %v7501, 4294901760
        %7503 = vmatpush1.msra.mxu0 %v7502
        %v7504 = vand.u32 %v7273, 4294901760
        %v7505 = vsub.f32 %v7273, %v7504
        %v7506 = vand.u32 %v7505, 4294901760
        %v7507 = vsub.f32 %v7505, %v7506
        %v7508 = vand.u32 %v7507, 4294901760
        %7509 = vmatprep.subr.mxu0 %v7508
        %v7510 = vand.u32 %v7272, 4294901760
        %v7511 = vsub.f32 %v7272, %v7510
        %v7512 = vand.u32 %v7511, 4294901760
        %v7513 = vsub.f32 %v7511, %v7512
        %v7514 = vand.u32 %v7513, 4294901760
        %7515 = vmatpush1.msra.mxu0 %v7514
        %v7516 = vand.u32 %v7275, 4294901760
        %v7517 = vsub.f32 %v7275, %v7516
        %v7518 = vand.u32 %v7517, 4294901760
        %v7519 = vsub.f32 %v7517, %v7518
        %v7520 = vand.u32 %v7519, 4294901760
        %7521 = vmatprep.subr.mxu0 %v7520
        %v7522 = vand.u32 %v7274, 4294901760
        %v7523 = vsub.f32 %v7274, %v7522
        %v7524 = vand.u32 %v7523, 4294901760
        %v7525 = vsub.f32 %v7523, %v7524
        %v7526 = vand.u32 %v7525, 4294901760
        %7527 = vmatpush1.msra.mxu0 %v7526
        %v7528 = vand.u32 %v7277, 4294901760
        %v7529 = vsub.f32 %v7277, %v7528
        %v7530 = vand.u32 %v7529, 4294901760
        %v7531 = vsub.f32 %v7529, %v7530
        %v7532 = vand.u32 %v7531, 4294901760
        %7533 = vmatprep.subr.mxu0 %v7532
        %v7534 = vand.u32 %v7276, 4294901760
        %v7535 = vsub.f32 %v7276, %v7534
        %v7536 = vand.u32 %v7535, 4294901760
        %v7537 = vsub.f32 %v7535, %v7536
        %v7538 = vand.u32 %v7537, 4294901760
        %7539 = vmatpush1.msra.mxu0 %v7538
        %v7540 = vand.u32 %v7279, 4294901760
        %v7541 = vsub.f32 %v7279, %v7540
        %v7542 = vand.u32 %v7541, 4294901760
        %v7543 = vsub.f32 %v7541, %v7542
        %v7544 = vand.u32 %v7543, 4294901760
        %7545 = vmatprep.subr.mxu0 %v7544
        %v7546 = vand.u32 %v7278, 4294901760
        %v7547 = vsub.f32 %v7278, %v7546
        %v7548 = vand.u32 %v7547, 4294901760
        %v7549 = vsub.f32 %v7547, %v7548
        %v7550 = vand.u32 %v7549, 4294901760
        %7551 = vmatpush1.msra.mxu0 %v7550
        %v7552 = vand.u32 %v7281, 4294901760
        %v7553 = vsub.f32 %v7281, %v7552
        %v7554 = vand.u32 %v7553, 4294901760
        %v7555 = vsub.f32 %v7553, %v7554
        %v7556 = vand.u32 %v7555, 4294901760
        %7557 = vmatprep.subr.mxu0 %v7556
        %v7558 = vand.u32 %v7280, 4294901760
        %v7559 = vsub.f32 %v7280, %v7558
        %v7560 = vand.u32 %v7559, 4294901760
        %v7561 = vsub.f32 %v7559, %v7560
        %v7562 = vand.u32 %v7561, 4294901760
        %7563 = vmatpush1.msra.mxu0 %v7562
        %v7564 = vand.u32 %v7283, 4294901760
        %v7565 = vsub.f32 %v7283, %v7564
        %v7566 = vand.u32 %v7565, 4294901760
        %v7567 = vsub.f32 %v7565, %v7566
        %v7568 = vand.u32 %v7567, 4294901760
        %7569 = vmatprep.subr.mxu0 %v7568
        %v7570 = vand.u32 %v7282, 4294901760
        %v7571 = vsub.f32 %v7282, %v7570
        %v7572 = vand.u32 %v7571, 4294901760
        %v7573 = vsub.f32 %v7571, %v7572
        %v7574 = vand.u32 %v7573, 4294901760
        %7575 = vmatpush1.msra.mxu0 %v7574
        %v7576 = vand.u32 %v7285, 4294901760
        %v7577 = vsub.f32 %v7285, %v7576
        %v7578 = vand.u32 %v7577, 4294901760
        %v7579 = vsub.f32 %v7577, %v7578
        %v7580 = vand.u32 %v7579, 4294901760
        %7581 = vmatprep.subr.mxu0 %v7580
        %v7582 = vand.u32 %v7284, 4294901760
        %v7583 = vsub.f32 %v7284, %v7582
        %v7584 = vand.u32 %v7583, 4294901760
        %v7585 = vsub.f32 %v7583, %v7584
        %v7586 = vand.u32 %v7585, 4294901760
        %7587 = vmatpush1.msra.mxu0 %v7586
        %v7588 = vand.u32 %v7287, 4294901760
        %v7589 = vsub.f32 %v7287, %v7588
        %v7590 = vand.u32 %v7589, 4294901760
        %v7591 = vsub.f32 %v7589, %v7590
        %v7592 = vand.u32 %v7591, 4294901760
        %7593 = vmatprep.subr.mxu0 %v7592
        %v7594 = vand.u32 %v7286, 4294901760
        %v7595 = vsub.f32 %v7286, %v7594
        %v7596 = vand.u32 %v7595, 4294901760
        %v7597 = vsub.f32 %v7595, %v7596
        %v7598 = vand.u32 %v7597, 4294901760
        %7599 = vmatpush1.msra.mxu0 %v7598
        %7600 = vmatprep.subr.mxu0 0.0
        %7601 = vmatpush1.msra.mxu0 0.0
        %7602 = vmatprep.subr.mxu0 0.0
        %7603 = vmatpush1.msra.mxu0 0.0
        %7604 = vmatprep.subr.mxu0 0.0
        %7605 = vmatpush1.msra.mxu0 0.0
        %7606 = vmatprep.subr.mxu0 0.0
        %7607 = vmatpush1.msra.mxu0 0.0
        %7608 = vmatprep.subr.mxu0 0.0
        %7609 = vmatpush1.msra.mxu0 0.0
        %7610 = vmatprep.subr.mxu0 0.0
        %7611 = vmatpush1.msra.mxu0 0.0
        %7612 = vmatprep.subr.mxu0 0.0
        %7613 = vmatpush1.msra.mxu0 0.0
        %7614 = vmatprep.subr.mxu0 0.0
        %7615 = vmatpush1.msra.mxu0 0.0
        %7616 = vmatprep.subr.mxu0 0.0
        %7617 = vmatpush1.msra.mxu0 0.0
        %7618 = vmatprep.subr.mxu0 0.0
        %7619 = vmatpush1.msra.mxu0 0.0
        %7620 = vmatprep.subr.mxu0 0.0
        %7621 = vmatpush1.msra.mxu0 0.0
        %7622 = vmatprep.subr.mxu0 0.0
        %7623 = vmatpush1.msra.mxu0 0.0
        %7624 = vmatprep.subr.mxu0 0.0
        %7625 = vmatpush1.msra.mxu0 0.0
        %7626 = vmatprep.subr.mxu0 0.0
        %7627 = vmatpush1.msra.mxu0 0.0
        %7628 = vmatprep.subr.mxu0 0.0
        %7629 = vmatpush1.msra.mxu0 0.0
        %7630 = vmatprep.subr.mxu0 0.0
        %7631 = vmatpush1.msra.mxu0 0.0
        %7632 = vmatprep.mubr.f32.mxu0 0.0
        %v7633 = vand.u32 %v7255, 4294901760
        %7634 = vmatmul.mubr.f32.gmra.mrb[0].mxu0 %v7633
        %v7635 = vpop.f32.mrb[0].mxu0
        %v7636 = vadd.f32 %v7404, %v7635
        %v7637 = vpop.f32.mrb[0].mxu0
        %v7638 = vadd.f32 %v7406, %v7637
        %7639 = vdwg.mxu0
        %v7640 = vand.u32 %v7257, 4294901760
        %v7641 = vsub.f32 %v7257, %v7640
        %7642 = vmatprep.subr.mxu0 %v7641
        %v7643 = vand.u32 %v7256, 4294901760
        %v7644 = vsub.f32 %v7256, %v7643
        %7645 = vmatpush1.msra.mxu0 %v7644
        %v7646 = vand.u32 %v7259, 4294901760
        %v7647 = vsub.f32 %v7259, %v7646
        %7648 = vmatprep.subr.mxu0 %v7647
        %v7649 = vand.u32 %v7258, 4294901760
        %v7650 = vsub.f32 %v7258, %v7649
        %7651 = vmatpush1.msra.mxu0 %v7650
        %v7652 = vand.u32 %v7261, 4294901760
        %v7653 = vsub.f32 %v7261, %v7652
        %7654 = vmatprep.subr.mxu0 %v7653
        %v7655 = vand.u32 %v7260, 4294901760
        %v7656 = vsub.f32 %v7260, %v7655
        %7657 = vmatpush1.msra.mxu0 %v7656
        %v7658 = vand.u32 %v7263, 4294901760
        %v7659 = vsub.f32 %v7263, %v7658
        %7660 = vmatprep.subr.mxu0 %v7659
        %v7661 = vand.u32 %v7262, 4294901760
        %v7662 = vsub.f32 %v7262, %v7661
        %7663 = vmatpush1.msra.mxu0 %v7662
        %v7664 = vand.u32 %v7265, 4294901760
        %v7665 = vsub.f32 %v7265, %v7664
        %7666 = vmatprep.subr.mxu0 %v7665
        %v7667 = vand.u32 %v7264, 4294901760
        %v7668 = vsub.f32 %v7264, %v7667
        %7669 = vmatpush1.msra.mxu0 %v7668
        %v7670 = vand.u32 %v7267, 4294901760
        %v7671 = vsub.f32 %v7267, %v7670
        %7672 = vmatprep.subr.mxu0 %v7671
        %v7673 = vand.u32 %v7266, 4294901760
        %v7674 = vsub.f32 %v7266, %v7673
        %7675 = vmatpush1.msra.mxu0 %v7674
        %v7676 = vand.u32 %v7269, 4294901760
        %v7677 = vsub.f32 %v7269, %v7676
        %7678 = vmatprep.subr.mxu0 %v7677
        %v7679 = vand.u32 %v7268, 4294901760
        %v7680 = vsub.f32 %v7268, %v7679
        %7681 = vmatpush1.msra.mxu0 %v7680
        %v7682 = vand.u32 %v7271, 4294901760
        %v7683 = vsub.f32 %v7271, %v7682
        %7684 = vmatprep.subr.mxu0 %v7683
        %v7685 = vand.u32 %v7270, 4294901760
        %v7686 = vsub.f32 %v7270, %v7685
        %7687 = vmatpush1.msra.mxu0 %v7686
        %v7688 = vand.u32 %v7273, 4294901760
        %v7689 = vsub.f32 %v7273, %v7688
        %7690 = vmatprep.subr.mxu0 %v7689
        %v7691 = vand.u32 %v7272, 4294901760
        %v7692 = vsub.f32 %v7272, %v7691
        %7693 = vmatpush1.msra.mxu0 %v7692
        %v7694 = vand.u32 %v7275, 4294901760
        %v7695 = vsub.f32 %v7275, %v7694
        %7696 = vmatprep.subr.mxu0 %v7695
        %v7697 = vand.u32 %v7274, 4294901760
        %v7698 = vsub.f32 %v7274, %v7697
        %7699 = vmatpush1.msra.mxu0 %v7698
        %v7700 = vand.u32 %v7277, 4294901760
        %v7701 = vsub.f32 %v7277, %v7700
        %7702 = vmatprep.subr.mxu0 %v7701
        %v7703 = vand.u32 %v7276, 4294901760
        %v7704 = vsub.f32 %v7276, %v7703
        %7705 = vmatpush1.msra.mxu0 %v7704
        %v7706 = vand.u32 %v7279, 4294901760
        %v7707 = vsub.f32 %v7279, %v7706
        %7708 = vmatprep.subr.mxu0 %v7707
        %v7709 = vand.u32 %v7278, 4294901760
        %v7710 = vsub.f32 %v7278, %v7709
        %7711 = vmatpush1.msra.mxu0 %v7710
        %v7712 = vand.u32 %v7281, 4294901760
        %v7713 = vsub.f32 %v7281, %v7712
        %7714 = vmatprep.subr.mxu0 %v7713
        %v7715 = vand.u32 %v7280, 4294901760
        %v7716 = vsub.f32 %v7280, %v7715
        %7717 = vmatpush1.msra.mxu0 %v7716
        %v7718 = vand.u32 %v7283, 4294901760
        %v7719 = vsub.f32 %v7283, %v7718
        %7720 = vmatprep.subr.mxu0 %v7719
        %v7721 = vand.u32 %v7282, 4294901760
        %v7722 = vsub.f32 %v7282, %v7721
        %7723 = vmatpush1.msra.mxu0 %v7722
        %v7724 = vand.u32 %v7285, 4294901760
        %v7725 = vsub.f32 %v7285, %v7724
        %7726 = vmatprep.subr.mxu0 %v7725
        %v7727 = vand.u32 %v7284, 4294901760
        %v7728 = vsub.f32 %v7284, %v7727
        %7729 = vmatpush1.msra.mxu0 %v7728
        %v7730 = vand.u32 %v7287, 4294901760
        %v7731 = vsub.f32 %v7287, %v7730
        %7732 = vmatprep.subr.mxu0 %v7731
        %v7733 = vand.u32 %v7286, 4294901760
        %v7734 = vsub.f32 %v7286, %v7733
        %7735 = vmatpush1.msra.mxu0 %v7734
        %7736 = vmatprep.subr.mxu0 0.0
        %7737 = vmatpush1.msra.mxu0 0.0
        %7738 = vmatprep.subr.mxu0 0.0
        %7739 = vmatpush1.msra.mxu0 0.0
        %7740 = vmatprep.subr.mxu0 0.0
        %7741 = vmatpush1.msra.mxu0 0.0
        %7742 = vmatprep.subr.mxu0 0.0
        %7743 = vmatpush1.msra.mxu0 0.0
        %7744 = vmatprep.subr.mxu0 0.0
        %7745 = vmatpush1.msra.mxu0 0.0
        %7746 = vmatprep.subr.mxu0 0.0
        %7747 = vmatpush1.msra.mxu0 0.0
        %7748 = vmatprep.subr.mxu0 0.0
        %7749 = vmatpush1.msra.mxu0 0.0
        %7750 = vmatprep.subr.mxu0 0.0
        %7751 = vmatpush1.msra.mxu0 0.0
        %7752 = vmatprep.subr.mxu0 0.0
        %7753 = vmatpush1.msra.mxu0 0.0
        %7754 = vmatprep.subr.mxu0 0.0
        %7755 = vmatpush1.msra.mxu0 0.0
        %7756 = vmatprep.subr.mxu0 0.0
        %7757 = vmatpush1.msra.mxu0 0.0
        %7758 = vmatprep.subr.mxu0 0.0
        %7759 = vmatpush1.msra.mxu0 0.0
        %7760 = vmatprep.subr.mxu0 0.0
        %7761 = vmatpush1.msra.mxu0 0.0
        %7762 = vmatprep.subr.mxu0 0.0
        %7763 = vmatpush1.msra.mxu0 0.0
        %7764 = vmatprep.subr.mxu0 0.0
        %7765 = vmatpush1.msra.mxu0 0.0
        %7766 = vmatprep.subr.mxu0 0.0
        %7767 = vmatpush1.msra.mxu0 0.0
        %7768 = vmatprep.mubr.f32.mxu0 0.0
        %v7769 = vand.u32 %v7255, 4294901760
        %v7770 = vsub.f32 %v7255, %v7769
        %7771 = vmatmul.mubr.f32.gmra.mrb[0].mxu0 %v7770
        %v7772 = vpop.f32.mrb[0].mxu0
        %v7773 = vadd.f32 %v7636, %v7772
        %v7774 = vpop.f32.mrb[0].mxu0
        %v7775 = vadd.f32 %v7638, %v7774
        %7776 = vdwg.mxu0
        %v7777 = vand.u32 %v7257, 4294901760
        %7778 = vmatprep.subr.mxu0 %v7777
        %v7779 = vand.u32 %v7256, 4294901760
        %7780 = vmatpush1.msra.mxu0 %v7779
        %v7781 = vand.u32 %v7259, 4294901760
        %7782 = vmatprep.subr.mxu0 %v7781
        %v7783 = vand.u32 %v7258, 4294901760
        %7784 = vmatpush1.msra.mxu0 %v7783
        %v7785 = vand.u32 %v7261, 4294901760
        %7786 = vmatprep.subr.mxu0 %v7785
        %v7787 = vand.u32 %v7260, 4294901760
        %7788 = vmatpush1.msra.mxu0 %v7787
        %v7789 = vand.u32 %v7263, 4294901760
        %7790 = vmatprep.subr.mxu0 %v7789
        %v7791 = vand.u32 %v7262, 4294901760
        %7792 = vmatpush1.msra.mxu0 %v7791
        %v7793 = vand.u32 %v7265, 4294901760
        %7794 = vmatprep.subr.mxu0 %v7793
        %v7795 = vand.u32 %v7264, 4294901760
        %7796 = vmatpush1.msra.mxu0 %v7795
        %v7797 = vand.u32 %v7267, 4294901760
        %7798 = vmatprep.subr.mxu0 %v7797
        %v7799 = vand.u32 %v7266, 4294901760
        %7800 = vmatpush1.msra.mxu0 %v7799
        %v7801 = vand.u32 %v7269, 4294901760
        %7802 = vmatprep.subr.mxu0 %v7801
        %v7803 = vand.u32 %v7268, 4294901760
        %7804 = vmatpush1.msra.mxu0 %v7803
        %v7805 = vand.u32 %v7271, 4294901760
        %7806 = vmatprep.subr.mxu0 %v7805
        %v7807 = vand.u32 %v7270, 4294901760
        %7808 = vmatpush1.msra.mxu0 %v7807
        %v7809 = vand.u32 %v7273, 4294901760
        %7810 = vmatprep.subr.mxu0 %v7809
        %v7811 = vand.u32 %v7272, 4294901760
        %7812 = vmatpush1.msra.mxu0 %v7811
        %v7813 = vand.u32 %v7275, 4294901760
        %7814 = vmatprep.subr.mxu0 %v7813
        %v7815 = vand.u32 %v7274, 4294901760
        %7816 = vmatpush1.msra.mxu0 %v7815
        %v7817 = vand.u32 %v7277, 4294901760
        %7818 = vmatprep.subr.mxu0 %v7817
        %v7819 = vand.u32 %v7276, 4294901760
        %7820 = vmatpush1.msra.mxu0 %v7819
        %v7821 = vand.u32 %v7279, 4294901760
        %7822 = vmatprep.subr.mxu0 %v7821
        %v7823 = vand.u32 %v7278, 4294901760
        %7824 = vmatpush1.msra.mxu0 %v7823
        %v7825 = vand.u32 %v7281, 4294901760
        %7826 = vmatprep.subr.mxu0 %v7825
        %v7827 = vand.u32 %v7280, 4294901760
        %7828 = vmatpush1.msra.mxu0 %v7827
        %v7829 = vand.u32 %v7283, 4294901760
        %7830 = vmatprep.subr.mxu0 %v7829
        %v7831 = vand.u32 %v7282, 4294901760
        %7832 = vmatpush1.msra.mxu0 %v7831
        %v7833 = vand.u32 %v7285, 4294901760
        %7834 = vmatprep.subr.mxu0 %v7833
        %v7835 = vand.u32 %v7284, 4294901760
        %7836 = vmatpush1.msra.mxu0 %v7835
        %v7837 = vand.u32 %v7287, 4294901760
        %7838 = vmatprep.subr.mxu0 %v7837
        %v7839 = vand.u32 %v7286, 4294901760
        %7840 = vmatpush1.msra.mxu0 %v7839
        %7841 = vmatprep.subr.mxu0 0.0
        %7842 = vmatpush1.msra.mxu0 0.0
        %7843 = vmatprep.subr.mxu0 0.0
        %7844 = vmatpush1.msra.mxu0 0.0
        %7845 = vmatprep.subr.mxu0 0.0
        %7846 = vmatpush1.msra.mxu0 0.0
        %7847 = vmatprep.subr.mxu0 0.0
        %7848 = vmatpush1.msra.mxu0 0.0
        %7849 = vmatprep.subr.mxu0 0.0
        %7850 = vmatpush1.msra.mxu0 0.0
        %7851 = vmatprep.subr.mxu0 0.0
        %7852 = vmatpush1.msra.mxu0 0.0
        %7853 = vmatprep.subr.mxu0 0.0
        %7854 = vmatpush1.msra.mxu0 0.0
        %7855 = vmatprep.subr.mxu0 0.0
        %7856 = vmatpush1.msra.mxu0 0.0
        %7857 = vmatprep.subr.mxu0 0.0
        %7858 = vmatpush1.msra.mxu0 0.0
        %7859 = vmatprep.subr.mxu0 0.0
        %7860 = vmatpush1.msra.mxu0 0.0
        %7861 = vmatprep.subr.mxu0 0.0
        %7862 = vmatpush1.msra.mxu0 0.0
        %7863 = vmatprep.subr.mxu0 0.0
        %7864 = vmatpush1.msra.mxu0 0.0
        %7865 = vmatprep.subr.mxu0 0.0
        %7866 = vmatpush1.msra.mxu0 0.0
        %7867 = vmatprep.subr.mxu0 0.0
        %7868 = vmatpush1.msra.mxu0 0.0
        %7869 = vmatprep.subr.mxu0 0.0
        %7870 = vmatpush1.msra.mxu0 0.0
        %7871 = vmatprep.subr.mxu0 0.0
        %7872 = vmatpush1.msra.mxu0 0.0
        %7873 = vmatprep.mubr.f32.mxu0 0.0
        %v7874 = vand.u32 %v7255, 4294901760
        %v7875 = vsub.f32 %v7255, %v7874
        %v7876 = vand.u32 %v7875, 4294901760
        %7877 = vmatmul.mubr.f32.gmra.mrb[0].mxu0 %v7876
        %v7878 = vpop.f32.mrb[0].mxu0
        %v7879 = vadd.f32 %v7773, %v7878
        %v7880 = vpop.f32.mrb[0].mxu0
        %v7881 = vadd.f32 %v7775, %v7880
        %7882 = vdwg.mxu0
        %v7883 = vand.u32 %v7257, 4294901760
        %v7884 = vsub.f32 %v7257, %v7883
        %v7885 = vand.u32 %v7884, 4294901760
        %7886 = vmatprep.subr.mxu0 %v7885
        %v7887 = vand.u32 %v7256, 4294901760
        %v7888 = vsub.f32 %v7256, %v7887
        %v7889 = vand.u32 %v7888, 4294901760
        %7890 = vmatpush1.msra.mxu0 %v7889
        %v7891 = vand.u32 %v7259, 4294901760
        %v7892 = vsub.f32 %v7259, %v7891
        %v7893 = vand.u32 %v7892, 4294901760
        %7894 = vmatprep.subr.mxu0 %v7893
        %v7895 = vand.u32 %v7258, 4294901760
        %v7896 = vsub.f32 %v7258, %v7895
        %v7897 = vand.u32 %v7896, 4294901760
        %7898 = vmatpush1.msra.mxu0 %v7897
        %v7899 = vand.u32 %v7261, 4294901760
        %v7900 = vsub.f32 %v7261, %v7899
        %v7901 = vand.u32 %v7900, 4294901760
        %7902 = vmatprep.subr.mxu0 %v7901
        %v7903 = vand.u32 %v7260, 4294901760
        %v7904 = vsub.f32 %v7260, %v7903
        %v7905 = vand.u32 %v7904, 4294901760
        %7906 = vmatpush1.msra.mxu0 %v7905
        %v7907 = vand.u32 %v7263, 4294901760
        %v7908 = vsub.f32 %v7263, %v7907
        %v7909 = vand.u32 %v7908, 4294901760
        %7910 = vmatprep.subr.mxu0 %v7909
        %v7911 = vand.u32 %v7262, 4294901760
        %v7912 = vsub.f32 %v7262, %v7911
        %v7913 = vand.u32 %v7912, 4294901760
        %7914 = vmatpush1.msra.mxu0 %v7913
        %v7915 = vand.u32 %v7265, 4294901760
        %v7916 = vsub.f32 %v7265, %v7915
        %v7917 = vand.u32 %v7916, 4294901760
        %7918 = vmatprep.subr.mxu0 %v7917
        %v7919 = vand.u32 %v7264, 4294901760
        %v7920 = vsub.f32 %v7264, %v7919
        %v7921 = vand.u32 %v7920, 4294901760
        %7922 = vmatpush1.msra.mxu0 %v7921
        %v7923 = vand.u32 %v7267, 4294901760
        %v7924 = vsub.f32 %v7267, %v7923
        %v7925 = vand.u32 %v7924, 4294901760
        %7926 = vmatprep.subr.mxu0 %v7925
        %v7927 = vand.u32 %v7266, 4294901760
        %v7928 = vsub.f32 %v7266, %v7927
        %v7929 = vand.u32 %v7928, 4294901760
        %7930 = vmatpush1.msra.mxu0 %v7929
        %v7931 = vand.u32 %v7269, 4294901760
        %v7932 = vsub.f32 %v7269, %v7931
        %v7933 = vand.u32 %v7932, 4294901760
        %7934 = vmatprep.subr.mxu0 %v7933
        %v7935 = vand.u32 %v7268, 4294901760
        %v7936 = vsub.f32 %v7268, %v7935
        %v7937 = vand.u32 %v7936, 4294901760
        %7938 = vmatpush1.msra.mxu0 %v7937
        %v7939 = vand.u32 %v7271, 4294901760
        %v7940 = vsub.f32 %v7271, %v7939
        %v7941 = vand.u32 %v7940, 4294901760
        %7942 = vmatprep.subr.mxu0 %v7941
        %v7943 = vand.u32 %v7270, 4294901760
        %v7944 = vsub.f32 %v7270, %v7943
        %v7945 = vand.u32 %v7944, 4294901760
        %7946 = vmatpush1.msra.mxu0 %v7945
        %v7947 = vand.u32 %v7273, 4294901760
        %v7948 = vsub.f32 %v7273, %v7947
        %v7949 = vand.u32 %v7948, 4294901760
        %7950 = vmatprep.subr.mxu0 %v7949
        %v7951 = vand.u32 %v7272, 4294901760
        %v7952 = vsub.f32 %v7272, %v7951
        %v7953 = vand.u32 %v7952, 4294901760
        %7954 = vmatpush1.msra.mxu0 %v7953
        %v7955 = vand.u32 %v7275, 4294901760
        %v7956 = vsub.f32 %v7275, %v7955
        %v7957 = vand.u32 %v7956, 4294901760
        %7958 = vmatprep.subr.mxu0 %v7957
        %v7959 = vand.u32 %v7274, 4294901760
        %v7960 = vsub.f32 %v7274, %v7959
        %v7961 = vand.u32 %v7960, 4294901760
        %7962 = vmatpush1.msra.mxu0 %v7961
        %v7963 = vand.u32 %v7277, 4294901760
        %v7964 = vsub.f32 %v7277, %v7963
        %v7965 = vand.u32 %v7964, 4294901760
        %7966 = vmatprep.subr.mxu0 %v7965
        %v7967 = vand.u32 %v7276, 4294901760
        %v7968 = vsub.f32 %v7276, %v7967
        %v7969 = vand.u32 %v7968, 4294901760
        %7970 = vmatpush1.msra.mxu0 %v7969
        %v7971 = vand.u32 %v7279, 4294901760
        %v7972 = vsub.f32 %v7279, %v7971
        %v7973 = vand.u32 %v7972, 4294901760
        %7974 = vmatprep.subr.mxu0 %v7973
        %v7975 = vand.u32 %v7278, 4294901760
        %v7976 = vsub.f32 %v7278, %v7975
        %v7977 = vand.u32 %v7976, 4294901760
        %7978 = vmatpush1.msra.mxu0 %v7977
        %v7979 = vand.u32 %v7281, 4294901760
        %v7980 = vsub.f32 %v7281, %v7979
        %v7981 = vand.u32 %v7980, 4294901760
        %7982 = vmatprep.subr.mxu0 %v7981
        %v7983 = vand.u32 %v7280, 4294901760
        %v7984 = vsub.f32 %v7280, %v7983
        %v7985 = vand.u32 %v7984, 4294901760
        %7986 = vmatpush1.msra.mxu0 %v7985
        %v7987 = vand.u32 %v7283, 4294901760
        %v7988 = vsub.f32 %v7283, %v7987
        %v7989 = vand.u32 %v7988, 4294901760
        %7990 = vmatprep.subr.mxu0 %v7989
        %v7991 = vand.u32 %v7282, 4294901760
        %v7992 = vsub.f32 %v7282, %v7991
        %v7993 = vand.u32 %v7992, 4294901760
        %7994 = vmatpush1.msra.mxu0 %v7993
        %v7995 = vand.u32 %v7285, 4294901760
        %v7996 = vsub.f32 %v7285, %v7995
        %v7997 = vand.u32 %v7996, 4294901760
        %7998 = vmatprep.subr.mxu0 %v7997
        %v7999 = vand.u32 %v7284, 4294901760
        %v8000 = vsub.f32 %v7284, %v7999
        %v8001 = vand.u32 %v8000, 4294901760
        %8002 = vmatpush1.msra.mxu0 %v8001
        %v8003 = vand.u32 %v7287, 4294901760
        %v8004 = vsub.f32 %v7287, %v8003
        %v8005 = vand.u32 %v8004, 4294901760
        %8006 = vmatprep.subr.mxu0 %v8005
        %v8007 = vand.u32 %v7286, 4294901760
        %v8008 = vsub.f32 %v7286, %v8007
        %v8009 = vand.u32 %v8008, 4294901760
        %8010 = vmatpush1.msra.mxu0 %v8009
        %8011 = vmatprep.subr.mxu0 0.0
        %8012 = vmatpush1.msra.mxu0 0.0
        %8013 = vmatprep.subr.mxu0 0.0
        %8014 = vmatpush1.msra.mxu0 0.0
        %8015 = vmatprep.subr.mxu0 0.0
        %8016 = vmatpush1.msra.mxu0 0.0
        %8017 = vmatprep.subr.mxu0 0.0
        %8018 = vmatpush1.msra.mxu0 0.0
        %8019 = vmatprep.subr.mxu0 0.0
        %8020 = vmatpush1.msra.mxu0 0.0
        %8021 = vmatprep.subr.mxu0 0.0
        %8022 = vmatpush1.msra.mxu0 0.0
        %8023 = vmatprep.subr.mxu0 0.0
        %8024 = vmatpush1.msra.mxu0 0.0
        %8025 = vmatprep.subr.mxu0 0.0
        %8026 = vmatpush1.msra.mxu0 0.0
        %8027 = vmatprep.subr.mxu0 0.0
        %8028 = vmatpush1.msra.mxu0 0.0
        %8029 = vmatprep.subr.mxu0 0.0
        %8030 = vmatpush1.msra.mxu0 0.0
        %8031 = vmatprep.subr.mxu0 0.0
        %8032 = vmatpush1.msra.mxu0 0.0
        %8033 = vmatprep.subr.mxu0 0.0
        %8034 = vmatpush1.msra.mxu0 0.0
        %8035 = vmatprep.subr.mxu0 0.0
        %8036 = vmatpush1.msra.mxu0 0.0
        %8037 = vmatprep.subr.mxu0 0.0
        %8038 = vmatpush1.msra.mxu0 0.0
        %8039 = vmatprep.subr.mxu0 0.0
        %8040 = vmatpush1.msra.mxu0 0.0
        %8041 = vmatprep.subr.mxu0 0.0
        %8042 = vmatpush1.msra.mxu0 0.0
        %8043 = vmatprep.mubr.f32.mxu0 0.0
        %v8044 = vand.u32 %v7255, 4294901760
        %8045 = vmatmul.mubr.f32.gmra.mrb[0].mxu0 %v8044
        %v8046 = vpop.f32.mrb[0].mxu0
        %v8047 = vadd.f32 %v7879, %v8046
        %v8048 = vpop.f32.mrb[0].mxu0
        %v8049 = vadd.f32 %v7881, %v8048
        %8050 = vdwg.mxu0
        %v8051 = vand.u32 %v7257, 4294901760
        %8052 = vmatprep.subr.mxu0 %v8051
        %v8053 = vand.u32 %v7256, 4294901760
        %8054 = vmatpush1.msra.mxu0 %v8053
        %v8055 = vand.u32 %v7259, 4294901760
        %8056 = vmatprep.subr.mxu0 %v8055
        %v8057 = vand.u32 %v7258, 4294901760
        %8058 = vmatpush1.msra.mxu0 %v8057
        %v8059 = vand.u32 %v7261, 4294901760
        %8060 = vmatprep.subr.mxu0 %v8059
        %v8061 = vand.u32 %v7260, 4294901760
        %8062 = vmatpush1.msra.mxu0 %v8061
        %v8063 = vand.u32 %v7263, 4294901760
        %8064 = vmatprep.subr.mxu0 %v8063
        %v8065 = vand.u32 %v7262, 4294901760
        %8066 = vmatpush1.msra.mxu0 %v8065
        %v8067 = vand.u32 %v7265, 4294901760
        %8068 = vmatprep.subr.mxu0 %v8067
        %v8069 = vand.u32 %v7264, 4294901760
        %8070 = vmatpush1.msra.mxu0 %v8069
        %v8071 = vand.u32 %v7267, 4294901760
        %8072 = vmatprep.subr.mxu0 %v8071
        %v8073 = vand.u32 %v7266, 4294901760
        %8074 = vmatpush1.msra.mxu0 %v8073
        %v8075 = vand.u32 %v7269, 4294901760
        %8076 = vmatprep.subr.mxu0 %v8075
        %v8077 = vand.u32 %v7268, 4294901760
        %8078 = vmatpush1.msra.mxu0 %v8077
        %v8079 = vand.u32 %v7271, 4294901760
        %8080 = vmatprep.subr.mxu0 %v8079
        %v8081 = vand.u32 %v7270, 4294901760
        %8082 = vmatpush1.msra.mxu0 %v8081
        %v8083 = vand.u32 %v7273, 4294901760
        %8084 = vmatprep.subr.mxu0 %v8083
        %v8085 = vand.u32 %v7272, 4294901760
        %8086 = vmatpush1.msra.mxu0 %v8085
        %v8087 = vand.u32 %v7275, 4294901760
        %8088 = vmatprep.subr.mxu0 %v8087
        %v8089 = vand.u32 %v7274, 4294901760
        %8090 = vmatpush1.msra.mxu0 %v8089
        %v8091 = vand.u32 %v7277, 4294901760
        %8092 = vmatprep.subr.mxu0 %v8091
        %v8093 = vand.u32 %v7276, 4294901760
        %8094 = vmatpush1.msra.mxu0 %v8093
        %v8095 = vand.u32 %v7279, 4294901760
        %8096 = vmatprep.subr.mxu0 %v8095
        %v8097 = vand.u32 %v7278, 4294901760
        %8098 = vmatpush1.msra.mxu0 %v8097
        %v8099 = vand.u32 %v7281, 4294901760
        %8100 = vmatprep.subr.mxu0 %v8099
        %v8101 = vand.u32 %v7280, 4294901760
        %8102 = vmatpush1.msra.mxu0 %v8101
        %v8103 = vand.u32 %v7283, 4294901760
        %8104 = vmatprep.subr.mxu0 %v8103
        %v8105 = vand.u32 %v7282, 4294901760
        %8106 = vmatpush1.msra.mxu0 %v8105
        %v8107 = vand.u32 %v7285, 4294901760
        %8108 = vmatprep.subr.mxu0 %v8107
        %v8109 = vand.u32 %v7284, 4294901760
        %8110 = vmatpush1.msra.mxu0 %v8109
        %v8111 = vand.u32 %v7287, 4294901760
        %8112 = vmatprep.subr.mxu0 %v8111
        %v8113 = vand.u32 %v7286, 4294901760
        %8114 = vmatpush1.msra.mxu0 %v8113
        %8115 = vmatprep.subr.mxu0 0.0
        %8116 = vmatpush1.msra.mxu0 0.0
        %8117 = vmatprep.subr.mxu0 0.0
        %8118 = vmatpush1.msra.mxu0 0.0
        %8119 = vmatprep.subr.mxu0 0.0
        %8120 = vmatpush1.msra.mxu0 0.0
        %8121 = vmatprep.subr.mxu0 0.0
        %8122 = vmatpush1.msra.mxu0 0.0
        %8123 = vmatprep.subr.mxu0 0.0
        %8124 = vmatpush1.msra.mxu0 0.0
        %8125 = vmatprep.subr.mxu0 0.0
        %8126 = vmatpush1.msra.mxu0 0.0
        %8127 = vmatprep.subr.mxu0 0.0
        %8128 = vmatpush1.msra.mxu0 0.0
        %8129 = vmatprep.subr.mxu0 0.0
        %8130 = vmatpush1.msra.mxu0 0.0
        %8131 = vmatprep.subr.mxu0 0.0
        %8132 = vmatpush1.msra.mxu0 0.0
        %8133 = vmatprep.subr.mxu0 0.0
        %8134 = vmatpush1.msra.mxu0 0.0
        %8135 = vmatprep.subr.mxu0 0.0
        %8136 = vmatpush1.msra.mxu0 0.0
        %8137 = vmatprep.subr.mxu0 0.0
        %8138 = vmatpush1.msra.mxu0 0.0
        %8139 = vmatprep.subr.mxu0 0.0
        %8140 = vmatpush1.msra.mxu0 0.0
        %8141 = vmatprep.subr.mxu0 0.0
        %8142 = vmatpush1.msra.mxu0 0.0
        %8143 = vmatprep.subr.mxu0 0.0
        %8144 = vmatpush1.msra.mxu0 0.0
        %8145 = vmatprep.subr.mxu0 0.0
        %8146 = vmatpush1.msra.mxu0 0.0
        %8147 = vmatprep.mubr.f32.mxu0 0.0
        %v8148 = vand.u32 %v7255, 4294901760
        %8149 = vmatmul.mubr.f32.gmra.mrb[0].mxu0 %v8148
        %v8150 = vpop.f32.mrb[0].mxu0
        %v8151 = vadd.f32 %v8047, %v8150
        %v8152 = vpop.f32.mrb[0].mxu0
        %v8153 = vadd.f32 %v8049, %v8152
        %8154 = vdwg.mxu0
        %v8155 = vmax.f32 %v8151, 0.0
        %v8156 = vmax.f32 %v8153, 0.0
        %v8157 = vld [vmem:[#allocation25] sm:$0xff]
        %v8158 = vld [vmem:[#allocation25 + $0x8] sm:$0xff]
        %v8159 = vld [vmem:[#allocation25 + $0x10] sm:$0xff]
        %v8160 = vld [vmem:[#allocation25 + $0x18] sm:$0xff]
        %v8161 = vld [vmem:[#allocation25 + $0x20] sm:$0xff]
        %v8162 = vld [vmem:[#allocation25 + $0x28] sm:$0xff]
        %v8163 = vld [vmem:[#allocation25 + $0x30] sm:$0xff]
        %v8164 = vld [vmem:[#allocation25 + $0x38] sm:$0xff]
        %v8165 = vld [vmem:[#allocation25 + $0x40] sm:$0xff]
        %v8166 = vld [vmem:[#allocation25 + $0x48] sm:$0xff]
        %v8167 = vld [vmem:[#allocation25 + $0x50] sm:$0xff]
        %v8168 = vld [vmem:[#allocation25 + $0x58] sm:$0xff]
        %v8169 = vld [vmem:[#allocation25 + $0x60] sm:$0xff]
        %v8170 = vld [vmem:[#allocation25 + $0x68] sm:$0xff]
        %v8171 = vld [vmem:[#allocation25 + $0x70] sm:$0xff]
        %v8172 = vld [vmem:[#allocation25 + $0x78] sm:$0xff]
        %v8173 = vld [vmem:[#allocation25 + $0x80] sm:$0xff]
        %v8174 = vld [vmem:[#allocation25 + $0x88] sm:$0xff]
        %v8175 = vld [vmem:[#allocation25 + $0x90] sm:$0xff]
        %v8176 = vld [vmem:[#allocation25 + $0x98] sm:$0xff]
        %v8177 = vld [vmem:[#allocation25 + $0xa0] sm:$0xff]
        %v8178 = vld [vmem:[#allocation25 + $0xa8] sm:$0xff]
        %v8179 = vld [vmem:[#allocation25 + $0xb0] sm:$0xff]
        %v8180 = vld [vmem:[#allocation25 + $0xb8] sm:$0xff]
        %v8181 = vld [vmem:[#allocation25 + $0xc0] sm:$0xff]
        %v8182 = vld [vmem:[#allocation25 + $0xc8] sm:$0xff]
        %v8183 = vld [vmem:[#allocation25 + $0xd0] sm:$0xff]
        %v8184 = vld [vmem:[#allocation25 + $0xd8] sm:$0xff]
        %v8185 = vld [vmem:[#allocation25 + $0xe0] sm:$0xff]
        %v8186 = vld [vmem:[#allocation25 + $0xe8] sm:$0xff]
        %v8187 = vld [vmem:[#allocation25 + $0xf0] sm:$0xff]
        %v8188 = vld [vmem:[#allocation25 + $0xf8] sm:$0xff]
        %v8189 = vld [vmem:[#allocation26] sm:$0x1]
        %v8191 = vlaneseq
        %v8192 = vshrl.u32 %v8191, 7
        %v8193 = vsub.s32 0, %v8192
        %v8194 = vrot.slane %v8189, %v8193
        %8196 = vmatprep.subr.mxu0 0.0
        %v8197 = vand.u32 %v8157, 4294901760
        %8198 = vmatpush1.msra.mxu0 %v8197
        %8199 = vmatprep.subr.mxu0 0.0
        %v8200 = vand.u32 %v8158, 4294901760
        %8201 = vmatpush1.msra.mxu0 %v8200
        %8202 = vmatprep.subr.mxu0 0.0
        %v8203 = vand.u32 %v8159, 4294901760
        %8204 = vmatpush1.msra.mxu0 %v8203
        %8205 = vmatprep.subr.mxu0 0.0
        %v8206 = vand.u32 %v8160, 4294901760
        %8207 = vmatpush1.msra.mxu0 %v8206
        %8208 = vmatprep.subr.mxu0 0.0
        %v8209 = vand.u32 %v8161, 4294901760
        %8210 = vmatpush1.msra.mxu0 %v8209
        %8211 = vmatprep.subr.mxu0 0.0
        %v8212 = vand.u32 %v8162, 4294901760
        %8213 = vmatpush1.msra.mxu0 %v8212
        %8214 = vmatprep.subr.mxu0 0.0
        %v8215 = vand.u32 %v8163, 4294901760
        %8216 = vmatpush1.msra.mxu0 %v8215
        %8217 = vmatprep.subr.mxu0 0.0
        %v8218 = vand.u32 %v8164, 4294901760
        %8219 = vmatpush1.msra.mxu0 %v8218
        %8220 = vmatprep.subr.mxu0 0.0
        %v8221 = vand.u32 %v8165, 4294901760
        %8222 = vmatpush1.msra.mxu0 %v8221
        %8223 = vmatprep.subr.mxu0 0.0
        %v8224 = vand.u32 %v8166, 4294901760
        %8225 = vmatpush1.msra.mxu0 %v8224
        %8226 = vmatprep.subr.mxu0 0.0
        %v8227 = vand.u32 %v8167, 4294901760
        %8228 = vmatpush1.msra.mxu0 %v8227
        %8229 = vmatprep.subr.mxu0 0.0
        %v8230 = vand.u32 %v8168, 4294901760
        %8231 = vmatpush1.msra.mxu0 %v8230
        %8232 = vmatprep.subr.mxu0 0.0
        %v8233 = vand.u32 %v8169, 4294901760
        %8234 = vmatpush1.msra.mxu0 %v8233
        %8235 = vmatprep.subr.mxu0 0.0
        %v8236 = vand.u32 %v8170, 4294901760
        %8237 = vmatpush1.msra.mxu0 %v8236
        %8238 = vmatprep.subr.mxu0 0.0
        %v8239 = vand.u32 %v8171, 4294901760
        %8240 = vmatpush1.msra.mxu0 %v8239
        %8241 = vmatprep.subr.mxu0 0.0
        %v8242 = vand.u32 %v8172, 4294901760
        %8243 = vmatpush1.msra.mxu0 %v8242
        %8244 = vmatprep.subr.mxu0 0.0
        %v8245 = vand.u32 %v8173, 4294901760
        %8246 = vmatpush1.msra.mxu0 %v8245
        %8247 = vmatprep.subr.mxu0 0.0
        %v8248 = vand.u32 %v8174, 4294901760
        %8249 = vmatpush1.msra.mxu0 %v8248
        %8250 = vmatprep.subr.mxu0 0.0
        %v8251 = vand.u32 %v8175, 4294901760
        %8252 = vmatpush1.msra.mxu0 %v8251
        %8253 = vmatprep.subr.mxu0 0.0
        %v8254 = vand.u32 %v8176, 4294901760
        %8255 = vmatpush1.msra.mxu0 %v8254
        %8256 = vmatprep.subr.mxu0 0.0
        %v8257 = vand.u32 %v8177, 4294901760
        %8258 = vmatpush1.msra.mxu0 %v8257
        %8259 = vmatprep.subr.mxu0 0.0
        %v8260 = vand.u32 %v8178, 4294901760
        %8261 = vmatpush1.msra.mxu0 %v8260
        %8262 = vmatprep.subr.mxu0 0.0
        %v8263 = vand.u32 %v8179, 4294901760
        %8264 = vmatpush1.msra.mxu0 %v8263
        %8265 = vmatprep.subr.mxu0 0.0
        %v8266 = vand.u32 %v8180, 4294901760
        %8267 = vmatpush1.msra.mxu0 %v8266
        %8268 = vmatprep.subr.mxu0 0.0
        %v8269 = vand.u32 %v8181, 4294901760
        %8270 = vmatpush1.msra.mxu0 %v8269
        %8271 = vmatprep.subr.mxu0 0.0
        %v8272 = vand.u32 %v8182, 4294901760
        %8273 = vmatpush1.msra.mxu0 %v8272
        %8274 = vmatprep.subr.mxu0 0.0
        %v8275 = vand.u32 %v8183, 4294901760
        %8276 = vmatpush1.msra.mxu0 %v8275
        %8277 = vmatprep.subr.mxu0 0.0
        %v8278 = vand.u32 %v8184, 4294901760
        %8279 = vmatpush1.msra.mxu0 %v8278
        %8280 = vmatprep.subr.mxu0 0.0
        %v8281 = vand.u32 %v8185, 4294901760
        %8282 = vmatpush1.msra.mxu0 %v8281
        %8283 = vmatprep.subr.mxu0 0.0
        %v8284 = vand.u32 %v8186, 4294901760
        %8285 = vmatpush1.msra.mxu0 %v8284
        %8286 = vmatprep.subr.mxu0 0.0
        %v8287 = vand.u32 %v8187, 4294901760
        %8288 = vmatpush1.msra.mxu0 %v8287
        %8289 = vmatprep.subr.mxu0 0.0
        %v8290 = vand.u32 %v8188, 4294901760
        %8291 = vmatpush1.msra.mxu0 %v8290
        %v8292 = vand.u32 %v8156, 4294901760
        %v8293 = vsub.f32 %v8156, %v8292
        %v8294 = vand.u32 %v8293, 4294901760
        %v8295 = vsub.f32 %v8293, %v8294
        %v8296 = vand.u32 %v8295, 4294901760
        %8297 = vmatprep.mubr.f32.mxu0 %v8296
        %v8298 = vand.u32 %v8155, 4294901760
        %v8299 = vsub.f32 %v8155, %v8298
        %v8300 = vand.u32 %v8299, 4294901760
        %v8301 = vsub.f32 %v8299, %v8300
        %v8302 = vand.u32 %v8301, 4294901760
        %8303 = vmatmul.mubr.f32.gmra.mrb[0].mxu0 %v8302
        %v8304 = vpop.f32.mrb[0].mxu0
        %v8305 = vadd.f32 %v8194, %v8304
        %v8306 = vpop.f32.mrb[0].mxu0
        %8307 = vdwg.mxu0
        %8308 = vmatprep.subr.mxu0 0.0
        %v8309 = vand.u32 %v8157, 4294901760
        %v8310 = vsub.f32 %v8157, %v8309
        %v8311 = vand.u32 %v8310, 4294901760
        %v8312 = vsub.f32 %v8310, %v8311
        %v8313 = vand.u32 %v8312, 4294901760
        %8314 = vmatpush1.msra.mxu0 %v8313
        %8315 = vmatprep.subr.mxu0 0.0
        %v8316 = vand.u32 %v8158, 4294901760
        %v8317 = vsub.f32 %v8158, %v8316
        %v8318 = vand.u32 %v8317, 4294901760
        %v8319 = vsub.f32 %v8317, %v8318
        %v8320 = vand.u32 %v8319, 4294901760
        %8321 = vmatpush1.msra.mxu0 %v8320
        %8322 = vmatprep.subr.mxu0 0.0
        %v8323 = vand.u32 %v8159, 4294901760
        %v8324 = vsub.f32 %v8159, %v8323
        %v8325 = vand.u32 %v8324, 4294901760
        %v8326 = vsub.f32 %v8324, %v8325
        %v8327 = vand.u32 %v8326, 4294901760
        %8328 = vmatpush1.msra.mxu0 %v8327
        %8329 = vmatprep.subr.mxu0 0.0
        %v8330 = vand.u32 %v8160, 4294901760
        %v8331 = vsub.f32 %v8160, %v8330
        %v8332 = vand.u32 %v8331, 4294901760
        %v8333 = vsub.f32 %v8331, %v8332
        %v8334 = vand.u32 %v8333, 4294901760
        %8335 = vmatpush1.msra.mxu0 %v8334
        %8336 = vmatprep.subr.mxu0 0.0
        %v8337 = vand.u32 %v8161, 4294901760
        %v8338 = vsub.f32 %v8161, %v8337
        %v8339 = vand.u32 %v8338, 4294901760
        %v8340 = vsub.f32 %v8338, %v8339
        %v8341 = vand.u32 %v8340, 4294901760
        %8342 = vmatpush1.msra.mxu0 %v8341
        %8343 = vmatprep.subr.mxu0 0.0
        %v8344 = vand.u32 %v8162, 4294901760
        %v8345 = vsub.f32 %v8162, %v8344
        %v8346 = vand.u32 %v8345, 4294901760
        %v8347 = vsub.f32 %v8345, %v8346
        %v8348 = vand.u32 %v8347, 4294901760
        %8349 = vmatpush1.msra.mxu0 %v8348
        %8350 = vmatprep.subr.mxu0 0.0
        %v8351 = vand.u32 %v8163, 4294901760
        %v8352 = vsub.f32 %v8163, %v8351
        %v8353 = vand.u32 %v8352, 4294901760
        %v8354 = vsub.f32 %v8352, %v8353
        %v8355 = vand.u32 %v8354, 4294901760
        %8356 = vmatpush1.msra.mxu0 %v8355
        %8357 = vmatprep.subr.mxu0 0.0
        %v8358 = vand.u32 %v8164, 4294901760
        %v8359 = vsub.f32 %v8164, %v8358
        %v8360 = vand.u32 %v8359, 4294901760
        %v8361 = vsub.f32 %v8359, %v8360
        %v8362 = vand.u32 %v8361, 4294901760
        %8363 = vmatpush1.msra.mxu0 %v8362
        %8364 = vmatprep.subr.mxu0 0.0
        %v8365 = vand.u32 %v8165, 4294901760
        %v8366 = vsub.f32 %v8165, %v8365
        %v8367 = vand.u32 %v8366, 4294901760
        %v8368 = vsub.f32 %v8366, %v8367
        %v8369 = vand.u32 %v8368, 4294901760
        %8370 = vmatpush1.msra.mxu0 %v8369
        %8371 = vmatprep.subr.mxu0 0.0
        %v8372 = vand.u32 %v8166, 4294901760
        %v8373 = vsub.f32 %v8166, %v8372
        %v8374 = vand.u32 %v8373, 4294901760
        %v8375 = vsub.f32 %v8373, %v8374
        %v8376 = vand.u32 %v8375, 4294901760
        %8377 = vmatpush1.msra.mxu0 %v8376
        %8378 = vmatprep.subr.mxu0 0.0
        %v8379 = vand.u32 %v8167, 4294901760
        %v8380 = vsub.f32 %v8167, %v8379
        %v8381 = vand.u32 %v8380, 4294901760
        %v8382 = vsub.f32 %v8380, %v8381
        %v8383 = vand.u32 %v8382, 4294901760
        %8384 = vmatpush1.msra.mxu0 %v8383
        %8385 = vmatprep.subr.mxu0 0.0
        %v8386 = vand.u32 %v8168, 4294901760
        %v8387 = vsub.f32 %v8168, %v8386
        %v8388 = vand.u32 %v8387, 4294901760
        %v8389 = vsub.f32 %v8387, %v8388
        %v8390 = vand.u32 %v8389, 4294901760
        %8391 = vmatpush1.msra.mxu0 %v8390
        %8392 = vmatprep.subr.mxu0 0.0
        %v8393 = vand.u32 %v8169, 4294901760
        %v8394 = vsub.f32 %v8169, %v8393
        %v8395 = vand.u32 %v8394, 4294901760
        %v8396 = vsub.f32 %v8394, %v8395
        %v8397 = vand.u32 %v8396, 4294901760
        %8398 = vmatpush1.msra.mxu0 %v8397
        %8399 = vmatprep.subr.mxu0 0.0
        %v8400 = vand.u32 %v8170, 4294901760
        %v8401 = vsub.f32 %v8170, %v8400
        %v8402 = vand.u32 %v8401, 4294901760
        %v8403 = vsub.f32 %v8401, %v8402
        %v8404 = vand.u32 %v8403, 4294901760
        %8405 = vmatpush1.msra.mxu0 %v8404
        %8406 = vmatprep.subr.mxu0 0.0
        %v8407 = vand.u32 %v8171, 4294901760
        %v8408 = vsub.f32 %v8171, %v8407
        %v8409 = vand.u32 %v8408, 4294901760
        %v8410 = vsub.f32 %v8408, %v8409
        %v8411 = vand.u32 %v8410, 4294901760
        %8412 = vmatpush1.msra.mxu0 %v8411
        %8413 = vmatprep.subr.mxu0 0.0
        %v8414 = vand.u32 %v8172, 4294901760
        %v8415 = vsub.f32 %v8172, %v8414
        %v8416 = vand.u32 %v8415, 4294901760
        %v8417 = vsub.f32 %v8415, %v8416
        %v8418 = vand.u32 %v8417, 4294901760
        %8419 = vmatpush1.msra.mxu0 %v8418
        %8420 = vmatprep.subr.mxu0 0.0
        %v8421 = vand.u32 %v8173, 4294901760
        %v8422 = vsub.f32 %v8173, %v8421
        %v8423 = vand.u32 %v8422, 4294901760
        %v8424 = vsub.f32 %v8422, %v8423
        %v8425 = vand.u32 %v8424, 4294901760
        %8426 = vmatpush1.msra.mxu0 %v8425
        %8427 = vmatprep.subr.mxu0 0.0
        %v8428 = vand.u32 %v8174, 4294901760
        %v8429 = vsub.f32 %v8174, %v8428
        %v8430 = vand.u32 %v8429, 4294901760
        %v8431 = vsub.f32 %v8429, %v8430
        %v8432 = vand.u32 %v8431, 4294901760
        %8433 = vmatpush1.msra.mxu0 %v8432
        %8434 = vmatprep.subr.mxu0 0.0
        %v8435 = vand.u32 %v8175, 4294901760
        %v8436 = vsub.f32 %v8175, %v8435
        %v8437 = vand.u32 %v8436, 4294901760
        %v8438 = vsub.f32 %v8436, %v8437
        %v8439 = vand.u32 %v8438, 4294901760
        %8440 = vmatpush1.msra.mxu0 %v8439
        %8441 = vmatprep.subr.mxu0 0.0
        %v8442 = vand.u32 %v8176, 4294901760
        %v8443 = vsub.f32 %v8176, %v8442
        %v8444 = vand.u32 %v8443, 4294901760
        %v8445 = vsub.f32 %v8443, %v8444
        %v8446 = vand.u32 %v8445, 4294901760
        %8447 = vmatpush1.msra.mxu0 %v8446
        %8448 = vmatprep.subr.mxu0 0.0
        %v8449 = vand.u32 %v8177, 4294901760
        %v8450 = vsub.f32 %v8177, %v8449
        %v8451 = vand.u32 %v8450, 4294901760
        %v8452 = vsub.f32 %v8450, %v8451
        %v8453 = vand.u32 %v8452, 4294901760
        %8454 = vmatpush1.msra.mxu0 %v8453
        %8455 = vmatprep.subr.mxu0 0.0
        %v8456 = vand.u32 %v8178, 4294901760
        %v8457 = vsub.f32 %v8178, %v8456
        %v8458 = vand.u32 %v8457, 4294901760
        %v8459 = vsub.f32 %v8457, %v8458
        %v8460 = vand.u32 %v8459, 4294901760
        %8461 = vmatpush1.msra.mxu0 %v8460
        %8462 = vmatprep.subr.mxu0 0.0
        %v8463 = vand.u32 %v8179, 4294901760
        %v8464 = vsub.f32 %v8179, %v8463
        %v8465 = vand.u32 %v8464, 4294901760
        %v8466 = vsub.f32 %v8464, %v8465
        %v8467 = vand.u32 %v8466, 4294901760
        %8468 = vmatpush1.msra.mxu0 %v8467
        %8469 = vmatprep.subr.mxu0 0.0
        %v8470 = vand.u32 %v8180, 4294901760
        %v8471 = vsub.f32 %v8180, %v8470
        %v8472 = vand.u32 %v8471, 4294901760
        %v8473 = vsub.f32 %v8471, %v8472
        %v8474 = vand.u32 %v8473, 4294901760
        %8475 = vmatpush1.msra.mxu0 %v8474
        %8476 = vmatprep.subr.mxu0 0.0
        %v8477 = vand.u32 %v8181, 4294901760
        %v8478 = vsub.f32 %v8181, %v8477
        %v8479 = vand.u32 %v8478, 4294901760
        %v8480 = vsub.f32 %v8478, %v8479
        %v8481 = vand.u32 %v8480, 4294901760
        %8482 = vmatpush1.msra.mxu0 %v8481
        %8483 = vmatprep.subr.mxu0 0.0
        %v8484 = vand.u32 %v8182, 4294901760
        %v8485 = vsub.f32 %v8182, %v8484
        %v8486 = vand.u32 %v8485, 4294901760
        %v8487 = vsub.f32 %v8485, %v8486
        %v8488 = vand.u32 %v8487, 4294901760
        %8489 = vmatpush1.msra.mxu0 %v8488
        %8490 = vmatprep.subr.mxu0 0.0
        %v8491 = vand.u32 %v8183, 4294901760
        %v8492 = vsub.f32 %v8183, %v8491
        %v8493 = vand.u32 %v8492, 4294901760
        %v8494 = vsub.f32 %v8492, %v8493
        %v8495 = vand.u32 %v8494, 4294901760
        %8496 = vmatpush1.msra.mxu0 %v8495
        %8497 = vmatprep.subr.mxu0 0.0
        %v8498 = vand.u32 %v8184, 4294901760
        %v8499 = vsub.f32 %v8184, %v8498
        %v8500 = vand.u32 %v8499, 4294901760
        %v8501 = vsub.f32 %v8499, %v8500
        %v8502 = vand.u32 %v8501, 4294901760
        %8503 = vmatpush1.msra.mxu0 %v8502
        %8504 = vmatprep.subr.mxu0 0.0
        %v8505 = vand.u32 %v8185, 4294901760
        %v8506 = vsub.f32 %v8185, %v8505
        %v8507 = vand.u32 %v8506, 4294901760
        %v8508 = vsub.f32 %v8506, %v8507
        %v8509 = vand.u32 %v8508, 4294901760
        %8510 = vmatpush1.msra.mxu0 %v8509
        %8511 = vmatprep.subr.mxu0 0.0
        %v8512 = vand.u32 %v8186, 4294901760
        %v8513 = vsub.f32 %v8186, %v8512
        %v8514 = vand.u32 %v8513, 4294901760
        %v8515 = vsub.f32 %v8513, %v8514
        %v8516 = vand.u32 %v8515, 4294901760
        %8517 = vmatpush1.msra.mxu0 %v8516
        %8518 = vmatprep.subr.mxu0 0.0
        %v8519 = vand.u32 %v8187, 4294901760
        %v8520 = vsub.f32 %v8187, %v8519
        %v8521 = vand.u32 %v8520, 4294901760
        %v8522 = vsub.f32 %v8520, %v8521
        %v8523 = vand.u32 %v8522, 4294901760
        %8524 = vmatpush1.msra.mxu0 %v8523
        %8525 = vmatprep.subr.mxu0 0.0
        %v8526 = vand.u32 %v8188, 4294901760
        %v8527 = vsub.f32 %v8188, %v8526
        %v8528 = vand.u32 %v8527, 4294901760
        %v8529 = vsub.f32 %v8527, %v8528
        %v8530 = vand.u32 %v8529, 4294901760
        %8531 = vmatpush1.msra.mxu0 %v8530
        %v8532 = vand.u32 %v8156, 4294901760
        %8533 = vmatprep.mubr.f32.mxu0 %v8532
        %v8534 = vand.u32 %v8155, 4294901760
        %8535 = vmatmul.mubr.f32.gmra.mrb[0].mxu0 %v8534
        %v8536 = vpop.f32.mrb[0].mxu0
        %v8537 = vadd.f32 %v8305, %v8536
        %v8538 = vpop.f32.mrb[0].mxu0
        %8539 = vdwg.mxu0
        %8540 = vmatprep.subr.mxu0 0.0
        %v8541 = vand.u32 %v8157, 4294901760
        %v8542 = vsub.f32 %v8157, %v8541
        %8543 = vmatpush1.msra.mxu0 %v8542
        %8544 = vmatprep.subr.mxu0 0.0
        %v8545 = vand.u32 %v8158, 4294901760
        %v8546 = vsub.f32 %v8158, %v8545
        %8547 = vmatpush1.msra.mxu0 %v8546
        %8548 = vmatprep.subr.mxu0 0.0
        %v8549 = vand.u32 %v8159, 4294901760
        %v8550 = vsub.f32 %v8159, %v8549
        %8551 = vmatpush1.msra.mxu0 %v8550
        %8552 = vmatprep.subr.mxu0 0.0
        %v8553 = vand.u32 %v8160, 4294901760
        %v8554 = vsub.f32 %v8160, %v8553
        %8555 = vmatpush1.msra.mxu0 %v8554
        %8556 = vmatprep.subr.mxu0 0.0
        %v8557 = vand.u32 %v8161, 4294901760
        %v8558 = vsub.f32 %v8161, %v8557
        %8559 = vmatpush1.msra.mxu0 %v8558
        %8560 = vmatprep.subr.mxu0 0.0
        %v8561 = vand.u32 %v8162, 4294901760
        %v8562 = vsub.f32 %v8162, %v8561
        %8563 = vmatpush1.msra.mxu0 %v8562
        %8564 = vmatprep.subr.mxu0 0.0
        %v8565 = vand.u32 %v8163, 4294901760
        %v8566 = vsub.f32 %v8163, %v8565
        %8567 = vmatpush1.msra.mxu0 %v8566
        %8568 = vmatprep.subr.mxu0 0.0
        %v8569 = vand.u32 %v8164, 4294901760
        %v8570 = vsub.f32 %v8164, %v8569
        %8571 = vmatpush1.msra.mxu0 %v8570
        %8572 = vmatprep.subr.mxu0 0.0
        %v8573 = vand.u32 %v8165, 4294901760
        %v8574 = vsub.f32 %v8165, %v8573
        %8575 = vmatpush1.msra.mxu0 %v8574
        %8576 = vmatprep.subr.mxu0 0.0
        %v8577 = vand.u32 %v8166, 4294901760
        %v8578 = vsub.f32 %v8166, %v8577
        %8579 = vmatpush1.msra.mxu0 %v8578
        %8580 = vmatprep.subr.mxu0 0.0
        %v8581 = vand.u32 %v8167, 4294901760
        %v8582 = vsub.f32 %v8167, %v8581
        %8583 = vmatpush1.msra.mxu0 %v8582
        %8584 = vmatprep.subr.mxu0 0.0
        %v8585 = vand.u32 %v8168, 4294901760
        %v8586 = vsub.f32 %v8168, %v8585
        %8587 = vmatpush1.msra.mxu0 %v8586
        %8588 = vmatprep.subr.mxu0 0.0
        %v8589 = vand.u32 %v8169, 4294901760
        %v8590 = vsub.f32 %v8169, %v8589
        %8591 = vmatpush1.msra.mxu0 %v8590
        %8592 = vmatprep.subr.mxu0 0.0
        %v8593 = vand.u32 %v8170, 4294901760
        %v8594 = vsub.f32 %v8170, %v8593
        %8595 = vmatpush1.msra.mxu0 %v8594
        %8596 = vmatprep.subr.mxu0 0.0
        %v8597 = vand.u32 %v8171, 4294901760
        %v8598 = vsub.f32 %v8171, %v8597
        %8599 = vmatpush1.msra.mxu0 %v8598
        %8600 = vmatprep.subr.mxu0 0.0
        %v8601 = vand.u32 %v8172, 4294901760
        %v8602 = vsub.f32 %v8172, %v8601
        %8603 = vmatpush1.msra.mxu0 %v8602
        %8604 = vmatprep.subr.mxu0 0.0
        %v8605 = vand.u32 %v8173, 4294901760
        %v8606 = vsub.f32 %v8173, %v8605
        %8607 = vmatpush1.msra.mxu0 %v8606
        %8608 = vmatprep.subr.mxu0 0.0
        %v8609 = vand.u32 %v8174, 4294901760
        %v8610 = vsub.f32 %v8174, %v8609
        %8611 = vmatpush1.msra.mxu0 %v8610
        %8612 = vmatprep.subr.mxu0 0.0
        %v8613 = vand.u32 %v8175, 4294901760
        %v8614 = vsub.f32 %v8175, %v8613
        %8615 = vmatpush1.msra.mxu0 %v8614
        %8616 = vmatprep.subr.mxu0 0.0
        %v8617 = vand.u32 %v8176, 4294901760
        %v8618 = vsub.f32 %v8176, %v8617
        %8619 = vmatpush1.msra.mxu0 %v8618
        %8620 = vmatprep.subr.mxu0 0.0
        %v8621 = vand.u32 %v8177, 4294901760
        %v8622 = vsub.f32 %v8177, %v8621
        %8623 = vmatpush1.msra.mxu0 %v8622
        %8624 = vmatprep.subr.mxu0 0.0
        %v8625 = vand.u32 %v8178, 4294901760
        %v8626 = vsub.f32 %v8178, %v8625
        %8627 = vmatpush1.msra.mxu0 %v8626
        %8628 = vmatprep.subr.mxu0 0.0
        %v8629 = vand.u32 %v8179, 4294901760
        %v8630 = vsub.f32 %v8179, %v8629
        %8631 = vmatpush1.msra.mxu0 %v8630
        %8632 = vmatprep.subr.mxu0 0.0
        %v8633 = vand.u32 %v8180, 4294901760
        %v8634 = vsub.f32 %v8180, %v8633
        %8635 = vmatpush1.msra.mxu0 %v8634
        %8636 = vmatprep.subr.mxu0 0.0
        %v8637 = vand.u32 %v8181, 4294901760
        %v8638 = vsub.f32 %v8181, %v8637
        %8639 = vmatpush1.msra.mxu0 %v8638
        %8640 = vmatprep.subr.mxu0 0.0
        %v8641 = vand.u32 %v8182, 4294901760
        %v8642 = vsub.f32 %v8182, %v8641
        %8643 = vmatpush1.msra.mxu0 %v8642
        %8644 = vmatprep.subr.mxu0 0.0
        %v8645 = vand.u32 %v8183, 4294901760
        %v8646 = vsub.f32 %v8183, %v8645
        %8647 = vmatpush1.msra.mxu0 %v8646
        %8648 = vmatprep.subr.mxu0 0.0
        %v8649 = vand.u32 %v8184, 4294901760
        %v8650 = vsub.f32 %v8184, %v8649
        %8651 = vmatpush1.msra.mxu0 %v8650
        %8652 = vmatprep.subr.mxu0 0.0
        %v8653 = vand.u32 %v8185, 4294901760
        %v8654 = vsub.f32 %v8185, %v8653
        %8655 = vmatpush1.msra.mxu0 %v8654
        %8656 = vmatprep.subr.mxu0 0.0
        %v8657 = vand.u32 %v8186, 4294901760
        %v8658 = vsub.f32 %v8186, %v8657
        %8659 = vmatpush1.msra.mxu0 %v8658
        %8660 = vmatprep.subr.mxu0 0.0
        %v8661 = vand.u32 %v8187, 4294901760
        %v8662 = vsub.f32 %v8187, %v8661
        %8663 = vmatpush1.msra.mxu0 %v8662
        %8664 = vmatprep.subr.mxu0 0.0
        %v8665 = vand.u32 %v8188, 4294901760
        %v8666 = vsub.f32 %v8188, %v8665
        %8667 = vmatpush1.msra.mxu0 %v8666
        %v8668 = vand.u32 %v8156, 4294901760
        %v8669 = vsub.f32 %v8156, %v8668
        %8670 = vmatprep.mubr.f32.mxu0 %v8669
        %v8671 = vand.u32 %v8155, 4294901760
        %v8672 = vsub.f32 %v8155, %v8671
        %8673 = vmatmul.mubr.f32.gmra.mrb[0].mxu0 %v8672
        %v8674 = vpop.f32.mrb[0].mxu0
        %v8675 = vadd.f32 %v8537, %v8674
        %v8676 = vpop.f32.mrb[0].mxu0
        %8677 = vdwg.mxu0
        %8678 = vmatprep.subr.mxu0 0.0
        %v8679 = vand.u32 %v8157, 4294901760
        %8680 = vmatpush1.msra.mxu0 %v8679
        %8681 = vmatprep.subr.mxu0 0.0
        %v8682 = vand.u32 %v8158, 4294901760
        %8683 = vmatpush1.msra.mxu0 %v8682
        %8684 = vmatprep.subr.mxu0 0.0
        %v8685 = vand.u32 %v8159, 4294901760
        %8686 = vmatpush1.msra.mxu0 %v8685
        %8687 = vmatprep.subr.mxu0 0.0
        %v8688 = vand.u32 %v8160, 4294901760
        %8689 = vmatpush1.msra.mxu0 %v8688
        %8690 = vmatprep.subr.mxu0 0.0
        %v8691 = vand.u32 %v8161, 4294901760
        %8692 = vmatpush1.msra.mxu0 %v8691
        %8693 = vmatprep.subr.mxu0 0.0
        %v8694 = vand.u32 %v8162, 4294901760
        %8695 = vmatpush1.msra.mxu0 %v8694
        %8696 = vmatprep.subr.mxu0 0.0
        %v8697 = vand.u32 %v8163, 4294901760
        %8698 = vmatpush1.msra.mxu0 %v8697
        %8699 = vmatprep.subr.mxu0 0.0
        %v8700 = vand.u32 %v8164, 4294901760
        %8701 = vmatpush1.msra.mxu0 %v8700
        %8702 = vmatprep.subr.mxu0 0.0
        %v8703 = vand.u32 %v8165, 4294901760
        %8704 = vmatpush1.msra.mxu0 %v8703
        %8705 = vmatprep.subr.mxu0 0.0
        %v8706 = vand.u32 %v8166, 4294901760
        %8707 = vmatpush1.msra.mxu0 %v8706
        %8708 = vmatprep.subr.mxu0 0.0
        %v8709 = vand.u32 %v8167, 4294901760
        %8710 = vmatpush1.msra.mxu0 %v8709
        %8711 = vmatprep.subr.mxu0 0.0
        %v8712 = vand.u32 %v8168, 4294901760
        %8713 = vmatpush1.msra.mxu0 %v8712
        %8714 = vmatprep.subr.mxu0 0.0
        %v8715 = vand.u32 %v8169, 4294901760
        %8716 = vmatpush1.msra.mxu0 %v8715
        %8717 = vmatprep.subr.mxu0 0.0
        %v8718 = vand.u32 %v8170, 4294901760
        %8719 = vmatpush1.msra.mxu0 %v8718
        %8720 = vmatprep.subr.mxu0 0.0
        %v8721 = vand.u32 %v8171, 4294901760
        %8722 = vmatpush1.msra.mxu0 %v8721
        %8723 = vmatprep.subr.mxu0 0.0
        %v8724 = vand.u32 %v8172, 4294901760
        %8725 = vmatpush1.msra.mxu0 %v8724
        %8726 = vmatprep.subr.mxu0 0.0
        %v8727 = vand.u32 %v8173, 4294901760
        %8728 = vmatpush1.msra.mxu0 %v8727
        %8729 = vmatprep.subr.mxu0 0.0
        %v8730 = vand.u32 %v8174, 4294901760
        %8731 = vmatpush1.msra.mxu0 %v8730
        %8732 = vmatprep.subr.mxu0 0.0
        %v8733 = vand.u32 %v8175, 4294901760
        %8734 = vmatpush1.msra.mxu0 %v8733
        %8735 = vmatprep.subr.mxu0 0.0
        %v8736 = vand.u32 %v8176, 4294901760
        %8737 = vmatpush1.msra.mxu0 %v8736
        %8738 = vmatprep.subr.mxu0 0.0
        %v8739 = vand.u32 %v8177, 4294901760
        %8740 = vmatpush1.msra.mxu0 %v8739
        %8741 = vmatprep.subr.mxu0 0.0
        %v8742 = vand.u32 %v8178, 4294901760
        %8743 = vmatpush1.msra.mxu0 %v8742
        %8744 = vmatprep.subr.mxu0 0.0
        %v8745 = vand.u32 %v8179, 4294901760
        %8746 = vmatpush1.msra.mxu0 %v8745
        %8747 = vmatprep.subr.mxu0 0.0
        %v8748 = vand.u32 %v8180, 4294901760
        %8749 = vmatpush1.msra.mxu0 %v8748
        %8750 = vmatprep.subr.mxu0 0.0
        %v8751 = vand.u32 %v8181, 4294901760
        %8752 = vmatpush1.msra.mxu0 %v8751
        %8753 = vmatprep.subr.mxu0 0.0
        %v8754 = vand.u32 %v8182, 4294901760
        %8755 = vmatpush1.msra.mxu0 %v8754
        %8756 = vmatprep.subr.mxu0 0.0
        %v8757 = vand.u32 %v8183, 4294901760
        %8758 = vmatpush1.msra.mxu0 %v8757
        %8759 = vmatprep.subr.mxu0 0.0
        %v8760 = vand.u32 %v8184, 4294901760
        %8761 = vmatpush1.msra.mxu0 %v8760
        %8762 = vmatprep.subr.mxu0 0.0
        %v8763 = vand.u32 %v8185, 4294901760
        %8764 = vmatpush1.msra.mxu0 %v8763
        %8765 = vmatprep.subr.mxu0 0.0
        %v8766 = vand.u32 %v8186, 4294901760
        %8767 = vmatpush1.msra.mxu0 %v8766
        %8768 = vmatprep.subr.mxu0 0.0
        %v8769 = vand.u32 %v8187, 4294901760
        %8770 = vmatpush1.msra.mxu0 %v8769
        %8771 = vmatprep.subr.mxu0 0.0
        %v8772 = vand.u32 %v8188, 4294901760
        %8773 = vmatpush1.msra.mxu0 %v8772
        %v8774 = vand.u32 %v8156, 4294901760
        %v8775 = vsub.f32 %v8156, %v8774
        %v8776 = vand.u32 %v8775, 4294901760
        %8777 = vmatprep.mubr.f32.mxu0 %v8776
        %v8778 = vand.u32 %v8155, 4294901760
        %v8779 = vsub.f32 %v8155, %v8778
        %v8780 = vand.u32 %v8779, 4294901760
        %8781 = vmatmul.mubr.f32.gmra.mrb[0].mxu0 %v8780
        %v8782 = vpop.f32.mrb[0].mxu0
        %v8783 = vadd.f32 %v8675, %v8782
        %v8784 = vpop.f32.mrb[0].mxu0
        %8785 = vdwg.mxu0
        %8786 = vmatprep.subr.mxu0 0.0
        %v8787 = vand.u32 %v8157, 4294901760
        %v8788 = vsub.f32 %v8157, %v8787
        %v8789 = vand.u32 %v8788, 4294901760
        %8790 = vmatpush1.msra.mxu0 %v8789
        %8791 = vmatprep.subr.mxu0 0.0
        %v8792 = vand.u32 %v8158, 4294901760
        %v8793 = vsub.f32 %v8158, %v8792
        %v8794 = vand.u32 %v8793, 4294901760
        %8795 = vmatpush1.msra.mxu0 %v8794
        %8796 = vmatprep.subr.mxu0 0.0
        %v8797 = vand.u32 %v8159, 4294901760
        %v8798 = vsub.f32 %v8159, %v8797
        %v8799 = vand.u32 %v8798, 4294901760
        %8800 = vmatpush1.msra.mxu0 %v8799
        %8801 = vmatprep.subr.mxu0 0.0
        %v8802 = vand.u32 %v8160, 4294901760
        %v8803 = vsub.f32 %v8160, %v8802
        %v8804 = vand.u32 %v8803, 4294901760
        %8805 = vmatpush1.msra.mxu0 %v8804
        %8806 = vmatprep.subr.mxu0 0.0
        %v8807 = vand.u32 %v8161, 4294901760
        %v8808 = vsub.f32 %v8161, %v8807
        %v8809 = vand.u32 %v8808, 4294901760
        %8810 = vmatpush1.msra.mxu0 %v8809
        %8811 = vmatprep.subr.mxu0 0.0
        %v8812 = vand.u32 %v8162, 4294901760
        %v8813 = vsub.f32 %v8162, %v8812
        %v8814 = vand.u32 %v8813, 4294901760
        %8815 = vmatpush1.msra.mxu0 %v8814
        %8816 = vmatprep.subr.mxu0 0.0
        %v8817 = vand.u32 %v8163, 4294901760
        %v8818 = vsub.f32 %v8163, %v8817
        %v8819 = vand.u32 %v8818, 4294901760
        %8820 = vmatpush1.msra.mxu0 %v8819
        %8821 = vmatprep.subr.mxu0 0.0
        %v8822 = vand.u32 %v8164, 4294901760
        %v8823 = vsub.f32 %v8164, %v8822
        %v8824 = vand.u32 %v8823, 4294901760
        %8825 = vmatpush1.msra.mxu0 %v8824
        %8826 = vmatprep.subr.mxu0 0.0
        %v8827 = vand.u32 %v8165, 4294901760
        %v8828 = vsub.f32 %v8165, %v8827
        %v8829 = vand.u32 %v8828, 4294901760
        %8830 = vmatpush1.msra.mxu0 %v8829
        %8831 = vmatprep.subr.mxu0 0.0
        %v8832 = vand.u32 %v8166, 4294901760
        %v8833 = vsub.f32 %v8166, %v8832
        %v8834 = vand.u32 %v8833, 4294901760
        %8835 = vmatpush1.msra.mxu0 %v8834
        %8836 = vmatprep.subr.mxu0 0.0
        %v8837 = vand.u32 %v8167, 4294901760
        %v8838 = vsub.f32 %v8167, %v8837
        %v8839 = vand.u32 %v8838, 4294901760
        %8840 = vmatpush1.msra.mxu0 %v8839
        %8841 = vmatprep.subr.mxu0 0.0
        %v8842 = vand.u32 %v8168, 4294901760
        %v8843 = vsub.f32 %v8168, %v8842
        %v8844 = vand.u32 %v8843, 4294901760
        %8845 = vmatpush1.msra.mxu0 %v8844
        %8846 = vmatprep.subr.mxu0 0.0
        %v8847 = vand.u32 %v8169, 4294901760
        %v8848 = vsub.f32 %v8169, %v8847
        %v8849 = vand.u32 %v8848, 4294901760
        %8850 = vmatpush1.msra.mxu0 %v8849
        %8851 = vmatprep.subr.mxu0 0.0
        %v8852 = vand.u32 %v8170, 4294901760
        %v8853 = vsub.f32 %v8170, %v8852
        %v8854 = vand.u32 %v8853, 4294901760
        %8855 = vmatpush1.msra.mxu0 %v8854
        %8856 = vmatprep.subr.mxu0 0.0
        %v8857 = vand.u32 %v8171, 4294901760
        %v8858 = vsub.f32 %v8171, %v8857
        %v8859 = vand.u32 %v8858, 4294901760
        %8860 = vmatpush1.msra.mxu0 %v8859
        %8861 = vmatprep.subr.mxu0 0.0
        %v8862 = vand.u32 %v8172, 4294901760
        %v8863 = vsub.f32 %v8172, %v8862
        %v8864 = vand.u32 %v8863, 4294901760
        %8865 = vmatpush1.msra.mxu0 %v8864
        %8866 = vmatprep.subr.mxu0 0.0
        %v8867 = vand.u32 %v8173, 4294901760
        %v8868 = vsub.f32 %v8173, %v8867
        %v8869 = vand.u32 %v8868, 4294901760
        %8870 = vmatpush1.msra.mxu0 %v8869
        %8871 = vmatprep.subr.mxu0 0.0
        %v8872 = vand.u32 %v8174, 4294901760
        %v8873 = vsub.f32 %v8174, %v8872
        %v8874 = vand.u32 %v8873, 4294901760
        %8875 = vmatpush1.msra.mxu0 %v8874
        %8876 = vmatprep.subr.mxu0 0.0
        %v8877 = vand.u32 %v8175, 4294901760
        %v8878 = vsub.f32 %v8175, %v8877
        %v8879 = vand.u32 %v8878, 4294901760
        %8880 = vmatpush1.msra.mxu0 %v8879
        %8881 = vmatprep.subr.mxu0 0.0
        %v8882 = vand.u32 %v8176, 4294901760
        %v8883 = vsub.f32 %v8176, %v8882
        %v8884 = vand.u32 %v8883, 4294901760
        %8885 = vmatpush1.msra.mxu0 %v8884
        %8886 = vmatprep.subr.mxu0 0.0
        %v8887 = vand.u32 %v8177, 4294901760
        %v8888 = vsub.f32 %v8177, %v8887
        %v8889 = vand.u32 %v8888, 4294901760
        %8890 = vmatpush1.msra.mxu0 %v8889
        %8891 = vmatprep.subr.mxu0 0.0
        %v8892 = vand.u32 %v8178, 4294901760
        %v8893 = vsub.f32 %v8178, %v8892
        %v8894 = vand.u32 %v8893, 4294901760
        %8895 = vmatpush1.msra.mxu0 %v8894
        %8896 = vmatprep.subr.mxu0 0.0
        %v8897 = vand.u32 %v8179, 4294901760
        %v8898 = vsub.f32 %v8179, %v8897
        %v8899 = vand.u32 %v8898, 4294901760
        %8900 = vmatpush1.msra.mxu0 %v8899
        %8901 = vmatprep.subr.mxu0 0.0
        %v8902 = vand.u32 %v8180, 4294901760
        %v8903 = vsub.f32 %v8180, %v8902
        %v8904 = vand.u32 %v8903, 4294901760
        %8905 = vmatpush1.msra.mxu0 %v8904
        %8906 = vmatprep.subr.mxu0 0.0
        %v8907 = vand.u32 %v8181, 4294901760
        %v8908 = vsub.f32 %v8181, %v8907
        %v8909 = vand.u32 %v8908, 4294901760
        %8910 = vmatpush1.msra.mxu0 %v8909
        %8911 = vmatprep.subr.mxu0 0.0
        %v8912 = vand.u32 %v8182, 4294901760
        %v8913 = vsub.f32 %v8182, %v8912
        %v8914 = vand.u32 %v8913, 4294901760
        %8915 = vmatpush1.msra.mxu0 %v8914
        %8916 = vmatprep.subr.mxu0 0.0
        %v8917 = vand.u32 %v8183, 4294901760
        %v8918 = vsub.f32 %v8183, %v8917
        %v8919 = vand.u32 %v8918, 4294901760
        %8920 = vmatpush1.msra.mxu0 %v8919
        %8921 = vmatprep.subr.mxu0 0.0
        %v8922 = vand.u32 %v8184, 4294901760
        %v8923 = vsub.f32 %v8184, %v8922
        %v8924 = vand.u32 %v8923, 4294901760
        %8925 = vmatpush1.msra.mxu0 %v8924
        %8926 = vmatprep.subr.mxu0 0.0
        %v8927 = vand.u32 %v8185, 4294901760
        %v8928 = vsub.f32 %v8185, %v8927
        %v8929 = vand.u32 %v8928, 4294901760
        %8930 = vmatpush1.msra.mxu0 %v8929
        %8931 = vmatprep.subr.mxu0 0.0
        %v8932 = vand.u32 %v8186, 4294901760
        %v8933 = vsub.f32 %v8186, %v8932
        %v8934 = vand.u32 %v8933, 4294901760
        %8935 = vmatpush1.msra.mxu0 %v8934
        %8936 = vmatprep.subr.mxu0 0.0
        %v8937 = vand.u32 %v8187, 4294901760
        %v8938 = vsub.f32 %v8187, %v8937
        %v8939 = vand.u32 %v8938, 4294901760
        %8940 = vmatpush1.msra.mxu0 %v8939
        %8941 = vmatprep.subr.mxu0 0.0
        %v8942 = vand.u32 %v8188, 4294901760
        %v8943 = vsub.f32 %v8188, %v8942
        %v8944 = vand.u32 %v8943, 4294901760
        %8945 = vmatpush1.msra.mxu0 %v8944
        %v8946 = vand.u32 %v8156, 4294901760
        %8947 = vmatprep.mubr.f32.mxu0 %v8946
        %v8948 = vand.u32 %v8155, 4294901760
        %8949 = vmatmul.mubr.f32.gmra.mrb[0].mxu0 %v8948
        %v8950 = vpop.f32.mrb[0].mxu0
        %v8951 = vadd.f32 %v8783, %v8950
        %v8952 = vpop.f32.mrb[0].mxu0
        %8953 = vdwg.mxu0
        %8954 = vmatprep.subr.mxu0 0.0
        %v8955 = vand.u32 %v8157, 4294901760
        %8956 = vmatpush1.msra.mxu0 %v8955
        %8957 = vmatprep.subr.mxu0 0.0
        %v8958 = vand.u32 %v8158, 4294901760
        %8959 = vmatpush1.msra.mxu0 %v8958
        %8960 = vmatprep.subr.mxu0 0.0
        %v8961 = vand.u32 %v8159, 4294901760
        %8962 = vmatpush1.msra.mxu0 %v8961
        %8963 = vmatprep.subr.mxu0 0.0
        %v8964 = vand.u32 %v8160, 4294901760
        %8965 = vmatpush1.msra.mxu0 %v8964
        %8966 = vmatprep.subr.mxu0 0.0
        %v8967 = vand.u32 %v8161, 4294901760
        %8968 = vmatpush1.msra.mxu0 %v8967
        %8969 = vmatprep.subr.mxu0 0.0
        %v8970 = vand.u32 %v8162, 4294901760
        %8971 = vmatpush1.msra.mxu0 %v8970
        %8972 = vmatprep.subr.mxu0 0.0
        %v8973 = vand.u32 %v8163, 4294901760
        %8974 = vmatpush1.msra.mxu0 %v8973
        %8975 = vmatprep.subr.mxu0 0.0
        %v8976 = vand.u32 %v8164, 4294901760
        %8977 = vmatpush1.msra.mxu0 %v8976
        %8978 = vmatprep.subr.mxu0 0.0
        %v8979 = vand.u32 %v8165, 4294901760
        %8980 = vmatpush1.msra.mxu0 %v8979
        %8981 = vmatprep.subr.mxu0 0.0
        %v8982 = vand.u32 %v8166, 4294901760
        %8983 = vmatpush1.msra.mxu0 %v8982
        %8984 = vmatprep.subr.mxu0 0.0
        %v8985 = vand.u32 %v8167, 4294901760
        %8986 = vmatpush1.msra.mxu0 %v8985
        %8987 = vmatprep.subr.mxu0 0.0
        %v8988 = vand.u32 %v8168, 4294901760
        %8989 = vmatpush1.msra.mxu0 %v8988
        %8990 = vmatprep.subr.mxu0 0.0
        %v8991 = vand.u32 %v8169, 4294901760
        %8992 = vmatpush1.msra.mxu0 %v8991
        %8993 = vmatprep.subr.mxu0 0.0
        %v8994 = vand.u32 %v8170, 4294901760
        %8995 = vmatpush1.msra.mxu0 %v8994
        %8996 = vmatprep.subr.mxu0 0.0
        %v8997 = vand.u32 %v8171, 4294901760
        %8998 = vmatpush1.msra.mxu0 %v8997
        %8999 = vmatprep.subr.mxu0 0.0
        %v9000 = vand.u32 %v8172, 4294901760
        %9001 = vmatpush1.msra.mxu0 %v9000
        %9002 = vmatprep.subr.mxu0 0.0
        %v9003 = vand.u32 %v8173, 4294901760
        %9004 = vmatpush1.msra.mxu0 %v9003
        %9005 = vmatprep.subr.mxu0 0.0
        %v9006 = vand.u32 %v8174, 4294901760
        %9007 = vmatpush1.msra.mxu0 %v9006
        %9008 = vmatprep.subr.mxu0 0.0
        %v9009 = vand.u32 %v8175, 4294901760
        %9010 = vmatpush1.msra.mxu0 %v9009
        %9011 = vmatprep.subr.mxu0 0.0
        %v9012 = vand.u32 %v8176, 4294901760
        %9013 = vmatpush1.msra.mxu0 %v9012
        %9014 = vmatprep.subr.mxu0 0.0
        %v9015 = vand.u32 %v8177, 4294901760
        %9016 = vmatpush1.msra.mxu0 %v9015
        %9017 = vmatprep.subr.mxu0 0.0
        %v9018 = vand.u32 %v8178, 4294901760
        %9019 = vmatpush1.msra.mxu0 %v9018
        %9020 = vmatprep.subr.mxu0 0.0
        %v9021 = vand.u32 %v8179, 4294901760
        %9022 = vmatpush1.msra.mxu0 %v9021
        %9023 = vmatprep.subr.mxu0 0.0
        %v9024 = vand.u32 %v8180, 4294901760
        %9025 = vmatpush1.msra.mxu0 %v9024
        %9026 = vmatprep.subr.mxu0 0.0
        %v9027 = vand.u32 %v8181, 4294901760
        %9028 = vmatpush1.msra.mxu0 %v9027
        %9029 = vmatprep.subr.mxu0 0.0
        %v9030 = vand.u32 %v8182, 4294901760
        %9031 = vmatpush1.msra.mxu0 %v9030
        %9032 = vmatprep.subr.mxu0 0.0
        %v9033 = vand.u32 %v8183, 4294901760
        %9034 = vmatpush1.msra.mxu0 %v9033
        %9035 = vmatprep.subr.mxu0 0.0
        %v9036 = vand.u32 %v8184, 4294901760
        %9037 = vmatpush1.msra.mxu0 %v9036
        %9038 = vmatprep.subr.mxu0 0.0
        %v9039 = vand.u32 %v8185, 4294901760
        %9040 = vmatpush1.msra.mxu0 %v9039
        %9041 = vmatprep.subr.mxu0 0.0
        %v9042 = vand.u32 %v8186, 4294901760
        %9043 = vmatpush1.msra.mxu0 %v9042
        %9044 = vmatprep.subr.mxu0 0.0
        %v9045 = vand.u32 %v8187, 4294901760
        %9046 = vmatpush1.msra.mxu0 %v9045
        %9047 = vmatprep.subr.mxu0 0.0
        %v9048 = vand.u32 %v8188, 4294901760
        %9049 = vmatpush1.msra.mxu0 %v9048
        %v9050 = vand.u32 %v8156, 4294901760
        %9051 = vmatprep.mubr.f32.mxu0 %v9050
        %v9052 = vand.u32 %v8155, 4294901760
        %9053 = vmatmul.mubr.f32.gmra.mrb[0].mxu0 %v9052
        %v9054 = vpop.f32.mrb[0].mxu0
        %v9055 = vadd.f32 %v8951, %v9054
        %v9056 = vpop.f32.mrb[0].mxu0
        %9057 = vdwg.mxu0
        %v9058 = vadd.f32 %v7255, %v9055
        %v9059 = vld [vmem:[#allocation28] sm:$0x1]
        %v9060 = vld [vmem:[#allocation29] sm:$0x1]
        %9061 = vadd.xlane.f32.xlu0 %v9058
        %v9062 = vpop.xlane.xlu0 %9061
        %v9063 = vmul.f32 %v9062, %v7232
        %v9064 = vsub.f32 %v9058, %v9063
        %v9065 = vmul.f32 %v9064, %v9064
        %9066 = vadd.xlane.f32.xlu0 %v9065
        %v9067 = vpop.xlane.xlu0 %9066
        %v9068 = vmul.f32 %v9067, %v7232
        %v9069 = vadd.f32 %v9068, 1e-05
        %v9070 = vrsqrt.pop %v9069
        %v9071 = vmul.f32 %v9064, %v9070
        %v9073 = vlaneseq
        %v9074 = vshrl.u32 %v9073, 7
        %v9075 = vsub.s32 0, %v9074
        %v9076 = vrot.slane %v9059, %v9075
        %v9078 = vmul.f32 %v9071, %v9076
        %v9080 = vlaneseq
        %v9081 = vshrl.u32 %v9080, 7
        %v9082 = vsub.s32 0, %v9081
        %v9083 = vrot.slane %v9060, %v9082
        %v9085 = vadd.f32 %v9078, %v9083
        %v9086 = vld [vmem:[%s18] sm:$0xff]
        %v9087 = vld [vmem:[%s18 + $0x8] sm:$0xff]
        %v9088 = vld [vmem:[%s18 + $0x10] sm:$0xff]
        %v9089 = vld [vmem:[%s18 + $0x18] sm:$0xff]
        %v9090 = vld [vmem:[%s18 + $0x20] sm:$0xff]
        %v9091 = vld [vmem:[%s18 + $0x28] sm:$0xff]
        %v9092 = vld [vmem:[%s18 + $0x30] sm:$0xff]
        %v9093 = vld [vmem:[%s18 + $0x38] sm:$0xff]
        %v9094 = vld [vmem:[%s18 + $0x40] sm:$0xff]
        %v9095 = vld [vmem:[%s18 + $0x48] sm:$0xff]
        %v9096 = vld [vmem:[%s18 + $0x50] sm:$0xff]
        %v9097 = vld [vmem:[%s18 + $0x58] sm:$0xff]
        %v9098 = vld [vmem:[%s18 + $0x60] sm:$0xff]
        %v9099 = vld [vmem:[%s18 + $0x68] sm:$0xff]
        %v9100 = vld [vmem:[%s18 + $0x70] sm:$0xff]
        %v9101 = vld [vmem:[%s18 + $0x78] sm:$0xff]
        %v9102 = vld [vmem:[#allocation2] sm:$0x1]
        %v9104 = vlaneseq
        %v9105 = vshrl.u32 %v9104, 7
        %v9106 = vsub.s32 0, %v9105
        %v9107 = vrot.slane %v9102, %v9106
        %9109 = vmatprep.subr.mxu0 0.0
        %v9110 = vand.u32 %v9086, 4294901760
        %9111 = vmatpush1.msra.mxu0 %v9110
        %9112 = vmatprep.subr.mxu0 0.0
        %v9113 = vand.u32 %v9087, 4294901760
        %9114 = vmatpush1.msra.mxu0 %v9113
        %9115 = vmatprep.subr.mxu0 0.0
        %v9116 = vand.u32 %v9088, 4294901760
        %9117 = vmatpush1.msra.mxu0 %v9116
        %9118 = vmatprep.subr.mxu0 0.0
        %v9119 = vand.u32 %v9089, 4294901760
        %9120 = vmatpush1.msra.mxu0 %v9119
        %9121 = vmatprep.subr.mxu0 0.0
        %v9122 = vand.u32 %v9090, 4294901760
        %9123 = vmatpush1.msra.mxu0 %v9122
        %9124 = vmatprep.subr.mxu0 0.0
        %v9125 = vand.u32 %v9091, 4294901760
        %9126 = vmatpush1.msra.mxu0 %v9125
        %9127 = vmatprep.subr.mxu0 0.0
        %v9128 = vand.u32 %v9092, 4294901760
        %9129 = vmatpush1.msra.mxu0 %v9128
        %9130 = vmatprep.subr.mxu0 0.0
        %v9131 = vand.u32 %v9093, 4294901760
        %9132 = vmatpush1.msra.mxu0 %v9131
        %9133 = vmatprep.subr.mxu0 0.0
        %v9134 = vand.u32 %v9094, 4294901760
        %9135 = vmatpush1.msra.mxu0 %v9134
        %9136 = vmatprep.subr.mxu0 0.0
        %v9137 = vand.u32 %v9095, 4294901760
        %9138 = vmatpush1.msra.mxu0 %v9137
        %9139 = vmatprep.subr.mxu0 0.0
        %v9140 = vand.u32 %v9096, 4294901760
        %9141 = vmatpush1.msra.mxu0 %v9140
        %9142 = vmatprep.subr.mxu0 0.0
        %v9143 = vand.u32 %v9097, 4294901760
        %9144 = vmatpush1.msra.mxu0 %v9143
        %9145 = vmatprep.subr.mxu0 0.0
        %v9146 = vand.u32 %v9098, 4294901760
        %9147 = vmatpush1.msra.mxu0 %v9146
        %9148 = vmatprep.subr.mxu0 0.0
        %v9149 = vand.u32 %v9099, 4294901760
        %9150 = vmatpush1.msra.mxu0 %v9149
        %9151 = vmatprep.subr.mxu0 0.0
        %v9152 = vand.u32 %v9100, 4294901760
        %9153 = vmatpush1.msra.mxu0 %v9152
        %9154 = vmatprep.subr.mxu0 0.0
        %v9155 = vand.u32 %v9101, 4294901760
        %9156 = vmatpush1.msra.mxu0 %v9155
        %9157 = vmatprep.subr.mxu0 0.0
        %9158 = vmatpush1.msra.mxu0 0.0
        %9159 = vmatprep.subr.mxu0 0.0
        %9160 = vmatpush1.msra.mxu0 0.0
        %9161 = vmatprep.subr.mxu0 0.0
        %9162 = vmatpush1.msra.mxu0 0.0
        %9163 = vmatprep.subr.mxu0 0.0
        %9164 = vmatpush1.msra.mxu0 0.0
        %9165 = vmatprep.subr.mxu0 0.0
        %9166 = vmatpush1.msra.mxu0 0.0
        %9167 = vmatprep.subr.mxu0 0.0
        %9168 = vmatpush1.msra.mxu0 0.0
        %9169 = vmatprep.subr.mxu0 0.0
        %9170 = vmatpush1.msra.mxu0 0.0
        %9171 = vmatprep.subr.mxu0 0.0
        %9172 = vmatpush1.msra.mxu0 0.0
        %9173 = vmatprep.subr.mxu0 0.0
        %9174 = vmatpush1.msra.mxu0 0.0
        %9175 = vmatprep.subr.mxu0 0.0
        %9176 = vmatpush1.msra.mxu0 0.0
        %9177 = vmatprep.subr.mxu0 0.0
        %9178 = vmatpush1.msra.mxu0 0.0
        %9179 = vmatprep.subr.mxu0 0.0
        %9180 = vmatpush1.msra.mxu0 0.0
        %9181 = vmatprep.subr.mxu0 0.0
        %9182 = vmatpush1.msra.mxu0 0.0
        %9183 = vmatprep.subr.mxu0 0.0
        %9184 = vmatpush1.msra.mxu0 0.0
        %9185 = vmatprep.subr.mxu0 0.0
        %9186 = vmatpush1.msra.mxu0 0.0
        %9187 = vmatprep.subr.mxu0 0.0
        %9188 = vmatpush1.msra.mxu0 0.0
        %9189 = vmatprep.mubr.f32.mxu0 0.0
        %v9190 = vand.u32 %v9085, 4294901760
        %v9191 = vsub.f32 %v9085, %v9190
        %v9192 = vand.u32 %v9191, 4294901760
        %v9193 = vsub.f32 %v9191, %v9192
        %v9194 = vand.u32 %v9193, 4294901760
        %9195 = vmatmul.mubr.f32.gmra.mrb[0].mxu0 %v9194
        %v9196 = vpop.f32.mrb[0].mxu0
        %v9197 = vadd.f32 %v9107, %v9196
        %v9198 = vpop.f32.mrb[0].mxu0
        %9199 = vdwg.mxu0
        %9200 = vmatprep.subr.mxu0 0.0
        %v9201 = vand.u32 %v9086, 4294901760
        %v9202 = vsub.f32 %v9086, %v9201
        %v9203 = vand.u32 %v9202, 4294901760
        %v9204 = vsub.f32 %v9202, %v9203
        %v9205 = vand.u32 %v9204, 4294901760
        %9206 = vmatpush1.msra.mxu0 %v9205
        %9207 = vmatprep.subr.mxu0 0.0
        %v9208 = vand.u32 %v9087, 4294901760
        %v9209 = vsub.f32 %v9087, %v9208
        %v9210 = vand.u32 %v9209, 4294901760
        %v9211 = vsub.f32 %v9209, %v9210
        %v9212 = vand.u32 %v9211, 4294901760
        %9213 = vmatpush1.msra.mxu0 %v9212
        %9214 = vmatprep.subr.mxu0 0.0
        %v9215 = vand.u32 %v9088, 4294901760
        %v9216 = vsub.f32 %v9088, %v9215
        %v9217 = vand.u32 %v9216, 4294901760
        %v9218 = vsub.f32 %v9216, %v9217
        %v9219 = vand.u32 %v9218, 4294901760
        %9220 = vmatpush1.msra.mxu0 %v9219
        %9221 = vmatprep.subr.mxu0 0.0
        %v9222 = vand.u32 %v9089, 4294901760
        %v9223 = vsub.f32 %v9089, %v9222
        %v9224 = vand.u32 %v9223, 4294901760
        %v9225 = vsub.f32 %v9223, %v9224
        %v9226 = vand.u32 %v9225, 4294901760
        %9227 = vmatpush1.msra.mxu0 %v9226
        %9228 = vmatprep.subr.mxu0 0.0
        %v9229 = vand.u32 %v9090, 4294901760
        %v9230 = vsub.f32 %v9090, %v9229
        %v9231 = vand.u32 %v9230, 4294901760
        %v9232 = vsub.f32 %v9230, %v9231
        %v9233 = vand.u32 %v9232, 4294901760
        %9234 = vmatpush1.msra.mxu0 %v9233
        %9235 = vmatprep.subr.mxu0 0.0
        %v9236 = vand.u32 %v9091, 4294901760
        %v9237 = vsub.f32 %v9091, %v9236
        %v9238 = vand.u32 %v9237, 4294901760
        %v9239 = vsub.f32 %v9237, %v9238
        %v9240 = vand.u32 %v9239, 4294901760
        %9241 = vmatpush1.msra.mxu0 %v9240
        %9242 = vmatprep.subr.mxu0 0.0
        %v9243 = vand.u32 %v9092, 4294901760
        %v9244 = vsub.f32 %v9092, %v9243
        %v9245 = vand.u32 %v9244, 4294901760
        %v9246 = vsub.f32 %v9244, %v9245
        %v9247 = vand.u32 %v9246, 4294901760
        %9248 = vmatpush1.msra.mxu0 %v9247
        %9249 = vmatprep.subr.mxu0 0.0
        %v9250 = vand.u32 %v9093, 4294901760
        %v9251 = vsub.f32 %v9093, %v9250
        %v9252 = vand.u32 %v9251, 4294901760
        %v9253 = vsub.f32 %v9251, %v9252
        %v9254 = vand.u32 %v9253, 4294901760
        %9255 = vmatpush1.msra.mxu0 %v9254
        %9256 = vmatprep.subr.mxu0 0.0
        %v9257 = vand.u32 %v9094, 4294901760
        %v9258 = vsub.f32 %v9094, %v9257
        %v9259 = vand.u32 %v9258, 4294901760
        %v9260 = vsub.f32 %v9258, %v9259
        %v9261 = vand.u32 %v9260, 4294901760
        %9262 = vmatpush1.msra.mxu0 %v9261
        %9263 = vmatprep.subr.mxu0 0.0
        %v9264 = vand.u32 %v9095, 4294901760
        %v9265 = vsub.f32 %v9095, %v9264
        %v9266 = vand.u32 %v9265, 4294901760
        %v9267 = vsub.f32 %v9265, %v9266
        %v9268 = vand.u32 %v9267, 4294901760
        %9269 = vmatpush1.msra.mxu0 %v9268
        %9270 = vmatprep.subr.mxu0 0.0
        %v9271 = vand.u32 %v9096, 4294901760
        %v9272 = vsub.f32 %v9096, %v9271
        %v9273 = vand.u32 %v9272, 4294901760
        %v9274 = vsub.f32 %v9272, %v9273
        %v9275 = vand.u32 %v9274, 4294901760
        %9276 = vmatpush1.msra.mxu0 %v9275
        %9277 = vmatprep.subr.mxu0 0.0
        %v9278 = vand.u32 %v9097, 4294901760
        %v9279 = vsub.f32 %v9097, %v9278
        %v9280 = vand.u32 %v9279, 4294901760
        %v9281 = vsub.f32 %v9279, %v9280
        %v9282 = vand.u32 %v9281, 4294901760
        %9283 = vmatpush1.msra.mxu0 %v9282
        %9284 = vmatprep.subr.mxu0 0.0
        %v9285 = vand.u32 %v9098, 4294901760
        %v9286 = vsub.f32 %v9098, %v9285
        %v9287 = vand.u32 %v9286, 4294901760
        %v9288 = vsub.f32 %v9286, %v9287
        %v9289 = vand.u32 %v9288, 4294901760
        %9290 = vmatpush1.msra.mxu0 %v9289
        %9291 = vmatprep.subr.mxu0 0.0
        %v9292 = vand.u32 %v9099, 4294901760
        %v9293 = vsub.f32 %v9099, %v9292
        %v9294 = vand.u32 %v9293, 4294901760
        %v9295 = vsub.f32 %v9293, %v9294
        %v9296 = vand.u32 %v9295, 4294901760
        %9297 = vmatpush1.msra.mxu0 %v9296
        %9298 = vmatprep.subr.mxu0 0.0
        %v9299 = vand.u32 %v9100, 4294901760
        %v9300 = vsub.f32 %v9100, %v9299
        %v9301 = vand.u32 %v9300, 4294901760
        %v9302 = vsub.f32 %v9300, %v9301
        %v9303 = vand.u32 %v9302, 4294901760
        %9304 = vmatpush1.msra.mxu0 %v9303
        %9305 = vmatprep.subr.mxu0 0.0
        %v9306 = vand.u32 %v9101, 4294901760
        %v9307 = vsub.f32 %v9101, %v9306
        %v9308 = vand.u32 %v9307, 4294901760
        %v9309 = vsub.f32 %v9307, %v9308
        %v9310 = vand.u32 %v9309, 4294901760
        %9311 = vmatpush1.msra.mxu0 %v9310
        %9312 = vmatprep.subr.mxu0 0.0
        %9313 = vmatpush1.msra.mxu0 0.0
        %9314 = vmatprep.subr.mxu0 0.0
        %9315 = vmatpush1.msra.mxu0 0.0
        %9316 = vmatprep.subr.mxu0 0.0
        %9317 = vmatpush1.msra.mxu0 0.0
        %9318 = vmatprep.subr.mxu0 0.0
        %9319 = vmatpush1.msra.mxu0 0.0
        %9320 = vmatprep.subr.mxu0 0.0
        %9321 = vmatpush1.msra.mxu0 0.0
        %9322 = vmatprep.subr.mxu0 0.0
        %9323 = vmatpush1.msra.mxu0 0.0
        %9324 = vmatprep.subr.mxu0 0.0
        %9325 = vmatpush1.msra.mxu0 0.0
        %9326 = vmatprep.subr.mxu0 0.0
        %9327 = vmatpush1.msra.mxu0 0.0
        %9328 = vmatprep.subr.mxu0 0.0
        %9329 = vmatpush1.msra.mxu0 0.0
        %9330 = vmatprep.subr.mxu0 0.0
        %9331 = vmatpush1.msra.mxu0 0.0
        %9332 = vmatprep.subr.mxu0 0.0
        %9333 = vmatpush1.msra.mxu0 0.0
        %9334 = vmatprep.subr.mxu0 0.0
        %9335 = vmatpush1.msra.mxu0 0.0
        %9336 = vmatprep.subr.mxu0 0.0
        %9337 = vmatpush1.msra.mxu0 0.0
        %9338 = vmatprep.subr.mxu0 0.0
        %9339 = vmatpush1.msra.mxu0 0.0
        %9340 = vmatprep.subr.mxu0 0.0
        %9341 = vmatpush1.msra.mxu0 0.0
        %9342 = vmatprep.subr.mxu0 0.0
        %9343 = vmatpush1.msra.mxu0 0.0
        %9344 = vmatprep.mubr.f32.mxu0 0.0
        %v9345 = vand.u32 %v9085, 4294901760
        %9346 = vmatmul.mubr.f32.gmra.mrb[0].mxu0 %v9345
        %v9347 = vpop.f32.mrb[0].mxu0
        %v9348 = vadd.f32 %v9197, %v9347
        %v9349 = vpop.f32.mrb[0].mxu0
        %9350 = vdwg.mxu0
        %9351 = vmatprep.subr.mxu0 0.0
        %v9352 = vand.u32 %v9086, 4294901760
        %v9353 = vsub.f32 %v9086, %v9352
        %9354 = vmatpush1.msra.mxu0 %v9353
        %9355 = vmatprep.subr.mxu0 0.0
        %v9356 = vand.u32 %v9087, 4294901760
        %v9357 = vsub.f32 %v9087, %v9356
        %9358 = vmatpush1.msra.mxu0 %v9357
        %9359 = vmatprep.subr.mxu0 0.0
        %v9360 = vand.u32 %v9088, 4294901760
        %v9361 = vsub.f32 %v9088, %v9360
        %9362 = vmatpush1.msra.mxu0 %v9361
        %9363 = vmatprep.subr.mxu0 0.0
        %v9364 = vand.u32 %v9089, 4294901760
        %v9365 = vsub.f32 %v9089, %v9364
        %9366 = vmatpush1.msra.mxu0 %v9365
        %9367 = vmatprep.subr.mxu0 0.0
        %v9368 = vand.u32 %v9090, 4294901760
        %v9369 = vsub.f32 %v9090, %v9368
        %9370 = vmatpush1.msra.mxu0 %v9369
        %9371 = vmatprep.subr.mxu0 0.0
        %v9372 = vand.u32 %v9091, 4294901760
        %v9373 = vsub.f32 %v9091, %v9372
        %9374 = vmatpush1.msra.mxu0 %v9373
        %9375 = vmatprep.subr.mxu0 0.0
        %v9376 = vand.u32 %v9092, 4294901760
        %v9377 = vsub.f32 %v9092, %v9376
        %9378 = vmatpush1.msra.mxu0 %v9377
        %9379 = vmatprep.subr.mxu0 0.0
        %v9380 = vand.u32 %v9093, 4294901760
        %v9381 = vsub.f32 %v9093, %v9380
        %9382 = vmatpush1.msra.mxu0 %v9381
        %9383 = vmatprep.subr.mxu0 0.0
        %v9384 = vand.u32 %v9094, 4294901760
        %v9385 = vsub.f32 %v9094, %v9384
        %9386 = vmatpush1.msra.mxu0 %v9385
        %9387 = vmatprep.subr.mxu0 0.0
        %v9388 = vand.u32 %v9095, 4294901760
        %v9389 = vsub.f32 %v9095, %v9388
        %9390 = vmatpush1.msra.mxu0 %v9389
        %9391 = vmatprep.subr.mxu0 0.0
        %v9392 = vand.u32 %v9096, 4294901760
        %v9393 = vsub.f32 %v9096, %v9392
        %9394 = vmatpush1.msra.mxu0 %v9393
        %9395 = vmatprep.subr.mxu0 0.0
        %v9396 = vand.u32 %v9097, 4294901760
        %v9397 = vsub.f32 %v9097, %v9396
        %9398 = vmatpush1.msra.mxu0 %v9397
        %9399 = vmatprep.subr.mxu0 0.0
        %v9400 = vand.u32 %v9098, 4294901760
        %v9401 = vsub.f32 %v9098, %v9400
        %9402 = vmatpush1.msra.mxu0 %v9401
        %9403 = vmatprep.subr.mxu0 0.0
        %v9404 = vand.u32 %v9099, 4294901760
        %v9405 = vsub.f32 %v9099, %v9404
        %9406 = vmatpush1.msra.mxu0 %v9405
        %9407 = vmatprep.subr.mxu0 0.0
        %v9408 = vand.u32 %v9100, 4294901760
        %v9409 = vsub.f32 %v9100, %v9408
        %9410 = vmatpush1.msra.mxu0 %v9409
        %9411 = vmatprep.subr.mxu0 0.0
        %v9412 = vand.u32 %v9101, 4294901760
        %v9413 = vsub.f32 %v9101, %v9412
        %9414 = vmatpush1.msra.mxu0 %v9413
        %9415 = vmatprep.subr.mxu0 0.0
        %9416 = vmatpush1.msra.mxu0 0.0
        %9417 = vmatprep.subr.mxu0 0.0
        %9418 = vmatpush1.msra.mxu0 0.0
        %9419 = vmatprep.subr.mxu0 0.0
        %9420 = vmatpush1.msra.mxu0 0.0
        %9421 = vmatprep.subr.mxu0 0.0
        %9422 = vmatpush1.msra.mxu0 0.0
        %9423 = vmatprep.subr.mxu0 0.0
        %9424 = vmatpush1.msra.mxu0 0.0
        %9425 = vmatprep.subr.mxu0 0.0
        %9426 = vmatpush1.msra.mxu0 0.0
        %9427 = vmatprep.subr.mxu0 0.0
        %9428 = vmatpush1.msra.mxu0 0.0
        %9429 = vmatprep.subr.mxu0 0.0
        %9430 = vmatpush1.msra.mxu0 0.0
        %9431 = vmatprep.subr.mxu0 0.0
        %9432 = vmatpush1.msra.mxu0 0.0
        %9433 = vmatprep.subr.mxu0 0.0
        %9434 = vmatpush1.msra.mxu0 0.0
        %9435 = vmatprep.subr.mxu0 0.0
        %9436 = vmatpush1.msra.mxu0 0.0
        %9437 = vmatprep.subr.mxu0 0.0
        %9438 = vmatpush1.msra.mxu0 0.0
        %9439 = vmatprep.subr.mxu0 0.0
        %9440 = vmatpush1.msra.mxu0 0.0
        %9441 = vmatprep.subr.mxu0 0.0
        %9442 = vmatpush1.msra.mxu0 0.0
        %9443 = vmatprep.subr.mxu0 0.0
        %9444 = vmatpush1.msra.mxu0 0.0
        %9445 = vmatprep.subr.mxu0 0.0
        %9446 = vmatpush1.msra.mxu0 0.0
        %9447 = vmatprep.mubr.f32.mxu0 0.0
        %v9448 = vand.u32 %v9085, 4294901760
        %v9449 = vsub.f32 %v9085, %v9448
        %9450 = vmatmul.mubr.f32.gmra.mrb[0].mxu0 %v9449
        %v9451 = vpop.f32.mrb[0].mxu0
        %v9452 = vadd.f32 %v9348, %v9451
        %v9453 = vpop.f32.mrb[0].mxu0
        %9454 = vdwg.mxu0
        %9455 = vmatprep.subr.mxu0 0.0
        %v9456 = vand.u32 %v9086, 4294901760
        %9457 = vmatpush1.msra.mxu0 %v9456
        %9458 = vmatprep.subr.mxu0 0.0
        %v9459 = vand.u32 %v9087, 4294901760
        %9460 = vmatpush1.msra.mxu0 %v9459
        %9461 = vmatprep.subr.mxu0 0.0
        %v9462 = vand.u32 %v9088, 4294901760
        %9463 = vmatpush1.msra.mxu0 %v9462
        %9464 = vmatprep.subr.mxu0 0.0
        %v9465 = vand.u32 %v9089, 4294901760
        %9466 = vmatpush1.msra.mxu0 %v9465
        %9467 = vmatprep.subr.mxu0 0.0
        %v9468 = vand.u32 %v9090, 4294901760
        %9469 = vmatpush1.msra.mxu0 %v9468
        %9470 = vmatprep.subr.mxu0 0.0
        %v9471 = vand.u32 %v9091, 4294901760
        %9472 = vmatpush1.msra.mxu0 %v9471
        %9473 = vmatprep.subr.mxu0 0.0
        %v9474 = vand.u32 %v9092, 4294901760
        %9475 = vmatpush1.msra.mxu0 %v9474
        %9476 = vmatprep.subr.mxu0 0.0
        %v9477 = vand.u32 %v9093, 4294901760
        %9478 = vmatpush1.msra.mxu0 %v9477
        %9479 = vmatprep.subr.mxu0 0.0
        %v9480 = vand.u32 %v9094, 4294901760
        %9481 = vmatpush1.msra.mxu0 %v9480
        %9482 = vmatprep.subr.mxu0 0.0
        %v9483 = vand.u32 %v9095, 4294901760
        %9484 = vmatpush1.msra.mxu0 %v9483
        %9485 = vmatprep.subr.mxu0 0.0
        %v9486 = vand.u32 %v9096, 4294901760
        %9487 = vmatpush1.msra.mxu0 %v9486
        %9488 = vmatprep.subr.mxu0 0.0
        %v9489 = vand.u32 %v9097, 4294901760
        %9490 = vmatpush1.msra.mxu0 %v9489
        %9491 = vmatprep.subr.mxu0 0.0
        %v9492 = vand.u32 %v9098, 4294901760
        %9493 = vmatpush1.msra.mxu0 %v9492
        %9494 = vmatprep.subr.mxu0 0.0
        %v9495 = vand.u32 %v9099, 4294901760
        %9496 = vmatpush1.msra.mxu0 %v9495
        %9497 = vmatprep.subr.mxu0 0.0
        %v9498 = vand.u32 %v9100, 4294901760
        %9499 = vmatpush1.msra.mxu0 %v9498
        %9500 = vmatprep.subr.mxu0 0.0
        %v9501 = vand.u32 %v9101, 4294901760
        %9502 = vmatpush1.msra.mxu0 %v9501
        %9503 = vmatprep.subr.mxu0 0.0
        %9504 = vmatpush1.msra.mxu0 0.0
        %9505 = vmatprep.subr.mxu0 0.0
        %9506 = vmatpush1.msra.mxu0 0.0
        %9507 = vmatprep.subr.mxu0 0.0
        %9508 = vmatpush1.msra.mxu0 0.0
        %9509 = vmatprep.subr.mxu0 0.0
        %9510 = vmatpush1.msra.mxu0 0.0
        %9511 = vmatprep.subr.mxu0 0.0
        %9512 = vmatpush1.msra.mxu0 0.0
        %9513 = vmatprep.subr.mxu0 0.0
        %9514 = vmatpush1.msra.mxu0 0.0
        %9515 = vmatprep.subr.mxu0 0.0
        %9516 = vmatpush1.msra.mxu0 0.0
        %9517 = vmatprep.subr.mxu0 0.0
        %9518 = vmatpush1.msra.mxu0 0.0
        %9519 = vmatprep.subr.mxu0 0.0
        %9520 = vmatpush1.msra.mxu0 0.0
        %9521 = vmatprep.subr.mxu0 0.0
        %9522 = vmatpush1.msra.mxu0 0.0
        %9523 = vmatprep.subr.mxu0 0.0
        %9524 = vmatpush1.msra.mxu0 0.0
        %9525 = vmatprep.subr.mxu0 0.0
        %9526 = vmatpush1.msra.mxu0 0.0
        %9527 = vmatprep.subr.mxu0 0.0
        %9528 = vmatpush1.msra.mxu0 0.0
        %9529 = vmatprep.subr.mxu0 0.0
        %9530 = vmatpush1.msra.mxu0 0.0
        %9531 = vmatprep.subr.mxu0 0.0
        %9532 = vmatpush1.msra.mxu0 0.0
        %9533 = vmatprep.subr.mxu0 0.0
        %9534 = vmatpush1.msra.mxu0 0.0
        %9535 = vmatprep.mubr.f32.mxu0 0.0
        %v9536 = vand.u32 %v9085, 4294901760
        %v9537 = vsub.f32 %v9085, %v9536
        %v9538 = vand.u32 %v9537, 4294901760
        %9539 = vmatmul.mubr.f32.gmra.mrb[0].mxu0 %v9538
        %v9540 = vpop.f32.mrb[0].mxu0
        %v9541 = vadd.f32 %v9452, %v9540
        %v9542 = vpop.f32.mrb[0].mxu0
        %9543 = vdwg.mxu0
        %9544 = vmatprep.subr.mxu0 0.0
        %v9545 = vand.u32 %v9086, 4294901760
        %v9546 = vsub.f32 %v9086, %v9545
        %v9547 = vand.u32 %v9546, 4294901760
        %9548 = vmatpush1.msra.mxu0 %v9547
        %9549 = vmatprep.subr.mxu0 0.0
        %v9550 = vand.u32 %v9087, 4294901760
        %v9551 = vsub.f32 %v9087, %v9550
        %v9552 = vand.u32 %v9551, 4294901760
        %9553 = vmatpush1.msra.mxu0 %v9552
        %9554 = vmatprep.subr.mxu0 0.0
        %v9555 = vand.u32 %v9088, 4294901760
        %v9556 = vsub.f32 %v9088, %v9555
        %v9557 = vand.u32 %v9556, 4294901760
        %9558 = vmatpush1.msra.mxu0 %v9557
        %9559 = vmatprep.subr.mxu0 0.0
        %v9560 = vand.u32 %v9089, 4294901760
        %v9561 = vsub.f32 %v9089, %v9560
        %v9562 = vand.u32 %v9561, 4294901760
        %9563 = vmatpush1.msra.mxu0 %v9562
        %9564 = vmatprep.subr.mxu0 0.0
        %v9565 = vand.u32 %v9090, 4294901760
        %v9566 = vsub.f32 %v9090, %v9565
        %v9567 = vand.u32 %v9566, 4294901760
        %9568 = vmatpush1.msra.mxu0 %v9567
        %9569 = vmatprep.subr.mxu0 0.0
        %v9570 = vand.u32 %v9091, 4294901760
        %v9571 = vsub.f32 %v9091, %v9570
        %v9572 = vand.u32 %v9571, 4294901760
        %9573 = vmatpush1.msra.mxu0 %v9572
        %9574 = vmatprep.subr.mxu0 0.0
        %v9575 = vand.u32 %v9092, 4294901760
        %v9576 = vsub.f32 %v9092, %v9575
        %v9577 = vand.u32 %v9576, 4294901760
        %9578 = vmatpush1.msra.mxu0 %v9577
        %9579 = vmatprep.subr.mxu0 0.0
        %v9580 = vand.u32 %v9093, 4294901760
        %v9581 = vsub.f32 %v9093, %v9580
        %v9582 = vand.u32 %v9581, 4294901760
        %9583 = vmatpush1.msra.mxu0 %v9582
        %9584 = vmatprep.subr.mxu0 0.0
        %v9585 = vand.u32 %v9094, 4294901760
        %v9586 = vsub.f32 %v9094, %v9585
        %v9587 = vand.u32 %v9586, 4294901760
        %9588 = vmatpush1.msra.mxu0 %v9587
        %9589 = vmatprep.subr.mxu0 0.0
        %v9590 = vand.u32 %v9095, 4294901760
        %v9591 = vsub.f32 %v9095, %v9590
        %v9592 = vand.u32 %v9591, 4294901760
        %9593 = vmatpush1.msra.mxu0 %v9592
        %9594 = vmatprep.subr.mxu0 0.0
        %v9595 = vand.u32 %v9096, 4294901760
        %v9596 = vsub.f32 %v9096, %v9595
        %v9597 = vand.u32 %v9596, 4294901760
        %9598 = vmatpush1.msra.mxu0 %v9597
        %9599 = vmatprep.subr.mxu0 0.0
        %v9600 = vand.u32 %v9097, 4294901760
        %v9601 = vsub.f32 %v9097, %v9600
        %v9602 = vand.u32 %v9601, 4294901760
        %9603 = vmatpush1.msra.mxu0 %v9602
        %9604 = vmatprep.subr.mxu0 0.0
        %v9605 = vand.u32 %v9098, 4294901760
        %v9606 = vsub.f32 %v9098, %v9605
        %v9607 = vand.u32 %v9606, 4294901760
        %9608 = vmatpush1.msra.mxu0 %v9607
        %9609 = vmatprep.subr.mxu0 0.0
        %v9610 = vand.u32 %v9099, 4294901760
        %v9611 = vsub.f32 %v9099, %v9610
        %v9612 = vand.u32 %v9611, 4294901760
        %9613 = vmatpush1.msra.mxu0 %v9612
        %9614 = vmatprep.subr.mxu0 0.0
        %v9615 = vand.u32 %v9100, 4294901760
        %v9616 = vsub.f32 %v9100, %v9615
        %v9617 = vand.u32 %v9616, 4294901760
        %9618 = vmatpush1.msra.mxu0 %v9617
        %9619 = vmatprep.subr.mxu0 0.0
        %v9620 = vand.u32 %v9101, 4294901760
        %v9621 = vsub.f32 %v9101, %v9620
        %v9622 = vand.u32 %v9621, 4294901760
        %9623 = vmatpush1.msra.mxu0 %v9622
        %9624 = vmatprep.subr.mxu0 0.0
        %9625 = vmatpush1.msra.mxu0 0.0
        %9626 = vmatprep.subr.mxu0 0.0
        %9627 = vmatpush1.msra.mxu0 0.0
        %9628 = vmatprep.subr.mxu0 0.0
        %9629 = vmatpush1.msra.mxu0 0.0
        %9630 = vmatprep.subr.mxu0 0.0
        %9631 = vmatpush1.msra.mxu0 0.0
        %9632 = vmatprep.subr.mxu0 0.0
        %9633 = vmatpush1.msra.mxu0 0.0
        %9634 = vmatprep.subr.mxu0 0.0
        %9635 = vmatpush1.msra.mxu0 0.0
        %9636 = vmatprep.subr.mxu0 0.0
        %9637 = vmatpush1.msra.mxu0 0.0
        %9638 = vmatprep.subr.mxu0 0.0
        %9639 = vmatpush1.msra.mxu0 0.0
        %9640 = vmatprep.subr.mxu0 0.0
        %9641 = vmatpush1.msra.mxu0 0.0
        %9642 = vmatprep.subr.mxu0 0.0
        %9643 = vmatpush1.msra.mxu0 0.0
        %9644 = vmatprep.subr.mxu0 0.0
        %9645 = vmatpush1.msra.mxu0 0.0
        %9646 = vmatprep.subr.mxu0 0.0
        %9647 = vmatpush1.msra.mxu0 0.0
        %9648 = vmatprep.subr.mxu0 0.0
        %9649 = vmatpush1.msra.mxu0 0.0
        %9650 = vmatprep.subr.mxu0 0.0
        %9651 = vmatpush1.msra.mxu0 0.0
        %9652 = vmatprep.subr.mxu0 0.0
        %9653 = vmatpush1.msra.mxu0 0.0
        %9654 = vmatprep.subr.mxu0 0.0
        %9655 = vmatpush1.msra.mxu0 0.0
        %9656 = vmatprep.mubr.f32.mxu0 0.0
        %v9657 = vand.u32 %v9085, 4294901760
        %9658 = vmatmul.mubr.f32.gmra.mrb[0].mxu0 %v9657
        %v9659 = vpop.f32.mrb[0].mxu0
        %v9660 = vadd.f32 %v9541, %v9659
        %v9661 = vpop.f32.mrb[0].mxu0
        %9662 = vdwg.mxu0
        %9663 = vmatprep.subr.mxu0 0.0
        %v9664 = vand.u32 %v9086, 4294901760
        %9665 = vmatpush1.msra.mxu0 %v9664
        %9666 = vmatprep.subr.mxu0 0.0
        %v9667 = vand.u32 %v9087, 4294901760
        %9668 = vmatpush1.msra.mxu0 %v9667
        %9669 = vmatprep.subr.mxu0 0.0
        %v9670 = vand.u32 %v9088, 4294901760
        %9671 = vmatpush1.msra.mxu0 %v9670
        %9672 = vmatprep.subr.mxu0 0.0
        %v9673 = vand.u32 %v9089, 4294901760
        %9674 = vmatpush1.msra.mxu0 %v9673
        %9675 = vmatprep.subr.mxu0 0.0
        %v9676 = vand.u32 %v9090, 4294901760
        %9677 = vmatpush1.msra.mxu0 %v9676
        %9678 = vmatprep.subr.mxu0 0.0
        %v9679 = vand.u32 %v9091, 4294901760
        %9680 = vmatpush1.msra.mxu0 %v9679
        %9681 = vmatprep.subr.mxu0 0.0
        %v9682 = vand.u32 %v9092, 4294901760
        %9683 = vmatpush1.msra.mxu0 %v9682
        %9684 = vmatprep.subr.mxu0 0.0
        %v9685 = vand.u32 %v9093, 4294901760
        %9686 = vmatpush1.msra.mxu0 %v9685
        %9687 = vmatprep.subr.mxu0 0.0
        %v9688 = vand.u32 %v9094, 4294901760
        %9689 = vmatpush1.msra.mxu0 %v9688
        %9690 = vmatprep.subr.mxu0 0.0
        %v9691 = vand.u32 %v9095, 4294901760
        %9692 = vmatpush1.msra.mxu0 %v9691
        %9693 = vmatprep.subr.mxu0 0.0
        %v9694 = vand.u32 %v9096, 4294901760
        %9695 = vmatpush1.msra.mxu0 %v9694
        %9696 = vmatprep.subr.mxu0 0.0
        %v9697 = vand.u32 %v9097, 4294901760
        %9698 = vmatpush1.msra.mxu0 %v9697
        %9699 = vmatprep.subr.mxu0 0.0
        %v9700 = vand.u32 %v9098, 4294901760
        %9701 = vmatpush1.msra.mxu0 %v9700
        %9702 = vmatprep.subr.mxu0 0.0
        %v9703 = vand.u32 %v9099, 4294901760
        %9704 = vmatpush1.msra.mxu0 %v9703
        %9705 = vmatprep.subr.mxu0 0.0
        %v9706 = vand.u32 %v9100, 4294901760
        %9707 = vmatpush1.msra.mxu0 %v9706
        %9708 = vmatprep.subr.mxu0 0.0
        %v9709 = vand.u32 %v9101, 4294901760
        %9710 = vmatpush1.msra.mxu0 %v9709
        %9711 = vmatprep.subr.mxu0 0.0
        %9712 = vmatpush1.msra.mxu0 0.0
        %9713 = vmatprep.subr.mxu0 0.0
        %9714 = vmatpush1.msra.mxu0 0.0
        %9715 = vmatprep.subr.mxu0 0.0
        %9716 = vmatpush1.msra.mxu0 0.0
        %9717 = vmatprep.subr.mxu0 0.0
        %9718 = vmatpush1.msra.mxu0 0.0
        %9719 = vmatprep.subr.mxu0 0.0
        %9720 = vmatpush1.msra.mxu0 0.0
        %9721 = vmatprep.subr.mxu0 0.0
        %9722 = vmatpush1.msra.mxu0 0.0
        %9723 = vmatprep.subr.mxu0 0.0
        %9724 = vmatpush1.msra.mxu0 0.0
        %9725 = vmatprep.subr.mxu0 0.0
        %9726 = vmatpush1.msra.mxu0 0.0
        %9727 = vmatprep.subr.mxu0 0.0
        %9728 = vmatpush1.msra.mxu0 0.0
        %9729 = vmatprep.subr.mxu0 0.0
        %9730 = vmatpush1.msra.mxu0 0.0
        %9731 = vmatprep.subr.mxu0 0.0
        %9732 = vmatpush1.msra.mxu0 0.0
        %9733 = vmatprep.subr.mxu0 0.0
        %9734 = vmatpush1.msra.mxu0 0.0
        %9735 = vmatprep.subr.mxu0 0.0
        %9736 = vmatpush1.msra.mxu0 0.0
        %9737 = vmatprep.subr.mxu0 0.0
        %9738 = vmatpush1.msra.mxu0 0.0
        %9739 = vmatprep.subr.mxu0 0.0
        %9740 = vmatpush1.msra.mxu0 0.0
        %9741 = vmatprep.subr.mxu0 0.0
        %9742 = vmatpush1.msra.mxu0 0.0
        %9743 = vmatprep.mubr.f32.mxu0 0.0
        %v9744 = vand.u32 %v9085, 4294901760
        %9745 = vmatmul.mubr.f32.gmra.mrb[0].mxu0 %v9744
        %v9746 = vpop.f32.mrb[0].mxu0
        %v9747 = vadd.f32 %v9660, %v9746
        %v9748 = vpop.f32.mrb[0].mxu0
        %9749 = vdwg.mxu0
        %vm9750 = vcmask 7168
        %9751 = vst.msk [vmem:[%s871] sm:$0xff] %vm9750, %v9747
        %p9752 = scmp.lt.s32.totalorder %s45, 1
        %s9753 = scalar_select %p9752, %s45, 1
        %s9754 = smul.addr %s9753, 8
        %s9755 = scalar_lea.vmem %s20, %s9754
        // Predicated region
        $region173: #{tpu_custom_call.1} parent=99 // pred_check
          %p9756 = pneg %p488
        $region174: #{tpu_custom_call.1} parent=99 // pred_check_branch
          %9758 = sbr.rel (%p9756) target = $region176
        $region175: #{tpu_custom_call.1} parent=99 // pred_region
          _
        $region176: #{tpu_custom_call.1} parent=99 // pred_fallthru
          _
      $region100: #{tpu_custom_call.1} parent=5 // pred_fallthru
        _
      %p9759 = scmp.le.s32.totalorder 2, %s40
      // Predicated region
      $region177: #{tpu_custom_call.1} parent=5 // pred_check
        %p9760 = pneg %p9759
      $region178: #{tpu_custom_call.1} parent=5 // pred_check_branch
        %9762 = sbr.rel (%p9760) target = $region180
      $region179: #{tpu_custom_call.1} parent=5 // pred_region
        %s9763 = ssub.s32 %s40, 2
        // Predicated region
        $region181: #{tpu_custom_call.1} parent=179 // pred_check
          %p9764 = pneg %p494
        $region182: #{tpu_custom_call.1} parent=179 // pred_check_branch
          %9766 = sbr.rel (%p9764) target = $region184
        $region183: #{tpu_custom_call.1} parent=179 // pred_region
          %p9767 = scmp.lt.s32.totalorder %s46, 1
          %s9768 = scalar_select %p9767, %s46, 1
          %s9769 = smul.addr %s9768, 8
          %s9770 = scalar_lea.vmem %s20, %s9769
        $region184: #{tpu_custom_call.1} parent=179 // pred_fallthru
          _
      $region180: #{tpu_custom_call.1} parent=5 // pred_fallthru
        _
    $region6: #{tpu_custom_call.1} parent=1 // loop_footer
      %s44 = sadd.s32 1, %s40
    $region7: #{tpu_custom_call.1} parent=1 // loop_footer_branch
      %39 = sbr.rel target = $region3
    $region8: #{tpu_custom_call.1} parent=1 // loop_exit
      _
    %9771 = vsyncpa [#allocation4], 1
    %s9772 = scalar_lea.sflag [#allocation4], 1
    %9773 = vsyncpa %s9772, 1
    %9774 = vsyncpa [#allocation6], 1
    %9775 = vsyncpa [#allocation9], 1
    %9776 = vsyncpa [#allocation12], 1
    %9777 = vsyncpa [#allocation15], 1
    %9778 = vsyncpa [#allocation18], 1
    %9779 = vsyncpa [#allocation21], 1
    %9780 = vsyncpa [#allocation24], 1
    %9781 = vsyncpa [#allocation27], 1
    %9782 = vsyncpa [#allocation30], 1

</llo_original>
